<compile_context>
chip_gen: v5e
topology: v5e:2x2
jax: 0.10.0
libtpu: 0.0.40
codegen_flags: <defaults>
</compile_context>

<pallas_src>
import math

import jax
import jax.numpy as jnp
from jax.experimental import pallas as pl
from jax.experimental.pallas import tpu as pltpu

# Model hyperparameters (from the PyTorch module)
HIDDEN = 30
INPUT_DIM = 1
NUM_LAYERS = 5

# Padded, TPU-friendly sizes
H_PAD = 32            # hidden padded 30 -> 32
G_PAD = 4 * H_PAD     # 4 concatenated gates -> exactly one 128-lane tile
B_BLOCK = 8           # batch rows per grid step (one f32 sublane group)


def lstm_wavefront_kernel(x_ref, wih_ref, whh_ref, b_ref, h0_ref, c0_ref,
                          fcw_ref, fcb_ref, out_ref, hn_ref, cn_ref):
    """One batch block per grid step; everything lives in VMEM.

    x_ref   : (S, Bb, Hp)    time-major input (only feature 0 is real data)
    wih_ref : (L, Hp, 4*Hp)  packed/padded input weights   (x @ W layout)
    whh_ref : (L, Hp, 4*Hp)  packed/padded hidden weights  (h @ W layout)
    b_ref   : (L, 1, 4*Hp)   combined bias (b_ih + b_hh), gate order [i,f,g,o]
    h0_ref  : (L, Bb, Hp)    padded lanes are zero
    c0_ref  : (L, Bb, Hp)
    fcw_ref : (1, Hp)        fc weight row, padded lanes zero
    fcb_ref : (1, 1)
    out_ref : (Bb, 1)
    hn_ref  : (L, Bb, Hp)
    cn_ref  : (L, Bb, Hp)
    """
    S, Bb, Hp = x_ref.shape
    L = h0_ref.shape[0]
    W = S + L - 1                      # number of wavefront steps

    def sigmoid_t(z):
        # sigmoid(z) == 0.5 * tanh(0.5 * z) + 0.5  -> single EUP op per gate
        return 0.5 * jnp.tanh(0.5 * z) + 0.5

    def cell(pre, c_old):
        i = sigmoid_t(pre[:, 0 * Hp:1 * Hp])
        f = sigmoid_t(pre[:, 1 * Hp:2 * Hp])
        g = jnp.tanh(pre[:, 2 * Hp:3 * Hp])
        o = sigmoid_t(pre[:, 3 * Hp:4 * Hp])
        c_new = f * c_old + i * g
        h_new = o * jnp.tanh(c_new)
        return h_new, c_new

    h_init = tuple(h0_ref[l] for l in range(L))
    c_init = tuple(c0_ref[l] for l in range(L))
    y_init = tuple(jnp.zeros((Bb, Hp), jnp.float32) for _ in range(L))

    def step(w, carry):
        h, c, y = carry                # tuples of (Bb, Hp) f32
        # Layer-0 input for this wavefront step (clamped index; masked below).
        t0 = jnp.minimum(w, S - 1)
        x_t = x_ref[t0]                                    # (Bb, Hp)
        wih0_row = wih_ref[0][0:1, :]                      # (1, 4*Hp)

        new_h, new_c, new_y = [], [], []
        for l in range(L):             # static -> fully unrolled cells
            if l == 0:
                # in_dim == 1: rank-1 input projection, pure VPU broadcast mul.
                xin_pre = x_t[:, 0:1] * wih0_row           # (Bb, 4*Hp)
            else:
                xin_pre = jnp.dot(y[l - 1], wih_ref[l],
                                  preferred_element_type=jnp.float32)
            pre = (xin_pre
                   + jnp.dot(h[l], whh_ref[l],
                             preferred_element_type=jnp.float32)
                   + b_ref[l])
            h_upd, c_upd = cell(pre, c[l])

            # Layer l is active iff 0 <= (w - l) < S.
            t = w - l
            active = jnp.logical_and(t >= 0, t < S)
            new_h.append(jnp.where(active, h_upd, h[l]))
            new_c.append(jnp.where(active, c_upd, c[l]))
            new_y.append(jnp.where(active, h_upd, y[l]))
        return tuple(new_h), tuple(new_c), tuple(new_y)

    # Full unroll for short wavefronts (LLO scheduler visibility); partial
    # unroll for long sequences to bound code size / vreg live ranges.
    unroll = True if W <= 16 else 8
    h, c, y = jax.lax.fori_loop(0, W, step, (h_init, c_init, y_init),
                                unroll=unroll)

    for l in range(L):
        hn_ref[l] = h[l]
        cn_ref[l] = c[l]

    # Final Linear(hidden, 1) on out[-1]: VPU multiply + lane reduction
    # (avoids an N=1 MXU matmul).  y[L-1] holds layer L-1's t = S-1 output.
    out_ref[...] = (jnp.sum(y[L - 1] * fcw_ref[...], axis=-1, keepdims=True)
                    + fcb_ref[...])


# ----------------------------------------------------------------------------
# Parameter construction / packing
# ----------------------------------------------------------------------------
def init_params(key, input_dim=INPUT_DIM, hidden=HIDDEN, num_layers=NUM_LAYERS):
    """Raw (PyTorch-layout) params, init mimicking U(-1/sqrt(H), 1/sqrt(H))."""
    k = 1.0 / math.sqrt(hidden)
    keys = jax.random.split(key, num_layers * 4 + 2)
    w_ih, w_hh, b_ih, b_hh = [], [], [], []
    for l in range(num_layers):
        in_dim = input_dim if l == 0 else hidden
        k0, k1, k2, k3 = keys[4 * l: 4 * l + 4]
        w_ih.append(jax.random.uniform(k0, (4 * hidden, in_dim), jnp.float32, -k, k))
        w_hh.append(jax.random.uniform(k1, (4 * hidden, hidden), jnp.float32, -k, k))
        b_ih.append(jax.random.uniform(k2, (4 * hidden,), jnp.float32, -k, k))
        b_hh.append(jax.random.uniform(k3, (4 * hidden,), jnp.float32, -k, k))
    fc_w = jax.random.uniform(keys[-2], (1, hidden), jnp.float32, -k, k)
    fc_b = jax.random.uniform(keys[-1], (1,), jnp.float32, -k, k)
    return (w_ih, w_hh, b_ih, b_hh, fc_w, fc_b)


def pack_params(raw, hidden=HIDDEN):
    """Pack raw params into padded, gate-merged, x@W-layout kernel params.

    Padded output lanes (cols 30,31 of each gate block) and padded bias lanes
    are ZERO so that padded h/c lanes stay exactly zero through the recurrence
    (0.5*c_pad + 0.5*tanh(0) = 0).
    """
    w_ih, w_hh, b_ih, b_hh, fc_w, fc_b = raw
    L, H, Hp, G = len(w_ih), hidden, H_PAD, G_PAD

    wih_p = jnp.zeros((L, Hp, G), jnp.float32)
    whh_p = jnp.zeros((L, Hp, G), jnp.float32)
    b_p = jnp.zeros((L, 1, G), jnp.float32)
    for l in range(L):
        in_dim = w_ih[l].shape[1]
        b_comb = (b_ih[l] + b_hh[l]).reshape(4, H)
        for g in range(4):
            wih_p = wih_p.at[l, :in_dim, g * Hp:g * Hp + H].set(
                w_ih[l][g * H:(g + 1) * H, :].T)
            whh_p = whh_p.at[l, :H, g * Hp:g * Hp + H].set(
                w_hh[l][g * H:(g + 1) * H, :].T)
            b_p = b_p.at[l, 0, g * Hp:g * Hp + H].set(b_comb[g])
    fcw_p = jnp.zeros((1, Hp), jnp.float32).at[0, :H].set(fc_w[0])
    fcb_p = fc_b.reshape(1, 1)
    return wih_p, whh_p, b_p, fcw_p, fcb_p


# ----------------------------------------------------------------------------
# Wrapper
# ----------------------------------------------------------------------------
def lstm_forward(x, hn, cn, packed):
    """x: (S, B, input_dim); hn, cn: (L, B, H) -> (final_out (B,1), hn, cn)."""
    wih_p, whh_p, b_p, fcw_p, fcb_p = packed
    S, B, in_dim = x.shape
    L, _, H = hn.shape
    Bp = ((B + B_BLOCK - 1) // B_BLOCK) * B_BLOCK
    Hp, G = H_PAD, G_PAD
    nb = Bp // B_BLOCK

    x_p = jnp.zeros((S, Bp, Hp), jnp.float32).at[:, :B, :in_dim].set(x)
    h0_p = jnp.zeros((L, Bp, Hp), jnp.float32).at[:, :B, :H].set(hn)
    c0_p = jnp.zeros((L, Bp, Hp), jnp.float32).at[:, :B, :H].set(cn)

    out_shapes = (
        jax.ShapeDtypeStruct((Bp, 1), jnp.float32),
        jax.ShapeDtypeStruct((L, Bp, Hp), jnp.float32),
        jax.ShapeDtypeStruct((L, Bp, Hp), jnp.float32),
    )

    in_specs = [
        pl.BlockSpec((S, B_BLOCK, Hp), lambda b: (0, b, 0)),    # x (batch-split)
        pl.BlockSpec((L, Hp, G), lambda b: (0, 0, 0)),          # Wih (shared)
        pl.BlockSpec((L, Hp, G), lambda b: (0, 0, 0)),          # Whh (shared)
        pl.BlockSpec((L, 1, G), lambda b: (0, 0, 0)),           # bias (shared)
        pl.BlockSpec((L, B_BLOCK, Hp), lambda b: (0, b, 0)),    # h0
        pl.BlockSpec((L, B_BLOCK, Hp), lambda b: (0, b, 0)),    # c0
        pl.BlockSpec((1, Hp), lambda b: (0, 0)),                # fc weight
        pl.BlockSpec((1, 1), lambda b: (0, 0)),                 # fc bias
    ]
    out_specs = (
        pl.BlockSpec((B_BLOCK, 1), lambda b: (b, 0)),
        pl.BlockSpec((L, B_BLOCK, Hp), lambda b: (0, b, 0)),
        pl.BlockSpec((L, B_BLOCK, Hp), lambda b: (0, b, 0)),
    )

    # Explicit VMEM budget: all per-step blocks, double-buffered, plus margin.
    block_bytes = 4 * (S * B_BLOCK * Hp            # x
                       + 2 * L * Hp * G            # Wih + Whh
                       + L * G                     # bias
                       + 2 * L * B_BLOCK * Hp      # h0 + c0
                       + Hp + 1                    # fc
                       + B_BLOCK                   # out
                       + 2 * L * B_BLOCK * Hp)     # hn + cn
    vmem_limit = int(min(32 << 20, max(4 << 20, 4 * block_bytes)))

    out_p, hn_p, cn_p = pl.pallas_call(
        lstm_wavefront_kernel,
        out_shape=out_shapes,
        grid=(nb,),
        in_specs=in_specs,
        out_specs=out_specs,
        compiler_params=pltpu.CompilerParams(
            dimension_semantics=("parallel",),      # batch blocks -> 2 TCs on v7x
            vmem_limit_bytes=vmem_limit),
    )(x_p, wih_p, whh_p, b_p, h0_p, c0_p, fcw_p, fcb_p)

    return out_p[:B], hn_p[:, :B, :H], cn_p[:, :B, :H]


# ----------------------------------------------------------------------------
# Pure-JAX reference (raw PyTorch-layout params, standard LSTM equations)
# ----------------------------------------------------------------------------
def lstm_forward_ref(x, hn, cn, raw):
    w_ih, w_hh, b_ih, b_hh, fc_w, fc_b = raw
    S, B, _ = x.shape
    L, _, H = hn.shape
    seq = x
    hs, cs = [], []
    for l in range(L):
        h, c = hn[l], cn[l]
        b = b_ih[l] + b_hh[l]
        outs = []
        for t in range(S):
            gates = seq[t] @ w_ih[l].T + h @ w_hh[l].T + b  # (B, 4H)
            i = jax.nn.sigmoid(gates[:, 0 * H:1 * H])
            f = jax.nn.sigmoid(gates[:, 1 * H:2 * H])
            g = jnp.tanh(gates[:, 2 * H:3 * H])
            o = jax.nn.sigmoid(gates[:, 3 * H:4 * H])
            c = f * c + i * g
            h = o * jnp.tanh(c)
            outs.append(h)
        seq = jnp.stack(outs)
        hs.append(h)
        cs.append(c)
    final = seq[-1] @ fc_w.T + fc_b
    return final, jnp.stack(hs), jnp.stack(cs)


if __name__ == "__main__":
    S, B = 8, 4  # small seq-len / batch for the demo
    key = jax.random.PRNGKey(0)
    kp, kx = jax.random.split(key)

    raw_params = init_params(kp)
    packed_params = pack_params(raw_params)

    x = jax.random.normal(kx, (S, B, INPUT_DIM), jnp.float32)
    hn = jnp.zeros((NUM_LAYERS, B, HIDDEN), jnp.float32)
    cn = jnp.zeros((NUM_LAYERS, B, HIDDEN), jnp.float32)

    run = jax.jit(lstm_forward)
    final_out, hn_out, cn_out = jax.block_until_ready(
        run(x, hn, cn, packed_params))

    ref_out, ref_hn, ref_cn = lstm_forward_ref(x, hn, cn, raw_params)

    assert final_out.shape == (B, 1)
    assert hn_out.shape == (NUM_LAYERS, B, HIDDEN)
    assert cn_out.shape == (NUM_LAYERS, B, HIDDEN)
    assert jnp.allclose(final_out, ref_out, atol=2e-4, rtol=2e-4)
    assert jnp.allclose(hn_out, ref_hn, atol=2e-4, rtol=2e-4)
    assert jnp.allclose(cn_out, ref_cn, atol=2e-4, rtol=2e-4)

    print("KERNEL_OK")
</pallas_src>

<mosaic_0001>
module attributes {stable_mosaic.version = 11 : i64} {
  func.func @lstm_wavefront_kernel(%arg0: i32, %arg1: memref<8x8x32xf32, #tpu.memory_space<vmem>>, %arg2: memref<5x32x128xf32, #tpu.memory_space<vmem>>, %arg3: memref<5x32x128xf32, #tpu.memory_space<vmem>>, %arg4: memref<5x1x128xf32, #tpu.memory_space<vmem>>, %arg5: memref<5x8x32xf32, #tpu.memory_space<vmem>>, %arg6: memref<5x8x32xf32, #tpu.memory_space<vmem>>, %arg7: memref<1x32xf32, #tpu.memory_space<vmem>>, %arg8: memref<1x1xf32, #tpu.memory_space<vmem>>, %arg9: memref<8x1xf32, #tpu.memory_space<vmem>>, %arg10: memref<5x8x32xf32, #tpu.memory_space<vmem>>, %arg11: memref<5x8x32xf32, #tpu.memory_space<vmem>>) attributes {dimension_semantics = [#tpu.dimension_semantics<parallel>], iteration_bounds = array<i64: 1>, scalar_prefetch = 0 : i64, scratch_operands = 0 : i64, tpu.core_type = #tpu.core_type<tc>, window_params = [{transform_indices = @transform_0, window_bounds = array<i64: 8, 8, 32>}, {pipeline_mode = #tpu.pipeline_mode<synchronous>, transform_indices = @transform_1, window_bounds = array<i64: 5, 32, 128>}, {pipeline_mode = #tpu.pipeline_mode<synchronous>, transform_indices = @transform_2, window_bounds = array<i64: 5, 32, 128>}, {pipeline_mode = #tpu.pipeline_mode<synchronous>, transform_indices = @transform_3, window_bounds = array<i64: 5, 1, 128>}, {transform_indices = @transform_4, window_bounds = array<i64: 5, 8, 32>}, {transform_indices = @transform_5, window_bounds = array<i64: 5, 8, 32>}, {pipeline_mode = #tpu.pipeline_mode<synchronous>, transform_indices = @transform_6, window_bounds = array<i64: 1, 32>}, {pipeline_mode = #tpu.pipeline_mode<synchronous>, transform_indices = @transform_7, window_bounds = array<i64: 1, 1>}, {transform_indices = @transform_8, window_bounds = array<i64: 8, 1>}, {transform_indices = @transform_9, window_bounds = array<i64: 5, 8, 32>}, {transform_indices = @transform_10, window_bounds = array<i64: 5, 8, 32>}]} {
    %c0 = arith.constant 0 : index
    %c0_0 = arith.constant 0 : index
    %c0_1 = arith.constant 0 : index
    %0 = vector.load %arg5[%c0, %c0_0, %c0_1] : memref<5x8x32xf32, #tpu.memory_space<vmem>>, vector<1x8x32xf32>
    %1 = vector.shape_cast %0 : vector<1x8x32xf32> to vector<8x32xf32>
    %c1 = arith.constant 1 : index
    %c0_2 = arith.constant 0 : index
    %c0_3 = arith.constant 0 : index
    %2 = vector.load %arg5[%c1, %c0_2, %c0_3] : memref<5x8x32xf32, #tpu.memory_space<vmem>>, vector<1x8x32xf32>
    %3 = vector.shape_cast %2 : vector<1x8x32xf32> to vector<8x32xf32>
    %c2 = arith.constant 2 : index
    %c0_4 = arith.constant 0 : index
    %c0_5 = arith.constant 0 : index
    %4 = vector.load %arg5[%c2, %c0_4, %c0_5] : memref<5x8x32xf32, #tpu.memory_space<vmem>>, vector<1x8x32xf32>
    %5 = vector.shape_cast %4 : vector<1x8x32xf32> to vector<8x32xf32>
    %c3 = arith.constant 3 : index
    %c0_6 = arith.constant 0 : index
    %c0_7 = arith.constant 0 : index
    %6 = vector.load %arg5[%c3, %c0_6, %c0_7] : memref<5x8x32xf32, #tpu.memory_space<vmem>>, vector<1x8x32xf32>
    %7 = vector.shape_cast %6 : vector<1x8x32xf32> to vector<8x32xf32>
    %c4 = arith.constant 4 : index
    %c0_8 = arith.constant 0 : index
    %c0_9 = arith.constant 0 : index
    %8 = vector.load %arg5[%c4, %c0_8, %c0_9] : memref<5x8x32xf32, #tpu.memory_space<vmem>>, vector<1x8x32xf32>
    %9 = vector.shape_cast %8 : vector<1x8x32xf32> to vector<8x32xf32>
    %c0_10 = arith.constant 0 : index
    %c0_11 = arith.constant 0 : index
    %c0_12 = arith.constant 0 : index
    %10 = vector.load %arg6[%c0_10, %c0_11, %c0_12] : memref<5x8x32xf32, #tpu.memory_space<vmem>>, vector<1x8x32xf32>
    %11 = vector.shape_cast %10 : vector<1x8x32xf32> to vector<8x32xf32>
    %c1_13 = arith.constant 1 : index
    %c0_14 = arith.constant 0 : index
    %c0_15 = arith.constant 0 : index
    %12 = vector.load %arg6[%c1_13, %c0_14, %c0_15] : memref<5x8x32xf32, #tpu.memory_space<vmem>>, vector<1x8x32xf32>
    %13 = vector.shape_cast %12 : vector<1x8x32xf32> to vector<8x32xf32>
    %c2_16 = arith.constant 2 : index
    %c0_17 = arith.constant 0 : index
    %c0_18 = arith.constant 0 : index
    %14 = vector.load %arg6[%c2_16, %c0_17, %c0_18] : memref<5x8x32xf32, #tpu.memory_space<vmem>>, vector<1x8x32xf32>
    %15 = vector.shape_cast %14 : vector<1x8x32xf32> to vector<8x32xf32>
    %c3_19 = arith.constant 3 : index
    %c0_20 = arith.constant 0 : index
    %c0_21 = arith.constant 0 : index
    %16 = vector.load %arg6[%c3_19, %c0_20, %c0_21] : memref<5x8x32xf32, #tpu.memory_space<vmem>>, vector<1x8x32xf32>
    %17 = vector.shape_cast %16 : vector<1x8x32xf32> to vector<8x32xf32>
    %c4_22 = arith.constant 4 : index
    %c0_23 = arith.constant 0 : index
    %c0_24 = arith.constant 0 : index
    %18 = vector.load %arg6[%c4_22, %c0_23, %c0_24] : memref<5x8x32xf32, #tpu.memory_space<vmem>>, vector<1x8x32xf32>
    %19 = vector.shape_cast %18 : vector<1x8x32xf32> to vector<8x32xf32>
    %cst = arith.constant 0.000000e+00 : f32
    %20 = vector.broadcast %cst : f32 to vector<8x32xf32>
    %cst_25 = arith.constant 0.000000e+00 : f32
    %21 = vector.broadcast %cst_25 : f32 to vector<8x32xf32>
    %cst_26 = arith.constant 0.000000e+00 : f32
    %22 = vector.broadcast %cst_26 : f32 to vector<8x32xf32>
    %cst_27 = arith.constant 0.000000e+00 : f32
    %23 = vector.broadcast %cst_27 : f32 to vector<8x32xf32>
    %cst_28 = arith.constant 0.000000e+00 : f32
    %24 = vector.broadcast %cst_28 : f32 to vector<8x32xf32>
    %c0_i32 = arith.constant 0 : i32
    %c7_i32 = arith.constant 7 : i32
    %25 = arith.minsi %c0_i32, %c7_i32 : i32
    %26 = arith.index_cast %25 : i32 to index
    %c0_29 = arith.constant 0 : index
    %c0_30 = arith.constant 0 : index
    %27 = vector.load %arg1[%26, %c0_29, %c0_30] : memref<8x8x32xf32, #tpu.memory_space<vmem>>, vector<1x8x32xf32>
    %28 = vector.shape_cast %27 : vector<1x8x32xf32> to vector<8x32xf32>
    %c0_31 = arith.constant 0 : index
    %c0_32 = arith.constant 0 : index
    %c0_33 = arith.constant 0 : index
    %29 = vector.load %arg2[%c0_31, %c0_32, %c0_33] : memref<5x32x128xf32, #tpu.memory_space<vmem>>, vector<1x32x128xf32>
    %30 = vector.shape_cast %29 : vector<1x32x128xf32> to vector<32x128xf32>
    %31 = vector.extract_strided_slice %30 {offsets = [0, 0], sizes = [1, 128], strides = [1, 1]} : vector<32x128xf32> to vector<1x128xf32>
    %32 = vector.extract_strided_slice %28 {offsets = [0, 0], sizes = [8, 1], strides = [1, 1]} : vector<8x32xf32> to vector<8x1xf32>
    %33 = vector.broadcast %32 : vector<8x1xf32> to vector<8x128xf32>
    %34 = vector.broadcast %31 : vector<1x128xf32> to vector<8x128xf32>
    %35 = arith.mulf %33, %34 : vector<8x128xf32>
    %c0_34 = arith.constant 0 : index
    %c0_35 = arith.constant 0 : index
    %c0_36 = arith.constant 0 : index
    %36 = vector.load %arg3[%c0_34, %c0_35, %c0_36] : memref<5x32x128xf32, #tpu.memory_space<vmem>>, vector<1x32x128xf32>
    %37 = vector.shape_cast %36 : vector<1x32x128xf32> to vector<32x128xf32>
    %cst_37 = arith.constant dense<0.000000e+00> : vector<8x128xf32>
    %38 = tpu.matmul %1, %37, %cst_37 {dimension_numbers = #tpu.dot_dimension_numbers<[1], [0], [0], [1], [0, 0, 1, 1], [], []>} : vector<8x32xf32>, vector<32x128xf32>, vector<8x128xf32> -> vector<8x128xf32>
    %39 = arith.addf %35, %38 : vector<8x128xf32>
    %c0_38 = arith.constant 0 : index
    %c0_39 = arith.constant 0 : index
    %c0_40 = arith.constant 0 : index
    %40 = vector.load %arg4[%c0_38, %c0_39, %c0_40] : memref<5x1x128xf32, #tpu.memory_space<vmem>>, vector<1x1x128xf32>
    %41 = vector.shape_cast %40 : vector<1x1x128xf32> to vector<1x128xf32>
    %42 = vector.broadcast %41 : vector<1x128xf32> to vector<8x128xf32>
    %43 = arith.addf %39, %42 : vector<8x128xf32>
    %44 = vector.extract_strided_slice %43 {offsets = [0, 0], sizes = [8, 32], strides = [1, 1]} : vector<8x128xf32> to vector<8x32xf32>
    %cst_41 = arith.constant 5.000000e-01 : f32
    %45 = vector.broadcast %cst_41 : f32 to vector<8x32xf32>
    %46 = arith.mulf %45, %44 : vector<8x32xf32>
    %47 = math.tanh %46 : vector<8x32xf32>
    %cst_42 = arith.constant 5.000000e-01 : f32
    %48 = vector.broadcast %cst_42 : f32 to vector<8x32xf32>
    %49 = arith.mulf %48, %47 : vector<8x32xf32>
    %cst_43 = arith.constant 5.000000e-01 : f32
    %50 = vector.broadcast %cst_43 : f32 to vector<8x32xf32>
    %51 = arith.addf %49, %50 : vector<8x32xf32>
    %52 = vector.extract_strided_slice %43 {offsets = [0, 32], sizes = [8, 32], strides = [1, 1]} : vector<8x128xf32> to vector<8x32xf32>
    %cst_44 = arith.constant 5.000000e-01 : f32
    %53 = vector.broadcast %cst_44 : f32 to vector<8x32xf32>
    %54 = arith.mulf %53, %52 : vector<8x32xf32>
    %55 = math.tanh %54 : vector<8x32xf32>
    %cst_45 = arith.constant 5.000000e-01 : f32
    %56 = vector.broadcast %cst_45 : f32 to vector<8x32xf32>
    %57 = arith.mulf %56, %55 : vector<8x32xf32>
    %cst_46 = arith.constant 5.000000e-01 : f32
    %58 = vector.broadcast %cst_46 : f32 to vector<8x32xf32>
    %59 = arith.addf %57, %58 : vector<8x32xf32>
    %60 = vector.extract_strided_slice %43 {offsets = [0, 64], sizes = [8, 32], strides = [1, 1]} : vector<8x128xf32> to vector<8x32xf32>
    %61 = math.tanh %60 : vector<8x32xf32>
    %62 = vector.extract_strided_slice %43 {offsets = [0, 96], sizes = [8, 32], strides = [1, 1]} : vector<8x128xf32> to vector<8x32xf32>
    %cst_47 = arith.constant 5.000000e-01 : f32
    %63 = vector.broadcast %cst_47 : f32 to vector<8x32xf32>
    %64 = arith.mulf %63, %62 : vector<8x32xf32>
    %65 = math.tanh %64 : vector<8x32xf32>
    %cst_48 = arith.constant 5.000000e-01 : f32
    %66 = vector.broadcast %cst_48 : f32 to vector<8x32xf32>
    %67 = arith.mulf %66, %65 : vector<8x32xf32>
    %cst_49 = arith.constant 5.000000e-01 : f32
    %68 = vector.broadcast %cst_49 : f32 to vector<8x32xf32>
    %69 = arith.addf %67, %68 : vector<8x32xf32>
    %70 = arith.mulf %59, %11 : vector<8x32xf32>
    %71 = arith.mulf %51, %61 : vector<8x32xf32>
    %72 = arith.addf %70, %71 : vector<8x32xf32>
    %73 = math.tanh %72 : vector<8x32xf32>
    %74 = arith.mulf %69, %73 : vector<8x32xf32>
    %c0_i32_50 = arith.constant 0 : i32
    %75 = arith.subi %c0_i32, %c0_i32_50 : i32
    %c0_i32_51 = arith.constant 0 : i32
    %76 = arith.cmpi sge, %75, %c0_i32_51 : i32
    %c8_i32 = arith.constant 8 : i32
    %77 = arith.cmpi slt, %75, %c8_i32 : i32
    %78 = arith.andi %76, %77 : i1
    %79 = arith.select %78, %74, %1 : vector<8x32xf32>
    %80 = arith.select %78, %72, %11 : vector<8x32xf32>
    %81 = arith.select %78, %74, %20 : vector<8x32xf32>
    %c1_52 = arith.constant 1 : index
    %c0_53 = arith.constant 0 : index
    %c0_54 = arith.constant 0 : index
    %82 = vector.load %arg2[%c1_52, %c0_53, %c0_54] : memref<5x32x128xf32, #tpu.memory_space<vmem>>, vector<1x32x128xf32>
    %83 = vector.shape_cast %82 : vector<1x32x128xf32> to vector<32x128xf32>
    %cst_55 = arith.constant dense<0.000000e+00> : vector<8x128xf32>
    %84 = tpu.matmul %20, %83, %cst_55 {dimension_numbers = #tpu.dot_dimension_numbers<[1], [0], [0], [1], [0, 0, 1, 1], [], []>} : vector<8x32xf32>, vector<32x128xf32>, vector<8x128xf32> -> vector<8x128xf32>
    %c1_56 = arith.constant 1 : index
    %c0_57 = arith.constant 0 : index
    %c0_58 = arith.constant 0 : index
    %85 = vector.load %arg3[%c1_56, %c0_57, %c0_58] : memref<5x32x128xf32, #tpu.memory_space<vmem>>, vector<1x32x128xf32>
    %86 = vector.shape_cast %85 : vector<1x32x128xf32> to vector<32x128xf32>
    %cst_59 = arith.constant dense<0.000000e+00> : vector<8x128xf32>
    %87 = tpu.matmul %3, %86, %cst_59 {dimension_numbers = #tpu.dot_dimension_numbers<[1], [0], [0], [1], [0, 0, 1, 1], [], []>} : vector<8x32xf32>, vector<32x128xf32>, vector<8x128xf32> -> vector<8x128xf32>
    %88 = arith.addf %84, %87 : vector<8x128xf32>
    %c1_60 = arith.constant 1 : index
    %c0_61 = arith.constant 0 : index
    %c0_62 = arith.constant 0 : index
    %89 = vector.load %arg4[%c1_60, %c0_61, %c0_62] : memref<5x1x128xf32, #tpu.memory_space<vmem>>, vector<1x1x128xf32>
    %90 = vector.shape_cast %89 : vector<1x1x128xf32> to vector<1x128xf32>
    %91 = vector.broadcast %90 : vector<1x128xf32> to vector<8x128xf32>
    %92 = arith.addf %88, %91 : vector<8x128xf32>
    %93 = vector.extract_strided_slice %92 {offsets = [0, 0], sizes = [8, 32], strides = [1, 1]} : vector<8x128xf32> to vector<8x32xf32>
    %cst_63 = arith.constant 5.000000e-01 : f32
    %94 = vector.broadcast %cst_63 : f32 to vector<8x32xf32>
    %95 = arith.mulf %94, %93 : vector<8x32xf32>
    %96 = math.tanh %95 : vector<8x32xf32>
    %cst_64 = arith.constant 5.000000e-01 : f32
    %97 = vector.broadcast %cst_64 : f32 to vector<8x32xf32>
    %98 = arith.mulf %97, %96 : vector<8x32xf32>
    %cst_65 = arith.constant 5.000000e-01 : f32
    %99 = vector.broadcast %cst_65 : f32 to vector<8x32xf32>
    %100 = arith.addf %98, %99 : vector<8x32xf32>
    %101 = vector.extract_strided_slice %92 {offsets = [0, 32], sizes = [8, 32], strides = [1, 1]} : vector<8x128xf32> to vector<8x32xf32>
    %cst_66 = arith.constant 5.000000e-01 : f32
    %102 = vector.broadcast %cst_66 : f32 to vector<8x32xf32>
    %103 = arith.mulf %102, %101 : vector<8x32xf32>
    %104 = math.tanh %103 : vector<8x32xf32>
    %cst_67 = arith.constant 5.000000e-01 : f32
    %105 = vector.broadcast %cst_67 : f32 to vector<8x32xf32>
    %106 = arith.mulf %105, %104 : vector<8x32xf32>
    %cst_68 = arith.constant 5.000000e-01 : f32
    %107 = vector.broadcast %cst_68 : f32 to vector<8x32xf32>
    %108 = arith.addf %106, %107 : vector<8x32xf32>
    %109 = vector.extract_strided_slice %92 {offsets = [0, 64], sizes = [8, 32], strides = [1, 1]} : vector<8x128xf32> to vector<8x32xf32>
    %110 = math.tanh %109 : vector<8x32xf32>
    %111 = vector.extract_strided_slice %92 {offsets = [0, 96], sizes = [8, 32], strides = [1, 1]} : vector<8x128xf32> to vector<8x32xf32>
    %cst_69 = arith.constant 5.000000e-01 : f32
    %112 = vector.broadcast %cst_69 : f32 to vector<8x32xf32>
    %113 = arith.mulf %112, %111 : vector<8x32xf32>
    %114 = math.tanh %113 : vector<8x32xf32>
    %cst_70 = arith.constant 5.000000e-01 : f32
    %115 = vector.broadcast %cst_70 : f32 to vector<8x32xf32>
    %116 = arith.mulf %115, %114 : vector<8x32xf32>
    %cst_71 = arith.constant 5.000000e-01 : f32
    %117 = vector.broadcast %cst_71 : f32 to vector<8x32xf32>
    %118 = arith.addf %116, %117 : vector<8x32xf32>
    %119 = arith.mulf %108, %13 : vector<8x32xf32>
    %120 = arith.mulf %100, %110 : vector<8x32xf32>
    %121 = arith.addf %119, %120 : vector<8x32xf32>
    %122 = math.tanh %121 : vector<8x32xf32>
    %123 = arith.mulf %118, %122 : vector<8x32xf32>
    %c1_i32 = arith.constant 1 : i32
    %124 = arith.subi %c0_i32, %c1_i32 : i32
    %c0_i32_72 = arith.constant 0 : i32
    %125 = arith.cmpi sge, %124, %c0_i32_72 : i32
    %c8_i32_73 = arith.constant 8 : i32
    %126 = arith.cmpi slt, %124, %c8_i32_73 : i32
    %127 = arith.andi %125, %126 : i1
    %128 = arith.select %127, %123, %3 : vector<8x32xf32>
    %129 = arith.select %127, %121, %13 : vector<8x32xf32>
    %130 = arith.select %127, %123, %21 : vector<8x32xf32>
    %c2_74 = arith.constant 2 : index
    %c0_75 = arith.constant 0 : index
    %c0_76 = arith.constant 0 : index
    %131 = vector.load %arg2[%c2_74, %c0_75, %c0_76] : memref<5x32x128xf32, #tpu.memory_space<vmem>>, vector<1x32x128xf32>
    %132 = vector.shape_cast %131 : vector<1x32x128xf32> to vector<32x128xf32>
    %cst_77 = arith.constant dense<0.000000e+00> : vector<8x128xf32>
    %133 = tpu.matmul %21, %132, %cst_77 {dimension_numbers = #tpu.dot_dimension_numbers<[1], [0], [0], [1], [0, 0, 1, 1], [], []>} : vector<8x32xf32>, vector<32x128xf32>, vector<8x128xf32> -> vector<8x128xf32>
    %c2_78 = arith.constant 2 : index
    %c0_79 = arith.constant 0 : index
    %c0_80 = arith.constant 0 : index
    %134 = vector.load %arg3[%c2_78, %c0_79, %c0_80] : memref<5x32x128xf32, #tpu.memory_space<vmem>>, vector<1x32x128xf32>
    %135 = vector.shape_cast %134 : vector<1x32x128xf32> to vector<32x128xf32>
    %cst_81 = arith.constant dense<0.000000e+00> : vector<8x128xf32>
    %136 = tpu.matmul %5, %135, %cst_81 {dimension_numbers = #tpu.dot_dimension_numbers<[1], [0], [0], [1], [0, 0, 1, 1], [], []>} : vector<8x32xf32>, vector<32x128xf32>, vector<8x128xf32> -> vector<8x128xf32>
    %137 = arith.addf %133, %136 : vector<8x128xf32>
    %c2_82 = arith.constant 2 : index
    %c0_83 = arith.constant 0 : index
    %c0_84 = arith.constant 0 : index
    %138 = vector.load %arg4[%c2_82, %c0_83, %c0_84] : memref<5x1x128xf32, #tpu.memory_space<vmem>>, vector<1x1x128xf32>
    %139 = vector.shape_cast %138 : vector<1x1x128xf32> to vector<1x128xf32>
    %140 = vector.broadcast %139 : vector<1x128xf32> to vector<8x128xf32>
    %141 = arith.addf %137, %140 : vector<8x128xf32>
    %142 = vector.extract_strided_slice %141 {offsets = [0, 0], sizes = [8, 32], strides = [1, 1]} : vector<8x128xf32> to vector<8x32xf32>
    %cst_85 = arith.constant 5.000000e-01 : f32
    %143 = vector.broadcast %cst_85 : f32 to vector<8x32xf32>
    %144 = arith.mulf %143, %142 : vector<8x32xf32>
    %145 = math.tanh %144 : vector<8x32xf32>
    %cst_86 = arith.constant 5.000000e-01 : f32
    %146 = vector.broadcast %cst_86 : f32 to vector<8x32xf32>
    %147 = arith.mulf %146, %145 : vector<8x32xf32>
    %cst_87 = arith.constant 5.000000e-01 : f32
    %148 = vector.broadcast %cst_87 : f32 to vector<8x32xf32>
    %149 = arith.addf %147, %148 : vector<8x32xf32>
    %150 = vector.extract_strided_slice %141 {offsets = [0, 32], sizes = [8, 32], strides = [1, 1]} : vector<8x128xf32> to vector<8x32xf32>
    %cst_88 = arith.constant 5.000000e-01 : f32
    %151 = vector.broadcast %cst_88 : f32 to vector<8x32xf32>
    %152 = arith.mulf %151, %150 : vector<8x32xf32>
    %153 = math.tanh %152 : vector<8x32xf32>
    %cst_89 = arith.constant 5.000000e-01 : f32
    %154 = vector.broadcast %cst_89 : f32 to vector<8x32xf32>
    %155 = arith.mulf %154, %153 : vector<8x32xf32>
    %cst_90 = arith.constant 5.000000e-01 : f32
    %156 = vector.broadcast %cst_90 : f32 to vector<8x32xf32>
    %157 = arith.addf %155, %156 : vector<8x32xf32>
    %158 = vector.extract_strided_slice %141 {offsets = [0, 64], sizes = [8, 32], strides = [1, 1]} : vector<8x128xf32> to vector<8x32xf32>
    %159 = math.tanh %158 : vector<8x32xf32>
    %160 = vector.extract_strided_slice %141 {offsets = [0, 96], sizes = [8, 32], strides = [1, 1]} : vector<8x128xf32> to vector<8x32xf32>
    %cst_91 = arith.constant 5.000000e-01 : f32
    %161 = vector.broadcast %cst_91 : f32 to vector<8x32xf32>
    %162 = arith.mulf %161, %160 : vector<8x32xf32>
    %163 = math.tanh %162 : vector<8x32xf32>
    %cst_92 = arith.constant 5.000000e-01 : f32
    %164 = vector.broadcast %cst_92 : f32 to vector<8x32xf32>
    %165 = arith.mulf %164, %163 : vector<8x32xf32>
    %cst_93 = arith.constant 5.000000e-01 : f32
    %166 = vector.broadcast %cst_93 : f32 to vector<8x32xf32>
    %167 = arith.addf %165, %166 : vector<8x32xf32>
    %168 = arith.mulf %157, %15 : vector<8x32xf32>
    %169 = arith.mulf %149, %159 : vector<8x32xf32>
    %170 = arith.addf %168, %169 : vector<8x32xf32>
    %171 = math.tanh %170 : vector<8x32xf32>
    %172 = arith.mulf %167, %171 : vector<8x32xf32>
    %c2_i32 = arith.constant 2 : i32
    %173 = arith.subi %c0_i32, %c2_i32 : i32
    %c0_i32_94 = arith.constant 0 : i32
    %174 = arith.cmpi sge, %173, %c0_i32_94 : i32
    %c8_i32_95 = arith.constant 8 : i32
    %175 = arith.cmpi slt, %173, %c8_i32_95 : i32
    %176 = arith.andi %174, %175 : i1
    %177 = arith.select %176, %172, %5 : vector<8x32xf32>
    %178 = arith.select %176, %170, %15 : vector<8x32xf32>
    %179 = arith.select %176, %172, %22 : vector<8x32xf32>
    %c3_96 = arith.constant 3 : index
    %c0_97 = arith.constant 0 : index
    %c0_98 = arith.constant 0 : index
    %180 = vector.load %arg2[%c3_96, %c0_97, %c0_98] : memref<5x32x128xf32, #tpu.memory_space<vmem>>, vector<1x32x128xf32>
    %181 = vector.shape_cast %180 : vector<1x32x128xf32> to vector<32x128xf32>
    %cst_99 = arith.constant dense<0.000000e+00> : vector<8x128xf32>
    %182 = tpu.matmul %22, %181, %cst_99 {dimension_numbers = #tpu.dot_dimension_numbers<[1], [0], [0], [1], [0, 0, 1, 1], [], []>} : vector<8x32xf32>, vector<32x128xf32>, vector<8x128xf32> -> vector<8x128xf32>
    %c3_100 = arith.constant 3 : index
    %c0_101 = arith.constant 0 : index
    %c0_102 = arith.constant 0 : index
    %183 = vector.load %arg3[%c3_100, %c0_101, %c0_102] : memref<5x32x128xf32, #tpu.memory_space<vmem>>, vector<1x32x128xf32>
    %184 = vector.shape_cast %183 : vector<1x32x128xf32> to vector<32x128xf32>
    %cst_103 = arith.constant dense<0.000000e+00> : vector<8x128xf32>
    %185 = tpu.matmul %7, %184, %cst_103 {dimension_numbers = #tpu.dot_dimension_numbers<[1], [0], [0], [1], [0, 0, 1, 1], [], []>} : vector<8x32xf32>, vector<32x128xf32>, vector<8x128xf32> -> vector<8x128xf32>
    %186 = arith.addf %182, %185 : vector<8x128xf32>
    %c3_104 = arith.constant 3 : index
    %c0_105 = arith.constant 0 : index
    %c0_106 = arith.constant 0 : index
    %187 = vector.load %arg4[%c3_104, %c0_105, %c0_106] : memref<5x1x128xf32, #tpu.memory_space<vmem>>, vector<1x1x128xf32>
    %188 = vector.shape_cast %187 : vector<1x1x128xf32> to vector<1x128xf32>
    %189 = vector.broadcast %188 : vector<1x128xf32> to vector<8x128xf32>
    %190 = arith.addf %186, %189 : vector<8x128xf32>
    %191 = vector.extract_strided_slice %190 {offsets = [0, 0], sizes = [8, 32], strides = [1, 1]} : vector<8x128xf32> to vector<8x32xf32>
    %cst_107 = arith.constant 5.000000e-01 : f32
    %192 = vector.broadcast %cst_107 : f32 to vector<8x32xf32>
    %193 = arith.mulf %192, %191 : vector<8x32xf32>
    %194 = math.tanh %193 : vector<8x32xf32>
    %cst_108 = arith.constant 5.000000e-01 : f32
    %195 = vector.broadcast %cst_108 : f32 to vector<8x32xf32>
    %196 = arith.mulf %195, %194 : vector<8x32xf32>
    %cst_109 = arith.constant 5.000000e-01 : f32
    %197 = vector.broadcast %cst_109 : f32 to vector<8x32xf32>
    %198 = arith.addf %196, %197 : vector<8x32xf32>
    %199 = vector.extract_strided_slice %190 {offsets = [0, 32], sizes = [8, 32], strides = [1, 1]} : vector<8x128xf32> to vector<8x32xf32>
    %cst_110 = arith.constant 5.000000e-01 : f32
    %200 = vector.broadcast %cst_110 : f32 to vector<8x32xf32>
    %201 = arith.mulf %200, %199 : vector<8x32xf32>
    %202 = math.tanh %201 : vector<8x32xf32>
    %cst_111 = arith.constant 5.000000e-01 : f32
    %203 = vector.broadcast %cst_111 : f32 to vector<8x32xf32>
    %204 = arith.mulf %203, %202 : vector<8x32xf32>
    %cst_112 = arith.constant 5.000000e-01 : f32
    %205 = vector.broadcast %cst_112 : f32 to vector<8x32xf32>
    %206 = arith.addf %204, %205 : vector<8x32xf32>
    %207 = vector.extract_strided_slice %190 {offsets = [0, 64], sizes = [8, 32], strides = [1, 1]} : vector<8x128xf32> to vector<8x32xf32>
    %208 = math.tanh %207 : vector<8x32xf32>
    %209 = vector.extract_strided_slice %190 {offsets = [0, 96], sizes = [8, 32], strides = [1, 1]} : vector<8x128xf32> to vector<8x32xf32>
    %cst_113 = arith.constant 5.000000e-01 : f32
    %210 = vector.broadcast %cst_113 : f32 to vector<8x32xf32>
    %211 = arith.mulf %210, %209 : vector<8x32xf32>
    %212 = math.tanh %211 : vector<8x32xf32>
    %cst_114 = arith.constant 5.000000e-01 : f32
    %213 = vector.broadcast %cst_114 : f32 to vector<8x32xf32>
    %214 = arith.mulf %213, %212 : vector<8x32xf32>
    %cst_115 = arith.constant 5.000000e-01 : f32
    %215 = vector.broadcast %cst_115 : f32 to vector<8x32xf32>
    %216 = arith.addf %214, %215 : vector<8x32xf32>
    %217 = arith.mulf %206, %17 : vector<8x32xf32>
    %218 = arith.mulf %198, %208 : vector<8x32xf32>
    %219 = arith.addf %217, %218 : vector<8x32xf32>
    %220 = math.tanh %219 : vector<8x32xf32>
    %221 = arith.mulf %216, %220 : vector<8x32xf32>
    %c3_i32 = arith.constant 3 : i32
    %222 = arith.subi %c0_i32, %c3_i32 : i32
    %c0_i32_116 = arith.constant 0 : i32
    %223 = arith.cmpi sge, %222, %c0_i32_116 : i32
    %c8_i32_117 = arith.constant 8 : i32
    %224 = arith.cmpi slt, %222, %c8_i32_117 : i32
    %225 = arith.andi %223, %224 : i1
    %226 = arith.select %225, %221, %7 : vector<8x32xf32>
    %227 = arith.select %225, %219, %17 : vector<8x32xf32>
    %228 = arith.select %225, %221, %23 : vector<8x32xf32>
    %c4_118 = arith.constant 4 : index
    %c0_119 = arith.constant 0 : index
    %c0_120 = arith.constant 0 : index
    %229 = vector.load %arg2[%c4_118, %c0_119, %c0_120] : memref<5x32x128xf32, #tpu.memory_space<vmem>>, vector<1x32x128xf32>
    %230 = vector.shape_cast %229 : vector<1x32x128xf32> to vector<32x128xf32>
    %cst_121 = arith.constant dense<0.000000e+00> : vector<8x128xf32>
    %231 = tpu.matmul %23, %230, %cst_121 {dimension_numbers = #tpu.dot_dimension_numbers<[1], [0], [0], [1], [0, 0, 1, 1], [], []>} : vector<8x32xf32>, vector<32x128xf32>, vector<8x128xf32> -> vector<8x128xf32>
    %c4_122 = arith.constant 4 : index
    %c0_123 = arith.constant 0 : index
    %c0_124 = arith.constant 0 : index
    %232 = vector.load %arg3[%c4_122, %c0_123, %c0_124] : memref<5x32x128xf32, #tpu.memory_space<vmem>>, vector<1x32x128xf32>
    %233 = vector.shape_cast %232 : vector<1x32x128xf32> to vector<32x128xf32>
    %cst_125 = arith.constant dense<0.000000e+00> : vector<8x128xf32>
    %234 = tpu.matmul %9, %233, %cst_125 {dimension_numbers = #tpu.dot_dimension_numbers<[1], [0], [0], [1], [0, 0, 1, 1], [], []>} : vector<8x32xf32>, vector<32x128xf32>, vector<8x128xf32> -> vector<8x128xf32>
    %235 = arith.addf %231, %234 : vector<8x128xf32>
    %c4_126 = arith.constant 4 : index
    %c0_127 = arith.constant 0 : index
    %c0_128 = arith.constant 0 : index
    %236 = vector.load %arg4[%c4_126, %c0_127, %c0_128] : memref<5x1x128xf32, #tpu.memory_space<vmem>>, vector<1x1x128xf32>
    %237 = vector.shape_cast %236 : vector<1x1x128xf32> to vector<1x128xf32>
    %238 = vector.broadcast %237 : vector<1x128xf32> to vector<8x128xf32>
    %239 = arith.addf %235, %238 : vector<8x128xf32>
    %240 = vector.extract_strided_slice %239 {offsets = [0, 0], sizes = [8, 32], strides = [1, 1]} : vector<8x128xf32> to vector<8x32xf32>
    %cst_129 = arith.constant 5.000000e-01 : f32
    %241 = vector.broadcast %cst_129 : f32 to vector<8x32xf32>
    %242 = arith.mulf %241, %240 : vector<8x32xf32>
    %243 = math.tanh %242 : vector<8x32xf32>
    %cst_130 = arith.constant 5.000000e-01 : f32
    %244 = vector.broadcast %cst_130 : f32 to vector<8x32xf32>
    %245 = arith.mulf %244, %243 : vector<8x32xf32>
    %cst_131 = arith.constant 5.000000e-01 : f32
    %246 = vector.broadcast %cst_131 : f32 to vector<8x32xf32>
    %247 = arith.addf %245, %246 : vector<8x32xf32>
    %248 = vector.extract_strided_slice %239 {offsets = [0, 32], sizes = [8, 32], strides = [1, 1]} : vector<8x128xf32> to vector<8x32xf32>
    %cst_132 = arith.constant 5.000000e-01 : f32
    %249 = vector.broadcast %cst_132 : f32 to vector<8x32xf32>
    %250 = arith.mulf %249, %248 : vector<8x32xf32>
    %251 = math.tanh %250 : vector<8x32xf32>
    %cst_133 = arith.constant 5.000000e-01 : f32
    %252 = vector.broadcast %cst_133 : f32 to vector<8x32xf32>
    %253 = arith.mulf %252, %251 : vector<8x32xf32>
    %cst_134 = arith.constant 5.000000e-01 : f32
    %254 = vector.broadcast %cst_134 : f32 to vector<8x32xf32>
    %255 = arith.addf %253, %254 : vector<8x32xf32>
    %256 = vector.extract_strided_slice %239 {offsets = [0, 64], sizes = [8, 32], strides = [1, 1]} : vector<8x128xf32> to vector<8x32xf32>
    %257 = math.tanh %256 : vector<8x32xf32>
    %258 = vector.extract_strided_slice %239 {offsets = [0, 96], sizes = [8, 32], strides = [1, 1]} : vector<8x128xf32> to vector<8x32xf32>
    %cst_135 = arith.constant 5.000000e-01 : f32
    %259 = vector.broadcast %cst_135 : f32 to vector<8x32xf32>
    %260 = arith.mulf %259, %258 : vector<8x32xf32>
    %261 = math.tanh %260 : vector<8x32xf32>
    %cst_136 = arith.constant 5.000000e-01 : f32
    %262 = vector.broadcast %cst_136 : f32 to vector<8x32xf32>
    %263 = arith.mulf %262, %261 : vector<8x32xf32>
    %cst_137 = arith.constant 5.000000e-01 : f32
    %264 = vector.broadcast %cst_137 : f32 to vector<8x32xf32>
    %265 = arith.addf %263, %264 : vector<8x32xf32>
    %266 = arith.mulf %255, %19 : vector<8x32xf32>
    %267 = arith.mulf %247, %257 : vector<8x32xf32>
    %268 = arith.addf %266, %267 : vector<8x32xf32>
    %269 = math.tanh %268 : vector<8x32xf32>
    %270 = arith.mulf %265, %269 : vector<8x32xf32>
    %c4_i32 = arith.constant 4 : i32
    %271 = arith.subi %c0_i32, %c4_i32 : i32
    %c0_i32_138 = arith.constant 0 : i32
    %272 = arith.cmpi sge, %271, %c0_i32_138 : i32
    %c8_i32_139 = arith.constant 8 : i32
    %273 = arith.cmpi slt, %271, %c8_i32_139 : i32
    %274 = arith.andi %272, %273 : i1
    %275 = arith.select %274, %270, %9 : vector<8x32xf32>
    %276 = arith.select %274, %268, %19 : vector<8x32xf32>
    %277 = arith.select %274, %270, %24 : vector<8x32xf32>
    %c1_i32_140 = arith.constant 1 : i32
    %c7_i32_141 = arith.constant 7 : i32
    %278 = arith.minsi %c1_i32_140, %c7_i32_141 : i32
    %279 = arith.index_cast %278 : i32 to index
    %c0_142 = arith.constant 0 : index
    %c0_143 = arith.constant 0 : index
    %280 = vector.load %arg1[%279, %c0_142, %c0_143] : memref<8x8x32xf32, #tpu.memory_space<vmem>>, vector<1x8x32xf32>
    %281 = vector.shape_cast %280 : vector<1x8x32xf32> to vector<8x32xf32>
    %c0_144 = arith.constant 0 : index
    %c0_145 = arith.constant 0 : index
    %c0_146 = arith.constant 0 : index
    %282 = vector.load %arg2[%c0_144, %c0_145, %c0_146] : memref<5x32x128xf32, #tpu.memory_space<vmem>>, vector<1x32x128xf32>
    %283 = vector.shape_cast %282 : vector<1x32x128xf32> to vector<32x128xf32>
    %284 = vector.extract_strided_slice %283 {offsets = [0, 0], sizes = [1, 128], strides = [1, 1]} : vector<32x128xf32> to vector<1x128xf32>
    %285 = vector.extract_strided_slice %281 {offsets = [0, 0], sizes = [8, 1], strides = [1, 1]} : vector<8x32xf32> to vector<8x1xf32>
    %286 = vector.broadcast %285 : vector<8x1xf32> to vector<8x128xf32>
    %287 = vector.broadcast %284 : vector<1x128xf32> to vector<8x128xf32>
    %288 = arith.mulf %286, %287 : vector<8x128xf32>
    %c0_147 = arith.constant 0 : index
    %c0_148 = arith.constant 0 : index
    %c0_149 = arith.constant 0 : index
    %289 = vector.load %arg3[%c0_147, %c0_148, %c0_149] : memref<5x32x128xf32, #tpu.memory_space<vmem>>, vector<1x32x128xf32>
    %290 = vector.shape_cast %289 : vector<1x32x128xf32> to vector<32x128xf32>
    %cst_150 = arith.constant dense<0.000000e+00> : vector<8x128xf32>
    %291 = tpu.matmul %79, %290, %cst_150 {dimension_numbers = #tpu.dot_dimension_numbers<[1], [0], [0], [1], [0, 0, 1, 1], [], []>} : vector<8x32xf32>, vector<32x128xf32>, vector<8x128xf32> -> vector<8x128xf32>
    %292 = arith.addf %288, %291 : vector<8x128xf32>
    %c0_151 = arith.constant 0 : index
    %c0_152 = arith.constant 0 : index
    %c0_153 = arith.constant 0 : index
    %293 = vector.load %arg4[%c0_151, %c0_152, %c0_153] : memref<5x1x128xf32, #tpu.memory_space<vmem>>, vector<1x1x128xf32>
    %294 = vector.shape_cast %293 : vector<1x1x128xf32> to vector<1x128xf32>
    %295 = vector.broadcast %294 : vector<1x128xf32> to vector<8x128xf32>
    %296 = arith.addf %292, %295 : vector<8x128xf32>
    %297 = vector.extract_strided_slice %296 {offsets = [0, 0], sizes = [8, 32], strides = [1, 1]} : vector<8x128xf32> to vector<8x32xf32>
    %cst_154 = arith.constant 5.000000e-01 : f32
    %298 = vector.broadcast %cst_154 : f32 to vector<8x32xf32>
    %299 = arith.mulf %298, %297 : vector<8x32xf32>
    %300 = math.tanh %299 : vector<8x32xf32>
    %cst_155 = arith.constant 5.000000e-01 : f32
    %301 = vector.broadcast %cst_155 : f32 to vector<8x32xf32>
    %302 = arith.mulf %301, %300 : vector<8x32xf32>
    %cst_156 = arith.constant 5.000000e-01 : f32
    %303 = vector.broadcast %cst_156 : f32 to vector<8x32xf32>
    %304 = arith.addf %302, %303 : vector<8x32xf32>
    %305 = vector.extract_strided_slice %296 {offsets = [0, 32], sizes = [8, 32], strides = [1, 1]} : vector<8x128xf32> to vector<8x32xf32>
    %cst_157 = arith.constant 5.000000e-01 : f32
    %306 = vector.broadcast %cst_157 : f32 to vector<8x32xf32>
    %307 = arith.mulf %306, %305 : vector<8x32xf32>
    %308 = math.tanh %307 : vector<8x32xf32>
    %cst_158 = arith.constant 5.000000e-01 : f32
    %309 = vector.broadcast %cst_158 : f32 to vector<8x32xf32>
    %310 = arith.mulf %309, %308 : vector<8x32xf32>
    %cst_159 = arith.constant 5.000000e-01 : f32
    %311 = vector.broadcast %cst_159 : f32 to vector<8x32xf32>
    %312 = arith.addf %310, %311 : vector<8x32xf32>
    %313 = vector.extract_strided_slice %296 {offsets = [0, 64], sizes = [8, 32], strides = [1, 1]} : vector<8x128xf32> to vector<8x32xf32>
    %314 = math.tanh %313 : vector<8x32xf32>
    %315 = vector.extract_strided_slice %296 {offsets = [0, 96], sizes = [8, 32], strides = [1, 1]} : vector<8x128xf32> to vector<8x32xf32>
    %cst_160 = arith.constant 5.000000e-01 : f32
    %316 = vector.broadcast %cst_160 : f32 to vector<8x32xf32>
    %317 = arith.mulf %316, %315 : vector<8x32xf32>
    %318 = math.tanh %317 : vector<8x32xf32>
    %cst_161 = arith.constant 5.000000e-01 : f32
    %319 = vector.broadcast %cst_161 : f32 to vector<8x32xf32>
    %320 = arith.mulf %319, %318 : vector<8x32xf32>
    %cst_162 = arith.constant 5.000000e-01 : f32
    %321 = vector.broadcast %cst_162 : f32 to vector<8x32xf32>
    %322 = arith.addf %320, %321 : vector<8x32xf32>
    %323 = arith.mulf %312, %80 : vector<8x32xf32>
    %324 = arith.mulf %304, %314 : vector<8x32xf32>
    %325 = arith.addf %323, %324 : vector<8x32xf32>
    %326 = math.tanh %325 : vector<8x32xf32>
    %327 = arith.mulf %322, %326 : vector<8x32xf32>
    %c0_i32_163 = arith.constant 0 : i32
    %328 = arith.subi %c1_i32_140, %c0_i32_163 : i32
    %c0_i32_164 = arith.constant 0 : i32
    %329 = arith.cmpi sge, %328, %c0_i32_164 : i32
    %c8_i32_165 = arith.constant 8 : i32
    %330 = arith.cmpi slt, %328, %c8_i32_165 : i32
    %331 = arith.andi %329, %330 : i1
    %332 = arith.select %331, %327, %79 : vector<8x32xf32>
    %333 = arith.select %331, %325, %80 : vector<8x32xf32>
    %334 = arith.select %331, %327, %81 : vector<8x32xf32>
    %c1_166 = arith.constant 1 : index
    %c0_167 = arith.constant 0 : index
    %c0_168 = arith.constant 0 : index
    %335 = vector.load %arg2[%c1_166, %c0_167, %c0_168] : memref<5x32x128xf32, #tpu.memory_space<vmem>>, vector<1x32x128xf32>
    %336 = vector.shape_cast %335 : vector<1x32x128xf32> to vector<32x128xf32>
    %cst_169 = arith.constant dense<0.000000e+00> : vector<8x128xf32>
    %337 = tpu.matmul %81, %336, %cst_169 {dimension_numbers = #tpu.dot_dimension_numbers<[1], [0], [0], [1], [0, 0, 1, 1], [], []>} : vector<8x32xf32>, vector<32x128xf32>, vector<8x128xf32> -> vector<8x128xf32>
    %c1_170 = arith.constant 1 : index
    %c0_171 = arith.constant 0 : index
    %c0_172 = arith.constant 0 : index
    %338 = vector.load %arg3[%c1_170, %c0_171, %c0_172] : memref<5x32x128xf32, #tpu.memory_space<vmem>>, vector<1x32x128xf32>
    %339 = vector.shape_cast %338 : vector<1x32x128xf32> to vector<32x128xf32>
    %cst_173 = arith.constant dense<0.000000e+00> : vector<8x128xf32>
    %340 = tpu.matmul %128, %339, %cst_173 {dimension_numbers = #tpu.dot_dimension_numbers<[1], [0], [0], [1], [0, 0, 1, 1], [], []>} : vector<8x32xf32>, vector<32x128xf32>, vector<8x128xf32> -> vector<8x128xf32>
    %341 = arith.addf %337, %340 : vector<8x128xf32>
    %c1_174 = arith.constant 1 : index
    %c0_175 = arith.constant 0 : index
    %c0_176 = arith.constant 0 : index
    %342 = vector.load %arg4[%c1_174, %c0_175, %c0_176] : memref<5x1x128xf32, #tpu.memory_space<vmem>>, vector<1x1x128xf32>
    %343 = vector.shape_cast %342 : vector<1x1x128xf32> to vector<1x128xf32>
    %344 = vector.broadcast %343 : vector<1x128xf32> to vector<8x128xf32>
    %345 = arith.addf %341, %344 : vector<8x128xf32>
    %346 = vector.extract_strided_slice %345 {offsets = [0, 0], sizes = [8, 32], strides = [1, 1]} : vector<8x128xf32> to vector<8x32xf32>
    %cst_177 = arith.constant 5.000000e-01 : f32
    %347 = vector.broadcast %cst_177 : f32 to vector<8x32xf32>
    %348 = arith.mulf %347, %346 : vector<8x32xf32>
    %349 = math.tanh %348 : vector<8x32xf32>
    %cst_178 = arith.constant 5.000000e-01 : f32
    %350 = vector.broadcast %cst_178 : f32 to vector<8x32xf32>
    %351 = arith.mulf %350, %349 : vector<8x32xf32>
    %cst_179 = arith.constant 5.000000e-01 : f32
    %352 = vector.broadcast %cst_179 : f32 to vector<8x32xf32>
    %353 = arith.addf %351, %352 : vector<8x32xf32>
    %354 = vector.extract_strided_slice %345 {offsets = [0, 32], sizes = [8, 32], strides = [1, 1]} : vector<8x128xf32> to vector<8x32xf32>
    %cst_180 = arith.constant 5.000000e-01 : f32
    %355 = vector.broadcast %cst_180 : f32 to vector<8x32xf32>
    %356 = arith.mulf %355, %354 : vector<8x32xf32>
    %357 = math.tanh %356 : vector<8x32xf32>
    %cst_181 = arith.constant 5.000000e-01 : f32
    %358 = vector.broadcast %cst_181 : f32 to vector<8x32xf32>
    %359 = arith.mulf %358, %357 : vector<8x32xf32>
    %cst_182 = arith.constant 5.000000e-01 : f32
    %360 = vector.broadcast %cst_182 : f32 to vector<8x32xf32>
    %361 = arith.addf %359, %360 : vector<8x32xf32>
    %362 = vector.extract_strided_slice %345 {offsets = [0, 64], sizes = [8, 32], strides = [1, 1]} : vector<8x128xf32> to vector<8x32xf32>
    %363 = math.tanh %362 : vector<8x32xf32>
    %364 = vector.extract_strided_slice %345 {offsets = [0, 96], sizes = [8, 32], strides = [1, 1]} : vector<8x128xf32> to vector<8x32xf32>
    %cst_183 = arith.constant 5.000000e-01 : f32
    %365 = vector.broadcast %cst_183 : f32 to vector<8x32xf32>
    %366 = arith.mulf %365, %364 : vector<8x32xf32>
    %367 = math.tanh %366 : vector<8x32xf32>
    %cst_184 = arith.constant 5.000000e-01 : f32
    %368 = vector.broadcast %cst_184 : f32 to vector<8x32xf32>
    %369 = arith.mulf %368, %367 : vector<8x32xf32>
    %cst_185 = arith.constant 5.000000e-01 : f32
    %370 = vector.broadcast %cst_185 : f32 to vector<8x32xf32>
    %371 = arith.addf %369, %370 : vector<8x32xf32>
    %372 = arith.mulf %361, %129 : vector<8x32xf32>
    %373 = arith.mulf %353, %363 : vector<8x32xf32>
    %374 = arith.addf %372, %373 : vector<8x32xf32>
    %375 = math.tanh %374 : vector<8x32xf32>
    %376 = arith.mulf %371, %375 : vector<8x32xf32>
    %c1_i32_186 = arith.constant 1 : i32
    %377 = arith.subi %c1_i32_140, %c1_i32_186 : i32
    %c0_i32_187 = arith.constant 0 : i32
    %378 = arith.cmpi sge, %377, %c0_i32_187 : i32
    %c8_i32_188 = arith.constant 8 : i32
    %379 = arith.cmpi slt, %377, %c8_i32_188 : i32
    %380 = arith.andi %378, %379 : i1
    %381 = arith.select %380, %376, %128 : vector<8x32xf32>
    %382 = arith.select %380, %374, %129 : vector<8x32xf32>
    %383 = arith.select %380, %376, %130 : vector<8x32xf32>
    %c2_189 = arith.constant 2 : index
    %c0_190 = arith.constant 0 : index
    %c0_191 = arith.constant 0 : index
    %384 = vector.load %arg2[%c2_189, %c0_190, %c0_191] : memref<5x32x128xf32, #tpu.memory_space<vmem>>, vector<1x32x128xf32>
    %385 = vector.shape_cast %384 : vector<1x32x128xf32> to vector<32x128xf32>
    %cst_192 = arith.constant dense<0.000000e+00> : vector<8x128xf32>
    %386 = tpu.matmul %130, %385, %cst_192 {dimension_numbers = #tpu.dot_dimension_numbers<[1], [0], [0], [1], [0, 0, 1, 1], [], []>} : vector<8x32xf32>, vector<32x128xf32>, vector<8x128xf32> -> vector<8x128xf32>
    %c2_193 = arith.constant 2 : index
    %c0_194 = arith.constant 0 : index
    %c0_195 = arith.constant 0 : index
    %387 = vector.load %arg3[%c2_193, %c0_194, %c0_195] : memref<5x32x128xf32, #tpu.memory_space<vmem>>, vector<1x32x128xf32>
    %388 = vector.shape_cast %387 : vector<1x32x128xf32> to vector<32x128xf32>
    %cst_196 = arith.constant dense<0.000000e+00> : vector<8x128xf32>
    %389 = tpu.matmul %177, %388, %cst_196 {dimension_numbers = #tpu.dot_dimension_numbers<[1], [0], [0], [1], [0, 0, 1, 1], [], []>} : vector<8x32xf32>, vector<32x128xf32>, vector<8x128xf32> -> vector<8x128xf32>
    %390 = arith.addf %386, %389 : vector<8x128xf32>
    %c2_197 = arith.constant 2 : index
    %c0_198 = arith.constant 0 : index
    %c0_199 = arith.constant 0 : index
    %391 = vector.load %arg4[%c2_197, %c0_198, %c0_199] : memref<5x1x128xf32, #tpu.memory_space<vmem>>, vector<1x1x128xf32>
    %392 = vector.shape_cast %391 : vector<1x1x128xf32> to vector<1x128xf32>
    %393 = vector.broadcast %392 : vector<1x128xf32> to vector<8x128xf32>
    %394 = arith.addf %390, %393 : vector<8x128xf32>
    %395 = vector.extract_strided_slice %394 {offsets = [0, 0], sizes = [8, 32], strides = [1, 1]} : vector<8x128xf32> to vector<8x32xf32>
    %cst_200 = arith.constant 5.000000e-01 : f32
    %396 = vector.broadcast %cst_200 : f32 to vector<8x32xf32>
    %397 = arith.mulf %396, %395 : vector<8x32xf32>
    %398 = math.tanh %397 : vector<8x32xf32>
    %cst_201 = arith.constant 5.000000e-01 : f32
    %399 = vector.broadcast %cst_201 : f32 to vector<8x32xf32>
    %400 = arith.mulf %399, %398 : vector<8x32xf32>
    %cst_202 = arith.constant 5.000000e-01 : f32
    %401 = vector.broadcast %cst_202 : f32 to vector<8x32xf32>
    %402 = arith.addf %400, %401 : vector<8x32xf32>
    %403 = vector.extract_strided_slice %394 {offsets = [0, 32], sizes = [8, 32], strides = [1, 1]} : vector<8x128xf32> to vector<8x32xf32>
    %cst_203 = arith.constant 5.000000e-01 : f32
    %404 = vector.broadcast %cst_203 : f32 to vector<8x32xf32>
    %405 = arith.mulf %404, %403 : vector<8x32xf32>
    %406 = math.tanh %405 : vector<8x32xf32>
    %cst_204 = arith.constant 5.000000e-01 : f32
    %407 = vector.broadcast %cst_204 : f32 to vector<8x32xf32>
    %408 = arith.mulf %407, %406 : vector<8x32xf32>
    %cst_205 = arith.constant 5.000000e-01 : f32
    %409 = vector.broadcast %cst_205 : f32 to vector<8x32xf32>
    %410 = arith.addf %408, %409 : vector<8x32xf32>
    %411 = vector.extract_strided_slice %394 {offsets = [0, 64], sizes = [8, 32], strides = [1, 1]} : vector<8x128xf32> to vector<8x32xf32>
    %412 = math.tanh %411 : vector<8x32xf32>
    %413 = vector.extract_strided_slice %394 {offsets = [0, 96], sizes = [8, 32], strides = [1, 1]} : vector<8x128xf32> to vector<8x32xf32>
    %cst_206 = arith.constant 5.000000e-01 : f32
    %414 = vector.broadcast %cst_206 : f32 to vector<8x32xf32>
    %415 = arith.mulf %414, %413 : vector<8x32xf32>
    %416 = math.tanh %415 : vector<8x32xf32>
    %cst_207 = arith.constant 5.000000e-01 : f32
    %417 = vector.broadcast %cst_207 : f32 to vector<8x32xf32>
    %418 = arith.mulf %417, %416 : vector<8x32xf32>
    %cst_208 = arith.constant 5.000000e-01 : f32
    %419 = vector.broadcast %cst_208 : f32 to vector<8x32xf32>
    %420 = arith.addf %418, %419 : vector<8x32xf32>
    %421 = arith.mulf %410, %178 : vector<8x32xf32>
    %422 = arith.mulf %402, %412 : vector<8x32xf32>
    %423 = arith.addf %421, %422 : vector<8x32xf32>
    %424 = math.tanh %423 : vector<8x32xf32>
    %425 = arith.mulf %420, %424 : vector<8x32xf32>
    %c2_i32_209 = arith.constant 2 : i32
    %426 = arith.subi %c1_i32_140, %c2_i32_209 : i32
    %c0_i32_210 = arith.constant 0 : i32
    %427 = arith.cmpi sge, %426, %c0_i32_210 : i32
    %c8_i32_211 = arith.constant 8 : i32
    %428 = arith.cmpi slt, %426, %c8_i32_211 : i32
    %429 = arith.andi %427, %428 : i1
    %430 = arith.select %429, %425, %177 : vector<8x32xf32>
    %431 = arith.select %429, %423, %178 : vector<8x32xf32>
    %432 = arith.select %429, %425, %179 : vector<8x32xf32>
    %c3_212 = arith.constant 3 : index
    %c0_213 = arith.constant 0 : index
    %c0_214 = arith.constant 0 : index
    %433 = vector.load %arg2[%c3_212, %c0_213, %c0_214] : memref<5x32x128xf32, #tpu.memory_space<vmem>>, vector<1x32x128xf32>
    %434 = vector.shape_cast %433 : vector<1x32x128xf32> to vector<32x128xf32>
    %cst_215 = arith.constant dense<0.000000e+00> : vector<8x128xf32>
    %435 = tpu.matmul %179, %434, %cst_215 {dimension_numbers = #tpu.dot_dimension_numbers<[1], [0], [0], [1], [0, 0, 1, 1], [], []>} : vector<8x32xf32>, vector<32x128xf32>, vector<8x128xf32> -> vector<8x128xf32>
    %c3_216 = arith.constant 3 : index
    %c0_217 = arith.constant 0 : index
    %c0_218 = arith.constant 0 : index
    %436 = vector.load %arg3[%c3_216, %c0_217, %c0_218] : memref<5x32x128xf32, #tpu.memory_space<vmem>>, vector<1x32x128xf32>
    %437 = vector.shape_cast %436 : vector<1x32x128xf32> to vector<32x128xf32>
    %cst_219 = arith.constant dense<0.000000e+00> : vector<8x128xf32>
    %438 = tpu.matmul %226, %437, %cst_219 {dimension_numbers = #tpu.dot_dimension_numbers<[1], [0], [0], [1], [0, 0, 1, 1], [], []>} : vector<8x32xf32>, vector<32x128xf32>, vector<8x128xf32> -> vector<8x128xf32>
    %439 = arith.addf %435, %438 : vector<8x128xf32>
    %c3_220 = arith.constant 3 : index
    %c0_221 = arith.constant 0 : index
    %c0_222 = arith.constant 0 : index
    %440 = vector.load %arg4[%c3_220, %c0_221, %c0_222] : memref<5x1x128xf32, #tpu.memory_space<vmem>>, vector<1x1x128xf32>
    %441 = vector.shape_cast %440 : vector<1x1x128xf32> to vector<1x128xf32>
    %442 = vector.broadcast %441 : vector<1x128xf32> to vector<8x128xf32>
    %443 = arith.addf %439, %442 : vector<8x128xf32>
    %444 = vector.extract_strided_slice %443 {offsets = [0, 0], sizes = [8, 32], strides = [1, 1]} : vector<8x128xf32> to vector<8x32xf32>
    %cst_223 = arith.constant 5.000000e-01 : f32
    %445 = vector.broadcast %cst_223 : f32 to vector<8x32xf32>
    %446 = arith.mulf %445, %444 : vector<8x32xf32>
    %447 = math.tanh %446 : vector<8x32xf32>
    %cst_224 = arith.constant 5.000000e-01 : f32
    %448 = vector.broadcast %cst_224 : f32 to vector<8x32xf32>
    %449 = arith.mulf %448, %447 : vector<8x32xf32>
    %cst_225 = arith.constant 5.000000e-01 : f32
    %450 = vector.broadcast %cst_225 : f32 to vector<8x32xf32>
    %451 = arith.addf %449, %450 : vector<8x32xf32>
    %452 = vector.extract_strided_slice %443 {offsets = [0, 32], sizes = [8, 32], strides = [1, 1]} : vector<8x128xf32> to vector<8x32xf32>
    %cst_226 = arith.constant 5.000000e-01 : f32
    %453 = vector.broadcast %cst_226 : f32 to vector<8x32xf32>
    %454 = arith.mulf %453, %452 : vector<8x32xf32>
    %455 = math.tanh %454 : vector<8x32xf32>
    %cst_227 = arith.constant 5.000000e-01 : f32
    %456 = vector.broadcast %cst_227 : f32 to vector<8x32xf32>
    %457 = arith.mulf %456, %455 : vector<8x32xf32>
    %cst_228 = arith.constant 5.000000e-01 : f32
    %458 = vector.broadcast %cst_228 : f32 to vector<8x32xf32>
    %459 = arith.addf %457, %458 : vector<8x32xf32>
    %460 = vector.extract_strided_slice %443 {offsets = [0, 64], sizes = [8, 32], strides = [1, 1]} : vector<8x128xf32> to vector<8x32xf32>
    %461 = math.tanh %460 : vector<8x32xf32>
    %462 = vector.extract_strided_slice %443 {offsets = [0, 96], sizes = [8, 32], strides = [1, 1]} : vector<8x128xf32> to vector<8x32xf32>
    %cst_229 = arith.constant 5.000000e-01 : f32
    %463 = vector.broadcast %cst_229 : f32 to vector<8x32xf32>
    %464 = arith.mulf %463, %462 : vector<8x32xf32>
    %465 = math.tanh %464 : vector<8x32xf32>
    %cst_230 = arith.constant 5.000000e-01 : f32
    %466 = vector.broadcast %cst_230 : f32 to vector<8x32xf32>
    %467 = arith.mulf %466, %465 : vector<8x32xf32>
    %cst_231 = arith.constant 5.000000e-01 : f32
    %468 = vector.broadcast %cst_231 : f32 to vector<8x32xf32>
    %469 = arith.addf %467, %468 : vector<8x32xf32>
    %470 = arith.mulf %459, %227 : vector<8x32xf32>
    %471 = arith.mulf %451, %461 : vector<8x32xf32>
    %472 = arith.addf %470, %471 : vector<8x32xf32>
    %473 = math.tanh %472 : vector<8x32xf32>
    %474 = arith.mulf %469, %473 : vector<8x32xf32>
    %c3_i32_232 = arith.constant 3 : i32
    %475 = arith.subi %c1_i32_140, %c3_i32_232 : i32
    %c0_i32_233 = arith.constant 0 : i32
    %476 = arith.cmpi sge, %475, %c0_i32_233 : i32
    %c8_i32_234 = arith.constant 8 : i32
    %477 = arith.cmpi slt, %475, %c8_i32_234 : i32
    %478 = arith.andi %476, %477 : i1
    %479 = arith.select %478, %474, %226 : vector<8x32xf32>
    %480 = arith.select %478, %472, %227 : vector<8x32xf32>
    %481 = arith.select %478, %474, %228 : vector<8x32xf32>
    %c4_235 = arith.constant 4 : index
    %c0_236 = arith.constant 0 : index
    %c0_237 = arith.constant 0 : index
    %482 = vector.load %arg2[%c4_235, %c0_236, %c0_237] : memref<5x32x128xf32, #tpu.memory_space<vmem>>, vector<1x32x128xf32>
    %483 = vector.shape_cast %482 : vector<1x32x128xf32> to vector<32x128xf32>
    %cst_238 = arith.constant dense<0.000000e+00> : vector<8x128xf32>
    %484 = tpu.matmul %228, %483, %cst_238 {dimension_numbers = #tpu.dot_dimension_numbers<[1], [0], [0], [1], [0, 0, 1, 1], [], []>} : vector<8x32xf32>, vector<32x128xf32>, vector<8x128xf32> -> vector<8x128xf32>
    %c4_239 = arith.constant 4 : index
    %c0_240 = arith.constant 0 : index
    %c0_241 = arith.constant 0 : index
    %485 = vector.load %arg3[%c4_239, %c0_240, %c0_241] : memref<5x32x128xf32, #tpu.memory_space<vmem>>, vector<1x32x128xf32>
    %486 = vector.shape_cast %485 : vector<1x32x128xf32> to vector<32x128xf32>
    %cst_242 = arith.constant dense<0.000000e+00> : vector<8x128xf32>
    %487 = tpu.matmul %275, %486, %cst_242 {dimension_numbers = #tpu.dot_dimension_numbers<[1], [0], [0], [1], [0, 0, 1, 1], [], []>} : vector<8x32xf32>, vector<32x128xf32>, vector<8x128xf32> -> vector<8x128xf32>
    %488 = arith.addf %484, %487 : vector<8x128xf32>
    %c4_243 = arith.constant 4 : index
    %c0_244 = arith.constant 0 : index
    %c0_245 = arith.constant 0 : index
    %489 = vector.load %arg4[%c4_243, %c0_244, %c0_245] : memref<5x1x128xf32, #tpu.memory_space<vmem>>, vector<1x1x128xf32>
    %490 = vector.shape_cast %489 : vector<1x1x128xf32> to vector<1x128xf32>
    %491 = vector.broadcast %490 : vector<1x128xf32> to vector<8x128xf32>
    %492 = arith.addf %488, %491 : vector<8x128xf32>
    %493 = vector.extract_strided_slice %492 {offsets = [0, 0], sizes = [8, 32], strides = [1, 1]} : vector<8x128xf32> to vector<8x32xf32>
    %cst_246 = arith.constant 5.000000e-01 : f32
    %494 = vector.broadcast %cst_246 : f32 to vector<8x32xf32>
    %495 = arith.mulf %494, %493 : vector<8x32xf32>
    %496 = math.tanh %495 : vector<8x32xf32>
    %cst_247 = arith.constant 5.000000e-01 : f32
    %497 = vector.broadcast %cst_247 : f32 to vector<8x32xf32>
    %498 = arith.mulf %497, %496 : vector<8x32xf32>
    %cst_248 = arith.constant 5.000000e-01 : f32
    %499 = vector.broadcast %cst_248 : f32 to vector<8x32xf32>
    %500 = arith.addf %498, %499 : vector<8x32xf32>
    %501 = vector.extract_strided_slice %492 {offsets = [0, 32], sizes = [8, 32], strides = [1, 1]} : vector<8x128xf32> to vector<8x32xf32>
    %cst_249 = arith.constant 5.000000e-01 : f32
    %502 = vector.broadcast %cst_249 : f32 to vector<8x32xf32>
    %503 = arith.mulf %502, %501 : vector<8x32xf32>
    %504 = math.tanh %503 : vector<8x32xf32>
    %cst_250 = arith.constant 5.000000e-01 : f32
    %505 = vector.broadcast %cst_250 : f32 to vector<8x32xf32>
    %506 = arith.mulf %505, %504 : vector<8x32xf32>
    %cst_251 = arith.constant 5.000000e-01 : f32
    %507 = vector.broadcast %cst_251 : f32 to vector<8x32xf32>
    %508 = arith.addf %506, %507 : vector<8x32xf32>
    %509 = vector.extract_strided_slice %492 {offsets = [0, 64], sizes = [8, 32], strides = [1, 1]} : vector<8x128xf32> to vector<8x32xf32>
    %510 = math.tanh %509 : vector<8x32xf32>
    %511 = vector.extract_strided_slice %492 {offsets = [0, 96], sizes = [8, 32], strides = [1, 1]} : vector<8x128xf32> to vector<8x32xf32>
    %cst_252 = arith.constant 5.000000e-01 : f32
    %512 = vector.broadcast %cst_252 : f32 to vector<8x32xf32>
    %513 = arith.mulf %512, %511 : vector<8x32xf32>
    %514 = math.tanh %513 : vector<8x32xf32>
    %cst_253 = arith.constant 5.000000e-01 : f32
    %515 = vector.broadcast %cst_253 : f32 to vector<8x32xf32>
    %516 = arith.mulf %515, %514 : vector<8x32xf32>
    %cst_254 = arith.constant 5.000000e-01 : f32
    %517 = vector.broadcast %cst_254 : f32 to vector<8x32xf32>
    %518 = arith.addf %516, %517 : vector<8x32xf32>
    %519 = arith.mulf %508, %276 : vector<8x32xf32>
    %520 = arith.mulf %500, %510 : vector<8x32xf32>
    %521 = arith.addf %519, %520 : vector<8x32xf32>
    %522 = math.tanh %521 : vector<8x32xf32>
    %523 = arith.mulf %518, %522 : vector<8x32xf32>
    %c4_i32_255 = arith.constant 4 : i32
    %524 = arith.subi %c1_i32_140, %c4_i32_255 : i32
    %c0_i32_256 = arith.constant 0 : i32
    %525 = arith.cmpi sge, %524, %c0_i32_256 : i32
    %c8_i32_257 = arith.constant 8 : i32
    %526 = arith.cmpi slt, %524, %c8_i32_257 : i32
    %527 = arith.andi %525, %526 : i1
    %528 = arith.select %527, %523, %275 : vector<8x32xf32>
    %529 = arith.select %527, %521, %276 : vector<8x32xf32>
    %530 = arith.select %527, %523, %277 : vector<8x32xf32>
    %c2_i32_258 = arith.constant 2 : i32
    %c7_i32_259 = arith.constant 7 : i32
    %531 = arith.minsi %c2_i32_258, %c7_i32_259 : i32
    %532 = arith.index_cast %531 : i32 to index
    %c0_260 = arith.constant 0 : index
    %c0_261 = arith.constant 0 : index
    %533 = vector.load %arg1[%532, %c0_260, %c0_261] : memref<8x8x32xf32, #tpu.memory_space<vmem>>, vector<1x8x32xf32>
    %534 = vector.shape_cast %533 : vector<1x8x32xf32> to vector<8x32xf32>
    %c0_262 = arith.constant 0 : index
    %c0_263 = arith.constant 0 : index
    %c0_264 = arith.constant 0 : index
    %535 = vector.load %arg2[%c0_262, %c0_263, %c0_264] : memref<5x32x128xf32, #tpu.memory_space<vmem>>, vector<1x32x128xf32>
    %536 = vector.shape_cast %535 : vector<1x32x128xf32> to vector<32x128xf32>
    %537 = vector.extract_strided_slice %536 {offsets = [0, 0], sizes = [1, 128], strides = [1, 1]} : vector<32x128xf32> to vector<1x128xf32>
    %538 = vector.extract_strided_slice %534 {offsets = [0, 0], sizes = [8, 1], strides = [1, 1]} : vector<8x32xf32> to vector<8x1xf32>
    %539 = vector.broadcast %538 : vector<8x1xf32> to vector<8x128xf32>
    %540 = vector.broadcast %537 : vector<1x128xf32> to vector<8x128xf32>
    %541 = arith.mulf %539, %540 : vector<8x128xf32>
    %c0_265 = arith.constant 0 : index
    %c0_266 = arith.constant 0 : index
    %c0_267 = arith.constant 0 : index
    %542 = vector.load %arg3[%c0_265, %c0_266, %c0_267] : memref<5x32x128xf32, #tpu.memory_space<vmem>>, vector<1x32x128xf32>
    %543 = vector.shape_cast %542 : vector<1x32x128xf32> to vector<32x128xf32>
    %cst_268 = arith.constant dense<0.000000e+00> : vector<8x128xf32>
    %544 = tpu.matmul %332, %543, %cst_268 {dimension_numbers = #tpu.dot_dimension_numbers<[1], [0], [0], [1], [0, 0, 1, 1], [], []>} : vector<8x32xf32>, vector<32x128xf32>, vector<8x128xf32> -> vector<8x128xf32>
    %545 = arith.addf %541, %544 : vector<8x128xf32>
    %c0_269 = arith.constant 0 : index
    %c0_270 = arith.constant 0 : index
    %c0_271 = arith.constant 0 : index
    %546 = vector.load %arg4[%c0_269, %c0_270, %c0_271] : memref<5x1x128xf32, #tpu.memory_space<vmem>>, vector<1x1x128xf32>
    %547 = vector.shape_cast %546 : vector<1x1x128xf32> to vector<1x128xf32>
    %548 = vector.broadcast %547 : vector<1x128xf32> to vector<8x128xf32>
    %549 = arith.addf %545, %548 : vector<8x128xf32>
    %550 = vector.extract_strided_slice %549 {offsets = [0, 0], sizes = [8, 32], strides = [1, 1]} : vector<8x128xf32> to vector<8x32xf32>
    %cst_272 = arith.constant 5.000000e-01 : f32
    %551 = vector.broadcast %cst_272 : f32 to vector<8x32xf32>
    %552 = arith.mulf %551, %550 : vector<8x32xf32>
    %553 = math.tanh %552 : vector<8x32xf32>
    %cst_273 = arith.constant 5.000000e-01 : f32
    %554 = vector.broadcast %cst_273 : f32 to vector<8x32xf32>
    %555 = arith.mulf %554, %553 : vector<8x32xf32>
    %cst_274 = arith.constant 5.000000e-01 : f32
    %556 = vector.broadcast %cst_274 : f32 to vector<8x32xf32>
    %557 = arith.addf %555, %556 : vector<8x32xf32>
    %558 = vector.extract_strided_slice %549 {offsets = [0, 32], sizes = [8, 32], strides = [1, 1]} : vector<8x128xf32> to vector<8x32xf32>
    %cst_275 = arith.constant 5.000000e-01 : f32
    %559 = vector.broadcast %cst_275 : f32 to vector<8x32xf32>
    %560 = arith.mulf %559, %558 : vector<8x32xf32>
    %561 = math.tanh %560 : vector<8x32xf32>
    %cst_276 = arith.constant 5.000000e-01 : f32
    %562 = vector.broadcast %cst_276 : f32 to vector<8x32xf32>
    %563 = arith.mulf %562, %561 : vector<8x32xf32>
    %cst_277 = arith.constant 5.000000e-01 : f32
    %564 = vector.broadcast %cst_277 : f32 to vector<8x32xf32>
    %565 = arith.addf %563, %564 : vector<8x32xf32>
    %566 = vector.extract_strided_slice %549 {offsets = [0, 64], sizes = [8, 32], strides = [1, 1]} : vector<8x128xf32> to vector<8x32xf32>
    %567 = math.tanh %566 : vector<8x32xf32>
    %568 = vector.extract_strided_slice %549 {offsets = [0, 96], sizes = [8, 32], strides = [1, 1]} : vector<8x128xf32> to vector<8x32xf32>
    %cst_278 = arith.constant 5.000000e-01 : f32
    %569 = vector.broadcast %cst_278 : f32 to vector<8x32xf32>
    %570 = arith.mulf %569, %568 : vector<8x32xf32>
    %571 = math.tanh %570 : vector<8x32xf32>
    %cst_279 = arith.constant 5.000000e-01 : f32
    %572 = vector.broadcast %cst_279 : f32 to vector<8x32xf32>
    %573 = arith.mulf %572, %571 : vector<8x32xf32>
    %cst_280 = arith.constant 5.000000e-01 : f32
    %574 = vector.broadcast %cst_280 : f32 to vector<8x32xf32>
    %575 = arith.addf %573, %574 : vector<8x32xf32>
    %576 = arith.mulf %565, %333 : vector<8x32xf32>
    %577 = arith.mulf %557, %567 : vector<8x32xf32>
    %578 = arith.addf %576, %577 : vector<8x32xf32>
    %579 = math.tanh %578 : vector<8x32xf32>
    %580 = arith.mulf %575, %579 : vector<8x32xf32>
    %c0_i32_281 = arith.constant 0 : i32
    %581 = arith.subi %c2_i32_258, %c0_i32_281 : i32
    %c0_i32_282 = arith.constant 0 : i32
    %582 = arith.cmpi sge, %581, %c0_i32_282 : i32
    %c8_i32_283 = arith.constant 8 : i32
    %583 = arith.cmpi slt, %581, %c8_i32_283 : i32
    %584 = arith.andi %582, %583 : i1
    %585 = arith.select %584, %580, %332 : vector<8x32xf32>
    %586 = arith.select %584, %578, %333 : vector<8x32xf32>
    %587 = arith.select %584, %580, %334 : vector<8x32xf32>
    %c1_284 = arith.constant 1 : index
    %c0_285 = arith.constant 0 : index
    %c0_286 = arith.constant 0 : index
    %588 = vector.load %arg2[%c1_284, %c0_285, %c0_286] : memref<5x32x128xf32, #tpu.memory_space<vmem>>, vector<1x32x128xf32>
    %589 = vector.shape_cast %588 : vector<1x32x128xf32> to vector<32x128xf32>
    %cst_287 = arith.constant dense<0.000000e+00> : vector<8x128xf32>
    %590 = tpu.matmul %334, %589, %cst_287 {dimension_numbers = #tpu.dot_dimension_numbers<[1], [0], [0], [1], [0, 0, 1, 1], [], []>} : vector<8x32xf32>, vector<32x128xf32>, vector<8x128xf32> -> vector<8x128xf32>
    %c1_288 = arith.constant 1 : index
    %c0_289 = arith.constant 0 : index
    %c0_290 = arith.constant 0 : index
    %591 = vector.load %arg3[%c1_288, %c0_289, %c0_290] : memref<5x32x128xf32, #tpu.memory_space<vmem>>, vector<1x32x128xf32>
    %592 = vector.shape_cast %591 : vector<1x32x128xf32> to vector<32x128xf32>
    %cst_291 = arith.constant dense<0.000000e+00> : vector<8x128xf32>
    %593 = tpu.matmul %381, %592, %cst_291 {dimension_numbers = #tpu.dot_dimension_numbers<[1], [0], [0], [1], [0, 0, 1, 1], [], []>} : vector<8x32xf32>, vector<32x128xf32>, vector<8x128xf32> -> vector<8x128xf32>
    %594 = arith.addf %590, %593 : vector<8x128xf32>
    %c1_292 = arith.constant 1 : index
    %c0_293 = arith.constant 0 : index
    %c0_294 = arith.constant 0 : index
    %595 = vector.load %arg4[%c1_292, %c0_293, %c0_294] : memref<5x1x128xf32, #tpu.memory_space<vmem>>, vector<1x1x128xf32>
    %596 = vector.shape_cast %595 : vector<1x1x128xf32> to vector<1x128xf32>
    %597 = vector.broadcast %596 : vector<1x128xf32> to vector<8x128xf32>
    %598 = arith.addf %594, %597 : vector<8x128xf32>
    %599 = vector.extract_strided_slice %598 {offsets = [0, 0], sizes = [8, 32], strides = [1, 1]} : vector<8x128xf32> to vector<8x32xf32>
    %cst_295 = arith.constant 5.000000e-01 : f32
    %600 = vector.broadcast %cst_295 : f32 to vector<8x32xf32>
    %601 = arith.mulf %600, %599 : vector<8x32xf32>
    %602 = math.tanh %601 : vector<8x32xf32>
    %cst_296 = arith.constant 5.000000e-01 : f32
    %603 = vector.broadcast %cst_296 : f32 to vector<8x32xf32>
    %604 = arith.mulf %603, %602 : vector<8x32xf32>
    %cst_297 = arith.constant 5.000000e-01 : f32
    %605 = vector.broadcast %cst_297 : f32 to vector<8x32xf32>
    %606 = arith.addf %604, %605 : vector<8x32xf32>
    %607 = vector.extract_strided_slice %598 {offsets = [0, 32], sizes = [8, 32], strides = [1, 1]} : vector<8x128xf32> to vector<8x32xf32>
    %cst_298 = arith.constant 5.000000e-01 : f32
    %608 = vector.broadcast %cst_298 : f32 to vector<8x32xf32>
    %609 = arith.mulf %608, %607 : vector<8x32xf32>
    %610 = math.tanh %609 : vector<8x32xf32>
    %cst_299 = arith.constant 5.000000e-01 : f32
    %611 = vector.broadcast %cst_299 : f32 to vector<8x32xf32>
    %612 = arith.mulf %611, %610 : vector<8x32xf32>
    %cst_300 = arith.constant 5.000000e-01 : f32
    %613 = vector.broadcast %cst_300 : f32 to vector<8x32xf32>
    %614 = arith.addf %612, %613 : vector<8x32xf32>
    %615 = vector.extract_strided_slice %598 {offsets = [0, 64], sizes = [8, 32], strides = [1, 1]} : vector<8x128xf32> to vector<8x32xf32>
    %616 = math.tanh %615 : vector<8x32xf32>
    %617 = vector.extract_strided_slice %598 {offsets = [0, 96], sizes = [8, 32], strides = [1, 1]} : vector<8x128xf32> to vector<8x32xf32>
    %cst_301 = arith.constant 5.000000e-01 : f32
    %618 = vector.broadcast %cst_301 : f32 to vector<8x32xf32>
    %619 = arith.mulf %618, %617 : vector<8x32xf32>
    %620 = math.tanh %619 : vector<8x32xf32>
    %cst_302 = arith.constant 5.000000e-01 : f32
    %621 = vector.broadcast %cst_302 : f32 to vector<8x32xf32>
    %622 = arith.mulf %621, %620 : vector<8x32xf32>
    %cst_303 = arith.constant 5.000000e-01 : f32
    %623 = vector.broadcast %cst_303 : f32 to vector<8x32xf32>
    %624 = arith.addf %622, %623 : vector<8x32xf32>
    %625 = arith.mulf %614, %382 : vector<8x32xf32>
    %626 = arith.mulf %606, %616 : vector<8x32xf32>
    %627 = arith.addf %625, %626 : vector<8x32xf32>
    %628 = math.tanh %627 : vector<8x32xf32>
    %629 = arith.mulf %624, %628 : vector<8x32xf32>
    %c1_i32_304 = arith.constant 1 : i32
    %630 = arith.subi %c2_i32_258, %c1_i32_304 : i32
    %c0_i32_305 = arith.constant 0 : i32
    %631 = arith.cmpi sge, %630, %c0_i32_305 : i32
    %c8_i32_306 = arith.constant 8 : i32
    %632 = arith.cmpi slt, %630, %c8_i32_306 : i32
    %633 = arith.andi %631, %632 : i1
    %634 = arith.select %633, %629, %381 : vector<8x32xf32>
    %635 = arith.select %633, %627, %382 : vector<8x32xf32>
    %636 = arith.select %633, %629, %383 : vector<8x32xf32>
    %c2_307 = arith.constant 2 : index
    %c0_308 = arith.constant 0 : index
    %c0_309 = arith.constant 0 : index
    %637 = vector.load %arg2[%c2_307, %c0_308, %c0_309] : memref<5x32x128xf32, #tpu.memory_space<vmem>>, vector<1x32x128xf32>
    %638 = vector.shape_cast %637 : vector<1x32x128xf32> to vector<32x128xf32>
    %cst_310 = arith.constant dense<0.000000e+00> : vector<8x128xf32>
    %639 = tpu.matmul %383, %638, %cst_310 {dimension_numbers = #tpu.dot_dimension_numbers<[1], [0], [0], [1], [0, 0, 1, 1], [], []>} : vector<8x32xf32>, vector<32x128xf32>, vector<8x128xf32> -> vector<8x128xf32>
    %c2_311 = arith.constant 2 : index
    %c0_312 = arith.constant 0 : index
    %c0_313 = arith.constant 0 : index
    %640 = vector.load %arg3[%c2_311, %c0_312, %c0_313] : memref<5x32x128xf32, #tpu.memory_space<vmem>>, vector<1x32x128xf32>
    %641 = vector.shape_cast %640 : vector<1x32x128xf32> to vector<32x128xf32>
    %cst_314 = arith.constant dense<0.000000e+00> : vector<8x128xf32>
    %642 = tpu.matmul %430, %641, %cst_314 {dimension_numbers = #tpu.dot_dimension_numbers<[1], [0], [0], [1], [0, 0, 1, 1], [], []>} : vector<8x32xf32>, vector<32x128xf32>, vector<8x128xf32> -> vector<8x128xf32>
    %643 = arith.addf %639, %642 : vector<8x128xf32>
    %c2_315 = arith.constant 2 : index
    %c0_316 = arith.constant 0 : index
    %c0_317 = arith.constant 0 : index
    %644 = vector.load %arg4[%c2_315, %c0_316, %c0_317] : memref<5x1x128xf32, #tpu.memory_space<vmem>>, vector<1x1x128xf32>
    %645 = vector.shape_cast %644 : vector<1x1x128xf32> to vector<1x128xf32>
    %646 = vector.broadcast %645 : vector<1x128xf32> to vector<8x128xf32>
    %647 = arith.addf %643, %646 : vector<8x128xf32>
    %648 = vector.extract_strided_slice %647 {offsets = [0, 0], sizes = [8, 32], strides = [1, 1]} : vector<8x128xf32> to vector<8x32xf32>
    %cst_318 = arith.constant 5.000000e-01 : f32
    %649 = vector.broadcast %cst_318 : f32 to vector<8x32xf32>
    %650 = arith.mulf %649, %648 : vector<8x32xf32>
    %651 = math.tanh %650 : vector<8x32xf32>
    %cst_319 = arith.constant 5.000000e-01 : f32
    %652 = vector.broadcast %cst_319 : f32 to vector<8x32xf32>
    %653 = arith.mulf %652, %651 : vector<8x32xf32>
    %cst_320 = arith.constant 5.000000e-01 : f32
    %654 = vector.broadcast %cst_320 : f32 to vector<8x32xf32>
    %655 = arith.addf %653, %654 : vector<8x32xf32>
    %656 = vector.extract_strided_slice %647 {offsets = [0, 32], sizes = [8, 32], strides = [1, 1]} : vector<8x128xf32> to vector<8x32xf32>
    %cst_321 = arith.constant 5.000000e-01 : f32
    %657 = vector.broadcast %cst_321 : f32 to vector<8x32xf32>
    %658 = arith.mulf %657, %656 : vector<8x32xf32>
    %659 = math.tanh %658 : vector<8x32xf32>
    %cst_322 = arith.constant 5.000000e-01 : f32
    %660 = vector.broadcast %cst_322 : f32 to vector<8x32xf32>
    %661 = arith.mulf %660, %659 : vector<8x32xf32>
    %cst_323 = arith.constant 5.000000e-01 : f32
    %662 = vector.broadcast %cst_323 : f32 to vector<8x32xf32>
    %663 = arith.addf %661, %662 : vector<8x32xf32>
    %664 = vector.extract_strided_slice %647 {offsets = [0, 64], sizes = [8, 32], strides = [1, 1]} : vector<8x128xf32> to vector<8x32xf32>
    %665 = math.tanh %664 : vector<8x32xf32>
    %666 = vector.extract_strided_slice %647 {offsets = [0, 96], sizes = [8, 32], strides = [1, 1]} : vector<8x128xf32> to vector<8x32xf32>
    %cst_324 = arith.constant 5.000000e-01 : f32
    %667 = vector.broadcast %cst_324 : f32 to vector<8x32xf32>
    %668 = arith.mulf %667, %666 : vector<8x32xf32>
    %669 = math.tanh %668 : vector<8x32xf32>
    %cst_325 = arith.constant 5.000000e-01 : f32
    %670 = vector.broadcast %cst_325 : f32 to vector<8x32xf32>
    %671 = arith.mulf %670, %669 : vector<8x32xf32>
    %cst_326 = arith.constant 5.000000e-01 : f32
    %672 = vector.broadcast %cst_326 : f32 to vector<8x32xf32>
    %673 = arith.addf %671, %672 : vector<8x32xf32>
    %674 = arith.mulf %663, %431 : vector<8x32xf32>
    %675 = arith.mulf %655, %665 : vector<8x32xf32>
    %676 = arith.addf %674, %675 : vector<8x32xf32>
    %677 = math.tanh %676 : vector<8x32xf32>
    %678 = arith.mulf %673, %677 : vector<8x32xf32>
    %c2_i32_327 = arith.constant 2 : i32
    %679 = arith.subi %c2_i32_258, %c2_i32_327 : i32
    %c0_i32_328 = arith.constant 0 : i32
    %680 = arith.cmpi sge, %679, %c0_i32_328 : i32
    %c8_i32_329 = arith.constant 8 : i32
    %681 = arith.cmpi slt, %679, %c8_i32_329 : i32
    %682 = arith.andi %680, %681 : i1
    %683 = arith.select %682, %678, %430 : vector<8x32xf32>
    %684 = arith.select %682, %676, %431 : vector<8x32xf32>
    %685 = arith.select %682, %678, %432 : vector<8x32xf32>
    %c3_330 = arith.constant 3 : index
    %c0_331 = arith.constant 0 : index
    %c0_332 = arith.constant 0 : index
    %686 = vector.load %arg2[%c3_330, %c0_331, %c0_332] : memref<5x32x128xf32, #tpu.memory_space<vmem>>, vector<1x32x128xf32>
    %687 = vector.shape_cast %686 : vector<1x32x128xf32> to vector<32x128xf32>
    %cst_333 = arith.constant dense<0.000000e+00> : vector<8x128xf32>
    %688 = tpu.matmul %432, %687, %cst_333 {dimension_numbers = #tpu.dot_dimension_numbers<[1], [0], [0], [1], [0, 0, 1, 1], [], []>} : vector<8x32xf32>, vector<32x128xf32>, vector<8x128xf32> -> vector<8x128xf32>
    %c3_334 = arith.constant 3 : index
    %c0_335 = arith.constant 0 : index
    %c0_336 = arith.constant 0 : index
    %689 = vector.load %arg3[%c3_334, %c0_335, %c0_336] : memref<5x32x128xf32, #tpu.memory_space<vmem>>, vector<1x32x128xf32>
    %690 = vector.shape_cast %689 : vector<1x32x128xf32> to vector<32x128xf32>
    %cst_337 = arith.constant dense<0.000000e+00> : vector<8x128xf32>
    %691 = tpu.matmul %479, %690, %cst_337 {dimension_numbers = #tpu.dot_dimension_numbers<[1], [0], [0], [1], [0, 0, 1, 1], [], []>} : vector<8x32xf32>, vector<32x128xf32>, vector<8x128xf32> -> vector<8x128xf32>
    %692 = arith.addf %688, %691 : vector<8x128xf32>
    %c3_338 = arith.constant 3 : index
    %c0_339 = arith.constant 0 : index
    %c0_340 = arith.constant 0 : index
    %693 = vector.load %arg4[%c3_338, %c0_339, %c0_340] : memref<5x1x128xf32, #tpu.memory_space<vmem>>, vector<1x1x128xf32>
    %694 = vector.shape_cast %693 : vector<1x1x128xf32> to vector<1x128xf32>
    %695 = vector.broadcast %694 : vector<1x128xf32> to vector<8x128xf32>
    %696 = arith.addf %692, %695 : vector<8x128xf32>
    %697 = vector.extract_strided_slice %696 {offsets = [0, 0], sizes = [8, 32], strides = [1, 1]} : vector<8x128xf32> to vector<8x32xf32>
    %cst_341 = arith.constant 5.000000e-01 : f32
    %698 = vector.broadcast %cst_341 : f32 to vector<8x32xf32>
    %699 = arith.mulf %698, %697 : vector<8x32xf32>
    %700 = math.tanh %699 : vector<8x32xf32>
    %cst_342 = arith.constant 5.000000e-01 : f32
    %701 = vector.broadcast %cst_342 : f32 to vector<8x32xf32>
    %702 = arith.mulf %701, %700 : vector<8x32xf32>
    %cst_343 = arith.constant 5.000000e-01 : f32
    %703 = vector.broadcast %cst_343 : f32 to vector<8x32xf32>
    %704 = arith.addf %702, %703 : vector<8x32xf32>
    %705 = vector.extract_strided_slice %696 {offsets = [0, 32], sizes = [8, 32], strides = [1, 1]} : vector<8x128xf32> to vector<8x32xf32>
    %cst_344 = arith.constant 5.000000e-01 : f32
    %706 = vector.broadcast %cst_344 : f32 to vector<8x32xf32>
    %707 = arith.mulf %706, %705 : vector<8x32xf32>
    %708 = math.tanh %707 : vector<8x32xf32>
    %cst_345 = arith.constant 5.000000e-01 : f32
    %709 = vector.broadcast %cst_345 : f32 to vector<8x32xf32>
    %710 = arith.mulf %709, %708 : vector<8x32xf32>
    %cst_346 = arith.constant 5.000000e-01 : f32
    %711 = vector.broadcast %cst_346 : f32 to vector<8x32xf32>
    %712 = arith.addf %710, %711 : vector<8x32xf32>
    %713 = vector.extract_strided_slice %696 {offsets = [0, 64], sizes = [8, 32], strides = [1, 1]} : vector<8x128xf32> to vector<8x32xf32>
    %714 = math.tanh %713 : vector<8x32xf32>
    %715 = vector.extract_strided_slice %696 {offsets = [0, 96], sizes = [8, 32], strides = [1, 1]} : vector<8x128xf32> to vector<8x32xf32>
    %cst_347 = arith.constant 5.000000e-01 : f32
    %716 = vector.broadcast %cst_347 : f32 to vector<8x32xf32>
    %717 = arith.mulf %716, %715 : vector<8x32xf32>
    %718 = math.tanh %717 : vector<8x32xf32>
    %cst_348 = arith.constant 5.000000e-01 : f32
    %719 = vector.broadcast %cst_348 : f32 to vector<8x32xf32>
    %720 = arith.mulf %719, %718 : vector<8x32xf32>
    %cst_349 = arith.constant 5.000000e-01 : f32
    %721 = vector.broadcast %cst_349 : f32 to vector<8x32xf32>
    %722 = arith.addf %720, %721 : vector<8x32xf32>
    %723 = arith.mulf %712, %480 : vector<8x32xf32>
    %724 = arith.mulf %704, %714 : vector<8x32xf32>
    %725 = arith.addf %723, %724 : vector<8x32xf32>
    %726 = math.tanh %725 : vector<8x32xf32>
    %727 = arith.mulf %722, %726 : vector<8x32xf32>
    %c3_i32_350 = arith.constant 3 : i32
    %728 = arith.subi %c2_i32_258, %c3_i32_350 : i32
    %c0_i32_351 = arith.constant 0 : i32
    %729 = arith.cmpi sge, %728, %c0_i32_351 : i32
    %c8_i32_352 = arith.constant 8 : i32
    %730 = arith.cmpi slt, %728, %c8_i32_352 : i32
    %731 = arith.andi %729, %730 : i1
    %732 = arith.select %731, %727, %479 : vector<8x32xf32>
    %733 = arith.select %731, %725, %480 : vector<8x32xf32>
    %734 = arith.select %731, %727, %481 : vector<8x32xf32>
    %c4_353 = arith.constant 4 : index
    %c0_354 = arith.constant 0 : index
    %c0_355 = arith.constant 0 : index
    %735 = vector.load %arg2[%c4_353, %c0_354, %c0_355] : memref<5x32x128xf32, #tpu.memory_space<vmem>>, vector<1x32x128xf32>
    %736 = vector.shape_cast %735 : vector<1x32x128xf32> to vector<32x128xf32>
    %cst_356 = arith.constant dense<0.000000e+00> : vector<8x128xf32>
    %737 = tpu.matmul %481, %736, %cst_356 {dimension_numbers = #tpu.dot_dimension_numbers<[1], [0], [0], [1], [0, 0, 1, 1], [], []>} : vector<8x32xf32>, vector<32x128xf32>, vector<8x128xf32> -> vector<8x128xf32>
    %c4_357 = arith.constant 4 : index
    %c0_358 = arith.constant 0 : index
    %c0_359 = arith.constant 0 : index
    %738 = vector.load %arg3[%c4_357, %c0_358, %c0_359] : memref<5x32x128xf32, #tpu.memory_space<vmem>>, vector<1x32x128xf32>
    %739 = vector.shape_cast %738 : vector<1x32x128xf32> to vector<32x128xf32>
    %cst_360 = arith.constant dense<0.000000e+00> : vector<8x128xf32>
    %740 = tpu.matmul %528, %739, %cst_360 {dimension_numbers = #tpu.dot_dimension_numbers<[1], [0], [0], [1], [0, 0, 1, 1], [], []>} : vector<8x32xf32>, vector<32x128xf32>, vector<8x128xf32> -> vector<8x128xf32>
    %741 = arith.addf %737, %740 : vector<8x128xf32>
    %c4_361 = arith.constant 4 : index
    %c0_362 = arith.constant 0 : index
    %c0_363 = arith.constant 0 : index
    %742 = vector.load %arg4[%c4_361, %c0_362, %c0_363] : memref<5x1x128xf32, #tpu.memory_space<vmem>>, vector<1x1x128xf32>
    %743 = vector.shape_cast %742 : vector<1x1x128xf32> to vector<1x128xf32>
    %744 = vector.broadcast %743 : vector<1x128xf32> to vector<8x128xf32>
    %745 = arith.addf %741, %744 : vector<8x128xf32>
    %746 = vector.extract_strided_slice %745 {offsets = [0, 0], sizes = [8, 32], strides = [1, 1]} : vector<8x128xf32> to vector<8x32xf32>
    %cst_364 = arith.constant 5.000000e-01 : f32
    %747 = vector.broadcast %cst_364 : f32 to vector<8x32xf32>
    %748 = arith.mulf %747, %746 : vector<8x32xf32>
    %749 = math.tanh %748 : vector<8x32xf32>
    %cst_365 = arith.constant 5.000000e-01 : f32
    %750 = vector.broadcast %cst_365 : f32 to vector<8x32xf32>
    %751 = arith.mulf %750, %749 : vector<8x32xf32>
    %cst_366 = arith.constant 5.000000e-01 : f32
    %752 = vector.broadcast %cst_366 : f32 to vector<8x32xf32>
    %753 = arith.addf %751, %752 : vector<8x32xf32>
    %754 = vector.extract_strided_slice %745 {offsets = [0, 32], sizes = [8, 32], strides = [1, 1]} : vector<8x128xf32> to vector<8x32xf32>
    %cst_367 = arith.constant 5.000000e-01 : f32
    %755 = vector.broadcast %cst_367 : f32 to vector<8x32xf32>
    %756 = arith.mulf %755, %754 : vector<8x32xf32>
    %757 = math.tanh %756 : vector<8x32xf32>
    %cst_368 = arith.constant 5.000000e-01 : f32
    %758 = vector.broadcast %cst_368 : f32 to vector<8x32xf32>
    %759 = arith.mulf %758, %757 : vector<8x32xf32>
    %cst_369 = arith.constant 5.000000e-01 : f32
    %760 = vector.broadcast %cst_369 : f32 to vector<8x32xf32>
    %761 = arith.addf %759, %760 : vector<8x32xf32>
    %762 = vector.extract_strided_slice %745 {offsets = [0, 64], sizes = [8, 32], strides = [1, 1]} : vector<8x128xf32> to vector<8x32xf32>
    %763 = math.tanh %762 : vector<8x32xf32>
    %764 = vector.extract_strided_slice %745 {offsets = [0, 96], sizes = [8, 32], strides = [1, 1]} : vector<8x128xf32> to vector<8x32xf32>
    %cst_370 = arith.constant 5.000000e-01 : f32
    %765 = vector.broadcast %cst_370 : f32 to vector<8x32xf32>
    %766 = arith.mulf %765, %764 : vector<8x32xf32>
    %767 = math.tanh %766 : vector<8x32xf32>
    %cst_371 = arith.constant 5.000000e-01 : f32
    %768 = vector.broadcast %cst_371 : f32 to vector<8x32xf32>
    %769 = arith.mulf %768, %767 : vector<8x32xf32>
    %cst_372 = arith.constant 5.000000e-01 : f32
    %770 = vector.broadcast %cst_372 : f32 to vector<8x32xf32>
    %771 = arith.addf %769, %770 : vector<8x32xf32>
    %772 = arith.mulf %761, %529 : vector<8x32xf32>
    %773 = arith.mulf %753, %763 : vector<8x32xf32>
    %774 = arith.addf %772, %773 : vector<8x32xf32>
    %775 = math.tanh %774 : vector<8x32xf32>
    %776 = arith.mulf %771, %775 : vector<8x32xf32>
    %c4_i32_373 = arith.constant 4 : i32
    %777 = arith.subi %c2_i32_258, %c4_i32_373 : i32
    %c0_i32_374 = arith.constant 0 : i32
    %778 = arith.cmpi sge, %777, %c0_i32_374 : i32
    %c8_i32_375 = arith.constant 8 : i32
    %779 = arith.cmpi slt, %777, %c8_i32_375 : i32
    %780 = arith.andi %778, %779 : i1
    %781 = arith.select %780, %776, %528 : vector<8x32xf32>
    %782 = arith.select %780, %774, %529 : vector<8x32xf32>
    %783 = arith.select %780, %776, %530 : vector<8x32xf32>
    %c3_i32_376 = arith.constant 3 : i32
    %c7_i32_377 = arith.constant 7 : i32
    %784 = arith.minsi %c3_i32_376, %c7_i32_377 : i32
    %785 = arith.index_cast %784 : i32 to index
    %c0_378 = arith.constant 0 : index
    %c0_379 = arith.constant 0 : index
    %786 = vector.load %arg1[%785, %c0_378, %c0_379] : memref<8x8x32xf32, #tpu.memory_space<vmem>>, vector<1x8x32xf32>
    %787 = vector.shape_cast %786 : vector<1x8x32xf32> to vector<8x32xf32>
    %c0_380 = arith.constant 0 : index
    %c0_381 = arith.constant 0 : index
    %c0_382 = arith.constant 0 : index
    %788 = vector.load %arg2[%c0_380, %c0_381, %c0_382] : memref<5x32x128xf32, #tpu.memory_space<vmem>>, vector<1x32x128xf32>
    %789 = vector.shape_cast %788 : vector<1x32x128xf32> to vector<32x128xf32>
    %790 = vector.extract_strided_slice %789 {offsets = [0, 0], sizes = [1, 128], strides = [1, 1]} : vector<32x128xf32> to vector<1x128xf32>
    %791 = vector.extract_strided_slice %787 {offsets = [0, 0], sizes = [8, 1], strides = [1, 1]} : vector<8x32xf32> to vector<8x1xf32>
    %792 = vector.broadcast %791 : vector<8x1xf32> to vector<8x128xf32>
    %793 = vector.broadcast %790 : vector<1x128xf32> to vector<8x128xf32>
    %794 = arith.mulf %792, %793 : vector<8x128xf32>
    %c0_383 = arith.constant 0 : index
    %c0_384 = arith.constant 0 : index
    %c0_385 = arith.constant 0 : index
    %795 = vector.load %arg3[%c0_383, %c0_384, %c0_385] : memref<5x32x128xf32, #tpu.memory_space<vmem>>, vector<1x32x128xf32>
    %796 = vector.shape_cast %795 : vector<1x32x128xf32> to vector<32x128xf32>
    %cst_386 = arith.constant dense<0.000000e+00> : vector<8x128xf32>
    %797 = tpu.matmul %585, %796, %cst_386 {dimension_numbers = #tpu.dot_dimension_numbers<[1], [0], [0], [1], [0, 0, 1, 1], [], []>} : vector<8x32xf32>, vector<32x128xf32>, vector<8x128xf32> -> vector<8x128xf32>
    %798 = arith.addf %794, %797 : vector<8x128xf32>
    %c0_387 = arith.constant 0 : index
    %c0_388 = arith.constant 0 : index
    %c0_389 = arith.constant 0 : index
    %799 = vector.load %arg4[%c0_387, %c0_388, %c0_389] : memref<5x1x128xf32, #tpu.memory_space<vmem>>, vector<1x1x128xf32>
    %800 = vector.shape_cast %799 : vector<1x1x128xf32> to vector<1x128xf32>
    %801 = vector.broadcast %800 : vector<1x128xf32> to vector<8x128xf32>
    %802 = arith.addf %798, %801 : vector<8x128xf32>
    %803 = vector.extract_strided_slice %802 {offsets = [0, 0], sizes = [8, 32], strides = [1, 1]} : vector<8x128xf32> to vector<8x32xf32>
    %cst_390 = arith.constant 5.000000e-01 : f32
    %804 = vector.broadcast %cst_390 : f32 to vector<8x32xf32>
    %805 = arith.mulf %804, %803 : vector<8x32xf32>
    %806 = math.tanh %805 : vector<8x32xf32>
    %cst_391 = arith.constant 5.000000e-01 : f32
    %807 = vector.broadcast %cst_391 : f32 to vector<8x32xf32>
    %808 = arith.mulf %807, %806 : vector<8x32xf32>
    %cst_392 = arith.constant 5.000000e-01 : f32
    %809 = vector.broadcast %cst_392 : f32 to vector<8x32xf32>
    %810 = arith.addf %808, %809 : vector<8x32xf32>
    %811 = vector.extract_strided_slice %802 {offsets = [0, 32], sizes = [8, 32], strides = [1, 1]} : vector<8x128xf32> to vector<8x32xf32>
    %cst_393 = arith.constant 5.000000e-01 : f32
    %812 = vector.broadcast %cst_393 : f32 to vector<8x32xf32>
    %813 = arith.mulf %812, %811 : vector<8x32xf32>
    %814 = math.tanh %813 : vector<8x32xf32>
    %cst_394 = arith.constant 5.000000e-01 : f32
    %815 = vector.broadcast %cst_394 : f32 to vector<8x32xf32>
    %816 = arith.mulf %815, %814 : vector<8x32xf32>
    %cst_395 = arith.constant 5.000000e-01 : f32
    %817 = vector.broadcast %cst_395 : f32 to vector<8x32xf32>
    %818 = arith.addf %816, %817 : vector<8x32xf32>
    %819 = vector.extract_strided_slice %802 {offsets = [0, 64], sizes = [8, 32], strides = [1, 1]} : vector<8x128xf32> to vector<8x32xf32>
    %820 = math.tanh %819 : vector<8x32xf32>
    %821 = vector.extract_strided_slice %802 {offsets = [0, 96], sizes = [8, 32], strides = [1, 1]} : vector<8x128xf32> to vector<8x32xf32>
    %cst_396 = arith.constant 5.000000e-01 : f32
    %822 = vector.broadcast %cst_396 : f32 to vector<8x32xf32>
    %823 = arith.mulf %822, %821 : vector<8x32xf32>
    %824 = math.tanh %823 : vector<8x32xf32>
    %cst_397 = arith.constant 5.000000e-01 : f32
    %825 = vector.broadcast %cst_397 : f32 to vector<8x32xf32>
    %826 = arith.mulf %825, %824 : vector<8x32xf32>
    %cst_398 = arith.constant 5.000000e-01 : f32
    %827 = vector.broadcast %cst_398 : f32 to vector<8x32xf32>
    %828 = arith.addf %826, %827 : vector<8x32xf32>
    %829 = arith.mulf %818, %586 : vector<8x32xf32>
    %830 = arith.mulf %810, %820 : vector<8x32xf32>
    %831 = arith.addf %829, %830 : vector<8x32xf32>
    %832 = math.tanh %831 : vector<8x32xf32>
    %833 = arith.mulf %828, %832 : vector<8x32xf32>
    %c0_i32_399 = arith.constant 0 : i32
    %834 = arith.subi %c3_i32_376, %c0_i32_399 : i32
    %c0_i32_400 = arith.constant 0 : i32
    %835 = arith.cmpi sge, %834, %c0_i32_400 : i32
    %c8_i32_401 = arith.constant 8 : i32
    %836 = arith.cmpi slt, %834, %c8_i32_401 : i32
    %837 = arith.andi %835, %836 : i1
    %838 = arith.select %837, %833, %585 : vector<8x32xf32>
    %839 = arith.select %837, %831, %586 : vector<8x32xf32>
    %840 = arith.select %837, %833, %587 : vector<8x32xf32>
    %c1_402 = arith.constant 1 : index
    %c0_403 = arith.constant 0 : index
    %c0_404 = arith.constant 0 : index
    %841 = vector.load %arg2[%c1_402, %c0_403, %c0_404] : memref<5x32x128xf32, #tpu.memory_space<vmem>>, vector<1x32x128xf32>
    %842 = vector.shape_cast %841 : vector<1x32x128xf32> to vector<32x128xf32>
    %cst_405 = arith.constant dense<0.000000e+00> : vector<8x128xf32>
    %843 = tpu.matmul %587, %842, %cst_405 {dimension_numbers = #tpu.dot_dimension_numbers<[1], [0], [0], [1], [0, 0, 1, 1], [], []>} : vector<8x32xf32>, vector<32x128xf32>, vector<8x128xf32> -> vector<8x128xf32>
    %c1_406 = arith.constant 1 : index
    %c0_407 = arith.constant 0 : index
    %c0_408 = arith.constant 0 : index
    %844 = vector.load %arg3[%c1_406, %c0_407, %c0_408] : memref<5x32x128xf32, #tpu.memory_space<vmem>>, vector<1x32x128xf32>
    %845 = vector.shape_cast %844 : vector<1x32x128xf32> to vector<32x128xf32>
    %cst_409 = arith.constant dense<0.000000e+00> : vector<8x128xf32>
    %846 = tpu.matmul %634, %845, %cst_409 {dimension_numbers = #tpu.dot_dimension_numbers<[1], [0], [0], [1], [0, 0, 1, 1], [], []>} : vector<8x32xf32>, vector<32x128xf32>, vector<8x128xf32> -> vector<8x128xf32>
    %847 = arith.addf %843, %846 : vector<8x128xf32>
    %c1_410 = arith.constant 1 : index
    %c0_411 = arith.constant 0 : index
    %c0_412 = arith.constant 0 : index
    %848 = vector.load %arg4[%c1_410, %c0_411, %c0_412] : memref<5x1x128xf32, #tpu.memory_space<vmem>>, vector<1x1x128xf32>
    %849 = vector.shape_cast %848 : vector<1x1x128xf32> to vector<1x128xf32>
    %850 = vector.broadcast %849 : vector<1x128xf32> to vector<8x128xf32>
    %851 = arith.addf %847, %850 : vector<8x128xf32>
    %852 = vector.extract_strided_slice %851 {offsets = [0, 0], sizes = [8, 32], strides = [1, 1]} : vector<8x128xf32> to vector<8x32xf32>
    %cst_413 = arith.constant 5.000000e-01 : f32
    %853 = vector.broadcast %cst_413 : f32 to vector<8x32xf32>
    %854 = arith.mulf %853, %852 : vector<8x32xf32>
    %855 = math.tanh %854 : vector<8x32xf32>
    %cst_414 = arith.constant 5.000000e-01 : f32
    %856 = vector.broadcast %cst_414 : f32 to vector<8x32xf32>
    %857 = arith.mulf %856, %855 : vector<8x32xf32>
    %cst_415 = arith.constant 5.000000e-01 : f32
    %858 = vector.broadcast %cst_415 : f32 to vector<8x32xf32>
    %859 = arith.addf %857, %858 : vector<8x32xf32>
    %860 = vector.extract_strided_slice %851 {offsets = [0, 32], sizes = [8, 32], strides = [1, 1]} : vector<8x128xf32> to vector<8x32xf32>
    %cst_416 = arith.constant 5.000000e-01 : f32
    %861 = vector.broadcast %cst_416 : f32 to vector<8x32xf32>
    %862 = arith.mulf %861, %860 : vector<8x32xf32>
    %863 = math.tanh %862 : vector<8x32xf32>
    %cst_417 = arith.constant 5.000000e-01 : f32
    %864 = vector.broadcast %cst_417 : f32 to vector<8x32xf32>
    %865 = arith.mulf %864, %863 : vector<8x32xf32>
    %cst_418 = arith.constant 5.000000e-01 : f32
    %866 = vector.broadcast %cst_418 : f32 to vector<8x32xf32>
    %867 = arith.addf %865, %866 : vector<8x32xf32>
    %868 = vector.extract_strided_slice %851 {offsets = [0, 64], sizes = [8, 32], strides = [1, 1]} : vector<8x128xf32> to vector<8x32xf32>
    %869 = math.tanh %868 : vector<8x32xf32>
    %870 = vector.extract_strided_slice %851 {offsets = [0, 96], sizes = [8, 32], strides = [1, 1]} : vector<8x128xf32> to vector<8x32xf32>
    %cst_419 = arith.constant 5.000000e-01 : f32
    %871 = vector.broadcast %cst_419 : f32 to vector<8x32xf32>
    %872 = arith.mulf %871, %870 : vector<8x32xf32>
    %873 = math.tanh %872 : vector<8x32xf32>
    %cst_420 = arith.constant 5.000000e-01 : f32
    %874 = vector.broadcast %cst_420 : f32 to vector<8x32xf32>
    %875 = arith.mulf %874, %873 : vector<8x32xf32>
    %cst_421 = arith.constant 5.000000e-01 : f32
    %876 = vector.broadcast %cst_421 : f32 to vector<8x32xf32>
    %877 = arith.addf %875, %876 : vector<8x32xf32>
    %878 = arith.mulf %867, %635 : vector<8x32xf32>
    %879 = arith.mulf %859, %869 : vector<8x32xf32>
    %880 = arith.addf %878, %879 : vector<8x32xf32>
    %881 = math.tanh %880 : vector<8x32xf32>
    %882 = arith.mulf %877, %881 : vector<8x32xf32>
    %c1_i32_422 = arith.constant 1 : i32
    %883 = arith.subi %c3_i32_376, %c1_i32_422 : i32
    %c0_i32_423 = arith.constant 0 : i32
    %884 = arith.cmpi sge, %883, %c0_i32_423 : i32
    %c8_i32_424 = arith.constant 8 : i32
    %885 = arith.cmpi slt, %883, %c8_i32_424 : i32
    %886 = arith.andi %884, %885 : i1
    %887 = arith.select %886, %882, %634 : vector<8x32xf32>
    %888 = arith.select %886, %880, %635 : vector<8x32xf32>
    %889 = arith.select %886, %882, %636 : vector<8x32xf32>
    %c2_425 = arith.constant 2 : index
    %c0_426 = arith.constant 0 : index
    %c0_427 = arith.constant 0 : index
    %890 = vector.load %arg2[%c2_425, %c0_426, %c0_427] : memref<5x32x128xf32, #tpu.memory_space<vmem>>, vector<1x32x128xf32>
    %891 = vector.shape_cast %890 : vector<1x32x128xf32> to vector<32x128xf32>
    %cst_428 = arith.constant dense<0.000000e+00> : vector<8x128xf32>
    %892 = tpu.matmul %636, %891, %cst_428 {dimension_numbers = #tpu.dot_dimension_numbers<[1], [0], [0], [1], [0, 0, 1, 1], [], []>} : vector<8x32xf32>, vector<32x128xf32>, vector<8x128xf32> -> vector<8x128xf32>
    %c2_429 = arith.constant 2 : index
    %c0_430 = arith.constant 0 : index
    %c0_431 = arith.constant 0 : index
    %893 = vector.load %arg3[%c2_429, %c0_430, %c0_431] : memref<5x32x128xf32, #tpu.memory_space<vmem>>, vector<1x32x128xf32>
    %894 = vector.shape_cast %893 : vector<1x32x128xf32> to vector<32x128xf32>
    %cst_432 = arith.constant dense<0.000000e+00> : vector<8x128xf32>
    %895 = tpu.matmul %683, %894, %cst_432 {dimension_numbers = #tpu.dot_dimension_numbers<[1], [0], [0], [1], [0, 0, 1, 1], [], []>} : vector<8x32xf32>, vector<32x128xf32>, vector<8x128xf32> -> vector<8x128xf32>
    %896 = arith.addf %892, %895 : vector<8x128xf32>
    %c2_433 = arith.constant 2 : index
    %c0_434 = arith.constant 0 : index
    %c0_435 = arith.constant 0 : index
    %897 = vector.load %arg4[%c2_433, %c0_434, %c0_435] : memref<5x1x128xf32, #tpu.memory_space<vmem>>, vector<1x1x128xf32>
    %898 = vector.shape_cast %897 : vector<1x1x128xf32> to vector<1x128xf32>
    %899 = vector.broadcast %898 : vector<1x128xf32> to vector<8x128xf32>
    %900 = arith.addf %896, %899 : vector<8x128xf32>
    %901 = vector.extract_strided_slice %900 {offsets = [0, 0], sizes = [8, 32], strides = [1, 1]} : vector<8x128xf32> to vector<8x32xf32>
    %cst_436 = arith.constant 5.000000e-01 : f32
    %902 = vector.broadcast %cst_436 : f32 to vector<8x32xf32>
    %903 = arith.mulf %902, %901 : vector<8x32xf32>
    %904 = math.tanh %903 : vector<8x32xf32>
    %cst_437 = arith.constant 5.000000e-01 : f32
    %905 = vector.broadcast %cst_437 : f32 to vector<8x32xf32>
    %906 = arith.mulf %905, %904 : vector<8x32xf32>
    %cst_438 = arith.constant 5.000000e-01 : f32
    %907 = vector.broadcast %cst_438 : f32 to vector<8x32xf32>
    %908 = arith.addf %906, %907 : vector<8x32xf32>
    %909 = vector.extract_strided_slice %900 {offsets = [0, 32], sizes = [8, 32], strides = [1, 1]} : vector<8x128xf32> to vector<8x32xf32>
    %cst_439 = arith.constant 5.000000e-01 : f32
    %910 = vector.broadcast %cst_439 : f32 to vector<8x32xf32>
    %911 = arith.mulf %910, %909 : vector<8x32xf32>
    %912 = math.tanh %911 : vector<8x32xf32>
    %cst_440 = arith.constant 5.000000e-01 : f32
    %913 = vector.broadcast %cst_440 : f32 to vector<8x32xf32>
    %914 = arith.mulf %913, %912 : vector<8x32xf32>
    %cst_441 = arith.constant 5.000000e-01 : f32
    %915 = vector.broadcast %cst_441 : f32 to vector<8x32xf32>
    %916 = arith.addf %914, %915 : vector<8x32xf32>
    %917 = vector.extract_strided_slice %900 {offsets = [0, 64], sizes = [8, 32], strides = [1, 1]} : vector<8x128xf32> to vector<8x32xf32>
    %918 = math.tanh %917 : vector<8x32xf32>
    %919 = vector.extract_strided_slice %900 {offsets = [0, 96], sizes = [8, 32], strides = [1, 1]} : vector<8x128xf32> to vector<8x32xf32>
    %cst_442 = arith.constant 5.000000e-01 : f32
    %920 = vector.broadcast %cst_442 : f32 to vector<8x32xf32>
    %921 = arith.mulf %920, %919 : vector<8x32xf32>
    %922 = math.tanh %921 : vector<8x32xf32>
    %cst_443 = arith.constant 5.000000e-01 : f32
    %923 = vector.broadcast %cst_443 : f32 to vector<8x32xf32>
    %924 = arith.mulf %923, %922 : vector<8x32xf32>
    %cst_444 = arith.constant 5.000000e-01 : f32
    %925 = vector.broadcast %cst_444 : f32 to vector<8x32xf32>
    %926 = arith.addf %924, %925 : vector<8x32xf32>
    %927 = arith.mulf %916, %684 : vector<8x32xf32>
    %928 = arith.mulf %908, %918 : vector<8x32xf32>
    %929 = arith.addf %927, %928 : vector<8x32xf32>
    %930 = math.tanh %929 : vector<8x32xf32>
    %931 = arith.mulf %926, %930 : vector<8x32xf32>
    %c2_i32_445 = arith.constant 2 : i32
    %932 = arith.subi %c3_i32_376, %c2_i32_445 : i32
    %c0_i32_446 = arith.constant 0 : i32
    %933 = arith.cmpi sge, %932, %c0_i32_446 : i32
    %c8_i32_447 = arith.constant 8 : i32
    %934 = arith.cmpi slt, %932, %c8_i32_447 : i32
    %935 = arith.andi %933, %934 : i1
    %936 = arith.select %935, %931, %683 : vector<8x32xf32>
    %937 = arith.select %935, %929, %684 : vector<8x32xf32>
    %938 = arith.select %935, %931, %685 : vector<8x32xf32>
    %c3_448 = arith.constant 3 : index
    %c0_449 = arith.constant 0 : index
    %c0_450 = arith.constant 0 : index
    %939 = vector.load %arg2[%c3_448, %c0_449, %c0_450] : memref<5x32x128xf32, #tpu.memory_space<vmem>>, vector<1x32x128xf32>
    %940 = vector.shape_cast %939 : vector<1x32x128xf32> to vector<32x128xf32>
    %cst_451 = arith.constant dense<0.000000e+00> : vector<8x128xf32>
    %941 = tpu.matmul %685, %940, %cst_451 {dimension_numbers = #tpu.dot_dimension_numbers<[1], [0], [0], [1], [0, 0, 1, 1], [], []>} : vector<8x32xf32>, vector<32x128xf32>, vector<8x128xf32> -> vector<8x128xf32>
    %c3_452 = arith.constant 3 : index
    %c0_453 = arith.constant 0 : index
    %c0_454 = arith.constant 0 : index
    %942 = vector.load %arg3[%c3_452, %c0_453, %c0_454] : memref<5x32x128xf32, #tpu.memory_space<vmem>>, vector<1x32x128xf32>
    %943 = vector.shape_cast %942 : vector<1x32x128xf32> to vector<32x128xf32>
    %cst_455 = arith.constant dense<0.000000e+00> : vector<8x128xf32>
    %944 = tpu.matmul %732, %943, %cst_455 {dimension_numbers = #tpu.dot_dimension_numbers<[1], [0], [0], [1], [0, 0, 1, 1], [], []>} : vector<8x32xf32>, vector<32x128xf32>, vector<8x128xf32> -> vector<8x128xf32>
    %945 = arith.addf %941, %944 : vector<8x128xf32>
    %c3_456 = arith.constant 3 : index
    %c0_457 = arith.constant 0 : index
    %c0_458 = arith.constant 0 : index
    %946 = vector.load %arg4[%c3_456, %c0_457, %c0_458] : memref<5x1x128xf32, #tpu.memory_space<vmem>>, vector<1x1x128xf32>
    %947 = vector.shape_cast %946 : vector<1x1x128xf32> to vector<1x128xf32>
    %948 = vector.broadcast %947 : vector<1x128xf32> to vector<8x128xf32>
    %949 = arith.addf %945, %948 : vector<8x128xf32>
    %950 = vector.extract_strided_slice %949 {offsets = [0, 0], sizes = [8, 32], strides = [1, 1]} : vector<8x128xf32> to vector<8x32xf32>
    %cst_459 = arith.constant 5.000000e-01 : f32
    %951 = vector.broadcast %cst_459 : f32 to vector<8x32xf32>
    %952 = arith.mulf %951, %950 : vector<8x32xf32>
    %953 = math.tanh %952 : vector<8x32xf32>
    %cst_460 = arith.constant 5.000000e-01 : f32
    %954 = vector.broadcast %cst_460 : f32 to vector<8x32xf32>
    %955 = arith.mulf %954, %953 : vector<8x32xf32>
    %cst_461 = arith.constant 5.000000e-01 : f32
    %956 = vector.broadcast %cst_461 : f32 to vector<8x32xf32>
    %957 = arith.addf %955, %956 : vector<8x32xf32>
    %958 = vector.extract_strided_slice %949 {offsets = [0, 32], sizes = [8, 32], strides = [1, 1]} : vector<8x128xf32> to vector<8x32xf32>
    %cst_462 = arith.constant 5.000000e-01 : f32
    %959 = vector.broadcast %cst_462 : f32 to vector<8x32xf32>
    %960 = arith.mulf %959, %958 : vector<8x32xf32>
    %961 = math.tanh %960 : vector<8x32xf32>
    %cst_463 = arith.constant 5.000000e-01 : f32
    %962 = vector.broadcast %cst_463 : f32 to vector<8x32xf32>
    %963 = arith.mulf %962, %961 : vector<8x32xf32>
    %cst_464 = arith.constant 5.000000e-01 : f32
    %964 = vector.broadcast %cst_464 : f32 to vector<8x32xf32>
    %965 = arith.addf %963, %964 : vector<8x32xf32>
    %966 = vector.extract_strided_slice %949 {offsets = [0, 64], sizes = [8, 32], strides = [1, 1]} : vector<8x128xf32> to vector<8x32xf32>
    %967 = math.tanh %966 : vector<8x32xf32>
    %968 = vector.extract_strided_slice %949 {offsets = [0, 96], sizes = [8, 32], strides = [1, 1]} : vector<8x128xf32> to vector<8x32xf32>
    %cst_465 = arith.constant 5.000000e-01 : f32
    %969 = vector.broadcast %cst_465 : f32 to vector<8x32xf32>
    %970 = arith.mulf %969, %968 : vector<8x32xf32>
    %971 = math.tanh %970 : vector<8x32xf32>
    %cst_466 = arith.constant 5.000000e-01 : f32
    %972 = vector.broadcast %cst_466 : f32 to vector<8x32xf32>
    %973 = arith.mulf %972, %971 : vector<8x32xf32>
    %cst_467 = arith.constant 5.000000e-01 : f32
    %974 = vector.broadcast %cst_467 : f32 to vector<8x32xf32>
    %975 = arith.addf %973, %974 : vector<8x32xf32>
    %976 = arith.mulf %965, %733 : vector<8x32xf32>
    %977 = arith.mulf %957, %967 : vector<8x32xf32>
    %978 = arith.addf %976, %977 : vector<8x32xf32>
    %979 = math.tanh %978 : vector<8x32xf32>
    %980 = arith.mulf %975, %979 : vector<8x32xf32>
    %c3_i32_468 = arith.constant 3 : i32
    %981 = arith.subi %c3_i32_376, %c3_i32_468 : i32
    %c0_i32_469 = arith.constant 0 : i32
    %982 = arith.cmpi sge, %981, %c0_i32_469 : i32
    %c8_i32_470 = arith.constant 8 : i32
    %983 = arith.cmpi slt, %981, %c8_i32_470 : i32
    %984 = arith.andi %982, %983 : i1
    %985 = arith.select %984, %980, %732 : vector<8x32xf32>
    %986 = arith.select %984, %978, %733 : vector<8x32xf32>
    %987 = arith.select %984, %980, %734 : vector<8x32xf32>
    %c4_471 = arith.constant 4 : index
    %c0_472 = arith.constant 0 : index
    %c0_473 = arith.constant 0 : index
    %988 = vector.load %arg2[%c4_471, %c0_472, %c0_473] : memref<5x32x128xf32, #tpu.memory_space<vmem>>, vector<1x32x128xf32>
    %989 = vector.shape_cast %988 : vector<1x32x128xf32> to vector<32x128xf32>
    %cst_474 = arith.constant dense<0.000000e+00> : vector<8x128xf32>
    %990 = tpu.matmul %734, %989, %cst_474 {dimension_numbers = #tpu.dot_dimension_numbers<[1], [0], [0], [1], [0, 0, 1, 1], [], []>} : vector<8x32xf32>, vector<32x128xf32>, vector<8x128xf32> -> vector<8x128xf32>
    %c4_475 = arith.constant 4 : index
    %c0_476 = arith.constant 0 : index
    %c0_477 = arith.constant 0 : index
    %991 = vector.load %arg3[%c4_475, %c0_476, %c0_477] : memref<5x32x128xf32, #tpu.memory_space<vmem>>, vector<1x32x128xf32>
    %992 = vector.shape_cast %991 : vector<1x32x128xf32> to vector<32x128xf32>
    %cst_478 = arith.constant dense<0.000000e+00> : vector<8x128xf32>
    %993 = tpu.matmul %781, %992, %cst_478 {dimension_numbers = #tpu.dot_dimension_numbers<[1], [0], [0], [1], [0, 0, 1, 1], [], []>} : vector<8x32xf32>, vector<32x128xf32>, vector<8x128xf32> -> vector<8x128xf32>
    %994 = arith.addf %990, %993 : vector<8x128xf32>
    %c4_479 = arith.constant 4 : index
    %c0_480 = arith.constant 0 : index
    %c0_481 = arith.constant 0 : index
    %995 = vector.load %arg4[%c4_479, %c0_480, %c0_481] : memref<5x1x128xf32, #tpu.memory_space<vmem>>, vector<1x1x128xf32>
    %996 = vector.shape_cast %995 : vector<1x1x128xf32> to vector<1x128xf32>
    %997 = vector.broadcast %996 : vector<1x128xf32> to vector<8x128xf32>
    %998 = arith.addf %994, %997 : vector<8x128xf32>
    %999 = vector.extract_strided_slice %998 {offsets = [0, 0], sizes = [8, 32], strides = [1, 1]} : vector<8x128xf32> to vector<8x32xf32>
    %cst_482 = arith.constant 5.000000e-01 : f32
    %1000 = vector.broadcast %cst_482 : f32 to vector<8x32xf32>
    %1001 = arith.mulf %1000, %999 : vector<8x32xf32>
    %1002 = math.tanh %1001 : vector<8x32xf32>
    %cst_483 = arith.constant 5.000000e-01 : f32
    %1003 = vector.broadcast %cst_483 : f32 to vector<8x32xf32>
    %1004 = arith.mulf %1003, %1002 : vector<8x32xf32>
    %cst_484 = arith.constant 5.000000e-01 : f32
    %1005 = vector.broadcast %cst_484 : f32 to vector<8x32xf32>
    %1006 = arith.addf %1004, %1005 : vector<8x32xf32>
    %1007 = vector.extract_strided_slice %998 {offsets = [0, 32], sizes = [8, 32], strides = [1, 1]} : vector<8x128xf32> to vector<8x32xf32>
    %cst_485 = arith.constant 5.000000e-01 : f32
    %1008 = vector.broadcast %cst_485 : f32 to vector<8x32xf32>
    %1009 = arith.mulf %1008, %1007 : vector<8x32xf32>
    %1010 = math.tanh %1009 : vector<8x32xf32>
    %cst_486 = arith.constant 5.000000e-01 : f32
    %1011 = vector.broadcast %cst_486 : f32 to vector<8x32xf32>
    %1012 = arith.mulf %1011, %1010 : vector<8x32xf32>
    %cst_487 = arith.constant 5.000000e-01 : f32
    %1013 = vector.broadcast %cst_487 : f32 to vector<8x32xf32>
    %1014 = arith.addf %1012, %1013 : vector<8x32xf32>
    %1015 = vector.extract_strided_slice %998 {offsets = [0, 64], sizes = [8, 32], strides = [1, 1]} : vector<8x128xf32> to vector<8x32xf32>
    %1016 = math.tanh %1015 : vector<8x32xf32>
    %1017 = vector.extract_strided_slice %998 {offsets = [0, 96], sizes = [8, 32], strides = [1, 1]} : vector<8x128xf32> to vector<8x32xf32>
    %cst_488 = arith.constant 5.000000e-01 : f32
    %1018 = vector.broadcast %cst_488 : f32 to vector<8x32xf32>
    %1019 = arith.mulf %1018, %1017 : vector<8x32xf32>
    %1020 = math.tanh %1019 : vector<8x32xf32>
    %cst_489 = arith.constant 5.000000e-01 : f32
    %1021 = vector.broadcast %cst_489 : f32 to vector<8x32xf32>
    %1022 = arith.mulf %1021, %1020 : vector<8x32xf32>
    %cst_490 = arith.constant 5.000000e-01 : f32
    %1023 = vector.broadcast %cst_490 : f32 to vector<8x32xf32>
    %1024 = arith.addf %1022, %1023 : vector<8x32xf32>
    %1025 = arith.mulf %1014, %782 : vector<8x32xf32>
    %1026 = arith.mulf %1006, %1016 : vector<8x32xf32>
    %1027 = arith.addf %1025, %1026 : vector<8x32xf32>
    %1028 = math.tanh %1027 : vector<8x32xf32>
    %1029 = arith.mulf %1024, %1028 : vector<8x32xf32>
    %c4_i32_491 = arith.constant 4 : i32
    %1030 = arith.subi %c3_i32_376, %c4_i32_491 : i32
    %c0_i32_492 = arith.constant 0 : i32
    %1031 = arith.cmpi sge, %1030, %c0_i32_492 : i32
    %c8_i32_493 = arith.constant 8 : i32
    %1032 = arith.cmpi slt, %1030, %c8_i32_493 : i32
    %1033 = arith.andi %1031, %1032 : i1
    %1034 = arith.select %1033, %1029, %781 : vector<8x32xf32>
    %1035 = arith.select %1033, %1027, %782 : vector<8x32xf32>
    %1036 = arith.select %1033, %1029, %783 : vector<8x32xf32>
    %c4_i32_494 = arith.constant 4 : i32
    %c7_i32_495 = arith.constant 7 : i32
    %1037 = arith.minsi %c4_i32_494, %c7_i32_495 : i32
    %1038 = arith.index_cast %1037 : i32 to index
    %c0_496 = arith.constant 0 : index
    %c0_497 = arith.constant 0 : index
    %1039 = vector.load %arg1[%1038, %c0_496, %c0_497] : memref<8x8x32xf32, #tpu.memory_space<vmem>>, vector<1x8x32xf32>
    %1040 = vector.shape_cast %1039 : vector<1x8x32xf32> to vector<8x32xf32>
    %c0_498 = arith.constant 0 : index
    %c0_499 = arith.constant 0 : index
    %c0_500 = arith.constant 0 : index
    %1041 = vector.load %arg2[%c0_498, %c0_499, %c0_500] : memref<5x32x128xf32, #tpu.memory_space<vmem>>, vector<1x32x128xf32>
    %1042 = vector.shape_cast %1041 : vector<1x32x128xf32> to vector<32x128xf32>
    %1043 = vector.extract_strided_slice %1042 {offsets = [0, 0], sizes = [1, 128], strides = [1, 1]} : vector<32x128xf32> to vector<1x128xf32>
    %1044 = vector.extract_strided_slice %1040 {offsets = [0, 0], sizes = [8, 1], strides = [1, 1]} : vector<8x32xf32> to vector<8x1xf32>
    %1045 = vector.broadcast %1044 : vector<8x1xf32> to vector<8x128xf32>
    %1046 = vector.broadcast %1043 : vector<1x128xf32> to vector<8x128xf32>
    %1047 = arith.mulf %1045, %1046 : vector<8x128xf32>
    %c0_501 = arith.constant 0 : index
    %c0_502 = arith.constant 0 : index
    %c0_503 = arith.constant 0 : index
    %1048 = vector.load %arg3[%c0_501, %c0_502, %c0_503] : memref<5x32x128xf32, #tpu.memory_space<vmem>>, vector<1x32x128xf32>
    %1049 = vector.shape_cast %1048 : vector<1x32x128xf32> to vector<32x128xf32>
    %cst_504 = arith.constant dense<0.000000e+00> : vector<8x128xf32>
    %1050 = tpu.matmul %838, %1049, %cst_504 {dimension_numbers = #tpu.dot_dimension_numbers<[1], [0], [0], [1], [0, 0, 1, 1], [], []>} : vector<8x32xf32>, vector<32x128xf32>, vector<8x128xf32> -> vector<8x128xf32>
    %1051 = arith.addf %1047, %1050 : vector<8x128xf32>
    %c0_505 = arith.constant 0 : index
    %c0_506 = arith.constant 0 : index
    %c0_507 = arith.constant 0 : index
    %1052 = vector.load %arg4[%c0_505, %c0_506, %c0_507] : memref<5x1x128xf32, #tpu.memory_space<vmem>>, vector<1x1x128xf32>
    %1053 = vector.shape_cast %1052 : vector<1x1x128xf32> to vector<1x128xf32>
    %1054 = vector.broadcast %1053 : vector<1x128xf32> to vector<8x128xf32>
    %1055 = arith.addf %1051, %1054 : vector<8x128xf32>
    %1056 = vector.extract_strided_slice %1055 {offsets = [0, 0], sizes = [8, 32], strides = [1, 1]} : vector<8x128xf32> to vector<8x32xf32>
    %cst_508 = arith.constant 5.000000e-01 : f32
    %1057 = vector.broadcast %cst_508 : f32 to vector<8x32xf32>
    %1058 = arith.mulf %1057, %1056 : vector<8x32xf32>
    %1059 = math.tanh %1058 : vector<8x32xf32>
    %cst_509 = arith.constant 5.000000e-01 : f32
    %1060 = vector.broadcast %cst_509 : f32 to vector<8x32xf32>
    %1061 = arith.mulf %1060, %1059 : vector<8x32xf32>
    %cst_510 = arith.constant 5.000000e-01 : f32
    %1062 = vector.broadcast %cst_510 : f32 to vector<8x32xf32>
    %1063 = arith.addf %1061, %1062 : vector<8x32xf32>
    %1064 = vector.extract_strided_slice %1055 {offsets = [0, 32], sizes = [8, 32], strides = [1, 1]} : vector<8x128xf32> to vector<8x32xf32>
    %cst_511 = arith.constant 5.000000e-01 : f32
    %1065 = vector.broadcast %cst_511 : f32 to vector<8x32xf32>
    %1066 = arith.mulf %1065, %1064 : vector<8x32xf32>
    %1067 = math.tanh %1066 : vector<8x32xf32>
    %cst_512 = arith.constant 5.000000e-01 : f32
    %1068 = vector.broadcast %cst_512 : f32 to vector<8x32xf32>
    %1069 = arith.mulf %1068, %1067 : vector<8x32xf32>
    %cst_513 = arith.constant 5.000000e-01 : f32
    %1070 = vector.broadcast %cst_513 : f32 to vector<8x32xf32>
    %1071 = arith.addf %1069, %1070 : vector<8x32xf32>
    %1072 = vector.extract_strided_slice %1055 {offsets = [0, 64], sizes = [8, 32], strides = [1, 1]} : vector<8x128xf32> to vector<8x32xf32>
    %1073 = math.tanh %1072 : vector<8x32xf32>
    %1074 = vector.extract_strided_slice %1055 {offsets = [0, 96], sizes = [8, 32], strides = [1, 1]} : vector<8x128xf32> to vector<8x32xf32>
    %cst_514 = arith.constant 5.000000e-01 : f32
    %1075 = vector.broadcast %cst_514 : f32 to vector<8x32xf32>
    %1076 = arith.mulf %1075, %1074 : vector<8x32xf32>
    %1077 = math.tanh %1076 : vector<8x32xf32>
    %cst_515 = arith.constant 5.000000e-01 : f32
    %1078 = vector.broadcast %cst_515 : f32 to vector<8x32xf32>
    %1079 = arith.mulf %1078, %1077 : vector<8x32xf32>
    %cst_516 = arith.constant 5.000000e-01 : f32
    %1080 = vector.broadcast %cst_516 : f32 to vector<8x32xf32>
    %1081 = arith.addf %1079, %1080 : vector<8x32xf32>
    %1082 = arith.mulf %1071, %839 : vector<8x32xf32>
    %1083 = arith.mulf %1063, %1073 : vector<8x32xf32>
    %1084 = arith.addf %1082, %1083 : vector<8x32xf32>
    %1085 = math.tanh %1084 : vector<8x32xf32>
    %1086 = arith.mulf %1081, %1085 : vector<8x32xf32>
    %c0_i32_517 = arith.constant 0 : i32
    %1087 = arith.subi %c4_i32_494, %c0_i32_517 : i32
    %c0_i32_518 = arith.constant 0 : i32
    %1088 = arith.cmpi sge, %1087, %c0_i32_518 : i32
    %c8_i32_519 = arith.constant 8 : i32
    %1089 = arith.cmpi slt, %1087, %c8_i32_519 : i32
    %1090 = arith.andi %1088, %1089 : i1
    %1091 = arith.select %1090, %1086, %838 : vector<8x32xf32>
    %1092 = arith.select %1090, %1084, %839 : vector<8x32xf32>
    %1093 = arith.select %1090, %1086, %840 : vector<8x32xf32>
    %c1_520 = arith.constant 1 : index
    %c0_521 = arith.constant 0 : index
    %c0_522 = arith.constant 0 : index
    %1094 = vector.load %arg2[%c1_520, %c0_521, %c0_522] : memref<5x32x128xf32, #tpu.memory_space<vmem>>, vector<1x32x128xf32>
    %1095 = vector.shape_cast %1094 : vector<1x32x128xf32> to vector<32x128xf32>
    %cst_523 = arith.constant dense<0.000000e+00> : vector<8x128xf32>
    %1096 = tpu.matmul %840, %1095, %cst_523 {dimension_numbers = #tpu.dot_dimension_numbers<[1], [0], [0], [1], [0, 0, 1, 1], [], []>} : vector<8x32xf32>, vector<32x128xf32>, vector<8x128xf32> -> vector<8x128xf32>
    %c1_524 = arith.constant 1 : index
    %c0_525 = arith.constant 0 : index
    %c0_526 = arith.constant 0 : index
    %1097 = vector.load %arg3[%c1_524, %c0_525, %c0_526] : memref<5x32x128xf32, #tpu.memory_space<vmem>>, vector<1x32x128xf32>
    %1098 = vector.shape_cast %1097 : vector<1x32x128xf32> to vector<32x128xf32>
    %cst_527 = arith.constant dense<0.000000e+00> : vector<8x128xf32>
    %1099 = tpu.matmul %887, %1098, %cst_527 {dimension_numbers = #tpu.dot_dimension_numbers<[1], [0], [0], [1], [0, 0, 1, 1], [], []>} : vector<8x32xf32>, vector<32x128xf32>, vector<8x128xf32> -> vector<8x128xf32>
    %1100 = arith.addf %1096, %1099 : vector<8x128xf32>
    %c1_528 = arith.constant 1 : index
    %c0_529 = arith.constant 0 : index
    %c0_530 = arith.constant 0 : index
    %1101 = vector.load %arg4[%c1_528, %c0_529, %c0_530] : memref<5x1x128xf32, #tpu.memory_space<vmem>>, vector<1x1x128xf32>
    %1102 = vector.shape_cast %1101 : vector<1x1x128xf32> to vector<1x128xf32>
    %1103 = vector.broadcast %1102 : vector<1x128xf32> to vector<8x128xf32>
    %1104 = arith.addf %1100, %1103 : vector<8x128xf32>
    %1105 = vector.extract_strided_slice %1104 {offsets = [0, 0], sizes = [8, 32], strides = [1, 1]} : vector<8x128xf32> to vector<8x32xf32>
    %cst_531 = arith.constant 5.000000e-01 : f32
    %1106 = vector.broadcast %cst_531 : f32 to vector<8x32xf32>
    %1107 = arith.mulf %1106, %1105 : vector<8x32xf32>
    %1108 = math.tanh %1107 : vector<8x32xf32>
    %cst_532 = arith.constant 5.000000e-01 : f32
    %1109 = vector.broadcast %cst_532 : f32 to vector<8x32xf32>
    %1110 = arith.mulf %1109, %1108 : vector<8x32xf32>
    %cst_533 = arith.constant 5.000000e-01 : f32
    %1111 = vector.broadcast %cst_533 : f32 to vector<8x32xf32>
    %1112 = arith.addf %1110, %1111 : vector<8x32xf32>
    %1113 = vector.extract_strided_slice %1104 {offsets = [0, 32], sizes = [8, 32], strides = [1, 1]} : vector<8x128xf32> to vector<8x32xf32>
    %cst_534 = arith.constant 5.000000e-01 : f32
    %1114 = vector.broadcast %cst_534 : f32 to vector<8x32xf32>
    %1115 = arith.mulf %1114, %1113 : vector<8x32xf32>
    %1116 = math.tanh %1115 : vector<8x32xf32>
    %cst_535 = arith.constant 5.000000e-01 : f32
    %1117 = vector.broadcast %cst_535 : f32 to vector<8x32xf32>
    %1118 = arith.mulf %1117, %1116 : vector<8x32xf32>
    %cst_536 = arith.constant 5.000000e-01 : f32
    %1119 = vector.broadcast %cst_536 : f32 to vector<8x32xf32>
    %1120 = arith.addf %1118, %1119 : vector<8x32xf32>
    %1121 = vector.extract_strided_slice %1104 {offsets = [0, 64], sizes = [8, 32], strides = [1, 1]} : vector<8x128xf32> to vector<8x32xf32>
    %1122 = math.tanh %1121 : vector<8x32xf32>
    %1123 = vector.extract_strided_slice %1104 {offsets = [0, 96], sizes = [8, 32], strides = [1, 1]} : vector<8x128xf32> to vector<8x32xf32>
    %cst_537 = arith.constant 5.000000e-01 : f32
    %1124 = vector.broadcast %cst_537 : f32 to vector<8x32xf32>
    %1125 = arith.mulf %1124, %1123 : vector<8x32xf32>
    %1126 = math.tanh %1125 : vector<8x32xf32>
    %cst_538 = arith.constant 5.000000e-01 : f32
    %1127 = vector.broadcast %cst_538 : f32 to vector<8x32xf32>
    %1128 = arith.mulf %1127, %1126 : vector<8x32xf32>
    %cst_539 = arith.constant 5.000000e-01 : f32
    %1129 = vector.broadcast %cst_539 : f32 to vector<8x32xf32>
    %1130 = arith.addf %1128, %1129 : vector<8x32xf32>
    %1131 = arith.mulf %1120, %888 : vector<8x32xf32>
    %1132 = arith.mulf %1112, %1122 : vector<8x32xf32>
    %1133 = arith.addf %1131, %1132 : vector<8x32xf32>
    %1134 = math.tanh %1133 : vector<8x32xf32>
    %1135 = arith.mulf %1130, %1134 : vector<8x32xf32>
    %c1_i32_540 = arith.constant 1 : i32
    %1136 = arith.subi %c4_i32_494, %c1_i32_540 : i32
    %c0_i32_541 = arith.constant 0 : i32
    %1137 = arith.cmpi sge, %1136, %c0_i32_541 : i32
    %c8_i32_542 = arith.constant 8 : i32
    %1138 = arith.cmpi slt, %1136, %c8_i32_542 : i32
    %1139 = arith.andi %1137, %1138 : i1
    %1140 = arith.select %1139, %1135, %887 : vector<8x32xf32>
    %1141 = arith.select %1139, %1133, %888 : vector<8x32xf32>
    %1142 = arith.select %1139, %1135, %889 : vector<8x32xf32>
    %c2_543 = arith.constant 2 : index
    %c0_544 = arith.constant 0 : index
    %c0_545 = arith.constant 0 : index
    %1143 = vector.load %arg2[%c2_543, %c0_544, %c0_545] : memref<5x32x128xf32, #tpu.memory_space<vmem>>, vector<1x32x128xf32>
    %1144 = vector.shape_cast %1143 : vector<1x32x128xf32> to vector<32x128xf32>
    %cst_546 = arith.constant dense<0.000000e+00> : vector<8x128xf32>
    %1145 = tpu.matmul %889, %1144, %cst_546 {dimension_numbers = #tpu.dot_dimension_numbers<[1], [0], [0], [1], [0, 0, 1, 1], [], []>} : vector<8x32xf32>, vector<32x128xf32>, vector<8x128xf32> -> vector<8x128xf32>
    %c2_547 = arith.constant 2 : index
    %c0_548 = arith.constant 0 : index
    %c0_549 = arith.constant 0 : index
    %1146 = vector.load %arg3[%c2_547, %c0_548, %c0_549] : memref<5x32x128xf32, #tpu.memory_space<vmem>>, vector<1x32x128xf32>
    %1147 = vector.shape_cast %1146 : vector<1x32x128xf32> to vector<32x128xf32>
    %cst_550 = arith.constant dense<0.000000e+00> : vector<8x128xf32>
    %1148 = tpu.matmul %936, %1147, %cst_550 {dimension_numbers = #tpu.dot_dimension_numbers<[1], [0], [0], [1], [0, 0, 1, 1], [], []>} : vector<8x32xf32>, vector<32x128xf32>, vector<8x128xf32> -> vector<8x128xf32>
    %1149 = arith.addf %1145, %1148 : vector<8x128xf32>
    %c2_551 = arith.constant 2 : index
    %c0_552 = arith.constant 0 : index
    %c0_553 = arith.constant 0 : index
    %1150 = vector.load %arg4[%c2_551, %c0_552, %c0_553] : memref<5x1x128xf32, #tpu.memory_space<vmem>>, vector<1x1x128xf32>
    %1151 = vector.shape_cast %1150 : vector<1x1x128xf32> to vector<1x128xf32>
    %1152 = vector.broadcast %1151 : vector<1x128xf32> to vector<8x128xf32>
    %1153 = arith.addf %1149, %1152 : vector<8x128xf32>
    %1154 = vector.extract_strided_slice %1153 {offsets = [0, 0], sizes = [8, 32], strides = [1, 1]} : vector<8x128xf32> to vector<8x32xf32>
    %cst_554 = arith.constant 5.000000e-01 : f32
    %1155 = vector.broadcast %cst_554 : f32 to vector<8x32xf32>
    %1156 = arith.mulf %1155, %1154 : vector<8x32xf32>
    %1157 = math.tanh %1156 : vector<8x32xf32>
    %cst_555 = arith.constant 5.000000e-01 : f32
    %1158 = vector.broadcast %cst_555 : f32 to vector<8x32xf32>
    %1159 = arith.mulf %1158, %1157 : vector<8x32xf32>
    %cst_556 = arith.constant 5.000000e-01 : f32
    %1160 = vector.broadcast %cst_556 : f32 to vector<8x32xf32>
    %1161 = arith.addf %1159, %1160 : vector<8x32xf32>
    %1162 = vector.extract_strided_slice %1153 {offsets = [0, 32], sizes = [8, 32], strides = [1, 1]} : vector<8x128xf32> to vector<8x32xf32>
    %cst_557 = arith.constant 5.000000e-01 : f32
    %1163 = vector.broadcast %cst_557 : f32 to vector<8x32xf32>
    %1164 = arith.mulf %1163, %1162 : vector<8x32xf32>
    %1165 = math.tanh %1164 : vector<8x32xf32>
    %cst_558 = arith.constant 5.000000e-01 : f32
    %1166 = vector.broadcast %cst_558 : f32 to vector<8x32xf32>
    %1167 = arith.mulf %1166, %1165 : vector<8x32xf32>
    %cst_559 = arith.constant 5.000000e-01 : f32
    %1168 = vector.broadcast %cst_559 : f32 to vector<8x32xf32>
    %1169 = arith.addf %1167, %1168 : vector<8x32xf32>
    %1170 = vector.extract_strided_slice %1153 {offsets = [0, 64], sizes = [8, 32], strides = [1, 1]} : vector<8x128xf32> to vector<8x32xf32>
    %1171 = math.tanh %1170 : vector<8x32xf32>
    %1172 = vector.extract_strided_slice %1153 {offsets = [0, 96], sizes = [8, 32], strides = [1, 1]} : vector<8x128xf32> to vector<8x32xf32>
    %cst_560 = arith.constant 5.000000e-01 : f32
    %1173 = vector.broadcast %cst_560 : f32 to vector<8x32xf32>
    %1174 = arith.mulf %1173, %1172 : vector<8x32xf32>
    %1175 = math.tanh %1174 : vector<8x32xf32>
    %cst_561 = arith.constant 5.000000e-01 : f32
    %1176 = vector.broadcast %cst_561 : f32 to vector<8x32xf32>
    %1177 = arith.mulf %1176, %1175 : vector<8x32xf32>
    %cst_562 = arith.constant 5.000000e-01 : f32
    %1178 = vector.broadcast %cst_562 : f32 to vector<8x32xf32>
    %1179 = arith.addf %1177, %1178 : vector<8x32xf32>
    %1180 = arith.mulf %1169, %937 : vector<8x32xf32>
    %1181 = arith.mulf %1161, %1171 : vector<8x32xf32>
    %1182 = arith.addf %1180, %1181 : vector<8x32xf32>
    %1183 = math.tanh %1182 : vector<8x32xf32>
    %1184 = arith.mulf %1179, %1183 : vector<8x32xf32>
    %c2_i32_563 = arith.constant 2 : i32
    %1185 = arith.subi %c4_i32_494, %c2_i32_563 : i32
    %c0_i32_564 = arith.constant 0 : i32
    %1186 = arith.cmpi sge, %1185, %c0_i32_564 : i32
    %c8_i32_565 = arith.constant 8 : i32
    %1187 = arith.cmpi slt, %1185, %c8_i32_565 : i32
    %1188 = arith.andi %1186, %1187 : i1
    %1189 = arith.select %1188, %1184, %936 : vector<8x32xf32>
    %1190 = arith.select %1188, %1182, %937 : vector<8x32xf32>
    %1191 = arith.select %1188, %1184, %938 : vector<8x32xf32>
    %c3_566 = arith.constant 3 : index
    %c0_567 = arith.constant 0 : index
    %c0_568 = arith.constant 0 : index
    %1192 = vector.load %arg2[%c3_566, %c0_567, %c0_568] : memref<5x32x128xf32, #tpu.memory_space<vmem>>, vector<1x32x128xf32>
    %1193 = vector.shape_cast %1192 : vector<1x32x128xf32> to vector<32x128xf32>
    %cst_569 = arith.constant dense<0.000000e+00> : vector<8x128xf32>
    %1194 = tpu.matmul %938, %1193, %cst_569 {dimension_numbers = #tpu.dot_dimension_numbers<[1], [0], [0], [1], [0, 0, 1, 1], [], []>} : vector<8x32xf32>, vector<32x128xf32>, vector<8x128xf32> -> vector<8x128xf32>
    %c3_570 = arith.constant 3 : index
    %c0_571 = arith.constant 0 : index
    %c0_572 = arith.constant 0 : index
    %1195 = vector.load %arg3[%c3_570, %c0_571, %c0_572] : memref<5x32x128xf32, #tpu.memory_space<vmem>>, vector<1x32x128xf32>
    %1196 = vector.shape_cast %1195 : vector<1x32x128xf32> to vector<32x128xf32>
    %cst_573 = arith.constant dense<0.000000e+00> : vector<8x128xf32>
    %1197 = tpu.matmul %985, %1196, %cst_573 {dimension_numbers = #tpu.dot_dimension_numbers<[1], [0], [0], [1], [0, 0, 1, 1], [], []>} : vector<8x32xf32>, vector<32x128xf32>, vector<8x128xf32> -> vector<8x128xf32>
    %1198 = arith.addf %1194, %1197 : vector<8x128xf32>
    %c3_574 = arith.constant 3 : index
    %c0_575 = arith.constant 0 : index
    %c0_576 = arith.constant 0 : index
    %1199 = vector.load %arg4[%c3_574, %c0_575, %c0_576] : memref<5x1x128xf32, #tpu.memory_space<vmem>>, vector<1x1x128xf32>
    %1200 = vector.shape_cast %1199 : vector<1x1x128xf32> to vector<1x128xf32>
    %1201 = vector.broadcast %1200 : vector<1x128xf32> to vector<8x128xf32>
    %1202 = arith.addf %1198, %1201 : vector<8x128xf32>
    %1203 = vector.extract_strided_slice %1202 {offsets = [0, 0], sizes = [8, 32], strides = [1, 1]} : vector<8x128xf32> to vector<8x32xf32>
    %cst_577 = arith.constant 5.000000e-01 : f32
    %1204 = vector.broadcast %cst_577 : f32 to vector<8x32xf32>
    %1205 = arith.mulf %1204, %1203 : vector<8x32xf32>
    %1206 = math.tanh %1205 : vector<8x32xf32>
    %cst_578 = arith.constant 5.000000e-01 : f32
    %1207 = vector.broadcast %cst_578 : f32 to vector<8x32xf32>
    %1208 = arith.mulf %1207, %1206 : vector<8x32xf32>
    %cst_579 = arith.constant 5.000000e-01 : f32
    %1209 = vector.broadcast %cst_579 : f32 to vector<8x32xf32>
    %1210 = arith.addf %1208, %1209 : vector<8x32xf32>
    %1211 = vector.extract_strided_slice %1202 {offsets = [0, 32], sizes = [8, 32], strides = [1, 1]} : vector<8x128xf32> to vector<8x32xf32>
    %cst_580 = arith.constant 5.000000e-01 : f32
    %1212 = vector.broadcast %cst_580 : f32 to vector<8x32xf32>
    %1213 = arith.mulf %1212, %1211 : vector<8x32xf32>
    %1214 = math.tanh %1213 : vector<8x32xf32>
    %cst_581 = arith.constant 5.000000e-01 : f32
    %1215 = vector.broadcast %cst_581 : f32 to vector<8x32xf32>
    %1216 = arith.mulf %1215, %1214 : vector<8x32xf32>
    %cst_582 = arith.constant 5.000000e-01 : f32
    %1217 = vector.broadcast %cst_582 : f32 to vector<8x32xf32>
    %1218 = arith.addf %1216, %1217 : vector<8x32xf32>
    %1219 = vector.extract_strided_slice %1202 {offsets = [0, 64], sizes = [8, 32], strides = [1, 1]} : vector<8x128xf32> to vector<8x32xf32>
    %1220 = math.tanh %1219 : vector<8x32xf32>
    %1221 = vector.extract_strided_slice %1202 {offsets = [0, 96], sizes = [8, 32], strides = [1, 1]} : vector<8x128xf32> to vector<8x32xf32>
    %cst_583 = arith.constant 5.000000e-01 : f32
    %1222 = vector.broadcast %cst_583 : f32 to vector<8x32xf32>
    %1223 = arith.mulf %1222, %1221 : vector<8x32xf32>
    %1224 = math.tanh %1223 : vector<8x32xf32>
    %cst_584 = arith.constant 5.000000e-01 : f32
    %1225 = vector.broadcast %cst_584 : f32 to vector<8x32xf32>
    %1226 = arith.mulf %1225, %1224 : vector<8x32xf32>
    %cst_585 = arith.constant 5.000000e-01 : f32
    %1227 = vector.broadcast %cst_585 : f32 to vector<8x32xf32>
    %1228 = arith.addf %1226, %1227 : vector<8x32xf32>
    %1229 = arith.mulf %1218, %986 : vector<8x32xf32>
    %1230 = arith.mulf %1210, %1220 : vector<8x32xf32>
    %1231 = arith.addf %1229, %1230 : vector<8x32xf32>
    %1232 = math.tanh %1231 : vector<8x32xf32>
    %1233 = arith.mulf %1228, %1232 : vector<8x32xf32>
    %c3_i32_586 = arith.constant 3 : i32
    %1234 = arith.subi %c4_i32_494, %c3_i32_586 : i32
    %c0_i32_587 = arith.constant 0 : i32
    %1235 = arith.cmpi sge, %1234, %c0_i32_587 : i32
    %c8_i32_588 = arith.constant 8 : i32
    %1236 = arith.cmpi slt, %1234, %c8_i32_588 : i32
    %1237 = arith.andi %1235, %1236 : i1
    %1238 = arith.select %1237, %1233, %985 : vector<8x32xf32>
    %1239 = arith.select %1237, %1231, %986 : vector<8x32xf32>
    %1240 = arith.select %1237, %1233, %987 : vector<8x32xf32>
    %c4_589 = arith.constant 4 : index
    %c0_590 = arith.constant 0 : index
    %c0_591 = arith.constant 0 : index
    %1241 = vector.load %arg2[%c4_589, %c0_590, %c0_591] : memref<5x32x128xf32, #tpu.memory_space<vmem>>, vector<1x32x128xf32>
    %1242 = vector.shape_cast %1241 : vector<1x32x128xf32> to vector<32x128xf32>
    %cst_592 = arith.constant dense<0.000000e+00> : vector<8x128xf32>
    %1243 = tpu.matmul %987, %1242, %cst_592 {dimension_numbers = #tpu.dot_dimension_numbers<[1], [0], [0], [1], [0, 0, 1, 1], [], []>} : vector<8x32xf32>, vector<32x128xf32>, vector<8x128xf32> -> vector<8x128xf32>
    %c4_593 = arith.constant 4 : index
    %c0_594 = arith.constant 0 : index
    %c0_595 = arith.constant 0 : index
    %1244 = vector.load %arg3[%c4_593, %c0_594, %c0_595] : memref<5x32x128xf32, #tpu.memory_space<vmem>>, vector<1x32x128xf32>
    %1245 = vector.shape_cast %1244 : vector<1x32x128xf32> to vector<32x128xf32>
    %cst_596 = arith.constant dense<0.000000e+00> : vector<8x128xf32>
    %1246 = tpu.matmul %1034, %1245, %cst_596 {dimension_numbers = #tpu.dot_dimension_numbers<[1], [0], [0], [1], [0, 0, 1, 1], [], []>} : vector<8x32xf32>, vector<32x128xf32>, vector<8x128xf32> -> vector<8x128xf32>
    %1247 = arith.addf %1243, %1246 : vector<8x128xf32>
    %c4_597 = arith.constant 4 : index
    %c0_598 = arith.constant 0 : index
    %c0_599 = arith.constant 0 : index
    %1248 = vector.load %arg4[%c4_597, %c0_598, %c0_599] : memref<5x1x128xf32, #tpu.memory_space<vmem>>, vector<1x1x128xf32>
    %1249 = vector.shape_cast %1248 : vector<1x1x128xf32> to vector<1x128xf32>
    %1250 = vector.broadcast %1249 : vector<1x128xf32> to vector<8x128xf32>
    %1251 = arith.addf %1247, %1250 : vector<8x128xf32>
    %1252 = vector.extract_strided_slice %1251 {offsets = [0, 0], sizes = [8, 32], strides = [1, 1]} : vector<8x128xf32> to vector<8x32xf32>
    %cst_600 = arith.constant 5.000000e-01 : f32
    %1253 = vector.broadcast %cst_600 : f32 to vector<8x32xf32>
    %1254 = arith.mulf %1253, %1252 : vector<8x32xf32>
    %1255 = math.tanh %1254 : vector<8x32xf32>
    %cst_601 = arith.constant 5.000000e-01 : f32
    %1256 = vector.broadcast %cst_601 : f32 to vector<8x32xf32>
    %1257 = arith.mulf %1256, %1255 : vector<8x32xf32>
    %cst_602 = arith.constant 5.000000e-01 : f32
    %1258 = vector.broadcast %cst_602 : f32 to vector<8x32xf32>
    %1259 = arith.addf %1257, %1258 : vector<8x32xf32>
    %1260 = vector.extract_strided_slice %1251 {offsets = [0, 32], sizes = [8, 32], strides = [1, 1]} : vector<8x128xf32> to vector<8x32xf32>
    %cst_603 = arith.constant 5.000000e-01 : f32
    %1261 = vector.broadcast %cst_603 : f32 to vector<8x32xf32>
    %1262 = arith.mulf %1261, %1260 : vector<8x32xf32>
    %1263 = math.tanh %1262 : vector<8x32xf32>
    %cst_604 = arith.constant 5.000000e-01 : f32
    %1264 = vector.broadcast %cst_604 : f32 to vector<8x32xf32>
    %1265 = arith.mulf %1264, %1263 : vector<8x32xf32>
    %cst_605 = arith.constant 5.000000e-01 : f32
    %1266 = vector.broadcast %cst_605 : f32 to vector<8x32xf32>
    %1267 = arith.addf %1265, %1266 : vector<8x32xf32>
    %1268 = vector.extract_strided_slice %1251 {offsets = [0, 64], sizes = [8, 32], strides = [1, 1]} : vector<8x128xf32> to vector<8x32xf32>
    %1269 = math.tanh %1268 : vector<8x32xf32>
    %1270 = vector.extract_strided_slice %1251 {offsets = [0, 96], sizes = [8, 32], strides = [1, 1]} : vector<8x128xf32> to vector<8x32xf32>
    %cst_606 = arith.constant 5.000000e-01 : f32
    %1271 = vector.broadcast %cst_606 : f32 to vector<8x32xf32>
    %1272 = arith.mulf %1271, %1270 : vector<8x32xf32>
    %1273 = math.tanh %1272 : vector<8x32xf32>
    %cst_607 = arith.constant 5.000000e-01 : f32
    %1274 = vector.broadcast %cst_607 : f32 to vector<8x32xf32>
    %1275 = arith.mulf %1274, %1273 : vector<8x32xf32>
    %cst_608 = arith.constant 5.000000e-01 : f32
    %1276 = vector.broadcast %cst_608 : f32 to vector<8x32xf32>
    %1277 = arith.addf %1275, %1276 : vector<8x32xf32>
    %1278 = arith.mulf %1267, %1035 : vector<8x32xf32>
    %1279 = arith.mulf %1259, %1269 : vector<8x32xf32>
    %1280 = arith.addf %1278, %1279 : vector<8x32xf32>
    %1281 = math.tanh %1280 : vector<8x32xf32>
    %1282 = arith.mulf %1277, %1281 : vector<8x32xf32>
    %c4_i32_609 = arith.constant 4 : i32
    %1283 = arith.subi %c4_i32_494, %c4_i32_609 : i32
    %c0_i32_610 = arith.constant 0 : i32
    %1284 = arith.cmpi sge, %1283, %c0_i32_610 : i32
    %c8_i32_611 = arith.constant 8 : i32
    %1285 = arith.cmpi slt, %1283, %c8_i32_611 : i32
    %1286 = arith.andi %1284, %1285 : i1
    %1287 = arith.select %1286, %1282, %1034 : vector<8x32xf32>
    %1288 = arith.select %1286, %1280, %1035 : vector<8x32xf32>
    %1289 = arith.select %1286, %1282, %1036 : vector<8x32xf32>
    %c5_i32 = arith.constant 5 : i32
    %c7_i32_612 = arith.constant 7 : i32
    %1290 = arith.minsi %c5_i32, %c7_i32_612 : i32
    %1291 = arith.index_cast %1290 : i32 to index
    %c0_613 = arith.constant 0 : index
    %c0_614 = arith.constant 0 : index
    %1292 = vector.load %arg1[%1291, %c0_613, %c0_614] : memref<8x8x32xf32, #tpu.memory_space<vmem>>, vector<1x8x32xf32>
    %1293 = vector.shape_cast %1292 : vector<1x8x32xf32> to vector<8x32xf32>
    %c0_615 = arith.constant 0 : index
    %c0_616 = arith.constant 0 : index
    %c0_617 = arith.constant 0 : index
    %1294 = vector.load %arg2[%c0_615, %c0_616, %c0_617] : memref<5x32x128xf32, #tpu.memory_space<vmem>>, vector<1x32x128xf32>
    %1295 = vector.shape_cast %1294 : vector<1x32x128xf32> to vector<32x128xf32>
    %1296 = vector.extract_strided_slice %1295 {offsets = [0, 0], sizes = [1, 128], strides = [1, 1]} : vector<32x128xf32> to vector<1x128xf32>
    %1297 = vector.extract_strided_slice %1293 {offsets = [0, 0], sizes = [8, 1], strides = [1, 1]} : vector<8x32xf32> to vector<8x1xf32>
    %1298 = vector.broadcast %1297 : vector<8x1xf32> to vector<8x128xf32>
    %1299 = vector.broadcast %1296 : vector<1x128xf32> to vector<8x128xf32>
    %1300 = arith.mulf %1298, %1299 : vector<8x128xf32>
    %c0_618 = arith.constant 0 : index
    %c0_619 = arith.constant 0 : index
    %c0_620 = arith.constant 0 : index
    %1301 = vector.load %arg3[%c0_618, %c0_619, %c0_620] : memref<5x32x128xf32, #tpu.memory_space<vmem>>, vector<1x32x128xf32>
    %1302 = vector.shape_cast %1301 : vector<1x32x128xf32> to vector<32x128xf32>
    %cst_621 = arith.constant dense<0.000000e+00> : vector<8x128xf32>
    %1303 = tpu.matmul %1091, %1302, %cst_621 {dimension_numbers = #tpu.dot_dimension_numbers<[1], [0], [0], [1], [0, 0, 1, 1], [], []>} : vector<8x32xf32>, vector<32x128xf32>, vector<8x128xf32> -> vector<8x128xf32>
    %1304 = arith.addf %1300, %1303 : vector<8x128xf32>
    %c0_622 = arith.constant 0 : index
    %c0_623 = arith.constant 0 : index
    %c0_624 = arith.constant 0 : index
    %1305 = vector.load %arg4[%c0_622, %c0_623, %c0_624] : memref<5x1x128xf32, #tpu.memory_space<vmem>>, vector<1x1x128xf32>
    %1306 = vector.shape_cast %1305 : vector<1x1x128xf32> to vector<1x128xf32>
    %1307 = vector.broadcast %1306 : vector<1x128xf32> to vector<8x128xf32>
    %1308 = arith.addf %1304, %1307 : vector<8x128xf32>
    %1309 = vector.extract_strided_slice %1308 {offsets = [0, 0], sizes = [8, 32], strides = [1, 1]} : vector<8x128xf32> to vector<8x32xf32>
    %cst_625 = arith.constant 5.000000e-01 : f32
    %1310 = vector.broadcast %cst_625 : f32 to vector<8x32xf32>
    %1311 = arith.mulf %1310, %1309 : vector<8x32xf32>
    %1312 = math.tanh %1311 : vector<8x32xf32>
    %cst_626 = arith.constant 5.000000e-01 : f32
    %1313 = vector.broadcast %cst_626 : f32 to vector<8x32xf32>
    %1314 = arith.mulf %1313, %1312 : vector<8x32xf32>
    %cst_627 = arith.constant 5.000000e-01 : f32
    %1315 = vector.broadcast %cst_627 : f32 to vector<8x32xf32>
    %1316 = arith.addf %1314, %1315 : vector<8x32xf32>
    %1317 = vector.extract_strided_slice %1308 {offsets = [0, 32], sizes = [8, 32], strides = [1, 1]} : vector<8x128xf32> to vector<8x32xf32>
    %cst_628 = arith.constant 5.000000e-01 : f32
    %1318 = vector.broadcast %cst_628 : f32 to vector<8x32xf32>
    %1319 = arith.mulf %1318, %1317 : vector<8x32xf32>
    %1320 = math.tanh %1319 : vector<8x32xf32>
    %cst_629 = arith.constant 5.000000e-01 : f32
    %1321 = vector.broadcast %cst_629 : f32 to vector<8x32xf32>
    %1322 = arith.mulf %1321, %1320 : vector<8x32xf32>
    %cst_630 = arith.constant 5.000000e-01 : f32
    %1323 = vector.broadcast %cst_630 : f32 to vector<8x32xf32>
    %1324 = arith.addf %1322, %1323 : vector<8x32xf32>
    %1325 = vector.extract_strided_slice %1308 {offsets = [0, 64], sizes = [8, 32], strides = [1, 1]} : vector<8x128xf32> to vector<8x32xf32>
    %1326 = math.tanh %1325 : vector<8x32xf32>
    %1327 = vector.extract_strided_slice %1308 {offsets = [0, 96], sizes = [8, 32], strides = [1, 1]} : vector<8x128xf32> to vector<8x32xf32>
    %cst_631 = arith.constant 5.000000e-01 : f32
    %1328 = vector.broadcast %cst_631 : f32 to vector<8x32xf32>
    %1329 = arith.mulf %1328, %1327 : vector<8x32xf32>
    %1330 = math.tanh %1329 : vector<8x32xf32>
    %cst_632 = arith.constant 5.000000e-01 : f32
    %1331 = vector.broadcast %cst_632 : f32 to vector<8x32xf32>
    %1332 = arith.mulf %1331, %1330 : vector<8x32xf32>
    %cst_633 = arith.constant 5.000000e-01 : f32
    %1333 = vector.broadcast %cst_633 : f32 to vector<8x32xf32>
    %1334 = arith.addf %1332, %1333 : vector<8x32xf32>
    %1335 = arith.mulf %1324, %1092 : vector<8x32xf32>
    %1336 = arith.mulf %1316, %1326 : vector<8x32xf32>
    %1337 = arith.addf %1335, %1336 : vector<8x32xf32>
    %1338 = math.tanh %1337 : vector<8x32xf32>
    %1339 = arith.mulf %1334, %1338 : vector<8x32xf32>
    %c0_i32_634 = arith.constant 0 : i32
    %1340 = arith.subi %c5_i32, %c0_i32_634 : i32
    %c0_i32_635 = arith.constant 0 : i32
    %1341 = arith.cmpi sge, %1340, %c0_i32_635 : i32
    %c8_i32_636 = arith.constant 8 : i32
    %1342 = arith.cmpi slt, %1340, %c8_i32_636 : i32
    %1343 = arith.andi %1341, %1342 : i1
    %1344 = arith.select %1343, %1339, %1091 : vector<8x32xf32>
    %1345 = arith.select %1343, %1337, %1092 : vector<8x32xf32>
    %1346 = arith.select %1343, %1339, %1093 : vector<8x32xf32>
    %c1_637 = arith.constant 1 : index
    %c0_638 = arith.constant 0 : index
    %c0_639 = arith.constant 0 : index
    %1347 = vector.load %arg2[%c1_637, %c0_638, %c0_639] : memref<5x32x128xf32, #tpu.memory_space<vmem>>, vector<1x32x128xf32>
    %1348 = vector.shape_cast %1347 : vector<1x32x128xf32> to vector<32x128xf32>
    %cst_640 = arith.constant dense<0.000000e+00> : vector<8x128xf32>
    %1349 = tpu.matmul %1093, %1348, %cst_640 {dimension_numbers = #tpu.dot_dimension_numbers<[1], [0], [0], [1], [0, 0, 1, 1], [], []>} : vector<8x32xf32>, vector<32x128xf32>, vector<8x128xf32> -> vector<8x128xf32>
    %c1_641 = arith.constant 1 : index
    %c0_642 = arith.constant 0 : index
    %c0_643 = arith.constant 0 : index
    %1350 = vector.load %arg3[%c1_641, %c0_642, %c0_643] : memref<5x32x128xf32, #tpu.memory_space<vmem>>, vector<1x32x128xf32>
    %1351 = vector.shape_cast %1350 : vector<1x32x128xf32> to vector<32x128xf32>
    %cst_644 = arith.constant dense<0.000000e+00> : vector<8x128xf32>
    %1352 = tpu.matmul %1140, %1351, %cst_644 {dimension_numbers = #tpu.dot_dimension_numbers<[1], [0], [0], [1], [0, 0, 1, 1], [], []>} : vector<8x32xf32>, vector<32x128xf32>, vector<8x128xf32> -> vector<8x128xf32>
    %1353 = arith.addf %1349, %1352 : vector<8x128xf32>
    %c1_645 = arith.constant 1 : index
    %c0_646 = arith.constant 0 : index
    %c0_647 = arith.constant 0 : index
    %1354 = vector.load %arg4[%c1_645, %c0_646, %c0_647] : memref<5x1x128xf32, #tpu.memory_space<vmem>>, vector<1x1x128xf32>
    %1355 = vector.shape_cast %1354 : vector<1x1x128xf32> to vector<1x128xf32>
    %1356 = vector.broadcast %1355 : vector<1x128xf32> to vector<8x128xf32>
    %1357 = arith.addf %1353, %1356 : vector<8x128xf32>
    %1358 = vector.extract_strided_slice %1357 {offsets = [0, 0], sizes = [8, 32], strides = [1, 1]} : vector<8x128xf32> to vector<8x32xf32>
    %cst_648 = arith.constant 5.000000e-01 : f32
    %1359 = vector.broadcast %cst_648 : f32 to vector<8x32xf32>
    %1360 = arith.mulf %1359, %1358 : vector<8x32xf32>
    %1361 = math.tanh %1360 : vector<8x32xf32>
    %cst_649 = arith.constant 5.000000e-01 : f32
    %1362 = vector.broadcast %cst_649 : f32 to vector<8x32xf32>
    %1363 = arith.mulf %1362, %1361 : vector<8x32xf32>
    %cst_650 = arith.constant 5.000000e-01 : f32
    %1364 = vector.broadcast %cst_650 : f32 to vector<8x32xf32>
    %1365 = arith.addf %1363, %1364 : vector<8x32xf32>
    %1366 = vector.extract_strided_slice %1357 {offsets = [0, 32], sizes = [8, 32], strides = [1, 1]} : vector<8x128xf32> to vector<8x32xf32>
    %cst_651 = arith.constant 5.000000e-01 : f32
    %1367 = vector.broadcast %cst_651 : f32 to vector<8x32xf32>
    %1368 = arith.mulf %1367, %1366 : vector<8x32xf32>
    %1369 = math.tanh %1368 : vector<8x32xf32>
    %cst_652 = arith.constant 5.000000e-01 : f32
    %1370 = vector.broadcast %cst_652 : f32 to vector<8x32xf32>
    %1371 = arith.mulf %1370, %1369 : vector<8x32xf32>
    %cst_653 = arith.constant 5.000000e-01 : f32
    %1372 = vector.broadcast %cst_653 : f32 to vector<8x32xf32>
    %1373 = arith.addf %1371, %1372 : vector<8x32xf32>
    %1374 = vector.extract_strided_slice %1357 {offsets = [0, 64], sizes = [8, 32], strides = [1, 1]} : vector<8x128xf32> to vector<8x32xf32>
    %1375 = math.tanh %1374 : vector<8x32xf32>
    %1376 = vector.extract_strided_slice %1357 {offsets = [0, 96], sizes = [8, 32], strides = [1, 1]} : vector<8x128xf32> to vector<8x32xf32>
    %cst_654 = arith.constant 5.000000e-01 : f32
    %1377 = vector.broadcast %cst_654 : f32 to vector<8x32xf32>
    %1378 = arith.mulf %1377, %1376 : vector<8x32xf32>
    %1379 = math.tanh %1378 : vector<8x32xf32>
    %cst_655 = arith.constant 5.000000e-01 : f32
    %1380 = vector.broadcast %cst_655 : f32 to vector<8x32xf32>
    %1381 = arith.mulf %1380, %1379 : vector<8x32xf32>
    %cst_656 = arith.constant 5.000000e-01 : f32
    %1382 = vector.broadcast %cst_656 : f32 to vector<8x32xf32>
    %1383 = arith.addf %1381, %1382 : vector<8x32xf32>
    %1384 = arith.mulf %1373, %1141 : vector<8x32xf32>
    %1385 = arith.mulf %1365, %1375 : vector<8x32xf32>
    %1386 = arith.addf %1384, %1385 : vector<8x32xf32>
    %1387 = math.tanh %1386 : vector<8x32xf32>
    %1388 = arith.mulf %1383, %1387 : vector<8x32xf32>
    %c1_i32_657 = arith.constant 1 : i32
    %1389 = arith.subi %c5_i32, %c1_i32_657 : i32
    %c0_i32_658 = arith.constant 0 : i32
    %1390 = arith.cmpi sge, %1389, %c0_i32_658 : i32
    %c8_i32_659 = arith.constant 8 : i32
    %1391 = arith.cmpi slt, %1389, %c8_i32_659 : i32
    %1392 = arith.andi %1390, %1391 : i1
    %1393 = arith.select %1392, %1388, %1140 : vector<8x32xf32>
    %1394 = arith.select %1392, %1386, %1141 : vector<8x32xf32>
    %1395 = arith.select %1392, %1388, %1142 : vector<8x32xf32>
    %c2_660 = arith.constant 2 : index
    %c0_661 = arith.constant 0 : index
    %c0_662 = arith.constant 0 : index
    %1396 = vector.load %arg2[%c2_660, %c0_661, %c0_662] : memref<5x32x128xf32, #tpu.memory_space<vmem>>, vector<1x32x128xf32>
    %1397 = vector.shape_cast %1396 : vector<1x32x128xf32> to vector<32x128xf32>
    %cst_663 = arith.constant dense<0.000000e+00> : vector<8x128xf32>
    %1398 = tpu.matmul %1142, %1397, %cst_663 {dimension_numbers = #tpu.dot_dimension_numbers<[1], [0], [0], [1], [0, 0, 1, 1], [], []>} : vector<8x32xf32>, vector<32x128xf32>, vector<8x128xf32> -> vector<8x128xf32>
    %c2_664 = arith.constant 2 : index
    %c0_665 = arith.constant 0 : index
    %c0_666 = arith.constant 0 : index
    %1399 = vector.load %arg3[%c2_664, %c0_665, %c0_666] : memref<5x32x128xf32, #tpu.memory_space<vmem>>, vector<1x32x128xf32>
    %1400 = vector.shape_cast %1399 : vector<1x32x128xf32> to vector<32x128xf32>
    %cst_667 = arith.constant dense<0.000000e+00> : vector<8x128xf32>
    %1401 = tpu.matmul %1189, %1400, %cst_667 {dimension_numbers = #tpu.dot_dimension_numbers<[1], [0], [0], [1], [0, 0, 1, 1], [], []>} : vector<8x32xf32>, vector<32x128xf32>, vector<8x128xf32> -> vector<8x128xf32>
    %1402 = arith.addf %1398, %1401 : vector<8x128xf32>
    %c2_668 = arith.constant 2 : index
    %c0_669 = arith.constant 0 : index
    %c0_670 = arith.constant 0 : index
    %1403 = vector.load %arg4[%c2_668, %c0_669, %c0_670] : memref<5x1x128xf32, #tpu.memory_space<vmem>>, vector<1x1x128xf32>
    %1404 = vector.shape_cast %1403 : vector<1x1x128xf32> to vector<1x128xf32>
    %1405 = vector.broadcast %1404 : vector<1x128xf32> to vector<8x128xf32>
    %1406 = arith.addf %1402, %1405 : vector<8x128xf32>
    %1407 = vector.extract_strided_slice %1406 {offsets = [0, 0], sizes = [8, 32], strides = [1, 1]} : vector<8x128xf32> to vector<8x32xf32>
    %cst_671 = arith.constant 5.000000e-01 : f32
    %1408 = vector.broadcast %cst_671 : f32 to vector<8x32xf32>
    %1409 = arith.mulf %1408, %1407 : vector<8x32xf32>
    %1410 = math.tanh %1409 : vector<8x32xf32>
    %cst_672 = arith.constant 5.000000e-01 : f32
    %1411 = vector.broadcast %cst_672 : f32 to vector<8x32xf32>
    %1412 = arith.mulf %1411, %1410 : vector<8x32xf32>
    %cst_673 = arith.constant 5.000000e-01 : f32
    %1413 = vector.broadcast %cst_673 : f32 to vector<8x32xf32>
    %1414 = arith.addf %1412, %1413 : vector<8x32xf32>
    %1415 = vector.extract_strided_slice %1406 {offsets = [0, 32], sizes = [8, 32], strides = [1, 1]} : vector<8x128xf32> to vector<8x32xf32>
    %cst_674 = arith.constant 5.000000e-01 : f32
    %1416 = vector.broadcast %cst_674 : f32 to vector<8x32xf32>
    %1417 = arith.mulf %1416, %1415 : vector<8x32xf32>
    %1418 = math.tanh %1417 : vector<8x32xf32>
    %cst_675 = arith.constant 5.000000e-01 : f32
    %1419 = vector.broadcast %cst_675 : f32 to vector<8x32xf32>
    %1420 = arith.mulf %1419, %1418 : vector<8x32xf32>
    %cst_676 = arith.constant 5.000000e-01 : f32
    %1421 = vector.broadcast %cst_676 : f32 to vector<8x32xf32>
    %1422 = arith.addf %1420, %1421 : vector<8x32xf32>
    %1423 = vector.extract_strided_slice %1406 {offsets = [0, 64], sizes = [8, 32], strides = [1, 1]} : vector<8x128xf32> to vector<8x32xf32>
    %1424 = math.tanh %1423 : vector<8x32xf32>
    %1425 = vector.extract_strided_slice %1406 {offsets = [0, 96], sizes = [8, 32], strides = [1, 1]} : vector<8x128xf32> to vector<8x32xf32>
    %cst_677 = arith.constant 5.000000e-01 : f32
    %1426 = vector.broadcast %cst_677 : f32 to vector<8x32xf32>
    %1427 = arith.mulf %1426, %1425 : vector<8x32xf32>
    %1428 = math.tanh %1427 : vector<8x32xf32>
    %cst_678 = arith.constant 5.000000e-01 : f32
    %1429 = vector.broadcast %cst_678 : f32 to vector<8x32xf32>
    %1430 = arith.mulf %1429, %1428 : vector<8x32xf32>
    %cst_679 = arith.constant 5.000000e-01 : f32
    %1431 = vector.broadcast %cst_679 : f32 to vector<8x32xf32>
    %1432 = arith.addf %1430, %1431 : vector<8x32xf32>
    %1433 = arith.mulf %1422, %1190 : vector<8x32xf32>
    %1434 = arith.mulf %1414, %1424 : vector<8x32xf32>
    %1435 = arith.addf %1433, %1434 : vector<8x32xf32>
    %1436 = math.tanh %1435 : vector<8x32xf32>
    %1437 = arith.mulf %1432, %1436 : vector<8x32xf32>
    %c2_i32_680 = arith.constant 2 : i32
    %1438 = arith.subi %c5_i32, %c2_i32_680 : i32
    %c0_i32_681 = arith.constant 0 : i32
    %1439 = arith.cmpi sge, %1438, %c0_i32_681 : i32
    %c8_i32_682 = arith.constant 8 : i32
    %1440 = arith.cmpi slt, %1438, %c8_i32_682 : i32
    %1441 = arith.andi %1439, %1440 : i1
    %1442 = arith.select %1441, %1437, %1189 : vector<8x32xf32>
    %1443 = arith.select %1441, %1435, %1190 : vector<8x32xf32>
    %1444 = arith.select %1441, %1437, %1191 : vector<8x32xf32>
    %c3_683 = arith.constant 3 : index
    %c0_684 = arith.constant 0 : index
    %c0_685 = arith.constant 0 : index
    %1445 = vector.load %arg2[%c3_683, %c0_684, %c0_685] : memref<5x32x128xf32, #tpu.memory_space<vmem>>, vector<1x32x128xf32>
    %1446 = vector.shape_cast %1445 : vector<1x32x128xf32> to vector<32x128xf32>
    %cst_686 = arith.constant dense<0.000000e+00> : vector<8x128xf32>
    %1447 = tpu.matmul %1191, %1446, %cst_686 {dimension_numbers = #tpu.dot_dimension_numbers<[1], [0], [0], [1], [0, 0, 1, 1], [], []>} : vector<8x32xf32>, vector<32x128xf32>, vector<8x128xf32> -> vector<8x128xf32>
    %c3_687 = arith.constant 3 : index
    %c0_688 = arith.constant 0 : index
    %c0_689 = arith.constant 0 : index
    %1448 = vector.load %arg3[%c3_687, %c0_688, %c0_689] : memref<5x32x128xf32, #tpu.memory_space<vmem>>, vector<1x32x128xf32>
    %1449 = vector.shape_cast %1448 : vector<1x32x128xf32> to vector<32x128xf32>
    %cst_690 = arith.constant dense<0.000000e+00> : vector<8x128xf32>
    %1450 = tpu.matmul %1238, %1449, %cst_690 {dimension_numbers = #tpu.dot_dimension_numbers<[1], [0], [0], [1], [0, 0, 1, 1], [], []>} : vector<8x32xf32>, vector<32x128xf32>, vector<8x128xf32> -> vector<8x128xf32>
    %1451 = arith.addf %1447, %1450 : vector<8x128xf32>
    %c3_691 = arith.constant 3 : index
    %c0_692 = arith.constant 0 : index
    %c0_693 = arith.constant 0 : index
    %1452 = vector.load %arg4[%c3_691, %c0_692, %c0_693] : memref<5x1x128xf32, #tpu.memory_space<vmem>>, vector<1x1x128xf32>
    %1453 = vector.shape_cast %1452 : vector<1x1x128xf32> to vector<1x128xf32>
    %1454 = vector.broadcast %1453 : vector<1x128xf32> to vector<8x128xf32>
    %1455 = arith.addf %1451, %1454 : vector<8x128xf32>
    %1456 = vector.extract_strided_slice %1455 {offsets = [0, 0], sizes = [8, 32], strides = [1, 1]} : vector<8x128xf32> to vector<8x32xf32>
    %cst_694 = arith.constant 5.000000e-01 : f32
    %1457 = vector.broadcast %cst_694 : f32 to vector<8x32xf32>
    %1458 = arith.mulf %1457, %1456 : vector<8x32xf32>
    %1459 = math.tanh %1458 : vector<8x32xf32>
    %cst_695 = arith.constant 5.000000e-01 : f32
    %1460 = vector.broadcast %cst_695 : f32 to vector<8x32xf32>
    %1461 = arith.mulf %1460, %1459 : vector<8x32xf32>
    %cst_696 = arith.constant 5.000000e-01 : f32
    %1462 = vector.broadcast %cst_696 : f32 to vector<8x32xf32>
    %1463 = arith.addf %1461, %1462 : vector<8x32xf32>
    %1464 = vector.extract_strided_slice %1455 {offsets = [0, 32], sizes = [8, 32], strides = [1, 1]} : vector<8x128xf32> to vector<8x32xf32>
    %cst_697 = arith.constant 5.000000e-01 : f32
    %1465 = vector.broadcast %cst_697 : f32 to vector<8x32xf32>
    %1466 = arith.mulf %1465, %1464 : vector<8x32xf32>
    %1467 = math.tanh %1466 : vector<8x32xf32>
    %cst_698 = arith.constant 5.000000e-01 : f32
    %1468 = vector.broadcast %cst_698 : f32 to vector<8x32xf32>
    %1469 = arith.mulf %1468, %1467 : vector<8x32xf32>
    %cst_699 = arith.constant 5.000000e-01 : f32
    %1470 = vector.broadcast %cst_699 : f32 to vector<8x32xf32>
    %1471 = arith.addf %1469, %1470 : vector<8x32xf32>
    %1472 = vector.extract_strided_slice %1455 {offsets = [0, 64], sizes = [8, 32], strides = [1, 1]} : vector<8x128xf32> to vector<8x32xf32>
    %1473 = math.tanh %1472 : vector<8x32xf32>
    %1474 = vector.extract_strided_slice %1455 {offsets = [0, 96], sizes = [8, 32], strides = [1, 1]} : vector<8x128xf32> to vector<8x32xf32>
    %cst_700 = arith.constant 5.000000e-01 : f32
    %1475 = vector.broadcast %cst_700 : f32 to vector<8x32xf32>
    %1476 = arith.mulf %1475, %1474 : vector<8x32xf32>
    %1477 = math.tanh %1476 : vector<8x32xf32>
    %cst_701 = arith.constant 5.000000e-01 : f32
    %1478 = vector.broadcast %cst_701 : f32 to vector<8x32xf32>
    %1479 = arith.mulf %1478, %1477 : vector<8x32xf32>
    %cst_702 = arith.constant 5.000000e-01 : f32
    %1480 = vector.broadcast %cst_702 : f32 to vector<8x32xf32>
    %1481 = arith.addf %1479, %1480 : vector<8x32xf32>
    %1482 = arith.mulf %1471, %1239 : vector<8x32xf32>
    %1483 = arith.mulf %1463, %1473 : vector<8x32xf32>
    %1484 = arith.addf %1482, %1483 : vector<8x32xf32>
    %1485 = math.tanh %1484 : vector<8x32xf32>
    %1486 = arith.mulf %1481, %1485 : vector<8x32xf32>
    %c3_i32_703 = arith.constant 3 : i32
    %1487 = arith.subi %c5_i32, %c3_i32_703 : i32
    %c0_i32_704 = arith.constant 0 : i32
    %1488 = arith.cmpi sge, %1487, %c0_i32_704 : i32
    %c8_i32_705 = arith.constant 8 : i32
    %1489 = arith.cmpi slt, %1487, %c8_i32_705 : i32
    %1490 = arith.andi %1488, %1489 : i1
    %1491 = arith.select %1490, %1486, %1238 : vector<8x32xf32>
    %1492 = arith.select %1490, %1484, %1239 : vector<8x32xf32>
    %1493 = arith.select %1490, %1486, %1240 : vector<8x32xf32>
    %c4_706 = arith.constant 4 : index
    %c0_707 = arith.constant 0 : index
    %c0_708 = arith.constant 0 : index
    %1494 = vector.load %arg2[%c4_706, %c0_707, %c0_708] : memref<5x32x128xf32, #tpu.memory_space<vmem>>, vector<1x32x128xf32>
    %1495 = vector.shape_cast %1494 : vector<1x32x128xf32> to vector<32x128xf32>
    %cst_709 = arith.constant dense<0.000000e+00> : vector<8x128xf32>
    %1496 = tpu.matmul %1240, %1495, %cst_709 {dimension_numbers = #tpu.dot_dimension_numbers<[1], [0], [0], [1], [0, 0, 1, 1], [], []>} : vector<8x32xf32>, vector<32x128xf32>, vector<8x128xf32> -> vector<8x128xf32>
    %c4_710 = arith.constant 4 : index
    %c0_711 = arith.constant 0 : index
    %c0_712 = arith.constant 0 : index
    %1497 = vector.load %arg3[%c4_710, %c0_711, %c0_712] : memref<5x32x128xf32, #tpu.memory_space<vmem>>, vector<1x32x128xf32>
    %1498 = vector.shape_cast %1497 : vector<1x32x128xf32> to vector<32x128xf32>
    %cst_713 = arith.constant dense<0.000000e+00> : vector<8x128xf32>
    %1499 = tpu.matmul %1287, %1498, %cst_713 {dimension_numbers = #tpu.dot_dimension_numbers<[1], [0], [0], [1], [0, 0, 1, 1], [], []>} : vector<8x32xf32>, vector<32x128xf32>, vector<8x128xf32> -> vector<8x128xf32>
    %1500 = arith.addf %1496, %1499 : vector<8x128xf32>
    %c4_714 = arith.constant 4 : index
    %c0_715 = arith.constant 0 : index
    %c0_716 = arith.constant 0 : index
    %1501 = vector.load %arg4[%c4_714, %c0_715, %c0_716] : memref<5x1x128xf32, #tpu.memory_space<vmem>>, vector<1x1x128xf32>
    %1502 = vector.shape_cast %1501 : vector<1x1x128xf32> to vector<1x128xf32>
    %1503 = vector.broadcast %1502 : vector<1x128xf32> to vector<8x128xf32>
    %1504 = arith.addf %1500, %1503 : vector<8x128xf32>
    %1505 = vector.extract_strided_slice %1504 {offsets = [0, 0], sizes = [8, 32], strides = [1, 1]} : vector<8x128xf32> to vector<8x32xf32>
    %cst_717 = arith.constant 5.000000e-01 : f32
    %1506 = vector.broadcast %cst_717 : f32 to vector<8x32xf32>
    %1507 = arith.mulf %1506, %1505 : vector<8x32xf32>
    %1508 = math.tanh %1507 : vector<8x32xf32>
    %cst_718 = arith.constant 5.000000e-01 : f32
    %1509 = vector.broadcast %cst_718 : f32 to vector<8x32xf32>
    %1510 = arith.mulf %1509, %1508 : vector<8x32xf32>
    %cst_719 = arith.constant 5.000000e-01 : f32
    %1511 = vector.broadcast %cst_719 : f32 to vector<8x32xf32>
    %1512 = arith.addf %1510, %1511 : vector<8x32xf32>
    %1513 = vector.extract_strided_slice %1504 {offsets = [0, 32], sizes = [8, 32], strides = [1, 1]} : vector<8x128xf32> to vector<8x32xf32>
    %cst_720 = arith.constant 5.000000e-01 : f32
    %1514 = vector.broadcast %cst_720 : f32 to vector<8x32xf32>
    %1515 = arith.mulf %1514, %1513 : vector<8x32xf32>
    %1516 = math.tanh %1515 : vector<8x32xf32>
    %cst_721 = arith.constant 5.000000e-01 : f32
    %1517 = vector.broadcast %cst_721 : f32 to vector<8x32xf32>
    %1518 = arith.mulf %1517, %1516 : vector<8x32xf32>
    %cst_722 = arith.constant 5.000000e-01 : f32
    %1519 = vector.broadcast %cst_722 : f32 to vector<8x32xf32>
    %1520 = arith.addf %1518, %1519 : vector<8x32xf32>
    %1521 = vector.extract_strided_slice %1504 {offsets = [0, 64], sizes = [8, 32], strides = [1, 1]} : vector<8x128xf32> to vector<8x32xf32>
    %1522 = math.tanh %1521 : vector<8x32xf32>
    %1523 = vector.extract_strided_slice %1504 {offsets = [0, 96], sizes = [8, 32], strides = [1, 1]} : vector<8x128xf32> to vector<8x32xf32>
    %cst_723 = arith.constant 5.000000e-01 : f32
    %1524 = vector.broadcast %cst_723 : f32 to vector<8x32xf32>
    %1525 = arith.mulf %1524, %1523 : vector<8x32xf32>
    %1526 = math.tanh %1525 : vector<8x32xf32>
    %cst_724 = arith.constant 5.000000e-01 : f32
    %1527 = vector.broadcast %cst_724 : f32 to vector<8x32xf32>
    %1528 = arith.mulf %1527, %1526 : vector<8x32xf32>
    %cst_725 = arith.constant 5.000000e-01 : f32
    %1529 = vector.broadcast %cst_725 : f32 to vector<8x32xf32>
    %1530 = arith.addf %1528, %1529 : vector<8x32xf32>
    %1531 = arith.mulf %1520, %1288 : vector<8x32xf32>
    %1532 = arith.mulf %1512, %1522 : vector<8x32xf32>
    %1533 = arith.addf %1531, %1532 : vector<8x32xf32>
    %1534 = math.tanh %1533 : vector<8x32xf32>
    %1535 = arith.mulf %1530, %1534 : vector<8x32xf32>
    %c4_i32_726 = arith.constant 4 : i32
    %1536 = arith.subi %c5_i32, %c4_i32_726 : i32
    %c0_i32_727 = arith.constant 0 : i32
    %1537 = arith.cmpi sge, %1536, %c0_i32_727 : i32
    %c8_i32_728 = arith.constant 8 : i32
    %1538 = arith.cmpi slt, %1536, %c8_i32_728 : i32
    %1539 = arith.andi %1537, %1538 : i1
    %1540 = arith.select %1539, %1535, %1287 : vector<8x32xf32>
    %1541 = arith.select %1539, %1533, %1288 : vector<8x32xf32>
    %1542 = arith.select %1539, %1535, %1289 : vector<8x32xf32>
    %c6_i32 = arith.constant 6 : i32
    %c7_i32_729 = arith.constant 7 : i32
    %1543 = arith.minsi %c6_i32, %c7_i32_729 : i32
    %1544 = arith.index_cast %1543 : i32 to index
    %c0_730 = arith.constant 0 : index
    %c0_731 = arith.constant 0 : index
    %1545 = vector.load %arg1[%1544, %c0_730, %c0_731] : memref<8x8x32xf32, #tpu.memory_space<vmem>>, vector<1x8x32xf32>
    %1546 = vector.shape_cast %1545 : vector<1x8x32xf32> to vector<8x32xf32>
    %c0_732 = arith.constant 0 : index
    %c0_733 = arith.constant 0 : index
    %c0_734 = arith.constant 0 : index
    %1547 = vector.load %arg2[%c0_732, %c0_733, %c0_734] : memref<5x32x128xf32, #tpu.memory_space<vmem>>, vector<1x32x128xf32>
    %1548 = vector.shape_cast %1547 : vector<1x32x128xf32> to vector<32x128xf32>
    %1549 = vector.extract_strided_slice %1548 {offsets = [0, 0], sizes = [1, 128], strides = [1, 1]} : vector<32x128xf32> to vector<1x128xf32>
    %1550 = vector.extract_strided_slice %1546 {offsets = [0, 0], sizes = [8, 1], strides = [1, 1]} : vector<8x32xf32> to vector<8x1xf32>
    %1551 = vector.broadcast %1550 : vector<8x1xf32> to vector<8x128xf32>
    %1552 = vector.broadcast %1549 : vector<1x128xf32> to vector<8x128xf32>
    %1553 = arith.mulf %1551, %1552 : vector<8x128xf32>
    %c0_735 = arith.constant 0 : index
    %c0_736 = arith.constant 0 : index
    %c0_737 = arith.constant 0 : index
    %1554 = vector.load %arg3[%c0_735, %c0_736, %c0_737] : memref<5x32x128xf32, #tpu.memory_space<vmem>>, vector<1x32x128xf32>
    %1555 = vector.shape_cast %1554 : vector<1x32x128xf32> to vector<32x128xf32>
    %cst_738 = arith.constant dense<0.000000e+00> : vector<8x128xf32>
    %1556 = tpu.matmul %1344, %1555, %cst_738 {dimension_numbers = #tpu.dot_dimension_numbers<[1], [0], [0], [1], [0, 0, 1, 1], [], []>} : vector<8x32xf32>, vector<32x128xf32>, vector<8x128xf32> -> vector<8x128xf32>
    %1557 = arith.addf %1553, %1556 : vector<8x128xf32>
    %c0_739 = arith.constant 0 : index
    %c0_740 = arith.constant 0 : index
    %c0_741 = arith.constant 0 : index
    %1558 = vector.load %arg4[%c0_739, %c0_740, %c0_741] : memref<5x1x128xf32, #tpu.memory_space<vmem>>, vector<1x1x128xf32>
    %1559 = vector.shape_cast %1558 : vector<1x1x128xf32> to vector<1x128xf32>
    %1560 = vector.broadcast %1559 : vector<1x128xf32> to vector<8x128xf32>
    %1561 = arith.addf %1557, %1560 : vector<8x128xf32>
    %1562 = vector.extract_strided_slice %1561 {offsets = [0, 0], sizes = [8, 32], strides = [1, 1]} : vector<8x128xf32> to vector<8x32xf32>
    %cst_742 = arith.constant 5.000000e-01 : f32
    %1563 = vector.broadcast %cst_742 : f32 to vector<8x32xf32>
    %1564 = arith.mulf %1563, %1562 : vector<8x32xf32>
    %1565 = math.tanh %1564 : vector<8x32xf32>
    %cst_743 = arith.constant 5.000000e-01 : f32
    %1566 = vector.broadcast %cst_743 : f32 to vector<8x32xf32>
    %1567 = arith.mulf %1566, %1565 : vector<8x32xf32>
    %cst_744 = arith.constant 5.000000e-01 : f32
    %1568 = vector.broadcast %cst_744 : f32 to vector<8x32xf32>
    %1569 = arith.addf %1567, %1568 : vector<8x32xf32>
    %1570 = vector.extract_strided_slice %1561 {offsets = [0, 32], sizes = [8, 32], strides = [1, 1]} : vector<8x128xf32> to vector<8x32xf32>
    %cst_745 = arith.constant 5.000000e-01 : f32
    %1571 = vector.broadcast %cst_745 : f32 to vector<8x32xf32>
    %1572 = arith.mulf %1571, %1570 : vector<8x32xf32>
    %1573 = math.tanh %1572 : vector<8x32xf32>
    %cst_746 = arith.constant 5.000000e-01 : f32
    %1574 = vector.broadcast %cst_746 : f32 to vector<8x32xf32>
    %1575 = arith.mulf %1574, %1573 : vector<8x32xf32>
    %cst_747 = arith.constant 5.000000e-01 : f32
    %1576 = vector.broadcast %cst_747 : f32 to vector<8x32xf32>
    %1577 = arith.addf %1575, %1576 : vector<8x32xf32>
    %1578 = vector.extract_strided_slice %1561 {offsets = [0, 64], sizes = [8, 32], strides = [1, 1]} : vector<8x128xf32> to vector<8x32xf32>
    %1579 = math.tanh %1578 : vector<8x32xf32>
    %1580 = vector.extract_strided_slice %1561 {offsets = [0, 96], sizes = [8, 32], strides = [1, 1]} : vector<8x128xf32> to vector<8x32xf32>
    %cst_748 = arith.constant 5.000000e-01 : f32
    %1581 = vector.broadcast %cst_748 : f32 to vector<8x32xf32>
    %1582 = arith.mulf %1581, %1580 : vector<8x32xf32>
    %1583 = math.tanh %1582 : vector<8x32xf32>
    %cst_749 = arith.constant 5.000000e-01 : f32
    %1584 = vector.broadcast %cst_749 : f32 to vector<8x32xf32>
    %1585 = arith.mulf %1584, %1583 : vector<8x32xf32>
    %cst_750 = arith.constant 5.000000e-01 : f32
    %1586 = vector.broadcast %cst_750 : f32 to vector<8x32xf32>
    %1587 = arith.addf %1585, %1586 : vector<8x32xf32>
    %1588 = arith.mulf %1577, %1345 : vector<8x32xf32>
    %1589 = arith.mulf %1569, %1579 : vector<8x32xf32>
    %1590 = arith.addf %1588, %1589 : vector<8x32xf32>
    %1591 = math.tanh %1590 : vector<8x32xf32>
    %1592 = arith.mulf %1587, %1591 : vector<8x32xf32>
    %c0_i32_751 = arith.constant 0 : i32
    %1593 = arith.subi %c6_i32, %c0_i32_751 : i32
    %c0_i32_752 = arith.constant 0 : i32
    %1594 = arith.cmpi sge, %1593, %c0_i32_752 : i32
    %c8_i32_753 = arith.constant 8 : i32
    %1595 = arith.cmpi slt, %1593, %c8_i32_753 : i32
    %1596 = arith.andi %1594, %1595 : i1
    %1597 = arith.select %1596, %1592, %1344 : vector<8x32xf32>
    %1598 = arith.select %1596, %1590, %1345 : vector<8x32xf32>
    %1599 = arith.select %1596, %1592, %1346 : vector<8x32xf32>
    %c1_754 = arith.constant 1 : index
    %c0_755 = arith.constant 0 : index
    %c0_756 = arith.constant 0 : index
    %1600 = vector.load %arg2[%c1_754, %c0_755, %c0_756] : memref<5x32x128xf32, #tpu.memory_space<vmem>>, vector<1x32x128xf32>
    %1601 = vector.shape_cast %1600 : vector<1x32x128xf32> to vector<32x128xf32>
    %cst_757 = arith.constant dense<0.000000e+00> : vector<8x128xf32>
    %1602 = tpu.matmul %1346, %1601, %cst_757 {dimension_numbers = #tpu.dot_dimension_numbers<[1], [0], [0], [1], [0, 0, 1, 1], [], []>} : vector<8x32xf32>, vector<32x128xf32>, vector<8x128xf32> -> vector<8x128xf32>
    %c1_758 = arith.constant 1 : index
    %c0_759 = arith.constant 0 : index
    %c0_760 = arith.constant 0 : index
    %1603 = vector.load %arg3[%c1_758, %c0_759, %c0_760] : memref<5x32x128xf32, #tpu.memory_space<vmem>>, vector<1x32x128xf32>
    %1604 = vector.shape_cast %1603 : vector<1x32x128xf32> to vector<32x128xf32>
    %cst_761 = arith.constant dense<0.000000e+00> : vector<8x128xf32>
    %1605 = tpu.matmul %1393, %1604, %cst_761 {dimension_numbers = #tpu.dot_dimension_numbers<[1], [0], [0], [1], [0, 0, 1, 1], [], []>} : vector<8x32xf32>, vector<32x128xf32>, vector<8x128xf32> -> vector<8x128xf32>
    %1606 = arith.addf %1602, %1605 : vector<8x128xf32>
    %c1_762 = arith.constant 1 : index
    %c0_763 = arith.constant 0 : index
    %c0_764 = arith.constant 0 : index
    %1607 = vector.load %arg4[%c1_762, %c0_763, %c0_764] : memref<5x1x128xf32, #tpu.memory_space<vmem>>, vector<1x1x128xf32>
    %1608 = vector.shape_cast %1607 : vector<1x1x128xf32> to vector<1x128xf32>
    %1609 = vector.broadcast %1608 : vector<1x128xf32> to vector<8x128xf32>
    %1610 = arith.addf %1606, %1609 : vector<8x128xf32>
    %1611 = vector.extract_strided_slice %1610 {offsets = [0, 0], sizes = [8, 32], strides = [1, 1]} : vector<8x128xf32> to vector<8x32xf32>
    %cst_765 = arith.constant 5.000000e-01 : f32
    %1612 = vector.broadcast %cst_765 : f32 to vector<8x32xf32>
    %1613 = arith.mulf %1612, %1611 : vector<8x32xf32>
    %1614 = math.tanh %1613 : vector<8x32xf32>
    %cst_766 = arith.constant 5.000000e-01 : f32
    %1615 = vector.broadcast %cst_766 : f32 to vector<8x32xf32>
    %1616 = arith.mulf %1615, %1614 : vector<8x32xf32>
    %cst_767 = arith.constant 5.000000e-01 : f32
    %1617 = vector.broadcast %cst_767 : f32 to vector<8x32xf32>
    %1618 = arith.addf %1616, %1617 : vector<8x32xf32>
    %1619 = vector.extract_strided_slice %1610 {offsets = [0, 32], sizes = [8, 32], strides = [1, 1]} : vector<8x128xf32> to vector<8x32xf32>
    %cst_768 = arith.constant 5.000000e-01 : f32
    %1620 = vector.broadcast %cst_768 : f32 to vector<8x32xf32>
    %1621 = arith.mulf %1620, %1619 : vector<8x32xf32>
    %1622 = math.tanh %1621 : vector<8x32xf32>
    %cst_769 = arith.constant 5.000000e-01 : f32
    %1623 = vector.broadcast %cst_769 : f32 to vector<8x32xf32>
    %1624 = arith.mulf %1623, %1622 : vector<8x32xf32>
    %cst_770 = arith.constant 5.000000e-01 : f32
    %1625 = vector.broadcast %cst_770 : f32 to vector<8x32xf32>
    %1626 = arith.addf %1624, %1625 : vector<8x32xf32>
    %1627 = vector.extract_strided_slice %1610 {offsets = [0, 64], sizes = [8, 32], strides = [1, 1]} : vector<8x128xf32> to vector<8x32xf32>
    %1628 = math.tanh %1627 : vector<8x32xf32>
    %1629 = vector.extract_strided_slice %1610 {offsets = [0, 96], sizes = [8, 32], strides = [1, 1]} : vector<8x128xf32> to vector<8x32xf32>
    %cst_771 = arith.constant 5.000000e-01 : f32
    %1630 = vector.broadcast %cst_771 : f32 to vector<8x32xf32>
    %1631 = arith.mulf %1630, %1629 : vector<8x32xf32>
    %1632 = math.tanh %1631 : vector<8x32xf32>
    %cst_772 = arith.constant 5.000000e-01 : f32
    %1633 = vector.broadcast %cst_772 : f32 to vector<8x32xf32>
    %1634 = arith.mulf %1633, %1632 : vector<8x32xf32>
    %cst_773 = arith.constant 5.000000e-01 : f32
    %1635 = vector.broadcast %cst_773 : f32 to vector<8x32xf32>
    %1636 = arith.addf %1634, %1635 : vector<8x32xf32>
    %1637 = arith.mulf %1626, %1394 : vector<8x32xf32>
    %1638 = arith.mulf %1618, %1628 : vector<8x32xf32>
    %1639 = arith.addf %1637, %1638 : vector<8x32xf32>
    %1640 = math.tanh %1639 : vector<8x32xf32>
    %1641 = arith.mulf %1636, %1640 : vector<8x32xf32>
    %c1_i32_774 = arith.constant 1 : i32
    %1642 = arith.subi %c6_i32, %c1_i32_774 : i32
    %c0_i32_775 = arith.constant 0 : i32
    %1643 = arith.cmpi sge, %1642, %c0_i32_775 : i32
    %c8_i32_776 = arith.constant 8 : i32
    %1644 = arith.cmpi slt, %1642, %c8_i32_776 : i32
    %1645 = arith.andi %1643, %1644 : i1
    %1646 = arith.select %1645, %1641, %1393 : vector<8x32xf32>
    %1647 = arith.select %1645, %1639, %1394 : vector<8x32xf32>
    %1648 = arith.select %1645, %1641, %1395 : vector<8x32xf32>
    %c2_777 = arith.constant 2 : index
    %c0_778 = arith.constant 0 : index
    %c0_779 = arith.constant 0 : index
    %1649 = vector.load %arg2[%c2_777, %c0_778, %c0_779] : memref<5x32x128xf32, #tpu.memory_space<vmem>>, vector<1x32x128xf32>
    %1650 = vector.shape_cast %1649 : vector<1x32x128xf32> to vector<32x128xf32>
    %cst_780 = arith.constant dense<0.000000e+00> : vector<8x128xf32>
    %1651 = tpu.matmul %1395, %1650, %cst_780 {dimension_numbers = #tpu.dot_dimension_numbers<[1], [0], [0], [1], [0, 0, 1, 1], [], []>} : vector<8x32xf32>, vector<32x128xf32>, vector<8x128xf32> -> vector<8x128xf32>
    %c2_781 = arith.constant 2 : index
    %c0_782 = arith.constant 0 : index
    %c0_783 = arith.constant 0 : index
    %1652 = vector.load %arg3[%c2_781, %c0_782, %c0_783] : memref<5x32x128xf32, #tpu.memory_space<vmem>>, vector<1x32x128xf32>
    %1653 = vector.shape_cast %1652 : vector<1x32x128xf32> to vector<32x128xf32>
    %cst_784 = arith.constant dense<0.000000e+00> : vector<8x128xf32>
    %1654 = tpu.matmul %1442, %1653, %cst_784 {dimension_numbers = #tpu.dot_dimension_numbers<[1], [0], [0], [1], [0, 0, 1, 1], [], []>} : vector<8x32xf32>, vector<32x128xf32>, vector<8x128xf32> -> vector<8x128xf32>
    %1655 = arith.addf %1651, %1654 : vector<8x128xf32>
    %c2_785 = arith.constant 2 : index
    %c0_786 = arith.constant 0 : index
    %c0_787 = arith.constant 0 : index
    %1656 = vector.load %arg4[%c2_785, %c0_786, %c0_787] : memref<5x1x128xf32, #tpu.memory_space<vmem>>, vector<1x1x128xf32>
    %1657 = vector.shape_cast %1656 : vector<1x1x128xf32> to vector<1x128xf32>
    %1658 = vector.broadcast %1657 : vector<1x128xf32> to vector<8x128xf32>
    %1659 = arith.addf %1655, %1658 : vector<8x128xf32>
    %1660 = vector.extract_strided_slice %1659 {offsets = [0, 0], sizes = [8, 32], strides = [1, 1]} : vector<8x128xf32> to vector<8x32xf32>
    %cst_788 = arith.constant 5.000000e-01 : f32
    %1661 = vector.broadcast %cst_788 : f32 to vector<8x32xf32>
    %1662 = arith.mulf %1661, %1660 : vector<8x32xf32>
    %1663 = math.tanh %1662 : vector<8x32xf32>
    %cst_789 = arith.constant 5.000000e-01 : f32
    %1664 = vector.broadcast %cst_789 : f32 to vector<8x32xf32>
    %1665 = arith.mulf %1664, %1663 : vector<8x32xf32>
    %cst_790 = arith.constant 5.000000e-01 : f32
    %1666 = vector.broadcast %cst_790 : f32 to vector<8x32xf32>
    %1667 = arith.addf %1665, %1666 : vector<8x32xf32>
    %1668 = vector.extract_strided_slice %1659 {offsets = [0, 32], sizes = [8, 32], strides = [1, 1]} : vector<8x128xf32> to vector<8x32xf32>
    %cst_791 = arith.constant 5.000000e-01 : f32
    %1669 = vector.broadcast %cst_791 : f32 to vector<8x32xf32>
    %1670 = arith.mulf %1669, %1668 : vector<8x32xf32>
    %1671 = math.tanh %1670 : vector<8x32xf32>
    %cst_792 = arith.constant 5.000000e-01 : f32
    %1672 = vector.broadcast %cst_792 : f32 to vector<8x32xf32>
    %1673 = arith.mulf %1672, %1671 : vector<8x32xf32>
    %cst_793 = arith.constant 5.000000e-01 : f32
    %1674 = vector.broadcast %cst_793 : f32 to vector<8x32xf32>
    %1675 = arith.addf %1673, %1674 : vector<8x32xf32>
    %1676 = vector.extract_strided_slice %1659 {offsets = [0, 64], sizes = [8, 32], strides = [1, 1]} : vector<8x128xf32> to vector<8x32xf32>
    %1677 = math.tanh %1676 : vector<8x32xf32>
    %1678 = vector.extract_strided_slice %1659 {offsets = [0, 96], sizes = [8, 32], strides = [1, 1]} : vector<8x128xf32> to vector<8x32xf32>
    %cst_794 = arith.constant 5.000000e-01 : f32
    %1679 = vector.broadcast %cst_794 : f32 to vector<8x32xf32>
    %1680 = arith.mulf %1679, %1678 : vector<8x32xf32>
    %1681 = math.tanh %1680 : vector<8x32xf32>
    %cst_795 = arith.constant 5.000000e-01 : f32
    %1682 = vector.broadcast %cst_795 : f32 to vector<8x32xf32>
    %1683 = arith.mulf %1682, %1681 : vector<8x32xf32>
    %cst_796 = arith.constant 5.000000e-01 : f32
    %1684 = vector.broadcast %cst_796 : f32 to vector<8x32xf32>
    %1685 = arith.addf %1683, %1684 : vector<8x32xf32>
    %1686 = arith.mulf %1675, %1443 : vector<8x32xf32>
    %1687 = arith.mulf %1667, %1677 : vector<8x32xf32>
    %1688 = arith.addf %1686, %1687 : vector<8x32xf32>
    %1689 = math.tanh %1688 : vector<8x32xf32>
    %1690 = arith.mulf %1685, %1689 : vector<8x32xf32>
    %c2_i32_797 = arith.constant 2 : i32
    %1691 = arith.subi %c6_i32, %c2_i32_797 : i32
    %c0_i32_798 = arith.constant 0 : i32
    %1692 = arith.cmpi sge, %1691, %c0_i32_798 : i32
    %c8_i32_799 = arith.constant 8 : i32
    %1693 = arith.cmpi slt, %1691, %c8_i32_799 : i32
    %1694 = arith.andi %1692, %1693 : i1
    %1695 = arith.select %1694, %1690, %1442 : vector<8x32xf32>
    %1696 = arith.select %1694, %1688, %1443 : vector<8x32xf32>
    %1697 = arith.select %1694, %1690, %1444 : vector<8x32xf32>
    %c3_800 = arith.constant 3 : index
    %c0_801 = arith.constant 0 : index
    %c0_802 = arith.constant 0 : index
    %1698 = vector.load %arg2[%c3_800, %c0_801, %c0_802] : memref<5x32x128xf32, #tpu.memory_space<vmem>>, vector<1x32x128xf32>
    %1699 = vector.shape_cast %1698 : vector<1x32x128xf32> to vector<32x128xf32>
    %cst_803 = arith.constant dense<0.000000e+00> : vector<8x128xf32>
    %1700 = tpu.matmul %1444, %1699, %cst_803 {dimension_numbers = #tpu.dot_dimension_numbers<[1], [0], [0], [1], [0, 0, 1, 1], [], []>} : vector<8x32xf32>, vector<32x128xf32>, vector<8x128xf32> -> vector<8x128xf32>
    %c3_804 = arith.constant 3 : index
    %c0_805 = arith.constant 0 : index
    %c0_806 = arith.constant 0 : index
    %1701 = vector.load %arg3[%c3_804, %c0_805, %c0_806] : memref<5x32x128xf32, #tpu.memory_space<vmem>>, vector<1x32x128xf32>
    %1702 = vector.shape_cast %1701 : vector<1x32x128xf32> to vector<32x128xf32>
    %cst_807 = arith.constant dense<0.000000e+00> : vector<8x128xf32>
    %1703 = tpu.matmul %1491, %1702, %cst_807 {dimension_numbers = #tpu.dot_dimension_numbers<[1], [0], [0], [1], [0, 0, 1, 1], [], []>} : vector<8x32xf32>, vector<32x128xf32>, vector<8x128xf32> -> vector<8x128xf32>
    %1704 = arith.addf %1700, %1703 : vector<8x128xf32>
    %c3_808 = arith.constant 3 : index
    %c0_809 = arith.constant 0 : index
    %c0_810 = arith.constant 0 : index
    %1705 = vector.load %arg4[%c3_808, %c0_809, %c0_810] : memref<5x1x128xf32, #tpu.memory_space<vmem>>, vector<1x1x128xf32>
    %1706 = vector.shape_cast %1705 : vector<1x1x128xf32> to vector<1x128xf32>
    %1707 = vector.broadcast %1706 : vector<1x128xf32> to vector<8x128xf32>
    %1708 = arith.addf %1704, %1707 : vector<8x128xf32>
    %1709 = vector.extract_strided_slice %1708 {offsets = [0, 0], sizes = [8, 32], strides = [1, 1]} : vector<8x128xf32> to vector<8x32xf32>
    %cst_811 = arith.constant 5.000000e-01 : f32
    %1710 = vector.broadcast %cst_811 : f32 to vector<8x32xf32>
    %1711 = arith.mulf %1710, %1709 : vector<8x32xf32>
    %1712 = math.tanh %1711 : vector<8x32xf32>
    %cst_812 = arith.constant 5.000000e-01 : f32
    %1713 = vector.broadcast %cst_812 : f32 to vector<8x32xf32>
    %1714 = arith.mulf %1713, %1712 : vector<8x32xf32>
    %cst_813 = arith.constant 5.000000e-01 : f32
    %1715 = vector.broadcast %cst_813 : f32 to vector<8x32xf32>
    %1716 = arith.addf %1714, %1715 : vector<8x32xf32>
    %1717 = vector.extract_strided_slice %1708 {offsets = [0, 32], sizes = [8, 32], strides = [1, 1]} : vector<8x128xf32> to vector<8x32xf32>
    %cst_814 = arith.constant 5.000000e-01 : f32
    %1718 = vector.broadcast %cst_814 : f32 to vector<8x32xf32>
    %1719 = arith.mulf %1718, %1717 : vector<8x32xf32>
    %1720 = math.tanh %1719 : vector<8x32xf32>
    %cst_815 = arith.constant 5.000000e-01 : f32
    %1721 = vector.broadcast %cst_815 : f32 to vector<8x32xf32>
    %1722 = arith.mulf %1721, %1720 : vector<8x32xf32>
    %cst_816 = arith.constant 5.000000e-01 : f32
    %1723 = vector.broadcast %cst_816 : f32 to vector<8x32xf32>
    %1724 = arith.addf %1722, %1723 : vector<8x32xf32>
    %1725 = vector.extract_strided_slice %1708 {offsets = [0, 64], sizes = [8, 32], strides = [1, 1]} : vector<8x128xf32> to vector<8x32xf32>
    %1726 = math.tanh %1725 : vector<8x32xf32>
    %1727 = vector.extract_strided_slice %1708 {offsets = [0, 96], sizes = [8, 32], strides = [1, 1]} : vector<8x128xf32> to vector<8x32xf32>
    %cst_817 = arith.constant 5.000000e-01 : f32
    %1728 = vector.broadcast %cst_817 : f32 to vector<8x32xf32>
    %1729 = arith.mulf %1728, %1727 : vector<8x32xf32>
    %1730 = math.tanh %1729 : vector<8x32xf32>
    %cst_818 = arith.constant 5.000000e-01 : f32
    %1731 = vector.broadcast %cst_818 : f32 to vector<8x32xf32>
    %1732 = arith.mulf %1731, %1730 : vector<8x32xf32>
    %cst_819 = arith.constant 5.000000e-01 : f32
    %1733 = vector.broadcast %cst_819 : f32 to vector<8x32xf32>
    %1734 = arith.addf %1732, %1733 : vector<8x32xf32>
    %1735 = arith.mulf %1724, %1492 : vector<8x32xf32>
    %1736 = arith.mulf %1716, %1726 : vector<8x32xf32>
    %1737 = arith.addf %1735, %1736 : vector<8x32xf32>
    %1738 = math.tanh %1737 : vector<8x32xf32>
    %1739 = arith.mulf %1734, %1738 : vector<8x32xf32>
    %c3_i32_820 = arith.constant 3 : i32
    %1740 = arith.subi %c6_i32, %c3_i32_820 : i32
    %c0_i32_821 = arith.constant 0 : i32
    %1741 = arith.cmpi sge, %1740, %c0_i32_821 : i32
    %c8_i32_822 = arith.constant 8 : i32
    %1742 = arith.cmpi slt, %1740, %c8_i32_822 : i32
    %1743 = arith.andi %1741, %1742 : i1
    %1744 = arith.select %1743, %1739, %1491 : vector<8x32xf32>
    %1745 = arith.select %1743, %1737, %1492 : vector<8x32xf32>
    %1746 = arith.select %1743, %1739, %1493 : vector<8x32xf32>
    %c4_823 = arith.constant 4 : index
    %c0_824 = arith.constant 0 : index
    %c0_825 = arith.constant 0 : index
    %1747 = vector.load %arg2[%c4_823, %c0_824, %c0_825] : memref<5x32x128xf32, #tpu.memory_space<vmem>>, vector<1x32x128xf32>
    %1748 = vector.shape_cast %1747 : vector<1x32x128xf32> to vector<32x128xf32>
    %cst_826 = arith.constant dense<0.000000e+00> : vector<8x128xf32>
    %1749 = tpu.matmul %1493, %1748, %cst_826 {dimension_numbers = #tpu.dot_dimension_numbers<[1], [0], [0], [1], [0, 0, 1, 1], [], []>} : vector<8x32xf32>, vector<32x128xf32>, vector<8x128xf32> -> vector<8x128xf32>
    %c4_827 = arith.constant 4 : index
    %c0_828 = arith.constant 0 : index
    %c0_829 = arith.constant 0 : index
    %1750 = vector.load %arg3[%c4_827, %c0_828, %c0_829] : memref<5x32x128xf32, #tpu.memory_space<vmem>>, vector<1x32x128xf32>
    %1751 = vector.shape_cast %1750 : vector<1x32x128xf32> to vector<32x128xf32>
    %cst_830 = arith.constant dense<0.000000e+00> : vector<8x128xf32>
    %1752 = tpu.matmul %1540, %1751, %cst_830 {dimension_numbers = #tpu.dot_dimension_numbers<[1], [0], [0], [1], [0, 0, 1, 1], [], []>} : vector<8x32xf32>, vector<32x128xf32>, vector<8x128xf32> -> vector<8x128xf32>
    %1753 = arith.addf %1749, %1752 : vector<8x128xf32>
    %c4_831 = arith.constant 4 : index
    %c0_832 = arith.constant 0 : index
    %c0_833 = arith.constant 0 : index
    %1754 = vector.load %arg4[%c4_831, %c0_832, %c0_833] : memref<5x1x128xf32, #tpu.memory_space<vmem>>, vector<1x1x128xf32>
    %1755 = vector.shape_cast %1754 : vector<1x1x128xf32> to vector<1x128xf32>
    %1756 = vector.broadcast %1755 : vector<1x128xf32> to vector<8x128xf32>
    %1757 = arith.addf %1753, %1756 : vector<8x128xf32>
    %1758 = vector.extract_strided_slice %1757 {offsets = [0, 0], sizes = [8, 32], strides = [1, 1]} : vector<8x128xf32> to vector<8x32xf32>
    %cst_834 = arith.constant 5.000000e-01 : f32
    %1759 = vector.broadcast %cst_834 : f32 to vector<8x32xf32>
    %1760 = arith.mulf %1759, %1758 : vector<8x32xf32>
    %1761 = math.tanh %1760 : vector<8x32xf32>
    %cst_835 = arith.constant 5.000000e-01 : f32
    %1762 = vector.broadcast %cst_835 : f32 to vector<8x32xf32>
    %1763 = arith.mulf %1762, %1761 : vector<8x32xf32>
    %cst_836 = arith.constant 5.000000e-01 : f32
    %1764 = vector.broadcast %cst_836 : f32 to vector<8x32xf32>
    %1765 = arith.addf %1763, %1764 : vector<8x32xf32>
    %1766 = vector.extract_strided_slice %1757 {offsets = [0, 32], sizes = [8, 32], strides = [1, 1]} : vector<8x128xf32> to vector<8x32xf32>
    %cst_837 = arith.constant 5.000000e-01 : f32
    %1767 = vector.broadcast %cst_837 : f32 to vector<8x32xf32>
    %1768 = arith.mulf %1767, %1766 : vector<8x32xf32>
    %1769 = math.tanh %1768 : vector<8x32xf32>
    %cst_838 = arith.constant 5.000000e-01 : f32
    %1770 = vector.broadcast %cst_838 : f32 to vector<8x32xf32>
    %1771 = arith.mulf %1770, %1769 : vector<8x32xf32>
    %cst_839 = arith.constant 5.000000e-01 : f32
    %1772 = vector.broadcast %cst_839 : f32 to vector<8x32xf32>
    %1773 = arith.addf %1771, %1772 : vector<8x32xf32>
    %1774 = vector.extract_strided_slice %1757 {offsets = [0, 64], sizes = [8, 32], strides = [1, 1]} : vector<8x128xf32> to vector<8x32xf32>
    %1775 = math.tanh %1774 : vector<8x32xf32>
    %1776 = vector.extract_strided_slice %1757 {offsets = [0, 96], sizes = [8, 32], strides = [1, 1]} : vector<8x128xf32> to vector<8x32xf32>
    %cst_840 = arith.constant 5.000000e-01 : f32
    %1777 = vector.broadcast %cst_840 : f32 to vector<8x32xf32>
    %1778 = arith.mulf %1777, %1776 : vector<8x32xf32>
    %1779 = math.tanh %1778 : vector<8x32xf32>
    %cst_841 = arith.constant 5.000000e-01 : f32
    %1780 = vector.broadcast %cst_841 : f32 to vector<8x32xf32>
    %1781 = arith.mulf %1780, %1779 : vector<8x32xf32>
    %cst_842 = arith.constant 5.000000e-01 : f32
    %1782 = vector.broadcast %cst_842 : f32 to vector<8x32xf32>
    %1783 = arith.addf %1781, %1782 : vector<8x32xf32>
    %1784 = arith.mulf %1773, %1541 : vector<8x32xf32>
    %1785 = arith.mulf %1765, %1775 : vector<8x32xf32>
    %1786 = arith.addf %1784, %1785 : vector<8x32xf32>
    %1787 = math.tanh %1786 : vector<8x32xf32>
    %1788 = arith.mulf %1783, %1787 : vector<8x32xf32>
    %c4_i32_843 = arith.constant 4 : i32
    %1789 = arith.subi %c6_i32, %c4_i32_843 : i32
    %c0_i32_844 = arith.constant 0 : i32
    %1790 = arith.cmpi sge, %1789, %c0_i32_844 : i32
    %c8_i32_845 = arith.constant 8 : i32
    %1791 = arith.cmpi slt, %1789, %c8_i32_845 : i32
    %1792 = arith.andi %1790, %1791 : i1
    %1793 = arith.select %1792, %1788, %1540 : vector<8x32xf32>
    %1794 = arith.select %1792, %1786, %1541 : vector<8x32xf32>
    %1795 = arith.select %1792, %1788, %1542 : vector<8x32xf32>
    %c7_i32_846 = arith.constant 7 : i32
    %c7_i32_847 = arith.constant 7 : i32
    %1796 = arith.minsi %c7_i32_846, %c7_i32_847 : i32
    %1797 = arith.index_cast %1796 : i32 to index
    %c0_848 = arith.constant 0 : index
    %c0_849 = arith.constant 0 : index
    %1798 = vector.load %arg1[%1797, %c0_848, %c0_849] : memref<8x8x32xf32, #tpu.memory_space<vmem>>, vector<1x8x32xf32>
    %1799 = vector.shape_cast %1798 : vector<1x8x32xf32> to vector<8x32xf32>
    %c0_850 = arith.constant 0 : index
    %c0_851 = arith.constant 0 : index
    %c0_852 = arith.constant 0 : index
    %1800 = vector.load %arg2[%c0_850, %c0_851, %c0_852] : memref<5x32x128xf32, #tpu.memory_space<vmem>>, vector<1x32x128xf32>
    %1801 = vector.shape_cast %1800 : vector<1x32x128xf32> to vector<32x128xf32>
    %1802 = vector.extract_strided_slice %1801 {offsets = [0, 0], sizes = [1, 128], strides = [1, 1]} : vector<32x128xf32> to vector<1x128xf32>
    %1803 = vector.extract_strided_slice %1799 {offsets = [0, 0], sizes = [8, 1], strides = [1, 1]} : vector<8x32xf32> to vector<8x1xf32>
    %1804 = vector.broadcast %1803 : vector<8x1xf32> to vector<8x128xf32>
    %1805 = vector.broadcast %1802 : vector<1x128xf32> to vector<8x128xf32>
    %1806 = arith.mulf %1804, %1805 : vector<8x128xf32>
    %c0_853 = arith.constant 0 : index
    %c0_854 = arith.constant 0 : index
    %c0_855 = arith.constant 0 : index
    %1807 = vector.load %arg3[%c0_853, %c0_854, %c0_855] : memref<5x32x128xf32, #tpu.memory_space<vmem>>, vector<1x32x128xf32>
    %1808 = vector.shape_cast %1807 : vector<1x32x128xf32> to vector<32x128xf32>
    %cst_856 = arith.constant dense<0.000000e+00> : vector<8x128xf32>
    %1809 = tpu.matmul %1597, %1808, %cst_856 {dimension_numbers = #tpu.dot_dimension_numbers<[1], [0], [0], [1], [0, 0, 1, 1], [], []>} : vector<8x32xf32>, vector<32x128xf32>, vector<8x128xf32> -> vector<8x128xf32>
    %1810 = arith.addf %1806, %1809 : vector<8x128xf32>
    %c0_857 = arith.constant 0 : index
    %c0_858 = arith.constant 0 : index
    %c0_859 = arith.constant 0 : index
    %1811 = vector.load %arg4[%c0_857, %c0_858, %c0_859] : memref<5x1x128xf32, #tpu.memory_space<vmem>>, vector<1x1x128xf32>
    %1812 = vector.shape_cast %1811 : vector<1x1x128xf32> to vector<1x128xf32>
    %1813 = vector.broadcast %1812 : vector<1x128xf32> to vector<8x128xf32>
    %1814 = arith.addf %1810, %1813 : vector<8x128xf32>
    %1815 = vector.extract_strided_slice %1814 {offsets = [0, 0], sizes = [8, 32], strides = [1, 1]} : vector<8x128xf32> to vector<8x32xf32>
    %cst_860 = arith.constant 5.000000e-01 : f32
    %1816 = vector.broadcast %cst_860 : f32 to vector<8x32xf32>
    %1817 = arith.mulf %1816, %1815 : vector<8x32xf32>
    %1818 = math.tanh %1817 : vector<8x32xf32>
    %cst_861 = arith.constant 5.000000e-01 : f32
    %1819 = vector.broadcast %cst_861 : f32 to vector<8x32xf32>
    %1820 = arith.mulf %1819, %1818 : vector<8x32xf32>
    %cst_862 = arith.constant 5.000000e-01 : f32
    %1821 = vector.broadcast %cst_862 : f32 to vector<8x32xf32>
    %1822 = arith.addf %1820, %1821 : vector<8x32xf32>
    %1823 = vector.extract_strided_slice %1814 {offsets = [0, 32], sizes = [8, 32], strides = [1, 1]} : vector<8x128xf32> to vector<8x32xf32>
    %cst_863 = arith.constant 5.000000e-01 : f32
    %1824 = vector.broadcast %cst_863 : f32 to vector<8x32xf32>
    %1825 = arith.mulf %1824, %1823 : vector<8x32xf32>
    %1826 = math.tanh %1825 : vector<8x32xf32>
    %cst_864 = arith.constant 5.000000e-01 : f32
    %1827 = vector.broadcast %cst_864 : f32 to vector<8x32xf32>
    %1828 = arith.mulf %1827, %1826 : vector<8x32xf32>
    %cst_865 = arith.constant 5.000000e-01 : f32
    %1829 = vector.broadcast %cst_865 : f32 to vector<8x32xf32>
    %1830 = arith.addf %1828, %1829 : vector<8x32xf32>
    %1831 = vector.extract_strided_slice %1814 {offsets = [0, 64], sizes = [8, 32], strides = [1, 1]} : vector<8x128xf32> to vector<8x32xf32>
    %1832 = math.tanh %1831 : vector<8x32xf32>
    %1833 = vector.extract_strided_slice %1814 {offsets = [0, 96], sizes = [8, 32], strides = [1, 1]} : vector<8x128xf32> to vector<8x32xf32>
    %cst_866 = arith.constant 5.000000e-01 : f32
    %1834 = vector.broadcast %cst_866 : f32 to vector<8x32xf32>
    %1835 = arith.mulf %1834, %1833 : vector<8x32xf32>
    %1836 = math.tanh %1835 : vector<8x32xf32>
    %cst_867 = arith.constant 5.000000e-01 : f32
    %1837 = vector.broadcast %cst_867 : f32 to vector<8x32xf32>
    %1838 = arith.mulf %1837, %1836 : vector<8x32xf32>
    %cst_868 = arith.constant 5.000000e-01 : f32
    %1839 = vector.broadcast %cst_868 : f32 to vector<8x32xf32>
    %1840 = arith.addf %1838, %1839 : vector<8x32xf32>
    %1841 = arith.mulf %1830, %1598 : vector<8x32xf32>
    %1842 = arith.mulf %1822, %1832 : vector<8x32xf32>
    %1843 = arith.addf %1841, %1842 : vector<8x32xf32>
    %1844 = math.tanh %1843 : vector<8x32xf32>
    %1845 = arith.mulf %1840, %1844 : vector<8x32xf32>
    %c0_i32_869 = arith.constant 0 : i32
    %1846 = arith.subi %c7_i32_846, %c0_i32_869 : i32
    %c0_i32_870 = arith.constant 0 : i32
    %1847 = arith.cmpi sge, %1846, %c0_i32_870 : i32
    %c8_i32_871 = arith.constant 8 : i32
    %1848 = arith.cmpi slt, %1846, %c8_i32_871 : i32
    %1849 = arith.andi %1847, %1848 : i1
    %1850 = arith.select %1849, %1845, %1597 : vector<8x32xf32>
    %1851 = arith.select %1849, %1843, %1598 : vector<8x32xf32>
    %1852 = arith.select %1849, %1845, %1599 : vector<8x32xf32>
    %c1_872 = arith.constant 1 : index
    %c0_873 = arith.constant 0 : index
    %c0_874 = arith.constant 0 : index
    %1853 = vector.load %arg2[%c1_872, %c0_873, %c0_874] : memref<5x32x128xf32, #tpu.memory_space<vmem>>, vector<1x32x128xf32>
    %1854 = vector.shape_cast %1853 : vector<1x32x128xf32> to vector<32x128xf32>
    %cst_875 = arith.constant dense<0.000000e+00> : vector<8x128xf32>
    %1855 = tpu.matmul %1599, %1854, %cst_875 {dimension_numbers = #tpu.dot_dimension_numbers<[1], [0], [0], [1], [0, 0, 1, 1], [], []>} : vector<8x32xf32>, vector<32x128xf32>, vector<8x128xf32> -> vector<8x128xf32>
    %c1_876 = arith.constant 1 : index
    %c0_877 = arith.constant 0 : index
    %c0_878 = arith.constant 0 : index
    %1856 = vector.load %arg3[%c1_876, %c0_877, %c0_878] : memref<5x32x128xf32, #tpu.memory_space<vmem>>, vector<1x32x128xf32>
    %1857 = vector.shape_cast %1856 : vector<1x32x128xf32> to vector<32x128xf32>
    %cst_879 = arith.constant dense<0.000000e+00> : vector<8x128xf32>
    %1858 = tpu.matmul %1646, %1857, %cst_879 {dimension_numbers = #tpu.dot_dimension_numbers<[1], [0], [0], [1], [0, 0, 1, 1], [], []>} : vector<8x32xf32>, vector<32x128xf32>, vector<8x128xf32> -> vector<8x128xf32>
    %1859 = arith.addf %1855, %1858 : vector<8x128xf32>
    %c1_880 = arith.constant 1 : index
    %c0_881 = arith.constant 0 : index
    %c0_882 = arith.constant 0 : index
    %1860 = vector.load %arg4[%c1_880, %c0_881, %c0_882] : memref<5x1x128xf32, #tpu.memory_space<vmem>>, vector<1x1x128xf32>
    %1861 = vector.shape_cast %1860 : vector<1x1x128xf32> to vector<1x128xf32>
    %1862 = vector.broadcast %1861 : vector<1x128xf32> to vector<8x128xf32>
    %1863 = arith.addf %1859, %1862 : vector<8x128xf32>
    %1864 = vector.extract_strided_slice %1863 {offsets = [0, 0], sizes = [8, 32], strides = [1, 1]} : vector<8x128xf32> to vector<8x32xf32>
    %cst_883 = arith.constant 5.000000e-01 : f32
    %1865 = vector.broadcast %cst_883 : f32 to vector<8x32xf32>
    %1866 = arith.mulf %1865, %1864 : vector<8x32xf32>
    %1867 = math.tanh %1866 : vector<8x32xf32>
    %cst_884 = arith.constant 5.000000e-01 : f32
    %1868 = vector.broadcast %cst_884 : f32 to vector<8x32xf32>
    %1869 = arith.mulf %1868, %1867 : vector<8x32xf32>
    %cst_885 = arith.constant 5.000000e-01 : f32
    %1870 = vector.broadcast %cst_885 : f32 to vector<8x32xf32>
    %1871 = arith.addf %1869, %1870 : vector<8x32xf32>
    %1872 = vector.extract_strided_slice %1863 {offsets = [0, 32], sizes = [8, 32], strides = [1, 1]} : vector<8x128xf32> to vector<8x32xf32>
    %cst_886 = arith.constant 5.000000e-01 : f32
    %1873 = vector.broadcast %cst_886 : f32 to vector<8x32xf32>
    %1874 = arith.mulf %1873, %1872 : vector<8x32xf32>
    %1875 = math.tanh %1874 : vector<8x32xf32>
    %cst_887 = arith.constant 5.000000e-01 : f32
    %1876 = vector.broadcast %cst_887 : f32 to vector<8x32xf32>
    %1877 = arith.mulf %1876, %1875 : vector<8x32xf32>
    %cst_888 = arith.constant 5.000000e-01 : f32
    %1878 = vector.broadcast %cst_888 : f32 to vector<8x32xf32>
    %1879 = arith.addf %1877, %1878 : vector<8x32xf32>
    %1880 = vector.extract_strided_slice %1863 {offsets = [0, 64], sizes = [8, 32], strides = [1, 1]} : vector<8x128xf32> to vector<8x32xf32>
    %1881 = math.tanh %1880 : vector<8x32xf32>
    %1882 = vector.extract_strided_slice %1863 {offsets = [0, 96], sizes = [8, 32], strides = [1, 1]} : vector<8x128xf32> to vector<8x32xf32>
    %cst_889 = arith.constant 5.000000e-01 : f32
    %1883 = vector.broadcast %cst_889 : f32 to vector<8x32xf32>
    %1884 = arith.mulf %1883, %1882 : vector<8x32xf32>
    %1885 = math.tanh %1884 : vector<8x32xf32>
    %cst_890 = arith.constant 5.000000e-01 : f32
    %1886 = vector.broadcast %cst_890 : f32 to vector<8x32xf32>
    %1887 = arith.mulf %1886, %1885 : vector<8x32xf32>
    %cst_891 = arith.constant 5.000000e-01 : f32
    %1888 = vector.broadcast %cst_891 : f32 to vector<8x32xf32>
    %1889 = arith.addf %1887, %1888 : vector<8x32xf32>
    %1890 = arith.mulf %1879, %1647 : vector<8x32xf32>
    %1891 = arith.mulf %1871, %1881 : vector<8x32xf32>
    %1892 = arith.addf %1890, %1891 : vector<8x32xf32>
    %1893 = math.tanh %1892 : vector<8x32xf32>
    %1894 = arith.mulf %1889, %1893 : vector<8x32xf32>
    %c1_i32_892 = arith.constant 1 : i32
    %1895 = arith.subi %c7_i32_846, %c1_i32_892 : i32
    %c0_i32_893 = arith.constant 0 : i32
    %1896 = arith.cmpi sge, %1895, %c0_i32_893 : i32
    %c8_i32_894 = arith.constant 8 : i32
    %1897 = arith.cmpi slt, %1895, %c8_i32_894 : i32
    %1898 = arith.andi %1896, %1897 : i1
    %1899 = arith.select %1898, %1894, %1646 : vector<8x32xf32>
    %1900 = arith.select %1898, %1892, %1647 : vector<8x32xf32>
    %1901 = arith.select %1898, %1894, %1648 : vector<8x32xf32>
    %c2_895 = arith.constant 2 : index
    %c0_896 = arith.constant 0 : index
    %c0_897 = arith.constant 0 : index
    %1902 = vector.load %arg2[%c2_895, %c0_896, %c0_897] : memref<5x32x128xf32, #tpu.memory_space<vmem>>, vector<1x32x128xf32>
    %1903 = vector.shape_cast %1902 : vector<1x32x128xf32> to vector<32x128xf32>
    %cst_898 = arith.constant dense<0.000000e+00> : vector<8x128xf32>
    %1904 = tpu.matmul %1648, %1903, %cst_898 {dimension_numbers = #tpu.dot_dimension_numbers<[1], [0], [0], [1], [0, 0, 1, 1], [], []>} : vector<8x32xf32>, vector<32x128xf32>, vector<8x128xf32> -> vector<8x128xf32>
    %c2_899 = arith.constant 2 : index
    %c0_900 = arith.constant 0 : index
    %c0_901 = arith.constant 0 : index
    %1905 = vector.load %arg3[%c2_899, %c0_900, %c0_901] : memref<5x32x128xf32, #tpu.memory_space<vmem>>, vector<1x32x128xf32>
    %1906 = vector.shape_cast %1905 : vector<1x32x128xf32> to vector<32x128xf32>
    %cst_902 = arith.constant dense<0.000000e+00> : vector<8x128xf32>
    %1907 = tpu.matmul %1695, %1906, %cst_902 {dimension_numbers = #tpu.dot_dimension_numbers<[1], [0], [0], [1], [0, 0, 1, 1], [], []>} : vector<8x32xf32>, vector<32x128xf32>, vector<8x128xf32> -> vector<8x128xf32>
    %1908 = arith.addf %1904, %1907 : vector<8x128xf32>
    %c2_903 = arith.constant 2 : index
    %c0_904 = arith.constant 0 : index
    %c0_905 = arith.constant 0 : index
    %1909 = vector.load %arg4[%c2_903, %c0_904, %c0_905] : memref<5x1x128xf32, #tpu.memory_space<vmem>>, vector<1x1x128xf32>
    %1910 = vector.shape_cast %1909 : vector<1x1x128xf32> to vector<1x128xf32>
    %1911 = vector.broadcast %1910 : vector<1x128xf32> to vector<8x128xf32>
    %1912 = arith.addf %1908, %1911 : vector<8x128xf32>
    %1913 = vector.extract_strided_slice %1912 {offsets = [0, 0], sizes = [8, 32], strides = [1, 1]} : vector<8x128xf32> to vector<8x32xf32>
    %cst_906 = arith.constant 5.000000e-01 : f32
    %1914 = vector.broadcast %cst_906 : f32 to vector<8x32xf32>
    %1915 = arith.mulf %1914, %1913 : vector<8x32xf32>
    %1916 = math.tanh %1915 : vector<8x32xf32>
    %cst_907 = arith.constant 5.000000e-01 : f32
    %1917 = vector.broadcast %cst_907 : f32 to vector<8x32xf32>
    %1918 = arith.mulf %1917, %1916 : vector<8x32xf32>
    %cst_908 = arith.constant 5.000000e-01 : f32
    %1919 = vector.broadcast %cst_908 : f32 to vector<8x32xf32>
    %1920 = arith.addf %1918, %1919 : vector<8x32xf32>
    %1921 = vector.extract_strided_slice %1912 {offsets = [0, 32], sizes = [8, 32], strides = [1, 1]} : vector<8x128xf32> to vector<8x32xf32>
    %cst_909 = arith.constant 5.000000e-01 : f32
    %1922 = vector.broadcast %cst_909 : f32 to vector<8x32xf32>
    %1923 = arith.mulf %1922, %1921 : vector<8x32xf32>
    %1924 = math.tanh %1923 : vector<8x32xf32>
    %cst_910 = arith.constant 5.000000e-01 : f32
    %1925 = vector.broadcast %cst_910 : f32 to vector<8x32xf32>
    %1926 = arith.mulf %1925, %1924 : vector<8x32xf32>
    %cst_911 = arith.constant 5.000000e-01 : f32
    %1927 = vector.broadcast %cst_911 : f32 to vector<8x32xf32>
    %1928 = arith.addf %1926, %1927 : vector<8x32xf32>
    %1929 = vector.extract_strided_slice %1912 {offsets = [0, 64], sizes = [8, 32], strides = [1, 1]} : vector<8x128xf32> to vector<8x32xf32>
    %1930 = math.tanh %1929 : vector<8x32xf32>
    %1931 = vector.extract_strided_slice %1912 {offsets = [0, 96], sizes = [8, 32], strides = [1, 1]} : vector<8x128xf32> to vector<8x32xf32>
    %cst_912 = arith.constant 5.000000e-01 : f32
    %1932 = vector.broadcast %cst_912 : f32 to vector<8x32xf32>
    %1933 = arith.mulf %1932, %1931 : vector<8x32xf32>
    %1934 = math.tanh %1933 : vector<8x32xf32>
    %cst_913 = arith.constant 5.000000e-01 : f32
    %1935 = vector.broadcast %cst_913 : f32 to vector<8x32xf32>
    %1936 = arith.mulf %1935, %1934 : vector<8x32xf32>
    %cst_914 = arith.constant 5.000000e-01 : f32
    %1937 = vector.broadcast %cst_914 : f32 to vector<8x32xf32>
    %1938 = arith.addf %1936, %1937 : vector<8x32xf32>
    %1939 = arith.mulf %1928, %1696 : vector<8x32xf32>
    %1940 = arith.mulf %1920, %1930 : vector<8x32xf32>
    %1941 = arith.addf %1939, %1940 : vector<8x32xf32>
    %1942 = math.tanh %1941 : vector<8x32xf32>
    %1943 = arith.mulf %1938, %1942 : vector<8x32xf32>
    %c2_i32_915 = arith.constant 2 : i32
    %1944 = arith.subi %c7_i32_846, %c2_i32_915 : i32
    %c0_i32_916 = arith.constant 0 : i32
    %1945 = arith.cmpi sge, %1944, %c0_i32_916 : i32
    %c8_i32_917 = arith.constant 8 : i32
    %1946 = arith.cmpi slt, %1944, %c8_i32_917 : i32
    %1947 = arith.andi %1945, %1946 : i1
    %1948 = arith.select %1947, %1943, %1695 : vector<8x32xf32>
    %1949 = arith.select %1947, %1941, %1696 : vector<8x32xf32>
    %1950 = arith.select %1947, %1943, %1697 : vector<8x32xf32>
    %c3_918 = arith.constant 3 : index
    %c0_919 = arith.constant 0 : index
    %c0_920 = arith.constant 0 : index
    %1951 = vector.load %arg2[%c3_918, %c0_919, %c0_920] : memref<5x32x128xf32, #tpu.memory_space<vmem>>, vector<1x32x128xf32>
    %1952 = vector.shape_cast %1951 : vector<1x32x128xf32> to vector<32x128xf32>
    %cst_921 = arith.constant dense<0.000000e+00> : vector<8x128xf32>
    %1953 = tpu.matmul %1697, %1952, %cst_921 {dimension_numbers = #tpu.dot_dimension_numbers<[1], [0], [0], [1], [0, 0, 1, 1], [], []>} : vector<8x32xf32>, vector<32x128xf32>, vector<8x128xf32> -> vector<8x128xf32>
    %c3_922 = arith.constant 3 : index
    %c0_923 = arith.constant 0 : index
    %c0_924 = arith.constant 0 : index
    %1954 = vector.load %arg3[%c3_922, %c0_923, %c0_924] : memref<5x32x128xf32, #tpu.memory_space<vmem>>, vector<1x32x128xf32>
    %1955 = vector.shape_cast %1954 : vector<1x32x128xf32> to vector<32x128xf32>
    %cst_925 = arith.constant dense<0.000000e+00> : vector<8x128xf32>
    %1956 = tpu.matmul %1744, %1955, %cst_925 {dimension_numbers = #tpu.dot_dimension_numbers<[1], [0], [0], [1], [0, 0, 1, 1], [], []>} : vector<8x32xf32>, vector<32x128xf32>, vector<8x128xf32> -> vector<8x128xf32>
    %1957 = arith.addf %1953, %1956 : vector<8x128xf32>
    %c3_926 = arith.constant 3 : index
    %c0_927 = arith.constant 0 : index
    %c0_928 = arith.constant 0 : index
    %1958 = vector.load %arg4[%c3_926, %c0_927, %c0_928] : memref<5x1x128xf32, #tpu.memory_space<vmem>>, vector<1x1x128xf32>
    %1959 = vector.shape_cast %1958 : vector<1x1x128xf32> to vector<1x128xf32>
    %1960 = vector.broadcast %1959 : vector<1x128xf32> to vector<8x128xf32>
    %1961 = arith.addf %1957, %1960 : vector<8x128xf32>
    %1962 = vector.extract_strided_slice %1961 {offsets = [0, 0], sizes = [8, 32], strides = [1, 1]} : vector<8x128xf32> to vector<8x32xf32>
    %cst_929 = arith.constant 5.000000e-01 : f32
    %1963 = vector.broadcast %cst_929 : f32 to vector<8x32xf32>
    %1964 = arith.mulf %1963, %1962 : vector<8x32xf32>
    %1965 = math.tanh %1964 : vector<8x32xf32>
    %cst_930 = arith.constant 5.000000e-01 : f32
    %1966 = vector.broadcast %cst_930 : f32 to vector<8x32xf32>
    %1967 = arith.mulf %1966, %1965 : vector<8x32xf32>
    %cst_931 = arith.constant 5.000000e-01 : f32
    %1968 = vector.broadcast %cst_931 : f32 to vector<8x32xf32>
    %1969 = arith.addf %1967, %1968 : vector<8x32xf32>
    %1970 = vector.extract_strided_slice %1961 {offsets = [0, 32], sizes = [8, 32], strides = [1, 1]} : vector<8x128xf32> to vector<8x32xf32>
    %cst_932 = arith.constant 5.000000e-01 : f32
    %1971 = vector.broadcast %cst_932 : f32 to vector<8x32xf32>
    %1972 = arith.mulf %1971, %1970 : vector<8x32xf32>
    %1973 = math.tanh %1972 : vector<8x32xf32>
    %cst_933 = arith.constant 5.000000e-01 : f32
    %1974 = vector.broadcast %cst_933 : f32 to vector<8x32xf32>
    %1975 = arith.mulf %1974, %1973 : vector<8x32xf32>
    %cst_934 = arith.constant 5.000000e-01 : f32
    %1976 = vector.broadcast %cst_934 : f32 to vector<8x32xf32>
    %1977 = arith.addf %1975, %1976 : vector<8x32xf32>
    %1978 = vector.extract_strided_slice %1961 {offsets = [0, 64], sizes = [8, 32], strides = [1, 1]} : vector<8x128xf32> to vector<8x32xf32>
    %1979 = math.tanh %1978 : vector<8x32xf32>
    %1980 = vector.extract_strided_slice %1961 {offsets = [0, 96], sizes = [8, 32], strides = [1, 1]} : vector<8x128xf32> to vector<8x32xf32>
    %cst_935 = arith.constant 5.000000e-01 : f32
    %1981 = vector.broadcast %cst_935 : f32 to vector<8x32xf32>
    %1982 = arith.mulf %1981, %1980 : vector<8x32xf32>
    %1983 = math.tanh %1982 : vector<8x32xf32>
    %cst_936 = arith.constant 5.000000e-01 : f32
    %1984 = vector.broadcast %cst_936 : f32 to vector<8x32xf32>
    %1985 = arith.mulf %1984, %1983 : vector<8x32xf32>
    %cst_937 = arith.constant 5.000000e-01 : f32
    %1986 = vector.broadcast %cst_937 : f32 to vector<8x32xf32>
    %1987 = arith.addf %1985, %1986 : vector<8x32xf32>
    %1988 = arith.mulf %1977, %1745 : vector<8x32xf32>
    %1989 = arith.mulf %1969, %1979 : vector<8x32xf32>
    %1990 = arith.addf %1988, %1989 : vector<8x32xf32>
    %1991 = math.tanh %1990 : vector<8x32xf32>
    %1992 = arith.mulf %1987, %1991 : vector<8x32xf32>
    %c3_i32_938 = arith.constant 3 : i32
    %1993 = arith.subi %c7_i32_846, %c3_i32_938 : i32
    %c0_i32_939 = arith.constant 0 : i32
    %1994 = arith.cmpi sge, %1993, %c0_i32_939 : i32
    %c8_i32_940 = arith.constant 8 : i32
    %1995 = arith.cmpi slt, %1993, %c8_i32_940 : i32
    %1996 = arith.andi %1994, %1995 : i1
    %1997 = arith.select %1996, %1992, %1744 : vector<8x32xf32>
    %1998 = arith.select %1996, %1990, %1745 : vector<8x32xf32>
    %1999 = arith.select %1996, %1992, %1746 : vector<8x32xf32>
    %c4_941 = arith.constant 4 : index
    %c0_942 = arith.constant 0 : index
    %c0_943 = arith.constant 0 : index
    %2000 = vector.load %arg2[%c4_941, %c0_942, %c0_943] : memref<5x32x128xf32, #tpu.memory_space<vmem>>, vector<1x32x128xf32>
    %2001 = vector.shape_cast %2000 : vector<1x32x128xf32> to vector<32x128xf32>
    %cst_944 = arith.constant dense<0.000000e+00> : vector<8x128xf32>
    %2002 = tpu.matmul %1746, %2001, %cst_944 {dimension_numbers = #tpu.dot_dimension_numbers<[1], [0], [0], [1], [0, 0, 1, 1], [], []>} : vector<8x32xf32>, vector<32x128xf32>, vector<8x128xf32> -> vector<8x128xf32>
    %c4_945 = arith.constant 4 : index
    %c0_946 = arith.constant 0 : index
    %c0_947 = arith.constant 0 : index
    %2003 = vector.load %arg3[%c4_945, %c0_946, %c0_947] : memref<5x32x128xf32, #tpu.memory_space<vmem>>, vector<1x32x128xf32>
    %2004 = vector.shape_cast %2003 : vector<1x32x128xf32> to vector<32x128xf32>
    %cst_948 = arith.constant dense<0.000000e+00> : vector<8x128xf32>
    %2005 = tpu.matmul %1793, %2004, %cst_948 {dimension_numbers = #tpu.dot_dimension_numbers<[1], [0], [0], [1], [0, 0, 1, 1], [], []>} : vector<8x32xf32>, vector<32x128xf32>, vector<8x128xf32> -> vector<8x128xf32>
    %2006 = arith.addf %2002, %2005 : vector<8x128xf32>
    %c4_949 = arith.constant 4 : index
    %c0_950 = arith.constant 0 : index
    %c0_951 = arith.constant 0 : index
    %2007 = vector.load %arg4[%c4_949, %c0_950, %c0_951] : memref<5x1x128xf32, #tpu.memory_space<vmem>>, vector<1x1x128xf32>
    %2008 = vector.shape_cast %2007 : vector<1x1x128xf32> to vector<1x128xf32>
    %2009 = vector.broadcast %2008 : vector<1x128xf32> to vector<8x128xf32>
    %2010 = arith.addf %2006, %2009 : vector<8x128xf32>
    %2011 = vector.extract_strided_slice %2010 {offsets = [0, 0], sizes = [8, 32], strides = [1, 1]} : vector<8x128xf32> to vector<8x32xf32>
    %cst_952 = arith.constant 5.000000e-01 : f32
    %2012 = vector.broadcast %cst_952 : f32 to vector<8x32xf32>
    %2013 = arith.mulf %2012, %2011 : vector<8x32xf32>
    %2014 = math.tanh %2013 : vector<8x32xf32>
    %cst_953 = arith.constant 5.000000e-01 : f32
    %2015 = vector.broadcast %cst_953 : f32 to vector<8x32xf32>
    %2016 = arith.mulf %2015, %2014 : vector<8x32xf32>
    %cst_954 = arith.constant 5.000000e-01 : f32
    %2017 = vector.broadcast %cst_954 : f32 to vector<8x32xf32>
    %2018 = arith.addf %2016, %2017 : vector<8x32xf32>
    %2019 = vector.extract_strided_slice %2010 {offsets = [0, 32], sizes = [8, 32], strides = [1, 1]} : vector<8x128xf32> to vector<8x32xf32>
    %cst_955 = arith.constant 5.000000e-01 : f32
    %2020 = vector.broadcast %cst_955 : f32 to vector<8x32xf32>
    %2021 = arith.mulf %2020, %2019 : vector<8x32xf32>
    %2022 = math.tanh %2021 : vector<8x32xf32>
    %cst_956 = arith.constant 5.000000e-01 : f32
    %2023 = vector.broadcast %cst_956 : f32 to vector<8x32xf32>
    %2024 = arith.mulf %2023, %2022 : vector<8x32xf32>
    %cst_957 = arith.constant 5.000000e-01 : f32
    %2025 = vector.broadcast %cst_957 : f32 to vector<8x32xf32>
    %2026 = arith.addf %2024, %2025 : vector<8x32xf32>
    %2027 = vector.extract_strided_slice %2010 {offsets = [0, 64], sizes = [8, 32], strides = [1, 1]} : vector<8x128xf32> to vector<8x32xf32>
    %2028 = math.tanh %2027 : vector<8x32xf32>
    %2029 = vector.extract_strided_slice %2010 {offsets = [0, 96], sizes = [8, 32], strides = [1, 1]} : vector<8x128xf32> to vector<8x32xf32>
    %cst_958 = arith.constant 5.000000e-01 : f32
    %2030 = vector.broadcast %cst_958 : f32 to vector<8x32xf32>
    %2031 = arith.mulf %2030, %2029 : vector<8x32xf32>
    %2032 = math.tanh %2031 : vector<8x32xf32>
    %cst_959 = arith.constant 5.000000e-01 : f32
    %2033 = vector.broadcast %cst_959 : f32 to vector<8x32xf32>
    %2034 = arith.mulf %2033, %2032 : vector<8x32xf32>
    %cst_960 = arith.constant 5.000000e-01 : f32
    %2035 = vector.broadcast %cst_960 : f32 to vector<8x32xf32>
    %2036 = arith.addf %2034, %2035 : vector<8x32xf32>
    %2037 = arith.mulf %2026, %1794 : vector<8x32xf32>
    %2038 = arith.mulf %2018, %2028 : vector<8x32xf32>
    %2039 = arith.addf %2037, %2038 : vector<8x32xf32>
    %2040 = math.tanh %2039 : vector<8x32xf32>
    %2041 = arith.mulf %2036, %2040 : vector<8x32xf32>
    %c4_i32_961 = arith.constant 4 : i32
    %2042 = arith.subi %c7_i32_846, %c4_i32_961 : i32
    %c0_i32_962 = arith.constant 0 : i32
    %2043 = arith.cmpi sge, %2042, %c0_i32_962 : i32
    %c8_i32_963 = arith.constant 8 : i32
    %2044 = arith.cmpi slt, %2042, %c8_i32_963 : i32
    %2045 = arith.andi %2043, %2044 : i1
    %2046 = arith.select %2045, %2041, %1793 : vector<8x32xf32>
    %2047 = arith.select %2045, %2039, %1794 : vector<8x32xf32>
    %2048 = arith.select %2045, %2041, %1795 : vector<8x32xf32>
    %c8_i32_964 = arith.constant 8 : i32
    %c7_i32_965 = arith.constant 7 : i32
    %2049 = arith.minsi %c8_i32_964, %c7_i32_965 : i32
    %2050 = arith.index_cast %2049 : i32 to index
    %c0_966 = arith.constant 0 : index
    %c0_967 = arith.constant 0 : index
    %2051 = vector.load %arg1[%2050, %c0_966, %c0_967] : memref<8x8x32xf32, #tpu.memory_space<vmem>>, vector<1x8x32xf32>
    %2052 = vector.shape_cast %2051 : vector<1x8x32xf32> to vector<8x32xf32>
    %c0_968 = arith.constant 0 : index
    %c0_969 = arith.constant 0 : index
    %c0_970 = arith.constant 0 : index
    %2053 = vector.load %arg2[%c0_968, %c0_969, %c0_970] : memref<5x32x128xf32, #tpu.memory_space<vmem>>, vector<1x32x128xf32>
    %2054 = vector.shape_cast %2053 : vector<1x32x128xf32> to vector<32x128xf32>
    %2055 = vector.extract_strided_slice %2054 {offsets = [0, 0], sizes = [1, 128], strides = [1, 1]} : vector<32x128xf32> to vector<1x128xf32>
    %2056 = vector.extract_strided_slice %2052 {offsets = [0, 0], sizes = [8, 1], strides = [1, 1]} : vector<8x32xf32> to vector<8x1xf32>
    %2057 = vector.broadcast %2056 : vector<8x1xf32> to vector<8x128xf32>
    %2058 = vector.broadcast %2055 : vector<1x128xf32> to vector<8x128xf32>
    %2059 = arith.mulf %2057, %2058 : vector<8x128xf32>
    %c0_971 = arith.constant 0 : index
    %c0_972 = arith.constant 0 : index
    %c0_973 = arith.constant 0 : index
    %2060 = vector.load %arg3[%c0_971, %c0_972, %c0_973] : memref<5x32x128xf32, #tpu.memory_space<vmem>>, vector<1x32x128xf32>
    %2061 = vector.shape_cast %2060 : vector<1x32x128xf32> to vector<32x128xf32>
    %cst_974 = arith.constant dense<0.000000e+00> : vector<8x128xf32>
    %2062 = tpu.matmul %1850, %2061, %cst_974 {dimension_numbers = #tpu.dot_dimension_numbers<[1], [0], [0], [1], [0, 0, 1, 1], [], []>} : vector<8x32xf32>, vector<32x128xf32>, vector<8x128xf32> -> vector<8x128xf32>
    %2063 = arith.addf %2059, %2062 : vector<8x128xf32>
    %c0_975 = arith.constant 0 : index
    %c0_976 = arith.constant 0 : index
    %c0_977 = arith.constant 0 : index
    %2064 = vector.load %arg4[%c0_975, %c0_976, %c0_977] : memref<5x1x128xf32, #tpu.memory_space<vmem>>, vector<1x1x128xf32>
    %2065 = vector.shape_cast %2064 : vector<1x1x128xf32> to vector<1x128xf32>
    %2066 = vector.broadcast %2065 : vector<1x128xf32> to vector<8x128xf32>
    %2067 = arith.addf %2063, %2066 : vector<8x128xf32>
    %2068 = vector.extract_strided_slice %2067 {offsets = [0, 0], sizes = [8, 32], strides = [1, 1]} : vector<8x128xf32> to vector<8x32xf32>
    %cst_978 = arith.constant 5.000000e-01 : f32
    %2069 = vector.broadcast %cst_978 : f32 to vector<8x32xf32>
    %2070 = arith.mulf %2069, %2068 : vector<8x32xf32>
    %2071 = math.tanh %2070 : vector<8x32xf32>
    %cst_979 = arith.constant 5.000000e-01 : f32
    %2072 = vector.broadcast %cst_979 : f32 to vector<8x32xf32>
    %2073 = arith.mulf %2072, %2071 : vector<8x32xf32>
    %cst_980 = arith.constant 5.000000e-01 : f32
    %2074 = vector.broadcast %cst_980 : f32 to vector<8x32xf32>
    %2075 = arith.addf %2073, %2074 : vector<8x32xf32>
    %2076 = vector.extract_strided_slice %2067 {offsets = [0, 32], sizes = [8, 32], strides = [1, 1]} : vector<8x128xf32> to vector<8x32xf32>
    %cst_981 = arith.constant 5.000000e-01 : f32
    %2077 = vector.broadcast %cst_981 : f32 to vector<8x32xf32>
    %2078 = arith.mulf %2077, %2076 : vector<8x32xf32>
    %2079 = math.tanh %2078 : vector<8x32xf32>
    %cst_982 = arith.constant 5.000000e-01 : f32
    %2080 = vector.broadcast %cst_982 : f32 to vector<8x32xf32>
    %2081 = arith.mulf %2080, %2079 : vector<8x32xf32>
    %cst_983 = arith.constant 5.000000e-01 : f32
    %2082 = vector.broadcast %cst_983 : f32 to vector<8x32xf32>
    %2083 = arith.addf %2081, %2082 : vector<8x32xf32>
    %2084 = vector.extract_strided_slice %2067 {offsets = [0, 64], sizes = [8, 32], strides = [1, 1]} : vector<8x128xf32> to vector<8x32xf32>
    %2085 = math.tanh %2084 : vector<8x32xf32>
    %2086 = vector.extract_strided_slice %2067 {offsets = [0, 96], sizes = [8, 32], strides = [1, 1]} : vector<8x128xf32> to vector<8x32xf32>
    %cst_984 = arith.constant 5.000000e-01 : f32
    %2087 = vector.broadcast %cst_984 : f32 to vector<8x32xf32>
    %2088 = arith.mulf %2087, %2086 : vector<8x32xf32>
    %2089 = math.tanh %2088 : vector<8x32xf32>
    %cst_985 = arith.constant 5.000000e-01 : f32
    %2090 = vector.broadcast %cst_985 : f32 to vector<8x32xf32>
    %2091 = arith.mulf %2090, %2089 : vector<8x32xf32>
    %cst_986 = arith.constant 5.000000e-01 : f32
    %2092 = vector.broadcast %cst_986 : f32 to vector<8x32xf32>
    %2093 = arith.addf %2091, %2092 : vector<8x32xf32>
    %2094 = arith.mulf %2083, %1851 : vector<8x32xf32>
    %2095 = arith.mulf %2075, %2085 : vector<8x32xf32>
    %2096 = arith.addf %2094, %2095 : vector<8x32xf32>
    %2097 = math.tanh %2096 : vector<8x32xf32>
    %2098 = arith.mulf %2093, %2097 : vector<8x32xf32>
    %c0_i32_987 = arith.constant 0 : i32
    %2099 = arith.subi %c8_i32_964, %c0_i32_987 : i32
    %c0_i32_988 = arith.constant 0 : i32
    %2100 = arith.cmpi sge, %2099, %c0_i32_988 : i32
    %c8_i32_989 = arith.constant 8 : i32
    %2101 = arith.cmpi slt, %2099, %c8_i32_989 : i32
    %2102 = arith.andi %2100, %2101 : i1
    %2103 = arith.select %2102, %2098, %1850 : vector<8x32xf32>
    %2104 = arith.select %2102, %2096, %1851 : vector<8x32xf32>
    %2105 = arith.select %2102, %2098, %1852 : vector<8x32xf32>
    %c1_990 = arith.constant 1 : index
    %c0_991 = arith.constant 0 : index
    %c0_992 = arith.constant 0 : index
    %2106 = vector.load %arg2[%c1_990, %c0_991, %c0_992] : memref<5x32x128xf32, #tpu.memory_space<vmem>>, vector<1x32x128xf32>
    %2107 = vector.shape_cast %2106 : vector<1x32x128xf32> to vector<32x128xf32>
    %cst_993 = arith.constant dense<0.000000e+00> : vector<8x128xf32>
    %2108 = tpu.matmul %1852, %2107, %cst_993 {dimension_numbers = #tpu.dot_dimension_numbers<[1], [0], [0], [1], [0, 0, 1, 1], [], []>} : vector<8x32xf32>, vector<32x128xf32>, vector<8x128xf32> -> vector<8x128xf32>
    %c1_994 = arith.constant 1 : index
    %c0_995 = arith.constant 0 : index
    %c0_996 = arith.constant 0 : index
    %2109 = vector.load %arg3[%c1_994, %c0_995, %c0_996] : memref<5x32x128xf32, #tpu.memory_space<vmem>>, vector<1x32x128xf32>
    %2110 = vector.shape_cast %2109 : vector<1x32x128xf32> to vector<32x128xf32>
    %cst_997 = arith.constant dense<0.000000e+00> : vector<8x128xf32>
    %2111 = tpu.matmul %1899, %2110, %cst_997 {dimension_numbers = #tpu.dot_dimension_numbers<[1], [0], [0], [1], [0, 0, 1, 1], [], []>} : vector<8x32xf32>, vector<32x128xf32>, vector<8x128xf32> -> vector<8x128xf32>
    %2112 = arith.addf %2108, %2111 : vector<8x128xf32>
    %c1_998 = arith.constant 1 : index
    %c0_999 = arith.constant 0 : index
    %c0_1000 = arith.constant 0 : index
    %2113 = vector.load %arg4[%c1_998, %c0_999, %c0_1000] : memref<5x1x128xf32, #tpu.memory_space<vmem>>, vector<1x1x128xf32>
    %2114 = vector.shape_cast %2113 : vector<1x1x128xf32> to vector<1x128xf32>
    %2115 = vector.broadcast %2114 : vector<1x128xf32> to vector<8x128xf32>
    %2116 = arith.addf %2112, %2115 : vector<8x128xf32>
    %2117 = vector.extract_strided_slice %2116 {offsets = [0, 0], sizes = [8, 32], strides = [1, 1]} : vector<8x128xf32> to vector<8x32xf32>
    %cst_1001 = arith.constant 5.000000e-01 : f32
    %2118 = vector.broadcast %cst_1001 : f32 to vector<8x32xf32>
    %2119 = arith.mulf %2118, %2117 : vector<8x32xf32>
    %2120 = math.tanh %2119 : vector<8x32xf32>
    %cst_1002 = arith.constant 5.000000e-01 : f32
    %2121 = vector.broadcast %cst_1002 : f32 to vector<8x32xf32>
    %2122 = arith.mulf %2121, %2120 : vector<8x32xf32>
    %cst_1003 = arith.constant 5.000000e-01 : f32
    %2123 = vector.broadcast %cst_1003 : f32 to vector<8x32xf32>
    %2124 = arith.addf %2122, %2123 : vector<8x32xf32>
    %2125 = vector.extract_strided_slice %2116 {offsets = [0, 32], sizes = [8, 32], strides = [1, 1]} : vector<8x128xf32> to vector<8x32xf32>
    %cst_1004 = arith.constant 5.000000e-01 : f32
    %2126 = vector.broadcast %cst_1004 : f32 to vector<8x32xf32>
    %2127 = arith.mulf %2126, %2125 : vector<8x32xf32>
    %2128 = math.tanh %2127 : vector<8x32xf32>
    %cst_1005 = arith.constant 5.000000e-01 : f32
    %2129 = vector.broadcast %cst_1005 : f32 to vector<8x32xf32>
    %2130 = arith.mulf %2129, %2128 : vector<8x32xf32>
    %cst_1006 = arith.constant 5.000000e-01 : f32
    %2131 = vector.broadcast %cst_1006 : f32 to vector<8x32xf32>
    %2132 = arith.addf %2130, %2131 : vector<8x32xf32>
    %2133 = vector.extract_strided_slice %2116 {offsets = [0, 64], sizes = [8, 32], strides = [1, 1]} : vector<8x128xf32> to vector<8x32xf32>
    %2134 = math.tanh %2133 : vector<8x32xf32>
    %2135 = vector.extract_strided_slice %2116 {offsets = [0, 96], sizes = [8, 32], strides = [1, 1]} : vector<8x128xf32> to vector<8x32xf32>
    %cst_1007 = arith.constant 5.000000e-01 : f32
    %2136 = vector.broadcast %cst_1007 : f32 to vector<8x32xf32>
    %2137 = arith.mulf %2136, %2135 : vector<8x32xf32>
    %2138 = math.tanh %2137 : vector<8x32xf32>
    %cst_1008 = arith.constant 5.000000e-01 : f32
    %2139 = vector.broadcast %cst_1008 : f32 to vector<8x32xf32>
    %2140 = arith.mulf %2139, %2138 : vector<8x32xf32>
    %cst_1009 = arith.constant 5.000000e-01 : f32
    %2141 = vector.broadcast %cst_1009 : f32 to vector<8x32xf32>
    %2142 = arith.addf %2140, %2141 : vector<8x32xf32>
    %2143 = arith.mulf %2132, %1900 : vector<8x32xf32>
    %2144 = arith.mulf %2124, %2134 : vector<8x32xf32>
    %2145 = arith.addf %2143, %2144 : vector<8x32xf32>
    %2146 = math.tanh %2145 : vector<8x32xf32>
    %2147 = arith.mulf %2142, %2146 : vector<8x32xf32>
    %c1_i32_1010 = arith.constant 1 : i32
    %2148 = arith.subi %c8_i32_964, %c1_i32_1010 : i32
    %c0_i32_1011 = arith.constant 0 : i32
    %2149 = arith.cmpi sge, %2148, %c0_i32_1011 : i32
    %c8_i32_1012 = arith.constant 8 : i32
    %2150 = arith.cmpi slt, %2148, %c8_i32_1012 : i32
    %2151 = arith.andi %2149, %2150 : i1
    %2152 = arith.select %2151, %2147, %1899 : vector<8x32xf32>
    %2153 = arith.select %2151, %2145, %1900 : vector<8x32xf32>
    %2154 = arith.select %2151, %2147, %1901 : vector<8x32xf32>
    %c2_1013 = arith.constant 2 : index
    %c0_1014 = arith.constant 0 : index
    %c0_1015 = arith.constant 0 : index
    %2155 = vector.load %arg2[%c2_1013, %c0_1014, %c0_1015] : memref<5x32x128xf32, #tpu.memory_space<vmem>>, vector<1x32x128xf32>
    %2156 = vector.shape_cast %2155 : vector<1x32x128xf32> to vector<32x128xf32>
    %cst_1016 = arith.constant dense<0.000000e+00> : vector<8x128xf32>
    %2157 = tpu.matmul %1901, %2156, %cst_1016 {dimension_numbers = #tpu.dot_dimension_numbers<[1], [0], [0], [1], [0, 0, 1, 1], [], []>} : vector<8x32xf32>, vector<32x128xf32>, vector<8x128xf32> -> vector<8x128xf32>
    %c2_1017 = arith.constant 2 : index
    %c0_1018 = arith.constant 0 : index
    %c0_1019 = arith.constant 0 : index
    %2158 = vector.load %arg3[%c2_1017, %c0_1018, %c0_1019] : memref<5x32x128xf32, #tpu.memory_space<vmem>>, vector<1x32x128xf32>
    %2159 = vector.shape_cast %2158 : vector<1x32x128xf32> to vector<32x128xf32>
    %cst_1020 = arith.constant dense<0.000000e+00> : vector<8x128xf32>
    %2160 = tpu.matmul %1948, %2159, %cst_1020 {dimension_numbers = #tpu.dot_dimension_numbers<[1], [0], [0], [1], [0, 0, 1, 1], [], []>} : vector<8x32xf32>, vector<32x128xf32>, vector<8x128xf32> -> vector<8x128xf32>
    %2161 = arith.addf %2157, %2160 : vector<8x128xf32>
    %c2_1021 = arith.constant 2 : index
    %c0_1022 = arith.constant 0 : index
    %c0_1023 = arith.constant 0 : index
    %2162 = vector.load %arg4[%c2_1021, %c0_1022, %c0_1023] : memref<5x1x128xf32, #tpu.memory_space<vmem>>, vector<1x1x128xf32>
    %2163 = vector.shape_cast %2162 : vector<1x1x128xf32> to vector<1x128xf32>
    %2164 = vector.broadcast %2163 : vector<1x128xf32> to vector<8x128xf32>
    %2165 = arith.addf %2161, %2164 : vector<8x128xf32>
    %2166 = vector.extract_strided_slice %2165 {offsets = [0, 0], sizes = [8, 32], strides = [1, 1]} : vector<8x128xf32> to vector<8x32xf32>
    %cst_1024 = arith.constant 5.000000e-01 : f32
    %2167 = vector.broadcast %cst_1024 : f32 to vector<8x32xf32>
    %2168 = arith.mulf %2167, %2166 : vector<8x32xf32>
    %2169 = math.tanh %2168 : vector<8x32xf32>
    %cst_1025 = arith.constant 5.000000e-01 : f32
    %2170 = vector.broadcast %cst_1025 : f32 to vector<8x32xf32>
    %2171 = arith.mulf %2170, %2169 : vector<8x32xf32>
    %cst_1026 = arith.constant 5.000000e-01 : f32
    %2172 = vector.broadcast %cst_1026 : f32 to vector<8x32xf32>
    %2173 = arith.addf %2171, %2172 : vector<8x32xf32>
    %2174 = vector.extract_strided_slice %2165 {offsets = [0, 32], sizes = [8, 32], strides = [1, 1]} : vector<8x128xf32> to vector<8x32xf32>
    %cst_1027 = arith.constant 5.000000e-01 : f32
    %2175 = vector.broadcast %cst_1027 : f32 to vector<8x32xf32>
    %2176 = arith.mulf %2175, %2174 : vector<8x32xf32>
    %2177 = math.tanh %2176 : vector<8x32xf32>
    %cst_1028 = arith.constant 5.000000e-01 : f32
    %2178 = vector.broadcast %cst_1028 : f32 to vector<8x32xf32>
    %2179 = arith.mulf %2178, %2177 : vector<8x32xf32>
    %cst_1029 = arith.constant 5.000000e-01 : f32
    %2180 = vector.broadcast %cst_1029 : f32 to vector<8x32xf32>
    %2181 = arith.addf %2179, %2180 : vector<8x32xf32>
    %2182 = vector.extract_strided_slice %2165 {offsets = [0, 64], sizes = [8, 32], strides = [1, 1]} : vector<8x128xf32> to vector<8x32xf32>
    %2183 = math.tanh %2182 : vector<8x32xf32>
    %2184 = vector.extract_strided_slice %2165 {offsets = [0, 96], sizes = [8, 32], strides = [1, 1]} : vector<8x128xf32> to vector<8x32xf32>
    %cst_1030 = arith.constant 5.000000e-01 : f32
    %2185 = vector.broadcast %cst_1030 : f32 to vector<8x32xf32>
    %2186 = arith.mulf %2185, %2184 : vector<8x32xf32>
    %2187 = math.tanh %2186 : vector<8x32xf32>
    %cst_1031 = arith.constant 5.000000e-01 : f32
    %2188 = vector.broadcast %cst_1031 : f32 to vector<8x32xf32>
    %2189 = arith.mulf %2188, %2187 : vector<8x32xf32>
    %cst_1032 = arith.constant 5.000000e-01 : f32
    %2190 = vector.broadcast %cst_1032 : f32 to vector<8x32xf32>
    %2191 = arith.addf %2189, %2190 : vector<8x32xf32>
    %2192 = arith.mulf %2181, %1949 : vector<8x32xf32>
    %2193 = arith.mulf %2173, %2183 : vector<8x32xf32>
    %2194 = arith.addf %2192, %2193 : vector<8x32xf32>
    %2195 = math.tanh %2194 : vector<8x32xf32>
    %2196 = arith.mulf %2191, %2195 : vector<8x32xf32>
    %c2_i32_1033 = arith.constant 2 : i32
    %2197 = arith.subi %c8_i32_964, %c2_i32_1033 : i32
    %c0_i32_1034 = arith.constant 0 : i32
    %2198 = arith.cmpi sge, %2197, %c0_i32_1034 : i32
    %c8_i32_1035 = arith.constant 8 : i32
    %2199 = arith.cmpi slt, %2197, %c8_i32_1035 : i32
    %2200 = arith.andi %2198, %2199 : i1
    %2201 = arith.select %2200, %2196, %1948 : vector<8x32xf32>
    %2202 = arith.select %2200, %2194, %1949 : vector<8x32xf32>
    %2203 = arith.select %2200, %2196, %1950 : vector<8x32xf32>
    %c3_1036 = arith.constant 3 : index
    %c0_1037 = arith.constant 0 : index
    %c0_1038 = arith.constant 0 : index
    %2204 = vector.load %arg2[%c3_1036, %c0_1037, %c0_1038] : memref<5x32x128xf32, #tpu.memory_space<vmem>>, vector<1x32x128xf32>
    %2205 = vector.shape_cast %2204 : vector<1x32x128xf32> to vector<32x128xf32>
    %cst_1039 = arith.constant dense<0.000000e+00> : vector<8x128xf32>
    %2206 = tpu.matmul %1950, %2205, %cst_1039 {dimension_numbers = #tpu.dot_dimension_numbers<[1], [0], [0], [1], [0, 0, 1, 1], [], []>} : vector<8x32xf32>, vector<32x128xf32>, vector<8x128xf32> -> vector<8x128xf32>
    %c3_1040 = arith.constant 3 : index
    %c0_1041 = arith.constant 0 : index
    %c0_1042 = arith.constant 0 : index
    %2207 = vector.load %arg3[%c3_1040, %c0_1041, %c0_1042] : memref<5x32x128xf32, #tpu.memory_space<vmem>>, vector<1x32x128xf32>
    %2208 = vector.shape_cast %2207 : vector<1x32x128xf32> to vector<32x128xf32>
    %cst_1043 = arith.constant dense<0.000000e+00> : vector<8x128xf32>
    %2209 = tpu.matmul %1997, %2208, %cst_1043 {dimension_numbers = #tpu.dot_dimension_numbers<[1], [0], [0], [1], [0, 0, 1, 1], [], []>} : vector<8x32xf32>, vector<32x128xf32>, vector<8x128xf32> -> vector<8x128xf32>
    %2210 = arith.addf %2206, %2209 : vector<8x128xf32>
    %c3_1044 = arith.constant 3 : index
    %c0_1045 = arith.constant 0 : index
    %c0_1046 = arith.constant 0 : index
    %2211 = vector.load %arg4[%c3_1044, %c0_1045, %c0_1046] : memref<5x1x128xf32, #tpu.memory_space<vmem>>, vector<1x1x128xf32>
    %2212 = vector.shape_cast %2211 : vector<1x1x128xf32> to vector<1x128xf32>
    %2213 = vector.broadcast %2212 : vector<1x128xf32> to vector<8x128xf32>
    %2214 = arith.addf %2210, %2213 : vector<8x128xf32>
    %2215 = vector.extract_strided_slice %2214 {offsets = [0, 0], sizes = [8, 32], strides = [1, 1]} : vector<8x128xf32> to vector<8x32xf32>
    %cst_1047 = arith.constant 5.000000e-01 : f32
    %2216 = vector.broadcast %cst_1047 : f32 to vector<8x32xf32>
    %2217 = arith.mulf %2216, %2215 : vector<8x32xf32>
    %2218 = math.tanh %2217 : vector<8x32xf32>
    %cst_1048 = arith.constant 5.000000e-01 : f32
    %2219 = vector.broadcast %cst_1048 : f32 to vector<8x32xf32>
    %2220 = arith.mulf %2219, %2218 : vector<8x32xf32>
    %cst_1049 = arith.constant 5.000000e-01 : f32
    %2221 = vector.broadcast %cst_1049 : f32 to vector<8x32xf32>
    %2222 = arith.addf %2220, %2221 : vector<8x32xf32>
    %2223 = vector.extract_strided_slice %2214 {offsets = [0, 32], sizes = [8, 32], strides = [1, 1]} : vector<8x128xf32> to vector<8x32xf32>
    %cst_1050 = arith.constant 5.000000e-01 : f32
    %2224 = vector.broadcast %cst_1050 : f32 to vector<8x32xf32>
    %2225 = arith.mulf %2224, %2223 : vector<8x32xf32>
    %2226 = math.tanh %2225 : vector<8x32xf32>
    %cst_1051 = arith.constant 5.000000e-01 : f32
    %2227 = vector.broadcast %cst_1051 : f32 to vector<8x32xf32>
    %2228 = arith.mulf %2227, %2226 : vector<8x32xf32>
    %cst_1052 = arith.constant 5.000000e-01 : f32
    %2229 = vector.broadcast %cst_1052 : f32 to vector<8x32xf32>
    %2230 = arith.addf %2228, %2229 : vector<8x32xf32>
    %2231 = vector.extract_strided_slice %2214 {offsets = [0, 64], sizes = [8, 32], strides = [1, 1]} : vector<8x128xf32> to vector<8x32xf32>
    %2232 = math.tanh %2231 : vector<8x32xf32>
    %2233 = vector.extract_strided_slice %2214 {offsets = [0, 96], sizes = [8, 32], strides = [1, 1]} : vector<8x128xf32> to vector<8x32xf32>
    %cst_1053 = arith.constant 5.000000e-01 : f32
    %2234 = vector.broadcast %cst_1053 : f32 to vector<8x32xf32>
    %2235 = arith.mulf %2234, %2233 : vector<8x32xf32>
    %2236 = math.tanh %2235 : vector<8x32xf32>
    %cst_1054 = arith.constant 5.000000e-01 : f32
    %2237 = vector.broadcast %cst_1054 : f32 to vector<8x32xf32>
    %2238 = arith.mulf %2237, %2236 : vector<8x32xf32>
    %cst_1055 = arith.constant 5.000000e-01 : f32
    %2239 = vector.broadcast %cst_1055 : f32 to vector<8x32xf32>
    %2240 = arith.addf %2238, %2239 : vector<8x32xf32>
    %2241 = arith.mulf %2230, %1998 : vector<8x32xf32>
    %2242 = arith.mulf %2222, %2232 : vector<8x32xf32>
    %2243 = arith.addf %2241, %2242 : vector<8x32xf32>
    %2244 = math.tanh %2243 : vector<8x32xf32>
    %2245 = arith.mulf %2240, %2244 : vector<8x32xf32>
    %c3_i32_1056 = arith.constant 3 : i32
    %2246 = arith.subi %c8_i32_964, %c3_i32_1056 : i32
    %c0_i32_1057 = arith.constant 0 : i32
    %2247 = arith.cmpi sge, %2246, %c0_i32_1057 : i32
    %c8_i32_1058 = arith.constant 8 : i32
    %2248 = arith.cmpi slt, %2246, %c8_i32_1058 : i32
    %2249 = arith.andi %2247, %2248 : i1
    %2250 = arith.select %2249, %2245, %1997 : vector<8x32xf32>
    %2251 = arith.select %2249, %2243, %1998 : vector<8x32xf32>
    %2252 = arith.select %2249, %2245, %1999 : vector<8x32xf32>
    %c4_1059 = arith.constant 4 : index
    %c0_1060 = arith.constant 0 : index
    %c0_1061 = arith.constant 0 : index
    %2253 = vector.load %arg2[%c4_1059, %c0_1060, %c0_1061] : memref<5x32x128xf32, #tpu.memory_space<vmem>>, vector<1x32x128xf32>
    %2254 = vector.shape_cast %2253 : vector<1x32x128xf32> to vector<32x128xf32>
    %cst_1062 = arith.constant dense<0.000000e+00> : vector<8x128xf32>
    %2255 = tpu.matmul %1999, %2254, %cst_1062 {dimension_numbers = #tpu.dot_dimension_numbers<[1], [0], [0], [1], [0, 0, 1, 1], [], []>} : vector<8x32xf32>, vector<32x128xf32>, vector<8x128xf32> -> vector<8x128xf32>
    %c4_1063 = arith.constant 4 : index
    %c0_1064 = arith.constant 0 : index
    %c0_1065 = arith.constant 0 : index
    %2256 = vector.load %arg3[%c4_1063, %c0_1064, %c0_1065] : memref<5x32x128xf32, #tpu.memory_space<vmem>>, vector<1x32x128xf32>
    %2257 = vector.shape_cast %2256 : vector<1x32x128xf32> to vector<32x128xf32>
    %cst_1066 = arith.constant dense<0.000000e+00> : vector<8x128xf32>
    %2258 = tpu.matmul %2046, %2257, %cst_1066 {dimension_numbers = #tpu.dot_dimension_numbers<[1], [0], [0], [1], [0, 0, 1, 1], [], []>} : vector<8x32xf32>, vector<32x128xf32>, vector<8x128xf32> -> vector<8x128xf32>
    %2259 = arith.addf %2255, %2258 : vector<8x128xf32>
    %c4_1067 = arith.constant 4 : index
    %c0_1068 = arith.constant 0 : index
    %c0_1069 = arith.constant 0 : index
    %2260 = vector.load %arg4[%c4_1067, %c0_1068, %c0_1069] : memref<5x1x128xf32, #tpu.memory_space<vmem>>, vector<1x1x128xf32>
    %2261 = vector.shape_cast %2260 : vector<1x1x128xf32> to vector<1x128xf32>
    %2262 = vector.broadcast %2261 : vector<1x128xf32> to vector<8x128xf32>
    %2263 = arith.addf %2259, %2262 : vector<8x128xf32>
    %2264 = vector.extract_strided_slice %2263 {offsets = [0, 0], sizes = [8, 32], strides = [1, 1]} : vector<8x128xf32> to vector<8x32xf32>
    %cst_1070 = arith.constant 5.000000e-01 : f32
    %2265 = vector.broadcast %cst_1070 : f32 to vector<8x32xf32>
    %2266 = arith.mulf %2265, %2264 : vector<8x32xf32>
    %2267 = math.tanh %2266 : vector<8x32xf32>
    %cst_1071 = arith.constant 5.000000e-01 : f32
    %2268 = vector.broadcast %cst_1071 : f32 to vector<8x32xf32>
    %2269 = arith.mulf %2268, %2267 : vector<8x32xf32>
    %cst_1072 = arith.constant 5.000000e-01 : f32
    %2270 = vector.broadcast %cst_1072 : f32 to vector<8x32xf32>
    %2271 = arith.addf %2269, %2270 : vector<8x32xf32>
    %2272 = vector.extract_strided_slice %2263 {offsets = [0, 32], sizes = [8, 32], strides = [1, 1]} : vector<8x128xf32> to vector<8x32xf32>
    %cst_1073 = arith.constant 5.000000e-01 : f32
    %2273 = vector.broadcast %cst_1073 : f32 to vector<8x32xf32>
    %2274 = arith.mulf %2273, %2272 : vector<8x32xf32>
    %2275 = math.tanh %2274 : vector<8x32xf32>
    %cst_1074 = arith.constant 5.000000e-01 : f32
    %2276 = vector.broadcast %cst_1074 : f32 to vector<8x32xf32>
    %2277 = arith.mulf %2276, %2275 : vector<8x32xf32>
    %cst_1075 = arith.constant 5.000000e-01 : f32
    %2278 = vector.broadcast %cst_1075 : f32 to vector<8x32xf32>
    %2279 = arith.addf %2277, %2278 : vector<8x32xf32>
    %2280 = vector.extract_strided_slice %2263 {offsets = [0, 64], sizes = [8, 32], strides = [1, 1]} : vector<8x128xf32> to vector<8x32xf32>
    %2281 = math.tanh %2280 : vector<8x32xf32>
    %2282 = vector.extract_strided_slice %2263 {offsets = [0, 96], sizes = [8, 32], strides = [1, 1]} : vector<8x128xf32> to vector<8x32xf32>
    %cst_1076 = arith.constant 5.000000e-01 : f32
    %2283 = vector.broadcast %cst_1076 : f32 to vector<8x32xf32>
    %2284 = arith.mulf %2283, %2282 : vector<8x32xf32>
    %2285 = math.tanh %2284 : vector<8x32xf32>
    %cst_1077 = arith.constant 5.000000e-01 : f32
    %2286 = vector.broadcast %cst_1077 : f32 to vector<8x32xf32>
    %2287 = arith.mulf %2286, %2285 : vector<8x32xf32>
    %cst_1078 = arith.constant 5.000000e-01 : f32
    %2288 = vector.broadcast %cst_1078 : f32 to vector<8x32xf32>
    %2289 = arith.addf %2287, %2288 : vector<8x32xf32>
    %2290 = arith.mulf %2279, %2047 : vector<8x32xf32>
    %2291 = arith.mulf %2271, %2281 : vector<8x32xf32>
    %2292 = arith.addf %2290, %2291 : vector<8x32xf32>
    %2293 = math.tanh %2292 : vector<8x32xf32>
    %2294 = arith.mulf %2289, %2293 : vector<8x32xf32>
    %c4_i32_1079 = arith.constant 4 : i32
    %2295 = arith.subi %c8_i32_964, %c4_i32_1079 : i32
    %c0_i32_1080 = arith.constant 0 : i32
    %2296 = arith.cmpi sge, %2295, %c0_i32_1080 : i32
    %c8_i32_1081 = arith.constant 8 : i32
    %2297 = arith.cmpi slt, %2295, %c8_i32_1081 : i32
    %2298 = arith.andi %2296, %2297 : i1
    %2299 = arith.select %2298, %2294, %2046 : vector<8x32xf32>
    %2300 = arith.select %2298, %2292, %2047 : vector<8x32xf32>
    %2301 = arith.select %2298, %2294, %2048 : vector<8x32xf32>
    %c9_i32 = arith.constant 9 : i32
    %c7_i32_1082 = arith.constant 7 : i32
    %2302 = arith.minsi %c9_i32, %c7_i32_1082 : i32
    %2303 = arith.index_cast %2302 : i32 to index
    %c0_1083 = arith.constant 0 : index
    %c0_1084 = arith.constant 0 : index
    %2304 = vector.load %arg1[%2303, %c0_1083, %c0_1084] : memref<8x8x32xf32, #tpu.memory_space<vmem>>, vector<1x8x32xf32>
    %2305 = vector.shape_cast %2304 : vector<1x8x32xf32> to vector<8x32xf32>
    %c0_1085 = arith.constant 0 : index
    %c0_1086 = arith.constant 0 : index
    %c0_1087 = arith.constant 0 : index
    %2306 = vector.load %arg2[%c0_1085, %c0_1086, %c0_1087] : memref<5x32x128xf32, #tpu.memory_space<vmem>>, vector<1x32x128xf32>
    %2307 = vector.shape_cast %2306 : vector<1x32x128xf32> to vector<32x128xf32>
    %2308 = vector.extract_strided_slice %2307 {offsets = [0, 0], sizes = [1, 128], strides = [1, 1]} : vector<32x128xf32> to vector<1x128xf32>
    %2309 = vector.extract_strided_slice %2305 {offsets = [0, 0], sizes = [8, 1], strides = [1, 1]} : vector<8x32xf32> to vector<8x1xf32>
    %2310 = vector.broadcast %2309 : vector<8x1xf32> to vector<8x128xf32>
    %2311 = vector.broadcast %2308 : vector<1x128xf32> to vector<8x128xf32>
    %2312 = arith.mulf %2310, %2311 : vector<8x128xf32>
    %c0_1088 = arith.constant 0 : index
    %c0_1089 = arith.constant 0 : index
    %c0_1090 = arith.constant 0 : index
    %2313 = vector.load %arg3[%c0_1088, %c0_1089, %c0_1090] : memref<5x32x128xf32, #tpu.memory_space<vmem>>, vector<1x32x128xf32>
    %2314 = vector.shape_cast %2313 : vector<1x32x128xf32> to vector<32x128xf32>
    %cst_1091 = arith.constant dense<0.000000e+00> : vector<8x128xf32>
    %2315 = tpu.matmul %2103, %2314, %cst_1091 {dimension_numbers = #tpu.dot_dimension_numbers<[1], [0], [0], [1], [0, 0, 1, 1], [], []>} : vector<8x32xf32>, vector<32x128xf32>, vector<8x128xf32> -> vector<8x128xf32>
    %2316 = arith.addf %2312, %2315 : vector<8x128xf32>
    %c0_1092 = arith.constant 0 : index
    %c0_1093 = arith.constant 0 : index
    %c0_1094 = arith.constant 0 : index
    %2317 = vector.load %arg4[%c0_1092, %c0_1093, %c0_1094] : memref<5x1x128xf32, #tpu.memory_space<vmem>>, vector<1x1x128xf32>
    %2318 = vector.shape_cast %2317 : vector<1x1x128xf32> to vector<1x128xf32>
    %2319 = vector.broadcast %2318 : vector<1x128xf32> to vector<8x128xf32>
    %2320 = arith.addf %2316, %2319 : vector<8x128xf32>
    %2321 = vector.extract_strided_slice %2320 {offsets = [0, 0], sizes = [8, 32], strides = [1, 1]} : vector<8x128xf32> to vector<8x32xf32>
    %cst_1095 = arith.constant 5.000000e-01 : f32
    %2322 = vector.broadcast %cst_1095 : f32 to vector<8x32xf32>
    %2323 = arith.mulf %2322, %2321 : vector<8x32xf32>
    %2324 = math.tanh %2323 : vector<8x32xf32>
    %cst_1096 = arith.constant 5.000000e-01 : f32
    %2325 = vector.broadcast %cst_1096 : f32 to vector<8x32xf32>
    %2326 = arith.mulf %2325, %2324 : vector<8x32xf32>
    %cst_1097 = arith.constant 5.000000e-01 : f32
    %2327 = vector.broadcast %cst_1097 : f32 to vector<8x32xf32>
    %2328 = arith.addf %2326, %2327 : vector<8x32xf32>
    %2329 = vector.extract_strided_slice %2320 {offsets = [0, 32], sizes = [8, 32], strides = [1, 1]} : vector<8x128xf32> to vector<8x32xf32>
    %cst_1098 = arith.constant 5.000000e-01 : f32
    %2330 = vector.broadcast %cst_1098 : f32 to vector<8x32xf32>
    %2331 = arith.mulf %2330, %2329 : vector<8x32xf32>
    %2332 = math.tanh %2331 : vector<8x32xf32>
    %cst_1099 = arith.constant 5.000000e-01 : f32
    %2333 = vector.broadcast %cst_1099 : f32 to vector<8x32xf32>
    %2334 = arith.mulf %2333, %2332 : vector<8x32xf32>
    %cst_1100 = arith.constant 5.000000e-01 : f32
    %2335 = vector.broadcast %cst_1100 : f32 to vector<8x32xf32>
    %2336 = arith.addf %2334, %2335 : vector<8x32xf32>
    %2337 = vector.extract_strided_slice %2320 {offsets = [0, 64], sizes = [8, 32], strides = [1, 1]} : vector<8x128xf32> to vector<8x32xf32>
    %2338 = math.tanh %2337 : vector<8x32xf32>
    %2339 = vector.extract_strided_slice %2320 {offsets = [0, 96], sizes = [8, 32], strides = [1, 1]} : vector<8x128xf32> to vector<8x32xf32>
    %cst_1101 = arith.constant 5.000000e-01 : f32
    %2340 = vector.broadcast %cst_1101 : f32 to vector<8x32xf32>
    %2341 = arith.mulf %2340, %2339 : vector<8x32xf32>
    %2342 = math.tanh %2341 : vector<8x32xf32>
    %cst_1102 = arith.constant 5.000000e-01 : f32
    %2343 = vector.broadcast %cst_1102 : f32 to vector<8x32xf32>
    %2344 = arith.mulf %2343, %2342 : vector<8x32xf32>
    %cst_1103 = arith.constant 5.000000e-01 : f32
    %2345 = vector.broadcast %cst_1103 : f32 to vector<8x32xf32>
    %2346 = arith.addf %2344, %2345 : vector<8x32xf32>
    %2347 = arith.mulf %2336, %2104 : vector<8x32xf32>
    %2348 = arith.mulf %2328, %2338 : vector<8x32xf32>
    %2349 = arith.addf %2347, %2348 : vector<8x32xf32>
    %2350 = math.tanh %2349 : vector<8x32xf32>
    %2351 = arith.mulf %2346, %2350 : vector<8x32xf32>
    %c0_i32_1104 = arith.constant 0 : i32
    %2352 = arith.subi %c9_i32, %c0_i32_1104 : i32
    %c0_i32_1105 = arith.constant 0 : i32
    %2353 = arith.cmpi sge, %2352, %c0_i32_1105 : i32
    %c8_i32_1106 = arith.constant 8 : i32
    %2354 = arith.cmpi slt, %2352, %c8_i32_1106 : i32
    %2355 = arith.andi %2353, %2354 : i1
    %2356 = arith.select %2355, %2351, %2103 : vector<8x32xf32>
    %2357 = arith.select %2355, %2349, %2104 : vector<8x32xf32>
    %2358 = arith.select %2355, %2351, %2105 : vector<8x32xf32>
    %c1_1107 = arith.constant 1 : index
    %c0_1108 = arith.constant 0 : index
    %c0_1109 = arith.constant 0 : index
    %2359 = vector.load %arg2[%c1_1107, %c0_1108, %c0_1109] : memref<5x32x128xf32, #tpu.memory_space<vmem>>, vector<1x32x128xf32>
    %2360 = vector.shape_cast %2359 : vector<1x32x128xf32> to vector<32x128xf32>
    %cst_1110 = arith.constant dense<0.000000e+00> : vector<8x128xf32>
    %2361 = tpu.matmul %2105, %2360, %cst_1110 {dimension_numbers = #tpu.dot_dimension_numbers<[1], [0], [0], [1], [0, 0, 1, 1], [], []>} : vector<8x32xf32>, vector<32x128xf32>, vector<8x128xf32> -> vector<8x128xf32>
    %c1_1111 = arith.constant 1 : index
    %c0_1112 = arith.constant 0 : index
    %c0_1113 = arith.constant 0 : index
    %2362 = vector.load %arg3[%c1_1111, %c0_1112, %c0_1113] : memref<5x32x128xf32, #tpu.memory_space<vmem>>, vector<1x32x128xf32>
    %2363 = vector.shape_cast %2362 : vector<1x32x128xf32> to vector<32x128xf32>
    %cst_1114 = arith.constant dense<0.000000e+00> : vector<8x128xf32>
    %2364 = tpu.matmul %2152, %2363, %cst_1114 {dimension_numbers = #tpu.dot_dimension_numbers<[1], [0], [0], [1], [0, 0, 1, 1], [], []>} : vector<8x32xf32>, vector<32x128xf32>, vector<8x128xf32> -> vector<8x128xf32>
    %2365 = arith.addf %2361, %2364 : vector<8x128xf32>
    %c1_1115 = arith.constant 1 : index
    %c0_1116 = arith.constant 0 : index
    %c0_1117 = arith.constant 0 : index
    %2366 = vector.load %arg4[%c1_1115, %c0_1116, %c0_1117] : memref<5x1x128xf32, #tpu.memory_space<vmem>>, vector<1x1x128xf32>
    %2367 = vector.shape_cast %2366 : vector<1x1x128xf32> to vector<1x128xf32>
    %2368 = vector.broadcast %2367 : vector<1x128xf32> to vector<8x128xf32>
    %2369 = arith.addf %2365, %2368 : vector<8x128xf32>
    %2370 = vector.extract_strided_slice %2369 {offsets = [0, 0], sizes = [8, 32], strides = [1, 1]} : vector<8x128xf32> to vector<8x32xf32>
    %cst_1118 = arith.constant 5.000000e-01 : f32
    %2371 = vector.broadcast %cst_1118 : f32 to vector<8x32xf32>
    %2372 = arith.mulf %2371, %2370 : vector<8x32xf32>
    %2373 = math.tanh %2372 : vector<8x32xf32>
    %cst_1119 = arith.constant 5.000000e-01 : f32
    %2374 = vector.broadcast %cst_1119 : f32 to vector<8x32xf32>
    %2375 = arith.mulf %2374, %2373 : vector<8x32xf32>
    %cst_1120 = arith.constant 5.000000e-01 : f32
    %2376 = vector.broadcast %cst_1120 : f32 to vector<8x32xf32>
    %2377 = arith.addf %2375, %2376 : vector<8x32xf32>
    %2378 = vector.extract_strided_slice %2369 {offsets = [0, 32], sizes = [8, 32], strides = [1, 1]} : vector<8x128xf32> to vector<8x32xf32>
    %cst_1121 = arith.constant 5.000000e-01 : f32
    %2379 = vector.broadcast %cst_1121 : f32 to vector<8x32xf32>
    %2380 = arith.mulf %2379, %2378 : vector<8x32xf32>
    %2381 = math.tanh %2380 : vector<8x32xf32>
    %cst_1122 = arith.constant 5.000000e-01 : f32
    %2382 = vector.broadcast %cst_1122 : f32 to vector<8x32xf32>
    %2383 = arith.mulf %2382, %2381 : vector<8x32xf32>
    %cst_1123 = arith.constant 5.000000e-01 : f32
    %2384 = vector.broadcast %cst_1123 : f32 to vector<8x32xf32>
    %2385 = arith.addf %2383, %2384 : vector<8x32xf32>
    %2386 = vector.extract_strided_slice %2369 {offsets = [0, 64], sizes = [8, 32], strides = [1, 1]} : vector<8x128xf32> to vector<8x32xf32>
    %2387 = math.tanh %2386 : vector<8x32xf32>
    %2388 = vector.extract_strided_slice %2369 {offsets = [0, 96], sizes = [8, 32], strides = [1, 1]} : vector<8x128xf32> to vector<8x32xf32>
    %cst_1124 = arith.constant 5.000000e-01 : f32
    %2389 = vector.broadcast %cst_1124 : f32 to vector<8x32xf32>
    %2390 = arith.mulf %2389, %2388 : vector<8x32xf32>
    %2391 = math.tanh %2390 : vector<8x32xf32>
    %cst_1125 = arith.constant 5.000000e-01 : f32
    %2392 = vector.broadcast %cst_1125 : f32 to vector<8x32xf32>
    %2393 = arith.mulf %2392, %2391 : vector<8x32xf32>
    %cst_1126 = arith.constant 5.000000e-01 : f32
    %2394 = vector.broadcast %cst_1126 : f32 to vector<8x32xf32>
    %2395 = arith.addf %2393, %2394 : vector<8x32xf32>
    %2396 = arith.mulf %2385, %2153 : vector<8x32xf32>
    %2397 = arith.mulf %2377, %2387 : vector<8x32xf32>
    %2398 = arith.addf %2396, %2397 : vector<8x32xf32>
    %2399 = math.tanh %2398 : vector<8x32xf32>
    %2400 = arith.mulf %2395, %2399 : vector<8x32xf32>
    %c1_i32_1127 = arith.constant 1 : i32
    %2401 = arith.subi %c9_i32, %c1_i32_1127 : i32
    %c0_i32_1128 = arith.constant 0 : i32
    %2402 = arith.cmpi sge, %2401, %c0_i32_1128 : i32
    %c8_i32_1129 = arith.constant 8 : i32
    %2403 = arith.cmpi slt, %2401, %c8_i32_1129 : i32
    %2404 = arith.andi %2402, %2403 : i1
    %2405 = arith.select %2404, %2400, %2152 : vector<8x32xf32>
    %2406 = arith.select %2404, %2398, %2153 : vector<8x32xf32>
    %2407 = arith.select %2404, %2400, %2154 : vector<8x32xf32>
    %c2_1130 = arith.constant 2 : index
    %c0_1131 = arith.constant 0 : index
    %c0_1132 = arith.constant 0 : index
    %2408 = vector.load %arg2[%c2_1130, %c0_1131, %c0_1132] : memref<5x32x128xf32, #tpu.memory_space<vmem>>, vector<1x32x128xf32>
    %2409 = vector.shape_cast %2408 : vector<1x32x128xf32> to vector<32x128xf32>
    %cst_1133 = arith.constant dense<0.000000e+00> : vector<8x128xf32>
    %2410 = tpu.matmul %2154, %2409, %cst_1133 {dimension_numbers = #tpu.dot_dimension_numbers<[1], [0], [0], [1], [0, 0, 1, 1], [], []>} : vector<8x32xf32>, vector<32x128xf32>, vector<8x128xf32> -> vector<8x128xf32>
    %c2_1134 = arith.constant 2 : index
    %c0_1135 = arith.constant 0 : index
    %c0_1136 = arith.constant 0 : index
    %2411 = vector.load %arg3[%c2_1134, %c0_1135, %c0_1136] : memref<5x32x128xf32, #tpu.memory_space<vmem>>, vector<1x32x128xf32>
    %2412 = vector.shape_cast %2411 : vector<1x32x128xf32> to vector<32x128xf32>
    %cst_1137 = arith.constant dense<0.000000e+00> : vector<8x128xf32>
    %2413 = tpu.matmul %2201, %2412, %cst_1137 {dimension_numbers = #tpu.dot_dimension_numbers<[1], [0], [0], [1], [0, 0, 1, 1], [], []>} : vector<8x32xf32>, vector<32x128xf32>, vector<8x128xf32> -> vector<8x128xf32>
    %2414 = arith.addf %2410, %2413 : vector<8x128xf32>
    %c2_1138 = arith.constant 2 : index
    %c0_1139 = arith.constant 0 : index
    %c0_1140 = arith.constant 0 : index
    %2415 = vector.load %arg4[%c2_1138, %c0_1139, %c0_1140] : memref<5x1x128xf32, #tpu.memory_space<vmem>>, vector<1x1x128xf32>
    %2416 = vector.shape_cast %2415 : vector<1x1x128xf32> to vector<1x128xf32>
    %2417 = vector.broadcast %2416 : vector<1x128xf32> to vector<8x128xf32>
    %2418 = arith.addf %2414, %2417 : vector<8x128xf32>
    %2419 = vector.extract_strided_slice %2418 {offsets = [0, 0], sizes = [8, 32], strides = [1, 1]} : vector<8x128xf32> to vector<8x32xf32>
    %cst_1141 = arith.constant 5.000000e-01 : f32
    %2420 = vector.broadcast %cst_1141 : f32 to vector<8x32xf32>
    %2421 = arith.mulf %2420, %2419 : vector<8x32xf32>
    %2422 = math.tanh %2421 : vector<8x32xf32>
    %cst_1142 = arith.constant 5.000000e-01 : f32
    %2423 = vector.broadcast %cst_1142 : f32 to vector<8x32xf32>
    %2424 = arith.mulf %2423, %2422 : vector<8x32xf32>
    %cst_1143 = arith.constant 5.000000e-01 : f32
    %2425 = vector.broadcast %cst_1143 : f32 to vector<8x32xf32>
    %2426 = arith.addf %2424, %2425 : vector<8x32xf32>
    %2427 = vector.extract_strided_slice %2418 {offsets = [0, 32], sizes = [8, 32], strides = [1, 1]} : vector<8x128xf32> to vector<8x32xf32>
    %cst_1144 = arith.constant 5.000000e-01 : f32
    %2428 = vector.broadcast %cst_1144 : f32 to vector<8x32xf32>
    %2429 = arith.mulf %2428, %2427 : vector<8x32xf32>
    %2430 = math.tanh %2429 : vector<8x32xf32>
    %cst_1145 = arith.constant 5.000000e-01 : f32
    %2431 = vector.broadcast %cst_1145 : f32 to vector<8x32xf32>
    %2432 = arith.mulf %2431, %2430 : vector<8x32xf32>
    %cst_1146 = arith.constant 5.000000e-01 : f32
    %2433 = vector.broadcast %cst_1146 : f32 to vector<8x32xf32>
    %2434 = arith.addf %2432, %2433 : vector<8x32xf32>
    %2435 = vector.extract_strided_slice %2418 {offsets = [0, 64], sizes = [8, 32], strides = [1, 1]} : vector<8x128xf32> to vector<8x32xf32>
    %2436 = math.tanh %2435 : vector<8x32xf32>
    %2437 = vector.extract_strided_slice %2418 {offsets = [0, 96], sizes = [8, 32], strides = [1, 1]} : vector<8x128xf32> to vector<8x32xf32>
    %cst_1147 = arith.constant 5.000000e-01 : f32
    %2438 = vector.broadcast %cst_1147 : f32 to vector<8x32xf32>
    %2439 = arith.mulf %2438, %2437 : vector<8x32xf32>
    %2440 = math.tanh %2439 : vector<8x32xf32>
    %cst_1148 = arith.constant 5.000000e-01 : f32
    %2441 = vector.broadcast %cst_1148 : f32 to vector<8x32xf32>
    %2442 = arith.mulf %2441, %2440 : vector<8x32xf32>
    %cst_1149 = arith.constant 5.000000e-01 : f32
    %2443 = vector.broadcast %cst_1149 : f32 to vector<8x32xf32>
    %2444 = arith.addf %2442, %2443 : vector<8x32xf32>
    %2445 = arith.mulf %2434, %2202 : vector<8x32xf32>
    %2446 = arith.mulf %2426, %2436 : vector<8x32xf32>
    %2447 = arith.addf %2445, %2446 : vector<8x32xf32>
    %2448 = math.tanh %2447 : vector<8x32xf32>
    %2449 = arith.mulf %2444, %2448 : vector<8x32xf32>
    %c2_i32_1150 = arith.constant 2 : i32
    %2450 = arith.subi %c9_i32, %c2_i32_1150 : i32
    %c0_i32_1151 = arith.constant 0 : i32
    %2451 = arith.cmpi sge, %2450, %c0_i32_1151 : i32
    %c8_i32_1152 = arith.constant 8 : i32
    %2452 = arith.cmpi slt, %2450, %c8_i32_1152 : i32
    %2453 = arith.andi %2451, %2452 : i1
    %2454 = arith.select %2453, %2449, %2201 : vector<8x32xf32>
    %2455 = arith.select %2453, %2447, %2202 : vector<8x32xf32>
    %2456 = arith.select %2453, %2449, %2203 : vector<8x32xf32>
    %c3_1153 = arith.constant 3 : index
    %c0_1154 = arith.constant 0 : index
    %c0_1155 = arith.constant 0 : index
    %2457 = vector.load %arg2[%c3_1153, %c0_1154, %c0_1155] : memref<5x32x128xf32, #tpu.memory_space<vmem>>, vector<1x32x128xf32>
    %2458 = vector.shape_cast %2457 : vector<1x32x128xf32> to vector<32x128xf32>
    %cst_1156 = arith.constant dense<0.000000e+00> : vector<8x128xf32>
    %2459 = tpu.matmul %2203, %2458, %cst_1156 {dimension_numbers = #tpu.dot_dimension_numbers<[1], [0], [0], [1], [0, 0, 1, 1], [], []>} : vector<8x32xf32>, vector<32x128xf32>, vector<8x128xf32> -> vector<8x128xf32>
    %c3_1157 = arith.constant 3 : index
    %c0_1158 = arith.constant 0 : index
    %c0_1159 = arith.constant 0 : index
    %2460 = vector.load %arg3[%c3_1157, %c0_1158, %c0_1159] : memref<5x32x128xf32, #tpu.memory_space<vmem>>, vector<1x32x128xf32>
    %2461 = vector.shape_cast %2460 : vector<1x32x128xf32> to vector<32x128xf32>
    %cst_1160 = arith.constant dense<0.000000e+00> : vector<8x128xf32>
    %2462 = tpu.matmul %2250, %2461, %cst_1160 {dimension_numbers = #tpu.dot_dimension_numbers<[1], [0], [0], [1], [0, 0, 1, 1], [], []>} : vector<8x32xf32>, vector<32x128xf32>, vector<8x128xf32> -> vector<8x128xf32>
    %2463 = arith.addf %2459, %2462 : vector<8x128xf32>
    %c3_1161 = arith.constant 3 : index
    %c0_1162 = arith.constant 0 : index
    %c0_1163 = arith.constant 0 : index
    %2464 = vector.load %arg4[%c3_1161, %c0_1162, %c0_1163] : memref<5x1x128xf32, #tpu.memory_space<vmem>>, vector<1x1x128xf32>
    %2465 = vector.shape_cast %2464 : vector<1x1x128xf32> to vector<1x128xf32>
    %2466 = vector.broadcast %2465 : vector<1x128xf32> to vector<8x128xf32>
    %2467 = arith.addf %2463, %2466 : vector<8x128xf32>
    %2468 = vector.extract_strided_slice %2467 {offsets = [0, 0], sizes = [8, 32], strides = [1, 1]} : vector<8x128xf32> to vector<8x32xf32>
    %cst_1164 = arith.constant 5.000000e-01 : f32
    %2469 = vector.broadcast %cst_1164 : f32 to vector<8x32xf32>
    %2470 = arith.mulf %2469, %2468 : vector<8x32xf32>
    %2471 = math.tanh %2470 : vector<8x32xf32>
    %cst_1165 = arith.constant 5.000000e-01 : f32
    %2472 = vector.broadcast %cst_1165 : f32 to vector<8x32xf32>
    %2473 = arith.mulf %2472, %2471 : vector<8x32xf32>
    %cst_1166 = arith.constant 5.000000e-01 : f32
    %2474 = vector.broadcast %cst_1166 : f32 to vector<8x32xf32>
    %2475 = arith.addf %2473, %2474 : vector<8x32xf32>
    %2476 = vector.extract_strided_slice %2467 {offsets = [0, 32], sizes = [8, 32], strides = [1, 1]} : vector<8x128xf32> to vector<8x32xf32>
    %cst_1167 = arith.constant 5.000000e-01 : f32
    %2477 = vector.broadcast %cst_1167 : f32 to vector<8x32xf32>
    %2478 = arith.mulf %2477, %2476 : vector<8x32xf32>
    %2479 = math.tanh %2478 : vector<8x32xf32>
    %cst_1168 = arith.constant 5.000000e-01 : f32
    %2480 = vector.broadcast %cst_1168 : f32 to vector<8x32xf32>
    %2481 = arith.mulf %2480, %2479 : vector<8x32xf32>
    %cst_1169 = arith.constant 5.000000e-01 : f32
    %2482 = vector.broadcast %cst_1169 : f32 to vector<8x32xf32>
    %2483 = arith.addf %2481, %2482 : vector<8x32xf32>
    %2484 = vector.extract_strided_slice %2467 {offsets = [0, 64], sizes = [8, 32], strides = [1, 1]} : vector<8x128xf32> to vector<8x32xf32>
    %2485 = math.tanh %2484 : vector<8x32xf32>
    %2486 = vector.extract_strided_slice %2467 {offsets = [0, 96], sizes = [8, 32], strides = [1, 1]} : vector<8x128xf32> to vector<8x32xf32>
    %cst_1170 = arith.constant 5.000000e-01 : f32
    %2487 = vector.broadcast %cst_1170 : f32 to vector<8x32xf32>
    %2488 = arith.mulf %2487, %2486 : vector<8x32xf32>
    %2489 = math.tanh %2488 : vector<8x32xf32>
    %cst_1171 = arith.constant 5.000000e-01 : f32
    %2490 = vector.broadcast %cst_1171 : f32 to vector<8x32xf32>
    %2491 = arith.mulf %2490, %2489 : vector<8x32xf32>
    %cst_1172 = arith.constant 5.000000e-01 : f32
    %2492 = vector.broadcast %cst_1172 : f32 to vector<8x32xf32>
    %2493 = arith.addf %2491, %2492 : vector<8x32xf32>
    %2494 = arith.mulf %2483, %2251 : vector<8x32xf32>
    %2495 = arith.mulf %2475, %2485 : vector<8x32xf32>
    %2496 = arith.addf %2494, %2495 : vector<8x32xf32>
    %2497 = math.tanh %2496 : vector<8x32xf32>
    %2498 = arith.mulf %2493, %2497 : vector<8x32xf32>
    %c3_i32_1173 = arith.constant 3 : i32
    %2499 = arith.subi %c9_i32, %c3_i32_1173 : i32
    %c0_i32_1174 = arith.constant 0 : i32
    %2500 = arith.cmpi sge, %2499, %c0_i32_1174 : i32
    %c8_i32_1175 = arith.constant 8 : i32
    %2501 = arith.cmpi slt, %2499, %c8_i32_1175 : i32
    %2502 = arith.andi %2500, %2501 : i1
    %2503 = arith.select %2502, %2498, %2250 : vector<8x32xf32>
    %2504 = arith.select %2502, %2496, %2251 : vector<8x32xf32>
    %2505 = arith.select %2502, %2498, %2252 : vector<8x32xf32>
    %c4_1176 = arith.constant 4 : index
    %c0_1177 = arith.constant 0 : index
    %c0_1178 = arith.constant 0 : index
    %2506 = vector.load %arg2[%c4_1176, %c0_1177, %c0_1178] : memref<5x32x128xf32, #tpu.memory_space<vmem>>, vector<1x32x128xf32>
    %2507 = vector.shape_cast %2506 : vector<1x32x128xf32> to vector<32x128xf32>
    %cst_1179 = arith.constant dense<0.000000e+00> : vector<8x128xf32>
    %2508 = tpu.matmul %2252, %2507, %cst_1179 {dimension_numbers = #tpu.dot_dimension_numbers<[1], [0], [0], [1], [0, 0, 1, 1], [], []>} : vector<8x32xf32>, vector<32x128xf32>, vector<8x128xf32> -> vector<8x128xf32>
    %c4_1180 = arith.constant 4 : index
    %c0_1181 = arith.constant 0 : index
    %c0_1182 = arith.constant 0 : index
    %2509 = vector.load %arg3[%c4_1180, %c0_1181, %c0_1182] : memref<5x32x128xf32, #tpu.memory_space<vmem>>, vector<1x32x128xf32>
    %2510 = vector.shape_cast %2509 : vector<1x32x128xf32> to vector<32x128xf32>
    %cst_1183 = arith.constant dense<0.000000e+00> : vector<8x128xf32>
    %2511 = tpu.matmul %2299, %2510, %cst_1183 {dimension_numbers = #tpu.dot_dimension_numbers<[1], [0], [0], [1], [0, 0, 1, 1], [], []>} : vector<8x32xf32>, vector<32x128xf32>, vector<8x128xf32> -> vector<8x128xf32>
    %2512 = arith.addf %2508, %2511 : vector<8x128xf32>
    %c4_1184 = arith.constant 4 : index
    %c0_1185 = arith.constant 0 : index
    %c0_1186 = arith.constant 0 : index
    %2513 = vector.load %arg4[%c4_1184, %c0_1185, %c0_1186] : memref<5x1x128xf32, #tpu.memory_space<vmem>>, vector<1x1x128xf32>
    %2514 = vector.shape_cast %2513 : vector<1x1x128xf32> to vector<1x128xf32>
    %2515 = vector.broadcast %2514 : vector<1x128xf32> to vector<8x128xf32>
    %2516 = arith.addf %2512, %2515 : vector<8x128xf32>
    %2517 = vector.extract_strided_slice %2516 {offsets = [0, 0], sizes = [8, 32], strides = [1, 1]} : vector<8x128xf32> to vector<8x32xf32>
    %cst_1187 = arith.constant 5.000000e-01 : f32
    %2518 = vector.broadcast %cst_1187 : f32 to vector<8x32xf32>
    %2519 = arith.mulf %2518, %2517 : vector<8x32xf32>
    %2520 = math.tanh %2519 : vector<8x32xf32>
    %cst_1188 = arith.constant 5.000000e-01 : f32
    %2521 = vector.broadcast %cst_1188 : f32 to vector<8x32xf32>
    %2522 = arith.mulf %2521, %2520 : vector<8x32xf32>
    %cst_1189 = arith.constant 5.000000e-01 : f32
    %2523 = vector.broadcast %cst_1189 : f32 to vector<8x32xf32>
    %2524 = arith.addf %2522, %2523 : vector<8x32xf32>
    %2525 = vector.extract_strided_slice %2516 {offsets = [0, 32], sizes = [8, 32], strides = [1, 1]} : vector<8x128xf32> to vector<8x32xf32>
    %cst_1190 = arith.constant 5.000000e-01 : f32
    %2526 = vector.broadcast %cst_1190 : f32 to vector<8x32xf32>
    %2527 = arith.mulf %2526, %2525 : vector<8x32xf32>
    %2528 = math.tanh %2527 : vector<8x32xf32>
    %cst_1191 = arith.constant 5.000000e-01 : f32
    %2529 = vector.broadcast %cst_1191 : f32 to vector<8x32xf32>
    %2530 = arith.mulf %2529, %2528 : vector<8x32xf32>
    %cst_1192 = arith.constant 5.000000e-01 : f32
    %2531 = vector.broadcast %cst_1192 : f32 to vector<8x32xf32>
    %2532 = arith.addf %2530, %2531 : vector<8x32xf32>
    %2533 = vector.extract_strided_slice %2516 {offsets = [0, 64], sizes = [8, 32], strides = [1, 1]} : vector<8x128xf32> to vector<8x32xf32>
    %2534 = math.tanh %2533 : vector<8x32xf32>
    %2535 = vector.extract_strided_slice %2516 {offsets = [0, 96], sizes = [8, 32], strides = [1, 1]} : vector<8x128xf32> to vector<8x32xf32>
    %cst_1193 = arith.constant 5.000000e-01 : f32
    %2536 = vector.broadcast %cst_1193 : f32 to vector<8x32xf32>
    %2537 = arith.mulf %2536, %2535 : vector<8x32xf32>
    %2538 = math.tanh %2537 : vector<8x32xf32>
    %cst_1194 = arith.constant 5.000000e-01 : f32
    %2539 = vector.broadcast %cst_1194 : f32 to vector<8x32xf32>
    %2540 = arith.mulf %2539, %2538 : vector<8x32xf32>
    %cst_1195 = arith.constant 5.000000e-01 : f32
    %2541 = vector.broadcast %cst_1195 : f32 to vector<8x32xf32>
    %2542 = arith.addf %2540, %2541 : vector<8x32xf32>
    %2543 = arith.mulf %2532, %2300 : vector<8x32xf32>
    %2544 = arith.mulf %2524, %2534 : vector<8x32xf32>
    %2545 = arith.addf %2543, %2544 : vector<8x32xf32>
    %2546 = math.tanh %2545 : vector<8x32xf32>
    %2547 = arith.mulf %2542, %2546 : vector<8x32xf32>
    %c4_i32_1196 = arith.constant 4 : i32
    %2548 = arith.subi %c9_i32, %c4_i32_1196 : i32
    %c0_i32_1197 = arith.constant 0 : i32
    %2549 = arith.cmpi sge, %2548, %c0_i32_1197 : i32
    %c8_i32_1198 = arith.constant 8 : i32
    %2550 = arith.cmpi slt, %2548, %c8_i32_1198 : i32
    %2551 = arith.andi %2549, %2550 : i1
    %2552 = arith.select %2551, %2547, %2299 : vector<8x32xf32>
    %2553 = arith.select %2551, %2545, %2300 : vector<8x32xf32>
    %2554 = arith.select %2551, %2547, %2301 : vector<8x32xf32>
    %c10_i32 = arith.constant 10 : i32
    %c7_i32_1199 = arith.constant 7 : i32
    %2555 = arith.minsi %c10_i32, %c7_i32_1199 : i32
    %2556 = arith.index_cast %2555 : i32 to index
    %c0_1200 = arith.constant 0 : index
    %c0_1201 = arith.constant 0 : index
    %2557 = vector.load %arg1[%2556, %c0_1200, %c0_1201] : memref<8x8x32xf32, #tpu.memory_space<vmem>>, vector<1x8x32xf32>
    %2558 = vector.shape_cast %2557 : vector<1x8x32xf32> to vector<8x32xf32>
    %c0_1202 = arith.constant 0 : index
    %c0_1203 = arith.constant 0 : index
    %c0_1204 = arith.constant 0 : index
    %2559 = vector.load %arg2[%c0_1202, %c0_1203, %c0_1204] : memref<5x32x128xf32, #tpu.memory_space<vmem>>, vector<1x32x128xf32>
    %2560 = vector.shape_cast %2559 : vector<1x32x128xf32> to vector<32x128xf32>
    %2561 = vector.extract_strided_slice %2560 {offsets = [0, 0], sizes = [1, 128], strides = [1, 1]} : vector<32x128xf32> to vector<1x128xf32>
    %2562 = vector.extract_strided_slice %2558 {offsets = [0, 0], sizes = [8, 1], strides = [1, 1]} : vector<8x32xf32> to vector<8x1xf32>
    %2563 = vector.broadcast %2562 : vector<8x1xf32> to vector<8x128xf32>
    %2564 = vector.broadcast %2561 : vector<1x128xf32> to vector<8x128xf32>
    %2565 = arith.mulf %2563, %2564 : vector<8x128xf32>
    %c0_1205 = arith.constant 0 : index
    %c0_1206 = arith.constant 0 : index
    %c0_1207 = arith.constant 0 : index
    %2566 = vector.load %arg3[%c0_1205, %c0_1206, %c0_1207] : memref<5x32x128xf32, #tpu.memory_space<vmem>>, vector<1x32x128xf32>
    %2567 = vector.shape_cast %2566 : vector<1x32x128xf32> to vector<32x128xf32>
    %cst_1208 = arith.constant dense<0.000000e+00> : vector<8x128xf32>
    %2568 = tpu.matmul %2356, %2567, %cst_1208 {dimension_numbers = #tpu.dot_dimension_numbers<[1], [0], [0], [1], [0, 0, 1, 1], [], []>} : vector<8x32xf32>, vector<32x128xf32>, vector<8x128xf32> -> vector<8x128xf32>
    %2569 = arith.addf %2565, %2568 : vector<8x128xf32>
    %c0_1209 = arith.constant 0 : index
    %c0_1210 = arith.constant 0 : index
    %c0_1211 = arith.constant 0 : index
    %2570 = vector.load %arg4[%c0_1209, %c0_1210, %c0_1211] : memref<5x1x128xf32, #tpu.memory_space<vmem>>, vector<1x1x128xf32>
    %2571 = vector.shape_cast %2570 : vector<1x1x128xf32> to vector<1x128xf32>
    %2572 = vector.broadcast %2571 : vector<1x128xf32> to vector<8x128xf32>
    %2573 = arith.addf %2569, %2572 : vector<8x128xf32>
    %2574 = vector.extract_strided_slice %2573 {offsets = [0, 0], sizes = [8, 32], strides = [1, 1]} : vector<8x128xf32> to vector<8x32xf32>
    %cst_1212 = arith.constant 5.000000e-01 : f32
    %2575 = vector.broadcast %cst_1212 : f32 to vector<8x32xf32>
    %2576 = arith.mulf %2575, %2574 : vector<8x32xf32>
    %2577 = math.tanh %2576 : vector<8x32xf32>
    %cst_1213 = arith.constant 5.000000e-01 : f32
    %2578 = vector.broadcast %cst_1213 : f32 to vector<8x32xf32>
    %2579 = arith.mulf %2578, %2577 : vector<8x32xf32>
    %cst_1214 = arith.constant 5.000000e-01 : f32
    %2580 = vector.broadcast %cst_1214 : f32 to vector<8x32xf32>
    %2581 = arith.addf %2579, %2580 : vector<8x32xf32>
    %2582 = vector.extract_strided_slice %2573 {offsets = [0, 32], sizes = [8, 32], strides = [1, 1]} : vector<8x128xf32> to vector<8x32xf32>
    %cst_1215 = arith.constant 5.000000e-01 : f32
    %2583 = vector.broadcast %cst_1215 : f32 to vector<8x32xf32>
    %2584 = arith.mulf %2583, %2582 : vector<8x32xf32>
    %2585 = math.tanh %2584 : vector<8x32xf32>
    %cst_1216 = arith.constant 5.000000e-01 : f32
    %2586 = vector.broadcast %cst_1216 : f32 to vector<8x32xf32>
    %2587 = arith.mulf %2586, %2585 : vector<8x32xf32>
    %cst_1217 = arith.constant 5.000000e-01 : f32
    %2588 = vector.broadcast %cst_1217 : f32 to vector<8x32xf32>
    %2589 = arith.addf %2587, %2588 : vector<8x32xf32>
    %2590 = vector.extract_strided_slice %2573 {offsets = [0, 64], sizes = [8, 32], strides = [1, 1]} : vector<8x128xf32> to vector<8x32xf32>
    %2591 = math.tanh %2590 : vector<8x32xf32>
    %2592 = vector.extract_strided_slice %2573 {offsets = [0, 96], sizes = [8, 32], strides = [1, 1]} : vector<8x128xf32> to vector<8x32xf32>
    %cst_1218 = arith.constant 5.000000e-01 : f32
    %2593 = vector.broadcast %cst_1218 : f32 to vector<8x32xf32>
    %2594 = arith.mulf %2593, %2592 : vector<8x32xf32>
    %2595 = math.tanh %2594 : vector<8x32xf32>
    %cst_1219 = arith.constant 5.000000e-01 : f32
    %2596 = vector.broadcast %cst_1219 : f32 to vector<8x32xf32>
    %2597 = arith.mulf %2596, %2595 : vector<8x32xf32>
    %cst_1220 = arith.constant 5.000000e-01 : f32
    %2598 = vector.broadcast %cst_1220 : f32 to vector<8x32xf32>
    %2599 = arith.addf %2597, %2598 : vector<8x32xf32>
    %2600 = arith.mulf %2589, %2357 : vector<8x32xf32>
    %2601 = arith.mulf %2581, %2591 : vector<8x32xf32>
    %2602 = arith.addf %2600, %2601 : vector<8x32xf32>
    %2603 = math.tanh %2602 : vector<8x32xf32>
    %2604 = arith.mulf %2599, %2603 : vector<8x32xf32>
    %c0_i32_1221 = arith.constant 0 : i32
    %2605 = arith.subi %c10_i32, %c0_i32_1221 : i32
    %c0_i32_1222 = arith.constant 0 : i32
    %2606 = arith.cmpi sge, %2605, %c0_i32_1222 : i32
    %c8_i32_1223 = arith.constant 8 : i32
    %2607 = arith.cmpi slt, %2605, %c8_i32_1223 : i32
    %2608 = arith.andi %2606, %2607 : i1
    %2609 = arith.select %2608, %2604, %2356 : vector<8x32xf32>
    %2610 = arith.select %2608, %2602, %2357 : vector<8x32xf32>
    %2611 = arith.select %2608, %2604, %2358 : vector<8x32xf32>
    %c1_1224 = arith.constant 1 : index
    %c0_1225 = arith.constant 0 : index
    %c0_1226 = arith.constant 0 : index
    %2612 = vector.load %arg2[%c1_1224, %c0_1225, %c0_1226] : memref<5x32x128xf32, #tpu.memory_space<vmem>>, vector<1x32x128xf32>
    %2613 = vector.shape_cast %2612 : vector<1x32x128xf32> to vector<32x128xf32>
    %cst_1227 = arith.constant dense<0.000000e+00> : vector<8x128xf32>
    %2614 = tpu.matmul %2358, %2613, %cst_1227 {dimension_numbers = #tpu.dot_dimension_numbers<[1], [0], [0], [1], [0, 0, 1, 1], [], []>} : vector<8x32xf32>, vector<32x128xf32>, vector<8x128xf32> -> vector<8x128xf32>
    %c1_1228 = arith.constant 1 : index
    %c0_1229 = arith.constant 0 : index
    %c0_1230 = arith.constant 0 : index
    %2615 = vector.load %arg3[%c1_1228, %c0_1229, %c0_1230] : memref<5x32x128xf32, #tpu.memory_space<vmem>>, vector<1x32x128xf32>
    %2616 = vector.shape_cast %2615 : vector<1x32x128xf32> to vector<32x128xf32>
    %cst_1231 = arith.constant dense<0.000000e+00> : vector<8x128xf32>
    %2617 = tpu.matmul %2405, %2616, %cst_1231 {dimension_numbers = #tpu.dot_dimension_numbers<[1], [0], [0], [1], [0, 0, 1, 1], [], []>} : vector<8x32xf32>, vector<32x128xf32>, vector<8x128xf32> -> vector<8x128xf32>
    %2618 = arith.addf %2614, %2617 : vector<8x128xf32>
    %c1_1232 = arith.constant 1 : index
    %c0_1233 = arith.constant 0 : index
    %c0_1234 = arith.constant 0 : index
    %2619 = vector.load %arg4[%c1_1232, %c0_1233, %c0_1234] : memref<5x1x128xf32, #tpu.memory_space<vmem>>, vector<1x1x128xf32>
    %2620 = vector.shape_cast %2619 : vector<1x1x128xf32> to vector<1x128xf32>
    %2621 = vector.broadcast %2620 : vector<1x128xf32> to vector<8x128xf32>
    %2622 = arith.addf %2618, %2621 : vector<8x128xf32>
    %2623 = vector.extract_strided_slice %2622 {offsets = [0, 0], sizes = [8, 32], strides = [1, 1]} : vector<8x128xf32> to vector<8x32xf32>
    %cst_1235 = arith.constant 5.000000e-01 : f32
    %2624 = vector.broadcast %cst_1235 : f32 to vector<8x32xf32>
    %2625 = arith.mulf %2624, %2623 : vector<8x32xf32>
    %2626 = math.tanh %2625 : vector<8x32xf32>
    %cst_1236 = arith.constant 5.000000e-01 : f32
    %2627 = vector.broadcast %cst_1236 : f32 to vector<8x32xf32>
    %2628 = arith.mulf %2627, %2626 : vector<8x32xf32>
    %cst_1237 = arith.constant 5.000000e-01 : f32
    %2629 = vector.broadcast %cst_1237 : f32 to vector<8x32xf32>
    %2630 = arith.addf %2628, %2629 : vector<8x32xf32>
    %2631 = vector.extract_strided_slice %2622 {offsets = [0, 32], sizes = [8, 32], strides = [1, 1]} : vector<8x128xf32> to vector<8x32xf32>
    %cst_1238 = arith.constant 5.000000e-01 : f32
    %2632 = vector.broadcast %cst_1238 : f32 to vector<8x32xf32>
    %2633 = arith.mulf %2632, %2631 : vector<8x32xf32>
    %2634 = math.tanh %2633 : vector<8x32xf32>
    %cst_1239 = arith.constant 5.000000e-01 : f32
    %2635 = vector.broadcast %cst_1239 : f32 to vector<8x32xf32>
    %2636 = arith.mulf %2635, %2634 : vector<8x32xf32>
    %cst_1240 = arith.constant 5.000000e-01 : f32
    %2637 = vector.broadcast %cst_1240 : f32 to vector<8x32xf32>
    %2638 = arith.addf %2636, %2637 : vector<8x32xf32>
    %2639 = vector.extract_strided_slice %2622 {offsets = [0, 64], sizes = [8, 32], strides = [1, 1]} : vector<8x128xf32> to vector<8x32xf32>
    %2640 = math.tanh %2639 : vector<8x32xf32>
    %2641 = vector.extract_strided_slice %2622 {offsets = [0, 96], sizes = [8, 32], strides = [1, 1]} : vector<8x128xf32> to vector<8x32xf32>
    %cst_1241 = arith.constant 5.000000e-01 : f32
    %2642 = vector.broadcast %cst_1241 : f32 to vector<8x32xf32>
    %2643 = arith.mulf %2642, %2641 : vector<8x32xf32>
    %2644 = math.tanh %2643 : vector<8x32xf32>
    %cst_1242 = arith.constant 5.000000e-01 : f32
    %2645 = vector.broadcast %cst_1242 : f32 to vector<8x32xf32>
    %2646 = arith.mulf %2645, %2644 : vector<8x32xf32>
    %cst_1243 = arith.constant 5.000000e-01 : f32
    %2647 = vector.broadcast %cst_1243 : f32 to vector<8x32xf32>
    %2648 = arith.addf %2646, %2647 : vector<8x32xf32>
    %2649 = arith.mulf %2638, %2406 : vector<8x32xf32>
    %2650 = arith.mulf %2630, %2640 : vector<8x32xf32>
    %2651 = arith.addf %2649, %2650 : vector<8x32xf32>
    %2652 = math.tanh %2651 : vector<8x32xf32>
    %2653 = arith.mulf %2648, %2652 : vector<8x32xf32>
    %c1_i32_1244 = arith.constant 1 : i32
    %2654 = arith.subi %c10_i32, %c1_i32_1244 : i32
    %c0_i32_1245 = arith.constant 0 : i32
    %2655 = arith.cmpi sge, %2654, %c0_i32_1245 : i32
    %c8_i32_1246 = arith.constant 8 : i32
    %2656 = arith.cmpi slt, %2654, %c8_i32_1246 : i32
    %2657 = arith.andi %2655, %2656 : i1
    %2658 = arith.select %2657, %2653, %2405 : vector<8x32xf32>
    %2659 = arith.select %2657, %2651, %2406 : vector<8x32xf32>
    %2660 = arith.select %2657, %2653, %2407 : vector<8x32xf32>
    %c2_1247 = arith.constant 2 : index
    %c0_1248 = arith.constant 0 : index
    %c0_1249 = arith.constant 0 : index
    %2661 = vector.load %arg2[%c2_1247, %c0_1248, %c0_1249] : memref<5x32x128xf32, #tpu.memory_space<vmem>>, vector<1x32x128xf32>
    %2662 = vector.shape_cast %2661 : vector<1x32x128xf32> to vector<32x128xf32>
    %cst_1250 = arith.constant dense<0.000000e+00> : vector<8x128xf32>
    %2663 = tpu.matmul %2407, %2662, %cst_1250 {dimension_numbers = #tpu.dot_dimension_numbers<[1], [0], [0], [1], [0, 0, 1, 1], [], []>} : vector<8x32xf32>, vector<32x128xf32>, vector<8x128xf32> -> vector<8x128xf32>
    %c2_1251 = arith.constant 2 : index
    %c0_1252 = arith.constant 0 : index
    %c0_1253 = arith.constant 0 : index
    %2664 = vector.load %arg3[%c2_1251, %c0_1252, %c0_1253] : memref<5x32x128xf32, #tpu.memory_space<vmem>>, vector<1x32x128xf32>
    %2665 = vector.shape_cast %2664 : vector<1x32x128xf32> to vector<32x128xf32>
    %cst_1254 = arith.constant dense<0.000000e+00> : vector<8x128xf32>
    %2666 = tpu.matmul %2454, %2665, %cst_1254 {dimension_numbers = #tpu.dot_dimension_numbers<[1], [0], [0], [1], [0, 0, 1, 1], [], []>} : vector<8x32xf32>, vector<32x128xf32>, vector<8x128xf32> -> vector<8x128xf32>
    %2667 = arith.addf %2663, %2666 : vector<8x128xf32>
    %c2_1255 = arith.constant 2 : index
    %c0_1256 = arith.constant 0 : index
    %c0_1257 = arith.constant 0 : index
    %2668 = vector.load %arg4[%c2_1255, %c0_1256, %c0_1257] : memref<5x1x128xf32, #tpu.memory_space<vmem>>, vector<1x1x128xf32>
    %2669 = vector.shape_cast %2668 : vector<1x1x128xf32> to vector<1x128xf32>
    %2670 = vector.broadcast %2669 : vector<1x128xf32> to vector<8x128xf32>
    %2671 = arith.addf %2667, %2670 : vector<8x128xf32>
    %2672 = vector.extract_strided_slice %2671 {offsets = [0, 0], sizes = [8, 32], strides = [1, 1]} : vector<8x128xf32> to vector<8x32xf32>
    %cst_1258 = arith.constant 5.000000e-01 : f32
    %2673 = vector.broadcast %cst_1258 : f32 to vector<8x32xf32>
    %2674 = arith.mulf %2673, %2672 : vector<8x32xf32>
    %2675 = math.tanh %2674 : vector<8x32xf32>
    %cst_1259 = arith.constant 5.000000e-01 : f32
    %2676 = vector.broadcast %cst_1259 : f32 to vector<8x32xf32>
    %2677 = arith.mulf %2676, %2675 : vector<8x32xf32>
    %cst_1260 = arith.constant 5.000000e-01 : f32
    %2678 = vector.broadcast %cst_1260 : f32 to vector<8x32xf32>
    %2679 = arith.addf %2677, %2678 : vector<8x32xf32>
    %2680 = vector.extract_strided_slice %2671 {offsets = [0, 32], sizes = [8, 32], strides = [1, 1]} : vector<8x128xf32> to vector<8x32xf32>
    %cst_1261 = arith.constant 5.000000e-01 : f32
    %2681 = vector.broadcast %cst_1261 : f32 to vector<8x32xf32>
    %2682 = arith.mulf %2681, %2680 : vector<8x32xf32>
    %2683 = math.tanh %2682 : vector<8x32xf32>
    %cst_1262 = arith.constant 5.000000e-01 : f32
    %2684 = vector.broadcast %cst_1262 : f32 to vector<8x32xf32>
    %2685 = arith.mulf %2684, %2683 : vector<8x32xf32>
    %cst_1263 = arith.constant 5.000000e-01 : f32
    %2686 = vector.broadcast %cst_1263 : f32 to vector<8x32xf32>
    %2687 = arith.addf %2685, %2686 : vector<8x32xf32>
    %2688 = vector.extract_strided_slice %2671 {offsets = [0, 64], sizes = [8, 32], strides = [1, 1]} : vector<8x128xf32> to vector<8x32xf32>
    %2689 = math.tanh %2688 : vector<8x32xf32>
    %2690 = vector.extract_strided_slice %2671 {offsets = [0, 96], sizes = [8, 32], strides = [1, 1]} : vector<8x128xf32> to vector<8x32xf32>
    %cst_1264 = arith.constant 5.000000e-01 : f32
    %2691 = vector.broadcast %cst_1264 : f32 to vector<8x32xf32>
    %2692 = arith.mulf %2691, %2690 : vector<8x32xf32>
    %2693 = math.tanh %2692 : vector<8x32xf32>
    %cst_1265 = arith.constant 5.000000e-01 : f32
    %2694 = vector.broadcast %cst_1265 : f32 to vector<8x32xf32>
    %2695 = arith.mulf %2694, %2693 : vector<8x32xf32>
    %cst_1266 = arith.constant 5.000000e-01 : f32
    %2696 = vector.broadcast %cst_1266 : f32 to vector<8x32xf32>
    %2697 = arith.addf %2695, %2696 : vector<8x32xf32>
    %2698 = arith.mulf %2687, %2455 : vector<8x32xf32>
    %2699 = arith.mulf %2679, %2689 : vector<8x32xf32>
    %2700 = arith.addf %2698, %2699 : vector<8x32xf32>
    %2701 = math.tanh %2700 : vector<8x32xf32>
    %2702 = arith.mulf %2697, %2701 : vector<8x32xf32>
    %c2_i32_1267 = arith.constant 2 : i32
    %2703 = arith.subi %c10_i32, %c2_i32_1267 : i32
    %c0_i32_1268 = arith.constant 0 : i32
    %2704 = arith.cmpi sge, %2703, %c0_i32_1268 : i32
    %c8_i32_1269 = arith.constant 8 : i32
    %2705 = arith.cmpi slt, %2703, %c8_i32_1269 : i32
    %2706 = arith.andi %2704, %2705 : i1
    %2707 = arith.select %2706, %2702, %2454 : vector<8x32xf32>
    %2708 = arith.select %2706, %2700, %2455 : vector<8x32xf32>
    %2709 = arith.select %2706, %2702, %2456 : vector<8x32xf32>
    %c3_1270 = arith.constant 3 : index
    %c0_1271 = arith.constant 0 : index
    %c0_1272 = arith.constant 0 : index
    %2710 = vector.load %arg2[%c3_1270, %c0_1271, %c0_1272] : memref<5x32x128xf32, #tpu.memory_space<vmem>>, vector<1x32x128xf32>
    %2711 = vector.shape_cast %2710 : vector<1x32x128xf32> to vector<32x128xf32>
    %cst_1273 = arith.constant dense<0.000000e+00> : vector<8x128xf32>
    %2712 = tpu.matmul %2456, %2711, %cst_1273 {dimension_numbers = #tpu.dot_dimension_numbers<[1], [0], [0], [1], [0, 0, 1, 1], [], []>} : vector<8x32xf32>, vector<32x128xf32>, vector<8x128xf32> -> vector<8x128xf32>
    %c3_1274 = arith.constant 3 : index
    %c0_1275 = arith.constant 0 : index
    %c0_1276 = arith.constant 0 : index
    %2713 = vector.load %arg3[%c3_1274, %c0_1275, %c0_1276] : memref<5x32x128xf32, #tpu.memory_space<vmem>>, vector<1x32x128xf32>
    %2714 = vector.shape_cast %2713 : vector<1x32x128xf32> to vector<32x128xf32>
    %cst_1277 = arith.constant dense<0.000000e+00> : vector<8x128xf32>
    %2715 = tpu.matmul %2503, %2714, %cst_1277 {dimension_numbers = #tpu.dot_dimension_numbers<[1], [0], [0], [1], [0, 0, 1, 1], [], []>} : vector<8x32xf32>, vector<32x128xf32>, vector<8x128xf32> -> vector<8x128xf32>
    %2716 = arith.addf %2712, %2715 : vector<8x128xf32>
    %c3_1278 = arith.constant 3 : index
    %c0_1279 = arith.constant 0 : index
    %c0_1280 = arith.constant 0 : index
    %2717 = vector.load %arg4[%c3_1278, %c0_1279, %c0_1280] : memref<5x1x128xf32, #tpu.memory_space<vmem>>, vector<1x1x128xf32>
    %2718 = vector.shape_cast %2717 : vector<1x1x128xf32> to vector<1x128xf32>
    %2719 = vector.broadcast %2718 : vector<1x128xf32> to vector<8x128xf32>
    %2720 = arith.addf %2716, %2719 : vector<8x128xf32>
    %2721 = vector.extract_strided_slice %2720 {offsets = [0, 0], sizes = [8, 32], strides = [1, 1]} : vector<8x128xf32> to vector<8x32xf32>
    %cst_1281 = arith.constant 5.000000e-01 : f32
    %2722 = vector.broadcast %cst_1281 : f32 to vector<8x32xf32>
    %2723 = arith.mulf %2722, %2721 : vector<8x32xf32>
    %2724 = math.tanh %2723 : vector<8x32xf32>
    %cst_1282 = arith.constant 5.000000e-01 : f32
    %2725 = vector.broadcast %cst_1282 : f32 to vector<8x32xf32>
    %2726 = arith.mulf %2725, %2724 : vector<8x32xf32>
    %cst_1283 = arith.constant 5.000000e-01 : f32
    %2727 = vector.broadcast %cst_1283 : f32 to vector<8x32xf32>
    %2728 = arith.addf %2726, %2727 : vector<8x32xf32>
    %2729 = vector.extract_strided_slice %2720 {offsets = [0, 32], sizes = [8, 32], strides = [1, 1]} : vector<8x128xf32> to vector<8x32xf32>
    %cst_1284 = arith.constant 5.000000e-01 : f32
    %2730 = vector.broadcast %cst_1284 : f32 to vector<8x32xf32>
    %2731 = arith.mulf %2730, %2729 : vector<8x32xf32>
    %2732 = math.tanh %2731 : vector<8x32xf32>
    %cst_1285 = arith.constant 5.000000e-01 : f32
    %2733 = vector.broadcast %cst_1285 : f32 to vector<8x32xf32>
    %2734 = arith.mulf %2733, %2732 : vector<8x32xf32>
    %cst_1286 = arith.constant 5.000000e-01 : f32
    %2735 = vector.broadcast %cst_1286 : f32 to vector<8x32xf32>
    %2736 = arith.addf %2734, %2735 : vector<8x32xf32>
    %2737 = vector.extract_strided_slice %2720 {offsets = [0, 64], sizes = [8, 32], strides = [1, 1]} : vector<8x128xf32> to vector<8x32xf32>
    %2738 = math.tanh %2737 : vector<8x32xf32>
    %2739 = vector.extract_strided_slice %2720 {offsets = [0, 96], sizes = [8, 32], strides = [1, 1]} : vector<8x128xf32> to vector<8x32xf32>
    %cst_1287 = arith.constant 5.000000e-01 : f32
    %2740 = vector.broadcast %cst_1287 : f32 to vector<8x32xf32>
    %2741 = arith.mulf %2740, %2739 : vector<8x32xf32>
    %2742 = math.tanh %2741 : vector<8x32xf32>
    %cst_1288 = arith.constant 5.000000e-01 : f32
    %2743 = vector.broadcast %cst_1288 : f32 to vector<8x32xf32>
    %2744 = arith.mulf %2743, %2742 : vector<8x32xf32>
    %cst_1289 = arith.constant 5.000000e-01 : f32
    %2745 = vector.broadcast %cst_1289 : f32 to vector<8x32xf32>
    %2746 = arith.addf %2744, %2745 : vector<8x32xf32>
    %2747 = arith.mulf %2736, %2504 : vector<8x32xf32>
    %2748 = arith.mulf %2728, %2738 : vector<8x32xf32>
    %2749 = arith.addf %2747, %2748 : vector<8x32xf32>
    %2750 = math.tanh %2749 : vector<8x32xf32>
    %2751 = arith.mulf %2746, %2750 : vector<8x32xf32>
    %c3_i32_1290 = arith.constant 3 : i32
    %2752 = arith.subi %c10_i32, %c3_i32_1290 : i32
    %c0_i32_1291 = arith.constant 0 : i32
    %2753 = arith.cmpi sge, %2752, %c0_i32_1291 : i32
    %c8_i32_1292 = arith.constant 8 : i32
    %2754 = arith.cmpi slt, %2752, %c8_i32_1292 : i32
    %2755 = arith.andi %2753, %2754 : i1
    %2756 = arith.select %2755, %2751, %2503 : vector<8x32xf32>
    %2757 = arith.select %2755, %2749, %2504 : vector<8x32xf32>
    %2758 = arith.select %2755, %2751, %2505 : vector<8x32xf32>
    %c4_1293 = arith.constant 4 : index
    %c0_1294 = arith.constant 0 : index
    %c0_1295 = arith.constant 0 : index
    %2759 = vector.load %arg2[%c4_1293, %c0_1294, %c0_1295] : memref<5x32x128xf32, #tpu.memory_space<vmem>>, vector<1x32x128xf32>
    %2760 = vector.shape_cast %2759 : vector<1x32x128xf32> to vector<32x128xf32>
    %cst_1296 = arith.constant dense<0.000000e+00> : vector<8x128xf32>
    %2761 = tpu.matmul %2505, %2760, %cst_1296 {dimension_numbers = #tpu.dot_dimension_numbers<[1], [0], [0], [1], [0, 0, 1, 1], [], []>} : vector<8x32xf32>, vector<32x128xf32>, vector<8x128xf32> -> vector<8x128xf32>
    %c4_1297 = arith.constant 4 : index
    %c0_1298 = arith.constant 0 : index
    %c0_1299 = arith.constant 0 : index
    %2762 = vector.load %arg3[%c4_1297, %c0_1298, %c0_1299] : memref<5x32x128xf32, #tpu.memory_space<vmem>>, vector<1x32x128xf32>
    %2763 = vector.shape_cast %2762 : vector<1x32x128xf32> to vector<32x128xf32>
    %cst_1300 = arith.constant dense<0.000000e+00> : vector<8x128xf32>
    %2764 = tpu.matmul %2552, %2763, %cst_1300 {dimension_numbers = #tpu.dot_dimension_numbers<[1], [0], [0], [1], [0, 0, 1, 1], [], []>} : vector<8x32xf32>, vector<32x128xf32>, vector<8x128xf32> -> vector<8x128xf32>
    %2765 = arith.addf %2761, %2764 : vector<8x128xf32>
    %c4_1301 = arith.constant 4 : index
    %c0_1302 = arith.constant 0 : index
    %c0_1303 = arith.constant 0 : index
    %2766 = vector.load %arg4[%c4_1301, %c0_1302, %c0_1303] : memref<5x1x128xf32, #tpu.memory_space<vmem>>, vector<1x1x128xf32>
    %2767 = vector.shape_cast %2766 : vector<1x1x128xf32> to vector<1x128xf32>
    %2768 = vector.broadcast %2767 : vector<1x128xf32> to vector<8x128xf32>
    %2769 = arith.addf %2765, %2768 : vector<8x128xf32>
    %2770 = vector.extract_strided_slice %2769 {offsets = [0, 0], sizes = [8, 32], strides = [1, 1]} : vector<8x128xf32> to vector<8x32xf32>
    %cst_1304 = arith.constant 5.000000e-01 : f32
    %2771 = vector.broadcast %cst_1304 : f32 to vector<8x32xf32>
    %2772 = arith.mulf %2771, %2770 : vector<8x32xf32>
    %2773 = math.tanh %2772 : vector<8x32xf32>
    %cst_1305 = arith.constant 5.000000e-01 : f32
    %2774 = vector.broadcast %cst_1305 : f32 to vector<8x32xf32>
    %2775 = arith.mulf %2774, %2773 : vector<8x32xf32>
    %cst_1306 = arith.constant 5.000000e-01 : f32
    %2776 = vector.broadcast %cst_1306 : f32 to vector<8x32xf32>
    %2777 = arith.addf %2775, %2776 : vector<8x32xf32>
    %2778 = vector.extract_strided_slice %2769 {offsets = [0, 32], sizes = [8, 32], strides = [1, 1]} : vector<8x128xf32> to vector<8x32xf32>
    %cst_1307 = arith.constant 5.000000e-01 : f32
    %2779 = vector.broadcast %cst_1307 : f32 to vector<8x32xf32>
    %2780 = arith.mulf %2779, %2778 : vector<8x32xf32>
    %2781 = math.tanh %2780 : vector<8x32xf32>
    %cst_1308 = arith.constant 5.000000e-01 : f32
    %2782 = vector.broadcast %cst_1308 : f32 to vector<8x32xf32>
    %2783 = arith.mulf %2782, %2781 : vector<8x32xf32>
    %cst_1309 = arith.constant 5.000000e-01 : f32
    %2784 = vector.broadcast %cst_1309 : f32 to vector<8x32xf32>
    %2785 = arith.addf %2783, %2784 : vector<8x32xf32>
    %2786 = vector.extract_strided_slice %2769 {offsets = [0, 64], sizes = [8, 32], strides = [1, 1]} : vector<8x128xf32> to vector<8x32xf32>
    %2787 = math.tanh %2786 : vector<8x32xf32>
    %2788 = vector.extract_strided_slice %2769 {offsets = [0, 96], sizes = [8, 32], strides = [1, 1]} : vector<8x128xf32> to vector<8x32xf32>
    %cst_1310 = arith.constant 5.000000e-01 : f32
    %2789 = vector.broadcast %cst_1310 : f32 to vector<8x32xf32>
    %2790 = arith.mulf %2789, %2788 : vector<8x32xf32>
    %2791 = math.tanh %2790 : vector<8x32xf32>
    %cst_1311 = arith.constant 5.000000e-01 : f32
    %2792 = vector.broadcast %cst_1311 : f32 to vector<8x32xf32>
    %2793 = arith.mulf %2792, %2791 : vector<8x32xf32>
    %cst_1312 = arith.constant 5.000000e-01 : f32
    %2794 = vector.broadcast %cst_1312 : f32 to vector<8x32xf32>
    %2795 = arith.addf %2793, %2794 : vector<8x32xf32>
    %2796 = arith.mulf %2785, %2553 : vector<8x32xf32>
    %2797 = arith.mulf %2777, %2787 : vector<8x32xf32>
    %2798 = arith.addf %2796, %2797 : vector<8x32xf32>
    %2799 = math.tanh %2798 : vector<8x32xf32>
    %2800 = arith.mulf %2795, %2799 : vector<8x32xf32>
    %c4_i32_1313 = arith.constant 4 : i32
    %2801 = arith.subi %c10_i32, %c4_i32_1313 : i32
    %c0_i32_1314 = arith.constant 0 : i32
    %2802 = arith.cmpi sge, %2801, %c0_i32_1314 : i32
    %c8_i32_1315 = arith.constant 8 : i32
    %2803 = arith.cmpi slt, %2801, %c8_i32_1315 : i32
    %2804 = arith.andi %2802, %2803 : i1
    %2805 = arith.select %2804, %2800, %2552 : vector<8x32xf32>
    %2806 = arith.select %2804, %2798, %2553 : vector<8x32xf32>
    %2807 = arith.select %2804, %2800, %2554 : vector<8x32xf32>
    %c11_i32 = arith.constant 11 : i32
    %c7_i32_1316 = arith.constant 7 : i32
    %2808 = arith.minsi %c11_i32, %c7_i32_1316 : i32
    %2809 = arith.index_cast %2808 : i32 to index
    %c0_1317 = arith.constant 0 : index
    %c0_1318 = arith.constant 0 : index
    %2810 = vector.load %arg1[%2809, %c0_1317, %c0_1318] : memref<8x8x32xf32, #tpu.memory_space<vmem>>, vector<1x8x32xf32>
    %2811 = vector.shape_cast %2810 : vector<1x8x32xf32> to vector<8x32xf32>
    %c0_1319 = arith.constant 0 : index
    %c0_1320 = arith.constant 0 : index
    %c0_1321 = arith.constant 0 : index
    %2812 = vector.load %arg2[%c0_1319, %c0_1320, %c0_1321] : memref<5x32x128xf32, #tpu.memory_space<vmem>>, vector<1x32x128xf32>
    %2813 = vector.shape_cast %2812 : vector<1x32x128xf32> to vector<32x128xf32>
    %2814 = vector.extract_strided_slice %2813 {offsets = [0, 0], sizes = [1, 128], strides = [1, 1]} : vector<32x128xf32> to vector<1x128xf32>
    %2815 = vector.extract_strided_slice %2811 {offsets = [0, 0], sizes = [8, 1], strides = [1, 1]} : vector<8x32xf32> to vector<8x1xf32>
    %2816 = vector.broadcast %2815 : vector<8x1xf32> to vector<8x128xf32>
    %2817 = vector.broadcast %2814 : vector<1x128xf32> to vector<8x128xf32>
    %2818 = arith.mulf %2816, %2817 : vector<8x128xf32>
    %c0_1322 = arith.constant 0 : index
    %c0_1323 = arith.constant 0 : index
    %c0_1324 = arith.constant 0 : index
    %2819 = vector.load %arg3[%c0_1322, %c0_1323, %c0_1324] : memref<5x32x128xf32, #tpu.memory_space<vmem>>, vector<1x32x128xf32>
    %2820 = vector.shape_cast %2819 : vector<1x32x128xf32> to vector<32x128xf32>
    %cst_1325 = arith.constant dense<0.000000e+00> : vector<8x128xf32>
    %2821 = tpu.matmul %2609, %2820, %cst_1325 {dimension_numbers = #tpu.dot_dimension_numbers<[1], [0], [0], [1], [0, 0, 1, 1], [], []>} : vector<8x32xf32>, vector<32x128xf32>, vector<8x128xf32> -> vector<8x128xf32>
    %2822 = arith.addf %2818, %2821 : vector<8x128xf32>
    %c0_1326 = arith.constant 0 : index
    %c0_1327 = arith.constant 0 : index
    %c0_1328 = arith.constant 0 : index
    %2823 = vector.load %arg4[%c0_1326, %c0_1327, %c0_1328] : memref<5x1x128xf32, #tpu.memory_space<vmem>>, vector<1x1x128xf32>
    %2824 = vector.shape_cast %2823 : vector<1x1x128xf32> to vector<1x128xf32>
    %2825 = vector.broadcast %2824 : vector<1x128xf32> to vector<8x128xf32>
    %2826 = arith.addf %2822, %2825 : vector<8x128xf32>
    %2827 = vector.extract_strided_slice %2826 {offsets = [0, 0], sizes = [8, 32], strides = [1, 1]} : vector<8x128xf32> to vector<8x32xf32>
    %cst_1329 = arith.constant 5.000000e-01 : f32
    %2828 = vector.broadcast %cst_1329 : f32 to vector<8x32xf32>
    %2829 = arith.mulf %2828, %2827 : vector<8x32xf32>
    %2830 = math.tanh %2829 : vector<8x32xf32>
    %cst_1330 = arith.constant 5.000000e-01 : f32
    %2831 = vector.broadcast %cst_1330 : f32 to vector<8x32xf32>
    %2832 = arith.mulf %2831, %2830 : vector<8x32xf32>
    %cst_1331 = arith.constant 5.000000e-01 : f32
    %2833 = vector.broadcast %cst_1331 : f32 to vector<8x32xf32>
    %2834 = arith.addf %2832, %2833 : vector<8x32xf32>
    %2835 = vector.extract_strided_slice %2826 {offsets = [0, 32], sizes = [8, 32], strides = [1, 1]} : vector<8x128xf32> to vector<8x32xf32>
    %cst_1332 = arith.constant 5.000000e-01 : f32
    %2836 = vector.broadcast %cst_1332 : f32 to vector<8x32xf32>
    %2837 = arith.mulf %2836, %2835 : vector<8x32xf32>
    %2838 = math.tanh %2837 : vector<8x32xf32>
    %cst_1333 = arith.constant 5.000000e-01 : f32
    %2839 = vector.broadcast %cst_1333 : f32 to vector<8x32xf32>
    %2840 = arith.mulf %2839, %2838 : vector<8x32xf32>
    %cst_1334 = arith.constant 5.000000e-01 : f32
    %2841 = vector.broadcast %cst_1334 : f32 to vector<8x32xf32>
    %2842 = arith.addf %2840, %2841 : vector<8x32xf32>
    %2843 = vector.extract_strided_slice %2826 {offsets = [0, 64], sizes = [8, 32], strides = [1, 1]} : vector<8x128xf32> to vector<8x32xf32>
    %2844 = math.tanh %2843 : vector<8x32xf32>
    %2845 = vector.extract_strided_slice %2826 {offsets = [0, 96], sizes = [8, 32], strides = [1, 1]} : vector<8x128xf32> to vector<8x32xf32>
    %cst_1335 = arith.constant 5.000000e-01 : f32
    %2846 = vector.broadcast %cst_1335 : f32 to vector<8x32xf32>
    %2847 = arith.mulf %2846, %2845 : vector<8x32xf32>
    %2848 = math.tanh %2847 : vector<8x32xf32>
    %cst_1336 = arith.constant 5.000000e-01 : f32
    %2849 = vector.broadcast %cst_1336 : f32 to vector<8x32xf32>
    %2850 = arith.mulf %2849, %2848 : vector<8x32xf32>
    %cst_1337 = arith.constant 5.000000e-01 : f32
    %2851 = vector.broadcast %cst_1337 : f32 to vector<8x32xf32>
    %2852 = arith.addf %2850, %2851 : vector<8x32xf32>
    %2853 = arith.mulf %2842, %2610 : vector<8x32xf32>
    %2854 = arith.mulf %2834, %2844 : vector<8x32xf32>
    %2855 = arith.addf %2853, %2854 : vector<8x32xf32>
    %2856 = math.tanh %2855 : vector<8x32xf32>
    %2857 = arith.mulf %2852, %2856 : vector<8x32xf32>
    %c0_i32_1338 = arith.constant 0 : i32
    %2858 = arith.subi %c11_i32, %c0_i32_1338 : i32
    %c0_i32_1339 = arith.constant 0 : i32
    %2859 = arith.cmpi sge, %2858, %c0_i32_1339 : i32
    %c8_i32_1340 = arith.constant 8 : i32
    %2860 = arith.cmpi slt, %2858, %c8_i32_1340 : i32
    %2861 = arith.andi %2859, %2860 : i1
    %2862 = arith.select %2861, %2857, %2609 : vector<8x32xf32>
    %2863 = arith.select %2861, %2855, %2610 : vector<8x32xf32>
    %2864 = arith.select %2861, %2857, %2611 : vector<8x32xf32>
    %c1_1341 = arith.constant 1 : index
    %c0_1342 = arith.constant 0 : index
    %c0_1343 = arith.constant 0 : index
    %2865 = vector.load %arg2[%c1_1341, %c0_1342, %c0_1343] : memref<5x32x128xf32, #tpu.memory_space<vmem>>, vector<1x32x128xf32>
    %2866 = vector.shape_cast %2865 : vector<1x32x128xf32> to vector<32x128xf32>
    %cst_1344 = arith.constant dense<0.000000e+00> : vector<8x128xf32>
    %2867 = tpu.matmul %2611, %2866, %cst_1344 {dimension_numbers = #tpu.dot_dimension_numbers<[1], [0], [0], [1], [0, 0, 1, 1], [], []>} : vector<8x32xf32>, vector<32x128xf32>, vector<8x128xf32> -> vector<8x128xf32>
    %c1_1345 = arith.constant 1 : index
    %c0_1346 = arith.constant 0 : index
    %c0_1347 = arith.constant 0 : index
    %2868 = vector.load %arg3[%c1_1345, %c0_1346, %c0_1347] : memref<5x32x128xf32, #tpu.memory_space<vmem>>, vector<1x32x128xf32>
    %2869 = vector.shape_cast %2868 : vector<1x32x128xf32> to vector<32x128xf32>
    %cst_1348 = arith.constant dense<0.000000e+00> : vector<8x128xf32>
    %2870 = tpu.matmul %2658, %2869, %cst_1348 {dimension_numbers = #tpu.dot_dimension_numbers<[1], [0], [0], [1], [0, 0, 1, 1], [], []>} : vector<8x32xf32>, vector<32x128xf32>, vector<8x128xf32> -> vector<8x128xf32>
    %2871 = arith.addf %2867, %2870 : vector<8x128xf32>
    %c1_1349 = arith.constant 1 : index
    %c0_1350 = arith.constant 0 : index
    %c0_1351 = arith.constant 0 : index
    %2872 = vector.load %arg4[%c1_1349, %c0_1350, %c0_1351] : memref<5x1x128xf32, #tpu.memory_space<vmem>>, vector<1x1x128xf32>
    %2873 = vector.shape_cast %2872 : vector<1x1x128xf32> to vector<1x128xf32>
    %2874 = vector.broadcast %2873 : vector<1x128xf32> to vector<8x128xf32>
    %2875 = arith.addf %2871, %2874 : vector<8x128xf32>
    %2876 = vector.extract_strided_slice %2875 {offsets = [0, 0], sizes = [8, 32], strides = [1, 1]} : vector<8x128xf32> to vector<8x32xf32>
    %cst_1352 = arith.constant 5.000000e-01 : f32
    %2877 = vector.broadcast %cst_1352 : f32 to vector<8x32xf32>
    %2878 = arith.mulf %2877, %2876 : vector<8x32xf32>
    %2879 = math.tanh %2878 : vector<8x32xf32>
    %cst_1353 = arith.constant 5.000000e-01 : f32
    %2880 = vector.broadcast %cst_1353 : f32 to vector<8x32xf32>
    %2881 = arith.mulf %2880, %2879 : vector<8x32xf32>
    %cst_1354 = arith.constant 5.000000e-01 : f32
    %2882 = vector.broadcast %cst_1354 : f32 to vector<8x32xf32>
    %2883 = arith.addf %2881, %2882 : vector<8x32xf32>
    %2884 = vector.extract_strided_slice %2875 {offsets = [0, 32], sizes = [8, 32], strides = [1, 1]} : vector<8x128xf32> to vector<8x32xf32>
    %cst_1355 = arith.constant 5.000000e-01 : f32
    %2885 = vector.broadcast %cst_1355 : f32 to vector<8x32xf32>
    %2886 = arith.mulf %2885, %2884 : vector<8x32xf32>
    %2887 = math.tanh %2886 : vector<8x32xf32>
    %cst_1356 = arith.constant 5.000000e-01 : f32
    %2888 = vector.broadcast %cst_1356 : f32 to vector<8x32xf32>
    %2889 = arith.mulf %2888, %2887 : vector<8x32xf32>
    %cst_1357 = arith.constant 5.000000e-01 : f32
    %2890 = vector.broadcast %cst_1357 : f32 to vector<8x32xf32>
    %2891 = arith.addf %2889, %2890 : vector<8x32xf32>
    %2892 = vector.extract_strided_slice %2875 {offsets = [0, 64], sizes = [8, 32], strides = [1, 1]} : vector<8x128xf32> to vector<8x32xf32>
    %2893 = math.tanh %2892 : vector<8x32xf32>
    %2894 = vector.extract_strided_slice %2875 {offsets = [0, 96], sizes = [8, 32], strides = [1, 1]} : vector<8x128xf32> to vector<8x32xf32>
    %cst_1358 = arith.constant 5.000000e-01 : f32
    %2895 = vector.broadcast %cst_1358 : f32 to vector<8x32xf32>
    %2896 = arith.mulf %2895, %2894 : vector<8x32xf32>
    %2897 = math.tanh %2896 : vector<8x32xf32>
    %cst_1359 = arith.constant 5.000000e-01 : f32
    %2898 = vector.broadcast %cst_1359 : f32 to vector<8x32xf32>
    %2899 = arith.mulf %2898, %2897 : vector<8x32xf32>
    %cst_1360 = arith.constant 5.000000e-01 : f32
    %2900 = vector.broadcast %cst_1360 : f32 to vector<8x32xf32>
    %2901 = arith.addf %2899, %2900 : vector<8x32xf32>
    %2902 = arith.mulf %2891, %2659 : vector<8x32xf32>
    %2903 = arith.mulf %2883, %2893 : vector<8x32xf32>
    %2904 = arith.addf %2902, %2903 : vector<8x32xf32>
    %2905 = math.tanh %2904 : vector<8x32xf32>
    %2906 = arith.mulf %2901, %2905 : vector<8x32xf32>
    %c1_i32_1361 = arith.constant 1 : i32
    %2907 = arith.subi %c11_i32, %c1_i32_1361 : i32
    %c0_i32_1362 = arith.constant 0 : i32
    %2908 = arith.cmpi sge, %2907, %c0_i32_1362 : i32
    %c8_i32_1363 = arith.constant 8 : i32
    %2909 = arith.cmpi slt, %2907, %c8_i32_1363 : i32
    %2910 = arith.andi %2908, %2909 : i1
    %2911 = arith.select %2910, %2906, %2658 : vector<8x32xf32>
    %2912 = arith.select %2910, %2904, %2659 : vector<8x32xf32>
    %2913 = arith.select %2910, %2906, %2660 : vector<8x32xf32>
    %c2_1364 = arith.constant 2 : index
    %c0_1365 = arith.constant 0 : index
    %c0_1366 = arith.constant 0 : index
    %2914 = vector.load %arg2[%c2_1364, %c0_1365, %c0_1366] : memref<5x32x128xf32, #tpu.memory_space<vmem>>, vector<1x32x128xf32>
    %2915 = vector.shape_cast %2914 : vector<1x32x128xf32> to vector<32x128xf32>
    %cst_1367 = arith.constant dense<0.000000e+00> : vector<8x128xf32>
    %2916 = tpu.matmul %2660, %2915, %cst_1367 {dimension_numbers = #tpu.dot_dimension_numbers<[1], [0], [0], [1], [0, 0, 1, 1], [], []>} : vector<8x32xf32>, vector<32x128xf32>, vector<8x128xf32> -> vector<8x128xf32>
    %c2_1368 = arith.constant 2 : index
    %c0_1369 = arith.constant 0 : index
    %c0_1370 = arith.constant 0 : index
    %2917 = vector.load %arg3[%c2_1368, %c0_1369, %c0_1370] : memref<5x32x128xf32, #tpu.memory_space<vmem>>, vector<1x32x128xf32>
    %2918 = vector.shape_cast %2917 : vector<1x32x128xf32> to vector<32x128xf32>
    %cst_1371 = arith.constant dense<0.000000e+00> : vector<8x128xf32>
    %2919 = tpu.matmul %2707, %2918, %cst_1371 {dimension_numbers = #tpu.dot_dimension_numbers<[1], [0], [0], [1], [0, 0, 1, 1], [], []>} : vector<8x32xf32>, vector<32x128xf32>, vector<8x128xf32> -> vector<8x128xf32>
    %2920 = arith.addf %2916, %2919 : vector<8x128xf32>
    %c2_1372 = arith.constant 2 : index
    %c0_1373 = arith.constant 0 : index
    %c0_1374 = arith.constant 0 : index
    %2921 = vector.load %arg4[%c2_1372, %c0_1373, %c0_1374] : memref<5x1x128xf32, #tpu.memory_space<vmem>>, vector<1x1x128xf32>
    %2922 = vector.shape_cast %2921 : vector<1x1x128xf32> to vector<1x128xf32>
    %2923 = vector.broadcast %2922 : vector<1x128xf32> to vector<8x128xf32>
    %2924 = arith.addf %2920, %2923 : vector<8x128xf32>
    %2925 = vector.extract_strided_slice %2924 {offsets = [0, 0], sizes = [8, 32], strides = [1, 1]} : vector<8x128xf32> to vector<8x32xf32>
    %cst_1375 = arith.constant 5.000000e-01 : f32
    %2926 = vector.broadcast %cst_1375 : f32 to vector<8x32xf32>
    %2927 = arith.mulf %2926, %2925 : vector<8x32xf32>
    %2928 = math.tanh %2927 : vector<8x32xf32>
    %cst_1376 = arith.constant 5.000000e-01 : f32
    %2929 = vector.broadcast %cst_1376 : f32 to vector<8x32xf32>
    %2930 = arith.mulf %2929, %2928 : vector<8x32xf32>
    %cst_1377 = arith.constant 5.000000e-01 : f32
    %2931 = vector.broadcast %cst_1377 : f32 to vector<8x32xf32>
    %2932 = arith.addf %2930, %2931 : vector<8x32xf32>
    %2933 = vector.extract_strided_slice %2924 {offsets = [0, 32], sizes = [8, 32], strides = [1, 1]} : vector<8x128xf32> to vector<8x32xf32>
    %cst_1378 = arith.constant 5.000000e-01 : f32
    %2934 = vector.broadcast %cst_1378 : f32 to vector<8x32xf32>
    %2935 = arith.mulf %2934, %2933 : vector<8x32xf32>
    %2936 = math.tanh %2935 : vector<8x32xf32>
    %cst_1379 = arith.constant 5.000000e-01 : f32
    %2937 = vector.broadcast %cst_1379 : f32 to vector<8x32xf32>
    %2938 = arith.mulf %2937, %2936 : vector<8x32xf32>
    %cst_1380 = arith.constant 5.000000e-01 : f32
    %2939 = vector.broadcast %cst_1380 : f32 to vector<8x32xf32>
    %2940 = arith.addf %2938, %2939 : vector<8x32xf32>
    %2941 = vector.extract_strided_slice %2924 {offsets = [0, 64], sizes = [8, 32], strides = [1, 1]} : vector<8x128xf32> to vector<8x32xf32>
    %2942 = math.tanh %2941 : vector<8x32xf32>
    %2943 = vector.extract_strided_slice %2924 {offsets = [0, 96], sizes = [8, 32], strides = [1, 1]} : vector<8x128xf32> to vector<8x32xf32>
    %cst_1381 = arith.constant 5.000000e-01 : f32
    %2944 = vector.broadcast %cst_1381 : f32 to vector<8x32xf32>
    %2945 = arith.mulf %2944, %2943 : vector<8x32xf32>
    %2946 = math.tanh %2945 : vector<8x32xf32>
    %cst_1382 = arith.constant 5.000000e-01 : f32
    %2947 = vector.broadcast %cst_1382 : f32 to vector<8x32xf32>
    %2948 = arith.mulf %2947, %2946 : vector<8x32xf32>
    %cst_1383 = arith.constant 5.000000e-01 : f32
    %2949 = vector.broadcast %cst_1383 : f32 to vector<8x32xf32>
    %2950 = arith.addf %2948, %2949 : vector<8x32xf32>
    %2951 = arith.mulf %2940, %2708 : vector<8x32xf32>
    %2952 = arith.mulf %2932, %2942 : vector<8x32xf32>
    %2953 = arith.addf %2951, %2952 : vector<8x32xf32>
    %2954 = math.tanh %2953 : vector<8x32xf32>
    %2955 = arith.mulf %2950, %2954 : vector<8x32xf32>
    %c2_i32_1384 = arith.constant 2 : i32
    %2956 = arith.subi %c11_i32, %c2_i32_1384 : i32
    %c0_i32_1385 = arith.constant 0 : i32
    %2957 = arith.cmpi sge, %2956, %c0_i32_1385 : i32
    %c8_i32_1386 = arith.constant 8 : i32
    %2958 = arith.cmpi slt, %2956, %c8_i32_1386 : i32
    %2959 = arith.andi %2957, %2958 : i1
    %2960 = arith.select %2959, %2955, %2707 : vector<8x32xf32>
    %2961 = arith.select %2959, %2953, %2708 : vector<8x32xf32>
    %2962 = arith.select %2959, %2955, %2709 : vector<8x32xf32>
    %c3_1387 = arith.constant 3 : index
    %c0_1388 = arith.constant 0 : index
    %c0_1389 = arith.constant 0 : index
    %2963 = vector.load %arg2[%c3_1387, %c0_1388, %c0_1389] : memref<5x32x128xf32, #tpu.memory_space<vmem>>, vector<1x32x128xf32>
    %2964 = vector.shape_cast %2963 : vector<1x32x128xf32> to vector<32x128xf32>
    %cst_1390 = arith.constant dense<0.000000e+00> : vector<8x128xf32>
    %2965 = tpu.matmul %2709, %2964, %cst_1390 {dimension_numbers = #tpu.dot_dimension_numbers<[1], [0], [0], [1], [0, 0, 1, 1], [], []>} : vector<8x32xf32>, vector<32x128xf32>, vector<8x128xf32> -> vector<8x128xf32>
    %c3_1391 = arith.constant 3 : index
    %c0_1392 = arith.constant 0 : index
    %c0_1393 = arith.constant 0 : index
    %2966 = vector.load %arg3[%c3_1391, %c0_1392, %c0_1393] : memref<5x32x128xf32, #tpu.memory_space<vmem>>, vector<1x32x128xf32>
    %2967 = vector.shape_cast %2966 : vector<1x32x128xf32> to vector<32x128xf32>
    %cst_1394 = arith.constant dense<0.000000e+00> : vector<8x128xf32>
    %2968 = tpu.matmul %2756, %2967, %cst_1394 {dimension_numbers = #tpu.dot_dimension_numbers<[1], [0], [0], [1], [0, 0, 1, 1], [], []>} : vector<8x32xf32>, vector<32x128xf32>, vector<8x128xf32> -> vector<8x128xf32>
    %2969 = arith.addf %2965, %2968 : vector<8x128xf32>
    %c3_1395 = arith.constant 3 : index
    %c0_1396 = arith.constant 0 : index
    %c0_1397 = arith.constant 0 : index
    %2970 = vector.load %arg4[%c3_1395, %c0_1396, %c0_1397] : memref<5x1x128xf32, #tpu.memory_space<vmem>>, vector<1x1x128xf32>
    %2971 = vector.shape_cast %2970 : vector<1x1x128xf32> to vector<1x128xf32>
    %2972 = vector.broadcast %2971 : vector<1x128xf32> to vector<8x128xf32>
    %2973 = arith.addf %2969, %2972 : vector<8x128xf32>
    %2974 = vector.extract_strided_slice %2973 {offsets = [0, 0], sizes = [8, 32], strides = [1, 1]} : vector<8x128xf32> to vector<8x32xf32>
    %cst_1398 = arith.constant 5.000000e-01 : f32
    %2975 = vector.broadcast %cst_1398 : f32 to vector<8x32xf32>
    %2976 = arith.mulf %2975, %2974 : vector<8x32xf32>
    %2977 = math.tanh %2976 : vector<8x32xf32>
    %cst_1399 = arith.constant 5.000000e-01 : f32
    %2978 = vector.broadcast %cst_1399 : f32 to vector<8x32xf32>
    %2979 = arith.mulf %2978, %2977 : vector<8x32xf32>
    %cst_1400 = arith.constant 5.000000e-01 : f32
    %2980 = vector.broadcast %cst_1400 : f32 to vector<8x32xf32>
    %2981 = arith.addf %2979, %2980 : vector<8x32xf32>
    %2982 = vector.extract_strided_slice %2973 {offsets = [0, 32], sizes = [8, 32], strides = [1, 1]} : vector<8x128xf32> to vector<8x32xf32>
    %cst_1401 = arith.constant 5.000000e-01 : f32
    %2983 = vector.broadcast %cst_1401 : f32 to vector<8x32xf32>
    %2984 = arith.mulf %2983, %2982 : vector<8x32xf32>
    %2985 = math.tanh %2984 : vector<8x32xf32>
    %cst_1402 = arith.constant 5.000000e-01 : f32
    %2986 = vector.broadcast %cst_1402 : f32 to vector<8x32xf32>
    %2987 = arith.mulf %2986, %2985 : vector<8x32xf32>
    %cst_1403 = arith.constant 5.000000e-01 : f32
    %2988 = vector.broadcast %cst_1403 : f32 to vector<8x32xf32>
    %2989 = arith.addf %2987, %2988 : vector<8x32xf32>
    %2990 = vector.extract_strided_slice %2973 {offsets = [0, 64], sizes = [8, 32], strides = [1, 1]} : vector<8x128xf32> to vector<8x32xf32>
    %2991 = math.tanh %2990 : vector<8x32xf32>
    %2992 = vector.extract_strided_slice %2973 {offsets = [0, 96], sizes = [8, 32], strides = [1, 1]} : vector<8x128xf32> to vector<8x32xf32>
    %cst_1404 = arith.constant 5.000000e-01 : f32
    %2993 = vector.broadcast %cst_1404 : f32 to vector<8x32xf32>
    %2994 = arith.mulf %2993, %2992 : vector<8x32xf32>
    %2995 = math.tanh %2994 : vector<8x32xf32>
    %cst_1405 = arith.constant 5.000000e-01 : f32
    %2996 = vector.broadcast %cst_1405 : f32 to vector<8x32xf32>
    %2997 = arith.mulf %2996, %2995 : vector<8x32xf32>
    %cst_1406 = arith.constant 5.000000e-01 : f32
    %2998 = vector.broadcast %cst_1406 : f32 to vector<8x32xf32>
    %2999 = arith.addf %2997, %2998 : vector<8x32xf32>
    %3000 = arith.mulf %2989, %2757 : vector<8x32xf32>
    %3001 = arith.mulf %2981, %2991 : vector<8x32xf32>
    %3002 = arith.addf %3000, %3001 : vector<8x32xf32>
    %3003 = math.tanh %3002 : vector<8x32xf32>
    %3004 = arith.mulf %2999, %3003 : vector<8x32xf32>
    %c3_i32_1407 = arith.constant 3 : i32
    %3005 = arith.subi %c11_i32, %c3_i32_1407 : i32
    %c0_i32_1408 = arith.constant 0 : i32
    %3006 = arith.cmpi sge, %3005, %c0_i32_1408 : i32
    %c8_i32_1409 = arith.constant 8 : i32
    %3007 = arith.cmpi slt, %3005, %c8_i32_1409 : i32
    %3008 = arith.andi %3006, %3007 : i1
    %3009 = arith.select %3008, %3004, %2756 : vector<8x32xf32>
    %3010 = arith.select %3008, %3002, %2757 : vector<8x32xf32>
    %3011 = arith.select %3008, %3004, %2758 : vector<8x32xf32>
    %c4_1410 = arith.constant 4 : index
    %c0_1411 = arith.constant 0 : index
    %c0_1412 = arith.constant 0 : index
    %3012 = vector.load %arg2[%c4_1410, %c0_1411, %c0_1412] : memref<5x32x128xf32, #tpu.memory_space<vmem>>, vector<1x32x128xf32>
    %3013 = vector.shape_cast %3012 : vector<1x32x128xf32> to vector<32x128xf32>
    %cst_1413 = arith.constant dense<0.000000e+00> : vector<8x128xf32>
    %3014 = tpu.matmul %2758, %3013, %cst_1413 {dimension_numbers = #tpu.dot_dimension_numbers<[1], [0], [0], [1], [0, 0, 1, 1], [], []>} : vector<8x32xf32>, vector<32x128xf32>, vector<8x128xf32> -> vector<8x128xf32>
    %c4_1414 = arith.constant 4 : index
    %c0_1415 = arith.constant 0 : index
    %c0_1416 = arith.constant 0 : index
    %3015 = vector.load %arg3[%c4_1414, %c0_1415, %c0_1416] : memref<5x32x128xf32, #tpu.memory_space<vmem>>, vector<1x32x128xf32>
    %3016 = vector.shape_cast %3015 : vector<1x32x128xf32> to vector<32x128xf32>
    %cst_1417 = arith.constant dense<0.000000e+00> : vector<8x128xf32>
    %3017 = tpu.matmul %2805, %3016, %cst_1417 {dimension_numbers = #tpu.dot_dimension_numbers<[1], [0], [0], [1], [0, 0, 1, 1], [], []>} : vector<8x32xf32>, vector<32x128xf32>, vector<8x128xf32> -> vector<8x128xf32>
    %3018 = arith.addf %3014, %3017 : vector<8x128xf32>
    %c4_1418 = arith.constant 4 : index
    %c0_1419 = arith.constant 0 : index
    %c0_1420 = arith.constant 0 : index
    %3019 = vector.load %arg4[%c4_1418, %c0_1419, %c0_1420] : memref<5x1x128xf32, #tpu.memory_space<vmem>>, vector<1x1x128xf32>
    %3020 = vector.shape_cast %3019 : vector<1x1x128xf32> to vector<1x128xf32>
    %3021 = vector.broadcast %3020 : vector<1x128xf32> to vector<8x128xf32>
    %3022 = arith.addf %3018, %3021 : vector<8x128xf32>
    %3023 = vector.extract_strided_slice %3022 {offsets = [0, 0], sizes = [8, 32], strides = [1, 1]} : vector<8x128xf32> to vector<8x32xf32>
    %cst_1421 = arith.constant 5.000000e-01 : f32
    %3024 = vector.broadcast %cst_1421 : f32 to vector<8x32xf32>
    %3025 = arith.mulf %3024, %3023 : vector<8x32xf32>
    %3026 = math.tanh %3025 : vector<8x32xf32>
    %cst_1422 = arith.constant 5.000000e-01 : f32
    %3027 = vector.broadcast %cst_1422 : f32 to vector<8x32xf32>
    %3028 = arith.mulf %3027, %3026 : vector<8x32xf32>
    %cst_1423 = arith.constant 5.000000e-01 : f32
    %3029 = vector.broadcast %cst_1423 : f32 to vector<8x32xf32>
    %3030 = arith.addf %3028, %3029 : vector<8x32xf32>
    %3031 = vector.extract_strided_slice %3022 {offsets = [0, 32], sizes = [8, 32], strides = [1, 1]} : vector<8x128xf32> to vector<8x32xf32>
    %cst_1424 = arith.constant 5.000000e-01 : f32
    %3032 = vector.broadcast %cst_1424 : f32 to vector<8x32xf32>
    %3033 = arith.mulf %3032, %3031 : vector<8x32xf32>
    %3034 = math.tanh %3033 : vector<8x32xf32>
    %cst_1425 = arith.constant 5.000000e-01 : f32
    %3035 = vector.broadcast %cst_1425 : f32 to vector<8x32xf32>
    %3036 = arith.mulf %3035, %3034 : vector<8x32xf32>
    %cst_1426 = arith.constant 5.000000e-01 : f32
    %3037 = vector.broadcast %cst_1426 : f32 to vector<8x32xf32>
    %3038 = arith.addf %3036, %3037 : vector<8x32xf32>
    %3039 = vector.extract_strided_slice %3022 {offsets = [0, 64], sizes = [8, 32], strides = [1, 1]} : vector<8x128xf32> to vector<8x32xf32>
    %3040 = math.tanh %3039 : vector<8x32xf32>
    %3041 = vector.extract_strided_slice %3022 {offsets = [0, 96], sizes = [8, 32], strides = [1, 1]} : vector<8x128xf32> to vector<8x32xf32>
    %cst_1427 = arith.constant 5.000000e-01 : f32
    %3042 = vector.broadcast %cst_1427 : f32 to vector<8x32xf32>
    %3043 = arith.mulf %3042, %3041 : vector<8x32xf32>
    %3044 = math.tanh %3043 : vector<8x32xf32>
    %cst_1428 = arith.constant 5.000000e-01 : f32
    %3045 = vector.broadcast %cst_1428 : f32 to vector<8x32xf32>
    %3046 = arith.mulf %3045, %3044 : vector<8x32xf32>
    %cst_1429 = arith.constant 5.000000e-01 : f32
    %3047 = vector.broadcast %cst_1429 : f32 to vector<8x32xf32>
    %3048 = arith.addf %3046, %3047 : vector<8x32xf32>
    %3049 = arith.mulf %3038, %2806 : vector<8x32xf32>
    %3050 = arith.mulf %3030, %3040 : vector<8x32xf32>
    %3051 = arith.addf %3049, %3050 : vector<8x32xf32>
    %3052 = math.tanh %3051 : vector<8x32xf32>
    %3053 = arith.mulf %3048, %3052 : vector<8x32xf32>
    %c4_i32_1430 = arith.constant 4 : i32
    %3054 = arith.subi %c11_i32, %c4_i32_1430 : i32
    %c0_i32_1431 = arith.constant 0 : i32
    %3055 = arith.cmpi sge, %3054, %c0_i32_1431 : i32
    %c8_i32_1432 = arith.constant 8 : i32
    %3056 = arith.cmpi slt, %3054, %c8_i32_1432 : i32
    %3057 = arith.andi %3055, %3056 : i1
    %3058 = arith.select %3057, %3053, %2805 : vector<8x32xf32>
    %3059 = arith.select %3057, %3051, %2806 : vector<8x32xf32>
    %3060 = arith.select %3057, %3053, %2807 : vector<8x32xf32>
    %c12_i32 = arith.constant 12 : i32
    %c0_1433 = arith.constant 0 : index
    %c0_1434 = arith.constant 0 : index
    %c0_1435 = arith.constant 0 : index
    %3061 = vector.load %arg10[%c0_1433, %c0_1434, %c0_1435] : memref<5x8x32xf32, #tpu.memory_space<vmem>>, vector<1x8x32xf32>
    %3062 = vector.shape_cast %3061 : vector<1x8x32xf32> to vector<8x32xf32>
    %3063 = vector.shape_cast %2862 : vector<8x32xf32> to vector<1x8x32xf32>
    tpu.vector_store %arg10[%c0_1433, %c0_1434, %c0_1435], %3063 {strides = array<i32>} : memref<5x8x32xf32, #tpu.memory_space<vmem>>, vector<1x8x32xf32>,
    %c0_1436 = arith.constant 0 : index
    %c0_1437 = arith.constant 0 : index
    %c0_1438 = arith.constant 0 : index
    %3064 = vector.load %arg11[%c0_1436, %c0_1437, %c0_1438] : memref<5x8x32xf32, #tpu.memory_space<vmem>>, vector<1x8x32xf32>
    %3065 = vector.shape_cast %3064 : vector<1x8x32xf32> to vector<8x32xf32>
    %3066 = vector.shape_cast %2863 : vector<8x32xf32> to vector<1x8x32xf32>
    tpu.vector_store %arg11[%c0_1436, %c0_1437, %c0_1438], %3066 {strides = array<i32>} : memref<5x8x32xf32, #tpu.memory_space<vmem>>, vector<1x8x32xf32>,
    %c1_1439 = arith.constant 1 : index
    %c0_1440 = arith.constant 0 : index
    %c0_1441 = arith.constant 0 : index
    %3067 = vector.load %arg10[%c1_1439, %c0_1440, %c0_1441] : memref<5x8x32xf32, #tpu.memory_space<vmem>>, vector<1x8x32xf32>
    %3068 = vector.shape_cast %3067 : vector<1x8x32xf32> to vector<8x32xf32>
    %3069 = vector.shape_cast %2911 : vector<8x32xf32> to vector<1x8x32xf32>
    tpu.vector_store %arg10[%c1_1439, %c0_1440, %c0_1441], %3069 {strides = array<i32>} : memref<5x8x32xf32, #tpu.memory_space<vmem>>, vector<1x8x32xf32>,
    %c1_1442 = arith.constant 1 : index
    %c0_1443 = arith.constant 0 : index
    %c0_1444 = arith.constant 0 : index
    %3070 = vector.load %arg11[%c1_1442, %c0_1443, %c0_1444] : memref<5x8x32xf32, #tpu.memory_space<vmem>>, vector<1x8x32xf32>
    %3071 = vector.shape_cast %3070 : vector<1x8x32xf32> to vector<8x32xf32>
    %3072 = vector.shape_cast %2912 : vector<8x32xf32> to vector<1x8x32xf32>
    tpu.vector_store %arg11[%c1_1442, %c0_1443, %c0_1444], %3072 {strides = array<i32>} : memref<5x8x32xf32, #tpu.memory_space<vmem>>, vector<1x8x32xf32>,
    %c2_1445 = arith.constant 2 : index
    %c0_1446 = arith.constant 0 : index
    %c0_1447 = arith.constant 0 : index
    %3073 = vector.load %arg10[%c2_1445, %c0_1446, %c0_1447] : memref<5x8x32xf32, #tpu.memory_space<vmem>>, vector<1x8x32xf32>
    %3074 = vector.shape_cast %3073 : vector<1x8x32xf32> to vector<8x32xf32>
    %3075 = vector.shape_cast %2960 : vector<8x32xf32> to vector<1x8x32xf32>
    tpu.vector_store %arg10[%c2_1445, %c0_1446, %c0_1447], %3075 {strides = array<i32>} : memref<5x8x32xf32, #tpu.memory_space<vmem>>, vector<1x8x32xf32>,
    %c2_1448 = arith.constant 2 : index
    %c0_1449 = arith.constant 0 : index
    %c0_1450 = arith.constant 0 : index
    %3076 = vector.load %arg11[%c2_1448, %c0_1449, %c0_1450] : memref<5x8x32xf32, #tpu.memory_space<vmem>>, vector<1x8x32xf32>
    %3077 = vector.shape_cast %3076 : vector<1x8x32xf32> to vector<8x32xf32>
    %3078 = vector.shape_cast %2961 : vector<8x32xf32> to vector<1x8x32xf32>
    tpu.vector_store %arg11[%c2_1448, %c0_1449, %c0_1450], %3078 {strides = array<i32>} : memref<5x8x32xf32, #tpu.memory_space<vmem>>, vector<1x8x32xf32>,
    %c3_1451 = arith.constant 3 : index
    %c0_1452 = arith.constant 0 : index
    %c0_1453 = arith.constant 0 : index
    %3079 = vector.load %arg10[%c3_1451, %c0_1452, %c0_1453] : memref<5x8x32xf32, #tpu.memory_space<vmem>>, vector<1x8x32xf32>
    %3080 = vector.shape_cast %3079 : vector<1x8x32xf32> to vector<8x32xf32>
    %3081 = vector.shape_cast %3009 : vector<8x32xf32> to vector<1x8x32xf32>
    tpu.vector_store %arg10[%c3_1451, %c0_1452, %c0_1453], %3081 {strides = array<i32>} : memref<5x8x32xf32, #tpu.memory_space<vmem>>, vector<1x8x32xf32>,
    %c3_1454 = arith.constant 3 : index
    %c0_1455 = arith.constant 0 : index
    %c0_1456 = arith.constant 0 : index
    %3082 = vector.load %arg11[%c3_1454, %c0_1455, %c0_1456] : memref<5x8x32xf32, #tpu.memory_space<vmem>>, vector<1x8x32xf32>
    %3083 = vector.shape_cast %3082 : vector<1x8x32xf32> to vector<8x32xf32>
    %3084 = vector.shape_cast %3010 : vector<8x32xf32> to vector<1x8x32xf32>
    tpu.vector_store %arg11[%c3_1454, %c0_1455, %c0_1456], %3084 {strides = array<i32>} : memref<5x8x32xf32, #tpu.memory_space<vmem>>, vector<1x8x32xf32>,
    %c4_1457 = arith.constant 4 : index
    %c0_1458 = arith.constant 0 : index
    %c0_1459 = arith.constant 0 : index
    %3085 = vector.load %arg10[%c4_1457, %c0_1458, %c0_1459] : memref<5x8x32xf32, #tpu.memory_space<vmem>>, vector<1x8x32xf32>
    %3086 = vector.shape_cast %3085 : vector<1x8x32xf32> to vector<8x32xf32>
    %3087 = vector.shape_cast %3058 : vector<8x32xf32> to vector<1x8x32xf32>
    tpu.vector_store %arg10[%c4_1457, %c0_1458, %c0_1459], %3087 {strides = array<i32>} : memref<5x8x32xf32, #tpu.memory_space<vmem>>, vector<1x8x32xf32>,
    %c4_1460 = arith.constant 4 : index
    %c0_1461 = arith.constant 0 : index
    %c0_1462 = arith.constant 0 : index
    %3088 = vector.load %arg11[%c4_1460, %c0_1461, %c0_1462] : memref<5x8x32xf32, #tpu.memory_space<vmem>>, vector<1x8x32xf32>
    %3089 = vector.shape_cast %3088 : vector<1x8x32xf32> to vector<8x32xf32>
    %3090 = vector.shape_cast %3059 : vector<8x32xf32> to vector<1x8x32xf32>
    tpu.vector_store %arg11[%c4_1460, %c0_1461, %c0_1462], %3090 {strides = array<i32>} : memref<5x8x32xf32, #tpu.memory_space<vmem>>, vector<1x8x32xf32>,
    %c0_1463 = arith.constant 0 : index
    %c0_1464 = arith.constant 0 : index
    %3091 = vector.load %arg7[%c0_1463, %c0_1464] : memref<1x32xf32, #tpu.memory_space<vmem>>, vector<1x32xf32>
    %3092 = vector.broadcast %3091 : vector<1x32xf32> to vector<8x32xf32>
    %3093 = arith.mulf %3060, %3092 : vector<8x32xf32>
    %cst_1465 = arith.constant dense<0.000000e+00> : vector<8xf32>
    %3094 = vector.multi_reduction <add>, %3093, %cst_1465 [1] : vector<8x32xf32> to vector<8xf32>
    %3095 = vector.shape_cast %3094 : vector<8xf32> to vector<8x1xf32>
    %c0_1466 = arith.constant 0 : index
    %c0_1467 = arith.constant 0 : index
    %3096 = vector.load %arg8[%c0_1466, %c0_1467] : memref<1x1xf32, #tpu.memory_space<vmem>>, vector<1x1xf32>
    %3097 = vector.broadcast %3096 : vector<1x1xf32> to vector<8x1xf32>
    %3098 = arith.addf %3095, %3097 : vector<8x1xf32>
    %c0_1468 = arith.constant 0 : index
    %c0_1469 = arith.constant 0 : index
    %3099 = vector.load %arg9[%c0_1468, %c0_1469] : memref<8x1xf32, #tpu.memory_space<vmem>>, vector<8x1xf32>
    tpu.vector_store %arg9[%c0_1468, %c0_1469], %3098 {strides = array<i32>} : memref<8x1xf32, #tpu.memory_space<vmem>>, vector<8x1xf32>,
    return
  }
  func.func @transform_0(%arg0: i32) -> (i32, i32, i32) {
    %c0_i32 = arith.constant 0 : i32
    %c0_i32_0 = arith.constant 0 : i32
    %c0_i32_1 = arith.constant 0 : i32
    return %c0_i32, %arg0, %c0_i32_0 : i32, i32, i32
  }
  func.func @transform_1(%arg0: i32) -> (i32, i32, i32) {
    %c0_i32 = arith.constant 0 : i32
    %c0_i32_0 = arith.constant 0 : i32
    %c0_i32_1 = arith.constant 0 : i32
    %c0_i32_2 = arith.constant 0 : i32
    return %c0_i32, %c0_i32_0, %c0_i32_1 : i32, i32, i32
  }
  func.func @transform_2(%arg0: i32) -> (i32, i32, i32) {
    %c0_i32 = arith.constant 0 : i32
    %c0_i32_0 = arith.constant 0 : i32
    %c0_i32_1 = arith.constant 0 : i32
    %c0_i32_2 = arith.constant 0 : i32
    return %c0_i32, %c0_i32_0, %c0_i32_1 : i32, i32, i32
  }
  func.func @transform_3(%arg0: i32) -> (i32, i32, i32) {
    %c0_i32 = arith.constant 0 : i32
    %c0_i32_0 = arith.constant 0 : i32
    %c0_i32_1 = arith.constant 0 : i32
    %c0_i32_2 = arith.constant 0 : i32
    return %c0_i32, %c0_i32_0, %c0_i32_1 : i32, i32, i32
  }
  func.func @transform_4(%arg0: i32) -> (i32, i32, i32) {
    %c0_i32 = arith.constant 0 : i32
    %c0_i32_0 = arith.constant 0 : i32
    %c0_i32_1 = arith.constant 0 : i32
    return %c0_i32, %arg0, %c0_i32_0 : i32, i32, i32
  }
  func.func @transform_5(%arg0: i32) -> (i32, i32, i32) {
    %c0_i32 = arith.constant 0 : i32
    %c0_i32_0 = arith.constant 0 : i32
    %c0_i32_1 = arith.constant 0 : i32
    return %c0_i32, %arg0, %c0_i32_0 : i32, i32, i32
  }
  func.func @transform_6(%arg0: i32) -> (i32, i32) {
    %c0_i32 = arith.constant 0 : i32
    %c0_i32_0 = arith.constant 0 : i32
    %c0_i32_1 = arith.constant 0 : i32
    return %c0_i32, %c0_i32_0 : i32, i32
  }
  func.func @transform_7(%arg0: i32) -> (i32, i32) {
    %c0_i32 = arith.constant 0 : i32
    %c0_i32_0 = arith.constant 0 : i32
    %c0_i32_1 = arith.constant 0 : i32
    return %c0_i32, %c0_i32_0 : i32, i32
  }
  func.func @transform_8(%arg0: i32) -> (i32, i32) {
    %c0_i32 = arith.constant 0 : i32
    %c0_i32_0 = arith.constant 0 : i32
    return %arg0, %c0_i32 : i32, i32
  }
  func.func @transform_9(%arg0: i32) -> (i32, i32, i32) {
    %c0_i32 = arith.constant 0 : i32
    %c0_i32_0 = arith.constant 0 : i32
    %c0_i32_1 = arith.constant 0 : i32
    return %c0_i32, %arg0, %c0_i32_0 : i32, i32, i32
  }
  func.func @transform_10(%arg0: i32) -> (i32, i32, i32) {
    %c0_i32 = arith.constant 0 : i32
    %c0_i32_0 = arith.constant 0 : i32
    %c0_i32_1 = arith.constant 0 : i32
    return %c0_i32, %arg0, %c0_i32_0 : i32, i32, i32
  }
}

</mosaic_0001>

<llo_original>
// kernel: lstm_forward.1
$region0: #{lstm_forward.1}
  #allocation0 [shape = 'u32[]', space=smem, size = 0x4, offset = 0x4, fixed_abs, tag = 'smem constant byte address 0x4 - core index']
  #allocation1 [shape = 'u32[72,128]{1,0:T(1,128)}', space=vmem, size = 0x9000, scoped, tag = 'internal scratch']
  #allocation2 [shape = 'f32[1,1]{1,0:T(1,128)S(1)}', space=vmem, size = 0x200, scoped, tag = 'scoped memory for lstm_forward.1']
  %s0 = inlined_call_operand.vmem [shape: f32[8,8,32], index: 0, kind: input, shape index: {}]
  %s1 = inlined_call_operand.hbm [shape: f32[5,32,128], index: 1, kind: input, shape index: {}]
  %s2 = inlined_call_operand.hbm [shape: f32[5,32,128], index: 2, kind: input, shape index: {}]
  %s3 = inlined_call_operand.vmem [shape: f32[5,1,128], index: 3, kind: input, shape index: {}]
  %s4 = inlined_call_operand.vmem [shape: f32[5,8,32], index: 4, kind: input, shape index: {}]
  %s5 = inlined_call_operand.vmem [shape: f32[5,8,32], index: 5, kind: input, shape index: {}]
  %s6 = inlined_call_operand.vmem [shape: f32[1,32], index: 6, kind: input, shape index: {}]
  %s7 = inlined_call_operand.<no memory space> [shape: f32[1,1], index: 7, kind: input, shape index: {}]
  %s8 = inlined_call_operand.vmem [shape: f32[8,1], index: 8, kind: output, shape index: {0}]
  %s9 = inlined_call_operand.vmem [shape: f32[5,8,32], index: 9, kind: output, shape index: {1}]
  %s10 = inlined_call_operand.vmem [shape: f32[5,8,32], index: 10, kind: output, shape index: {2}]
  %11 = xla_tuple %s8, %s9, %s10
  %s12 = sld [smem:[#allocation0]]
  $region66: #{lstm_forward.1} parent=0
    _
  %s14 = ssub.s32 1, %s12
  %s15 = scalar_select 0, %s14, %s12
  %v16 = vstv %s7
  %17 = vst [vmem:[#allocation2] sm:$0x1] %v16
  $region1: #{lstm_forward.1} parent=0
    #allocation3 [shape = 'u8[81920]{0}', space=vmem, size = 0x14000, scoped, tag = 'input window, operand 1, single buffered']
    #allocation4 [shape = 's32[1]{0}', space=sflag, size = 0x4, scoped, tag = 'scoped memory for lstm_forward.1']
    #allocation5 [shape = 'u8[81920]{0}', space=vmem, size = 0x14000, scoped, tag = 'input window, operand 2, single buffered']
    #allocation6 [shape = 's32[1]{0}', space=sflag, size = 0x4, scoped, tag = 'scoped memory for lstm_forward.1']
    %18 = vsyncpa [#allocation4], 0
    %19 = vsyncpa [#allocation6], 0
    // Predicated region
    $region2: #{lstm_forward.1} parent=1 // pred_check
      _
    $region3: #{lstm_forward.1} parent=1 // pred_check_branch
      %21 = sbr.rel (0) target = $region5
    $region4: #{lstm_forward.1} parent=1 // pred_region
      _
    $region5: #{lstm_forward.1} parent=1 // pred_fallthru
      _
    // Predicated region
    $region6: #{lstm_forward.1} parent=1 // pred_check
      _
    $region7: #{lstm_forward.1} parent=1 // pred_check_branch
      %23 = sbr.rel (0) target = $region9
    $region8: #{lstm_forward.1} parent=1 // pred_region
      %25 = vsyncadd [#allocation4], 0
      %s26 = sshll.u32 %s1, 4
      %s27 = int_to_ptr.hbm [resolvable:$true] %s26
      %s28 = sshll.u32 [#allocation3], 4
      %s29 = int_to_ptr.vmem [resolvable:$true] %s28
      %34 = dma.hbm_to_vmem [thread:$0]  %s27, 2560, %s29, [#allocation4], 128, 128, 8
    $region9: #{lstm_forward.1} parent=1 // pred_fallthru
      _
    // Predicated region
    $region10: #{lstm_forward.1} parent=1 // pred_check
      _
    $region11: #{lstm_forward.1} parent=1 // pred_check_branch
      %36 = sbr.rel (0) target = $region13
    $region12: #{lstm_forward.1} parent=1 // pred_region
      %38 = vsyncadd [#allocation6], 0
      %s39 = sshll.u32 %s2, 4
      %s40 = int_to_ptr.hbm [resolvable:$true] %s39
      %s41 = sshll.u32 [#allocation5], 4
      %s42 = int_to_ptr.vmem [resolvable:$true] %s41
      %47 = dma.hbm_to_vmem [thread:$0]  %s40, 2560, %s42, [#allocation6], 128, 128, 8
    $region13: #{lstm_forward.1} parent=1 // pred_fallthru
      _
    // Predicated region
    $region14: #{lstm_forward.1} parent=1 // pred_check
      _
    $region15: #{lstm_forward.1} parent=1 // pred_check_branch
      %49 = sbr.rel (0) target = $region17
    $region16: #{lstm_forward.1} parent=1 // pred_region
      _
    $region17: #{lstm_forward.1} parent=1 // pred_fallthru
      _
    // Predicated region
    $region18: #{lstm_forward.1} parent=1 // pred_check
      _
    $region19: #{lstm_forward.1} parent=1 // pred_check_branch
      %51 = sbr.rel (0) target = $region21
    $region20: #{lstm_forward.1} parent=1 // pred_region
      _
    $region21: #{lstm_forward.1} parent=1 // pred_fallthru
      _
    // Predicated region
    $region22: #{lstm_forward.1} parent=1 // pred_check
      _
    $region23: #{lstm_forward.1} parent=1 // pred_check_branch
      %53 = sbr.rel (0) target = $region25
    $region24: #{lstm_forward.1} parent=1 // pred_region
      _
    $region25: #{lstm_forward.1} parent=1 // pred_fallthru
      _
    // Predicated region
    $region26: #{lstm_forward.1} parent=1 // pred_check
      _
    $region27: #{lstm_forward.1} parent=1 // pred_check_branch
      %55 = sbr.rel (0) target = $region29
    $region28: #{lstm_forward.1} parent=1 // pred_region
      _
    $region29: #{lstm_forward.1} parent=1 // pred_fallthru
      _
    // Predicated region
    $region30: #{lstm_forward.1} parent=1 // pred_check
      _
    $region31: #{lstm_forward.1} parent=1 // pred_check_branch
      %57 = sbr.rel (0) target = $region33
    $region32: #{lstm_forward.1} parent=1 // pred_region
      _
    $region33: #{lstm_forward.1} parent=1 // pred_fallthru
      _
    // Predicated region
    $region34: #{lstm_forward.1} parent=1 // pred_check
      _
    $region35: #{lstm_forward.1} parent=1 // pred_check_branch
      %59 = sbr.rel (0) target = $region37
    $region36: #{lstm_forward.1} parent=1 // pred_region
      %61 = dma.done [#allocation4], 2560
    $region37: #{lstm_forward.1} parent=1 // pred_fallthru
      _
    // Predicated region
    $region38: #{lstm_forward.1} parent=1 // pred_check
      _
    $region39: #{lstm_forward.1} parent=1 // pred_check_branch
      %63 = sbr.rel (0) target = $region41
    $region40: #{lstm_forward.1} parent=1 // pred_region
      %65 = dma.done [#allocation6], 2560
    $region41: #{lstm_forward.1} parent=1 // pred_fallthru
      _
    %v66 = vld [vmem:[%s4] sm:$0xff]
    %s67 = scalar_lea.vmem %s4, 8
    %v68 = vld [vmem:[%s67] sm:$0xff]
    %s69 = scalar_lea.vmem %s4, 16
    %v70 = vld [vmem:[%s69] sm:$0xff]
    %s71 = scalar_lea.vmem %s4, 24
    %v72 = vld [vmem:[%s71] sm:$0xff]
    %s73 = scalar_lea.vmem %s4, 32
    %v74 = vld [vmem:[%s73] sm:$0xff]
    %v75 = vld [vmem:[%s5] sm:$0xff]
    %s76 = scalar_lea.vmem %s5, 8
    %v77 = vld [vmem:[%s76] sm:$0xff]
    %s78 = scalar_lea.vmem %s5, 16
    %v79 = vld [vmem:[%s78] sm:$0xff]
    %s80 = scalar_lea.vmem %s5, 24
    %v81 = vld [vmem:[%s80] sm:$0xff]
    %s82 = scalar_lea.vmem %s5, 32
    %v83 = vld [vmem:[%s82] sm:$0xff]
    %v84 = vld [vmem:[%s0] sm:$0xff]
    %v85 = vld [vmem:[#allocation3] sm:$0xff]
    %87 = vset.pattern.permute.xlu0 0
    %88 = vperm.xlu0 %87, %v84
    %v89 = vpop.permute.xlu0 %88
    %v91 = vperm.slane %v85, 0
    %v92 = vmul.f32 %v89, %v91
    %v93 = vld [vmem:[#allocation5] sm:$0xff]
    %v94 = vld [vmem:[#allocation5 + $0x8] sm:$0xff]
    %v95 = vld [vmem:[#allocation5 + $0x10] sm:$0xff]
    %v96 = vld [vmem:[#allocation5 + $0x18] sm:$0xff]
    %vm97 = vcmask 261120
    %v99 = vsel %vm97, %v66, 0
    %101 = vmatpush.msra.mxu0 0.0
    %102 = vmatpush.msra.mxu0 0.0
    %103 = vmatpush.msra.mxu0 0.0
    %104 = vmatpush.msra.mxu0 0.0
    %105 = vmatpush.msra.mxu0 0.0
    %106 = vmatpush.msra.mxu0 0.0
    %107 = vmatpush.msra.mxu0 0.0
    %108 = vmatpush.msra.mxu0 0.0
    %109 = vmatpush.msra.mxu0 0.0
    %110 = vmatpush.msra.mxu0 0.0
    %111 = vmatpush.msra.mxu0 0.0
    %112 = vmatpush.msra.mxu0 0.0
    %113 = vmatpush.msra.mxu0 %v96
    %114 = vmatpush.msra.mxu0 %v95
    %115 = vmatpush.msra.mxu0 %v94
    %116 = vmatpush.msra.mxu0 %v93
    %117 = vmatmul.f32.gmra.mxu0 %v99
    %v118 = vpop.f32.mrf.mxu0
    %v119 = vadd.f32 0.0, %v118
    %120 = vdwg.mxu0
    %v121 = vadd.f32 %v92, %v119
    %v122 = vld [vmem:[%s3] sm:$0x1]
    %v124 = vperm.slane %v122, 0
    %v126 = vadd.f32 %v121, %v124
    %v127 = vmul.f32 %v126, 0.5
    %v128 = vtanh.pop %v127
    %v129 = vmul.f32 %v128, 0.5
    %v130 = vadd.f32 %v129, 0.5
    %v131 = vtanh.pop %v126
    %133 = vrot.lane.b32.xlu0 %v75, 32
    %v134 = vpop.permute.xlu0 %133
    %v136 = vmul.f32 %v130, %v134
    %138 = vrot.lane.b32.xlu0 %v131, 64
    %v139 = vpop.permute.xlu0 %138
    %v141 = vmul.f32 %v130, %v139
    %143 = vrot.lane.b32.xlu0 %v141, 32
    %v144 = vpop.permute.xlu0 %143
    %v146 = vadd.f32 %v136, %v144
    %v147 = vtanh.pop %v146
    %149 = vrot.lane.b32.xlu0 %v147, 64
    %v150 = vpop.permute.xlu0 %149
    %v152 = vmul.f32 %v130, %v150
    %s153 = scalar_lea.vmem %s0, 8
    %v154 = vld [vmem:[%s153] sm:$0xff]
    %156 = vset.pattern.permute.xlu0 0
    %157 = vperm.xlu0 %156, %v154
    %v158 = vpop.permute.xlu0 %157
    %v160 = vmul.f32 %v158, %v91
    %162 = vrot.lane.b32.xlu0 %v152, 32
    %v163 = vpop.permute.xlu0 %162
    %v164 = vsel %vm97, %v163, 0
    %166 = vmatpush.msra.mxu0 0.0
    %167 = vmatpush.msra.mxu0 0.0
    %168 = vmatpush.msra.mxu0 0.0
    %169 = vmatpush.msra.mxu0 0.0
    %170 = vmatpush.msra.mxu0 0.0
    %171 = vmatpush.msra.mxu0 0.0
    %172 = vmatpush.msra.mxu0 0.0
    %173 = vmatpush.msra.mxu0 0.0
    %174 = vmatpush.msra.mxu0 0.0
    %175 = vmatpush.msra.mxu0 0.0
    %176 = vmatpush.msra.mxu0 0.0
    %177 = vmatpush.msra.mxu0 0.0
    %178 = vmatpush.msra.mxu0 %v96
    %179 = vmatpush.msra.mxu0 %v95
    %180 = vmatpush.msra.mxu0 %v94
    %181 = vmatpush.msra.mxu0 %v93
    %182 = vmatmul.f32.gmra.mxu0 %v164
    %v183 = vpop.f32.mrf.mxu0
    %v184 = vadd.f32 0.0, %v183
    %185 = vdwg.mxu0
    %v186 = vadd.f32 %v160, %v184
    %v187 = vadd.f32 %v186, %v124
    %v188 = vmul.f32 %v187, 0.5
    %v189 = vtanh.pop %v188
    %v190 = vmul.f32 %v189, 0.5
    %v191 = vadd.f32 %v190, 0.5
    %v192 = vtanh.pop %v187
    %v193 = vmul.f32 %v191, %v146
    %195 = vrot.lane.b32.xlu0 %v192, 64
    %v196 = vpop.permute.xlu0 %195
    %v198 = vmul.f32 %v191, %v196
    %200 = vrot.lane.b32.xlu0 %v198, 32
    %v201 = vpop.permute.xlu0 %200
    %v203 = vadd.f32 %v193, %v201
    %v204 = vtanh.pop %v203
    %206 = vrot.lane.b32.xlu0 %v204, 64
    %v207 = vpop.permute.xlu0 %206
    %v209 = vmul.f32 %v191, %v207
    %s210 = scalar_lea.vmem [#allocation3], 32
    %v211 = vld [vmem:[%s210] sm:$0xff]
    %v212 = vld [vmem:[%s210 + $0x8] sm:$0xff]
    %v213 = vld [vmem:[%s210 + $0x10] sm:$0xff]
    %v214 = vld [vmem:[%s210 + $0x18] sm:$0xff]
    %s215 = scalar_lea.vmem [#allocation5], 32
    %v216 = vld [vmem:[%s215] sm:$0xff]
    %v217 = vld [vmem:[%s215 + $0x8] sm:$0xff]
    %v218 = vld [vmem:[%s215 + $0x10] sm:$0xff]
    %v219 = vld [vmem:[%s215 + $0x18] sm:$0xff]
    %v221 = vsel %vm97, %v68, 0
    %223 = vmatpush.msra.mxu0 0.0
    %224 = vmatpush.msra.mxu0 0.0
    %225 = vmatpush.msra.mxu0 0.0
    %226 = vmatpush.msra.mxu0 0.0
    %227 = vmatpush.msra.mxu0 0.0
    %228 = vmatpush.msra.mxu0 0.0
    %229 = vmatpush.msra.mxu0 0.0
    %230 = vmatpush.msra.mxu0 0.0
    %231 = vmatpush.msra.mxu0 0.0
    %232 = vmatpush.msra.mxu0 0.0
    %233 = vmatpush.msra.mxu0 0.0
    %234 = vmatpush.msra.mxu0 0.0
    %235 = vmatpush.msra.mxu0 %v219
    %236 = vmatpush.msra.mxu0 %v218
    %237 = vmatpush.msra.mxu0 %v217
    %238 = vmatpush.msra.mxu0 %v216
    %239 = vmatmul.f32.gmra.mxu0 %v221
    %v240 = vpop.f32.mrf.mxu0
    %v241 = vadd.f32 0.0, %v240
    %242 = vdwg.mxu0
    %243 = vmatpush.msra.mxu0 0.0
    %244 = vmatpush.msra.mxu0 0.0
    %245 = vmatpush.msra.mxu0 0.0
    %246 = vmatpush.msra.mxu0 0.0
    %247 = vmatpush.msra.mxu0 0.0
    %248 = vmatpush.msra.mxu0 0.0
    %249 = vmatpush.msra.mxu0 0.0
    %250 = vmatpush.msra.mxu0 0.0
    %251 = vmatpush.msra.mxu0 0.0
    %252 = vmatpush.msra.mxu0 0.0
    %253 = vmatpush.msra.mxu0 0.0
    %254 = vmatpush.msra.mxu0 0.0
    %255 = vmatpush.msra.mxu0 %v214
    %256 = vmatpush.msra.mxu0 %v213
    %257 = vmatpush.msra.mxu0 %v212
    %258 = vmatpush.msra.mxu0 %v211
    %259 = vmatmul.f32.gmra.mxu0 %v164
    %v260 = vpop.f32.mrf.mxu0
    %v261 = vadd.f32 %v241, %v260
    %262 = vdwg.mxu0
    %s263 = scalar_lea.vmem %s3, 1
    %v264 = vld [vmem:[%s263] sm:$0x1]
    %v266 = vperm.slane %v264, 0
    %v268 = vadd.f32 %v261, %v266
    %v269 = vmul.f32 %v268, 0.5
    %v270 = vtanh.pop %v269
    %v271 = vmul.f32 %v270, 0.5
    %v272 = vadd.f32 %v271, 0.5
    %v273 = vtanh.pop %v268
    %275 = vrot.lane.b32.xlu0 %v77, 32
    %v276 = vpop.permute.xlu0 %275
    %v278 = vmul.f32 %v272, %v276
    %280 = vrot.lane.b32.xlu0 %v273, 64
    %v281 = vpop.permute.xlu0 %280
    %v283 = vmul.f32 %v272, %v281
    %285 = vrot.lane.b32.xlu0 %v283, 32
    %v286 = vpop.permute.xlu0 %285
    %v288 = vadd.f32 %v278, %v286
    %v289 = vtanh.pop %v288
    %291 = vrot.lane.b32.xlu0 %v289, 64
    %v292 = vpop.permute.xlu0 %291
    %v294 = vmul.f32 %v272, %v292
    %s295 = scalar_lea.vmem %s0, 16
    %v296 = vld [vmem:[%s295] sm:$0xff]
    %298 = vset.pattern.permute.xlu0 0
    %299 = vperm.xlu0 %298, %v296
    %v300 = vpop.permute.xlu0 %299
    %v302 = vmul.f32 %v300, %v91
    %304 = vrot.lane.b32.xlu0 %v209, 32
    %v305 = vpop.permute.xlu0 %304
    %v306 = vsel %vm97, %v305, 0
    %308 = vmatpush.msra.mxu0 0.0
    %309 = vmatpush.msra.mxu0 0.0
    %310 = vmatpush.msra.mxu0 0.0
    %311 = vmatpush.msra.mxu0 0.0
    %312 = vmatpush.msra.mxu0 0.0
    %313 = vmatpush.msra.mxu0 0.0
    %314 = vmatpush.msra.mxu0 0.0
    %315 = vmatpush.msra.mxu0 0.0
    %316 = vmatpush.msra.mxu0 0.0
    %317 = vmatpush.msra.mxu0 0.0
    %318 = vmatpush.msra.mxu0 0.0
    %319 = vmatpush.msra.mxu0 0.0
    %320 = vmatpush.msra.mxu0 %v96
    %321 = vmatpush.msra.mxu0 %v95
    %322 = vmatpush.msra.mxu0 %v94
    %323 = vmatpush.msra.mxu0 %v93
    %324 = vmatmul.f32.gmra.mxu0 %v306
    %v325 = vpop.f32.mrf.mxu0
    %v326 = vadd.f32 0.0, %v325
    %327 = vdwg.mxu0
    %v328 = vadd.f32 %v302, %v326
    %v329 = vadd.f32 %v328, %v124
    %v330 = vmul.f32 %v329, 0.5
    %v331 = vtanh.pop %v330
    %v332 = vmul.f32 %v331, 0.5
    %v333 = vadd.f32 %v332, 0.5
    %v334 = vtanh.pop %v329
    %v335 = vmul.f32 %v333, %v203
    %337 = vrot.lane.b32.xlu0 %v334, 64
    %v338 = vpop.permute.xlu0 %337
    %v340 = vmul.f32 %v333, %v338
    %342 = vrot.lane.b32.xlu0 %v340, 32
    %v343 = vpop.permute.xlu0 %342
    %v345 = vadd.f32 %v335, %v343
    %v346 = vtanh.pop %v345
    %348 = vrot.lane.b32.xlu0 %v346, 64
    %v349 = vpop.permute.xlu0 %348
    %v351 = vmul.f32 %v333, %v349
    %353 = vrot.lane.b32.xlu0 %v294, 32
    %v354 = vpop.permute.xlu0 %353
    %v355 = vsel %vm97, %v354, 0
    %357 = vmatpush.msra.mxu0 0.0
    %358 = vmatpush.msra.mxu0 0.0
    %359 = vmatpush.msra.mxu0 0.0
    %360 = vmatpush.msra.mxu0 0.0
    %361 = vmatpush.msra.mxu0 0.0
    %362 = vmatpush.msra.mxu0 0.0
    %363 = vmatpush.msra.mxu0 0.0
    %364 = vmatpush.msra.mxu0 0.0
    %365 = vmatpush.msra.mxu0 0.0
    %366 = vmatpush.msra.mxu0 0.0
    %367 = vmatpush.msra.mxu0 0.0
    %368 = vmatpush.msra.mxu0 0.0
    %369 = vmatpush.msra.mxu0 %v219
    %370 = vmatpush.msra.mxu0 %v218
    %371 = vmatpush.msra.mxu0 %v217
    %372 = vmatpush.msra.mxu0 %v216
    %373 = vmatmul.f32.gmra.mxu0 %v355
    %v374 = vpop.f32.mrf.mxu0
    %v375 = vadd.f32 0.0, %v374
    %376 = vdwg.mxu0
    %377 = vmatpush.msra.mxu0 0.0
    %378 = vmatpush.msra.mxu0 0.0
    %379 = vmatpush.msra.mxu0 0.0
    %380 = vmatpush.msra.mxu0 0.0
    %381 = vmatpush.msra.mxu0 0.0
    %382 = vmatpush.msra.mxu0 0.0
    %383 = vmatpush.msra.mxu0 0.0
    %384 = vmatpush.msra.mxu0 0.0
    %385 = vmatpush.msra.mxu0 0.0
    %386 = vmatpush.msra.mxu0 0.0
    %387 = vmatpush.msra.mxu0 0.0
    %388 = vmatpush.msra.mxu0 0.0
    %389 = vmatpush.msra.mxu0 %v214
    %390 = vmatpush.msra.mxu0 %v213
    %391 = vmatpush.msra.mxu0 %v212
    %392 = vmatpush.msra.mxu0 %v211
    %393 = vmatmul.f32.gmra.mxu0 %v306
    %v394 = vpop.f32.mrf.mxu0
    %v395 = vadd.f32 %v375, %v394
    %396 = vdwg.mxu0
    %v397 = vadd.f32 %v395, %v266
    %v398 = vmul.f32 %v397, 0.5
    %v399 = vtanh.pop %v398
    %v400 = vmul.f32 %v399, 0.5
    %v401 = vadd.f32 %v400, 0.5
    %v402 = vtanh.pop %v397
    %v403 = vmul.f32 %v401, %v288
    %405 = vrot.lane.b32.xlu0 %v402, 64
    %v406 = vpop.permute.xlu0 %405
    %v408 = vmul.f32 %v401, %v406
    %410 = vrot.lane.b32.xlu0 %v408, 32
    %v411 = vpop.permute.xlu0 %410
    %v413 = vadd.f32 %v403, %v411
    %v414 = vtanh.pop %v413
    %416 = vrot.lane.b32.xlu0 %v414, 64
    %v417 = vpop.permute.xlu0 %416
    %v419 = vmul.f32 %v401, %v417
    %s420 = scalar_lea.vmem [#allocation3], 64
    %v421 = vld [vmem:[%s420] sm:$0xff]
    %v422 = vld [vmem:[%s420 + $0x8] sm:$0xff]
    %v423 = vld [vmem:[%s420 + $0x10] sm:$0xff]
    %v424 = vld [vmem:[%s420 + $0x18] sm:$0xff]
    %s425 = scalar_lea.vmem [#allocation5], 64
    %v426 = vld [vmem:[%s425] sm:$0xff]
    %v427 = vld [vmem:[%s425 + $0x8] sm:$0xff]
    %v428 = vld [vmem:[%s425 + $0x10] sm:$0xff]
    %v429 = vld [vmem:[%s425 + $0x18] sm:$0xff]
    %v431 = vsel %vm97, %v70, 0
    %433 = vmatpush.msra.mxu0 0.0
    %434 = vmatpush.msra.mxu0 0.0
    %435 = vmatpush.msra.mxu0 0.0
    %436 = vmatpush.msra.mxu0 0.0
    %437 = vmatpush.msra.mxu0 0.0
    %438 = vmatpush.msra.mxu0 0.0
    %439 = vmatpush.msra.mxu0 0.0
    %440 = vmatpush.msra.mxu0 0.0
    %441 = vmatpush.msra.mxu0 0.0
    %442 = vmatpush.msra.mxu0 0.0
    %443 = vmatpush.msra.mxu0 0.0
    %444 = vmatpush.msra.mxu0 0.0
    %445 = vmatpush.msra.mxu0 %v429
    %446 = vmatpush.msra.mxu0 %v428
    %447 = vmatpush.msra.mxu0 %v427
    %448 = vmatpush.msra.mxu0 %v426
    %449 = vmatmul.f32.gmra.mxu0 %v431
    %v450 = vpop.f32.mrf.mxu0
    %v451 = vadd.f32 0.0, %v450
    %452 = vdwg.mxu0
    %453 = vmatpush.msra.mxu0 0.0
    %454 = vmatpush.msra.mxu0 0.0
    %455 = vmatpush.msra.mxu0 0.0
    %456 = vmatpush.msra.mxu0 0.0
    %457 = vmatpush.msra.mxu0 0.0
    %458 = vmatpush.msra.mxu0 0.0
    %459 = vmatpush.msra.mxu0 0.0
    %460 = vmatpush.msra.mxu0 0.0
    %461 = vmatpush.msra.mxu0 0.0
    %462 = vmatpush.msra.mxu0 0.0
    %463 = vmatpush.msra.mxu0 0.0
    %464 = vmatpush.msra.mxu0 0.0
    %465 = vmatpush.msra.mxu0 %v424
    %466 = vmatpush.msra.mxu0 %v423
    %467 = vmatpush.msra.mxu0 %v422
    %468 = vmatpush.msra.mxu0 %v421
    %469 = vmatmul.f32.gmra.mxu0 %v355
    %v470 = vpop.f32.mrf.mxu0
    %v471 = vadd.f32 %v451, %v470
    %472 = vdwg.mxu0
    %s473 = scalar_lea.vmem %s3, 2
    %v474 = vld [vmem:[%s473] sm:$0x1]
    %v476 = vperm.slane %v474, 0
    %v478 = vadd.f32 %v471, %v476
    %v479 = vmul.f32 %v478, 0.5
    %v480 = vtanh.pop %v479
    %v481 = vmul.f32 %v480, 0.5
    %v482 = vadd.f32 %v481, 0.5
    %v483 = vtanh.pop %v478
    %485 = vrot.lane.b32.xlu0 %v79, 32
    %v486 = vpop.permute.xlu0 %485
    %v488 = vmul.f32 %v482, %v486
    %490 = vrot.lane.b32.xlu0 %v483, 64
    %v491 = vpop.permute.xlu0 %490
    %v493 = vmul.f32 %v482, %v491
    %495 = vrot.lane.b32.xlu0 %v493, 32
    %v496 = vpop.permute.xlu0 %495
    %v498 = vadd.f32 %v488, %v496
    %v499 = vtanh.pop %v498
    %501 = vrot.lane.b32.xlu0 %v499, 64
    %v502 = vpop.permute.xlu0 %501
    %v504 = vmul.f32 %v482, %v502
    %s505 = scalar_lea.vmem %s0, 24
    %v506 = vld [vmem:[%s505] sm:$0xff]
    %508 = vset.pattern.permute.xlu0 0
    %509 = vperm.xlu0 %508, %v506
    %v510 = vpop.permute.xlu0 %509
    %v512 = vmul.f32 %v510, %v91
    %514 = vrot.lane.b32.xlu0 %v351, 32
    %v515 = vpop.permute.xlu0 %514
    %v516 = vsel %vm97, %v515, 0
    %518 = vmatpush.msra.mxu0 0.0
    %519 = vmatpush.msra.mxu0 0.0
    %520 = vmatpush.msra.mxu0 0.0
    %521 = vmatpush.msra.mxu0 0.0
    %522 = vmatpush.msra.mxu0 0.0
    %523 = vmatpush.msra.mxu0 0.0
    %524 = vmatpush.msra.mxu0 0.0
    %525 = vmatpush.msra.mxu0 0.0
    %526 = vmatpush.msra.mxu0 0.0
    %527 = vmatpush.msra.mxu0 0.0
    %528 = vmatpush.msra.mxu0 0.0
    %529 = vmatpush.msra.mxu0 0.0
    %530 = vmatpush.msra.mxu0 %v96
    %531 = vmatpush.msra.mxu0 %v95
    %532 = vmatpush.msra.mxu0 %v94
    %533 = vmatpush.msra.mxu0 %v93
    %534 = vmatmul.f32.gmra.mxu0 %v516
    %v535 = vpop.f32.mrf.mxu0
    %v536 = vadd.f32 0.0, %v535
    %537 = vdwg.mxu0
    %v538 = vadd.f32 %v512, %v536
    %v539 = vadd.f32 %v538, %v124
    %v540 = vmul.f32 %v539, 0.5
    %v541 = vtanh.pop %v540
    %v542 = vmul.f32 %v541, 0.5
    %v543 = vadd.f32 %v542, 0.5
    %v544 = vtanh.pop %v539
    %v545 = vmul.f32 %v543, %v345
    %547 = vrot.lane.b32.xlu0 %v544, 64
    %v548 = vpop.permute.xlu0 %547
    %v550 = vmul.f32 %v543, %v548
    %552 = vrot.lane.b32.xlu0 %v550, 32
    %v553 = vpop.permute.xlu0 %552
    %v555 = vadd.f32 %v545, %v553
    %v556 = vtanh.pop %v555
    %558 = vrot.lane.b32.xlu0 %v556, 64
    %v559 = vpop.permute.xlu0 %558
    %v561 = vmul.f32 %v543, %v559
    %563 = vrot.lane.b32.xlu0 %v419, 32
    %v564 = vpop.permute.xlu0 %563
    %v565 = vsel %vm97, %v564, 0
    %567 = vmatpush.msra.mxu0 0.0
    %568 = vmatpush.msra.mxu0 0.0
    %569 = vmatpush.msra.mxu0 0.0
    %570 = vmatpush.msra.mxu0 0.0
    %571 = vmatpush.msra.mxu0 0.0
    %572 = vmatpush.msra.mxu0 0.0
    %573 = vmatpush.msra.mxu0 0.0
    %574 = vmatpush.msra.mxu0 0.0
    %575 = vmatpush.msra.mxu0 0.0
    %576 = vmatpush.msra.mxu0 0.0
    %577 = vmatpush.msra.mxu0 0.0
    %578 = vmatpush.msra.mxu0 0.0
    %579 = vmatpush.msra.mxu0 %v219
    %580 = vmatpush.msra.mxu0 %v218
    %581 = vmatpush.msra.mxu0 %v217
    %582 = vmatpush.msra.mxu0 %v216
    %583 = vmatmul.f32.gmra.mxu0 %v565
    %v584 = vpop.f32.mrf.mxu0
    %v585 = vadd.f32 0.0, %v584
    %586 = vdwg.mxu0
    %587 = vmatpush.msra.mxu0 0.0
    %588 = vmatpush.msra.mxu0 0.0
    %589 = vmatpush.msra.mxu0 0.0
    %590 = vmatpush.msra.mxu0 0.0
    %591 = vmatpush.msra.mxu0 0.0
    %592 = vmatpush.msra.mxu0 0.0
    %593 = vmatpush.msra.mxu0 0.0
    %594 = vmatpush.msra.mxu0 0.0
    %595 = vmatpush.msra.mxu0 0.0
    %596 = vmatpush.msra.mxu0 0.0
    %597 = vmatpush.msra.mxu0 0.0
    %598 = vmatpush.msra.mxu0 0.0
    %599 = vmatpush.msra.mxu0 %v214
    %600 = vmatpush.msra.mxu0 %v213
    %601 = vmatpush.msra.mxu0 %v212
    %602 = vmatpush.msra.mxu0 %v211
    %603 = vmatmul.f32.gmra.mxu0 %v516
    %v604 = vpop.f32.mrf.mxu0
    %v605 = vadd.f32 %v585, %v604
    %606 = vdwg.mxu0
    %v607 = vadd.f32 %v605, %v266
    %v608 = vmul.f32 %v607, 0.5
    %v609 = vtanh.pop %v608
    %v610 = vmul.f32 %v609, 0.5
    %v611 = vadd.f32 %v610, 0.5
    %v612 = vtanh.pop %v607
    %v613 = vmul.f32 %v611, %v413
    %615 = vrot.lane.b32.xlu0 %v612, 64
    %v616 = vpop.permute.xlu0 %615
    %v618 = vmul.f32 %v611, %v616
    %620 = vrot.lane.b32.xlu0 %v618, 32
    %v621 = vpop.permute.xlu0 %620
    %v623 = vadd.f32 %v613, %v621
    %v624 = vtanh.pop %v623
    %626 = vrot.lane.b32.xlu0 %v624, 64
    %v627 = vpop.permute.xlu0 %626
    %v629 = vmul.f32 %v611, %v627
    %631 = vrot.lane.b32.xlu0 %v504, 32
    %v632 = vpop.permute.xlu0 %631
    %v633 = vsel %vm97, %v632, 0
    %635 = vmatpush.msra.mxu0 0.0
    %636 = vmatpush.msra.mxu0 0.0
    %637 = vmatpush.msra.mxu0 0.0
    %638 = vmatpush.msra.mxu0 0.0
    %639 = vmatpush.msra.mxu0 0.0
    %640 = vmatpush.msra.mxu0 0.0
    %641 = vmatpush.msra.mxu0 0.0
    %642 = vmatpush.msra.mxu0 0.0
    %643 = vmatpush.msra.mxu0 0.0
    %644 = vmatpush.msra.mxu0 0.0
    %645 = vmatpush.msra.mxu0 0.0
    %646 = vmatpush.msra.mxu0 0.0
    %647 = vmatpush.msra.mxu0 %v429
    %648 = vmatpush.msra.mxu0 %v428
    %649 = vmatpush.msra.mxu0 %v427
    %650 = vmatpush.msra.mxu0 %v426
    %651 = vmatmul.f32.gmra.mxu0 %v633
    %v652 = vpop.f32.mrf.mxu0
    %v653 = vadd.f32 0.0, %v652
    %654 = vdwg.mxu0
    %655 = vmatpush.msra.mxu0 0.0
    %656 = vmatpush.msra.mxu0 0.0
    %657 = vmatpush.msra.mxu0 0.0
    %658 = vmatpush.msra.mxu0 0.0
    %659 = vmatpush.msra.mxu0 0.0
    %660 = vmatpush.msra.mxu0 0.0
    %661 = vmatpush.msra.mxu0 0.0
    %662 = vmatpush.msra.mxu0 0.0
    %663 = vmatpush.msra.mxu0 0.0
    %664 = vmatpush.msra.mxu0 0.0
    %665 = vmatpush.msra.mxu0 0.0
    %666 = vmatpush.msra.mxu0 0.0
    %667 = vmatpush.msra.mxu0 %v424
    %668 = vmatpush.msra.mxu0 %v423
    %669 = vmatpush.msra.mxu0 %v422
    %670 = vmatpush.msra.mxu0 %v421
    %671 = vmatmul.f32.gmra.mxu0 %v565
    %v672 = vpop.f32.mrf.mxu0
    %v673 = vadd.f32 %v653, %v672
    %674 = vdwg.mxu0
    %v675 = vadd.f32 %v673, %v476
    %v676 = vmul.f32 %v675, 0.5
    %v677 = vtanh.pop %v676
    %v678 = vmul.f32 %v677, 0.5
    %v679 = vadd.f32 %v678, 0.5
    %v680 = vtanh.pop %v675
    %v681 = vmul.f32 %v679, %v498
    %683 = vrot.lane.b32.xlu0 %v680, 64
    %v684 = vpop.permute.xlu0 %683
    %v686 = vmul.f32 %v679, %v684
    %688 = vrot.lane.b32.xlu0 %v686, 32
    %v689 = vpop.permute.xlu0 %688
    %v691 = vadd.f32 %v681, %v689
    %v692 = vtanh.pop %v691
    %694 = vrot.lane.b32.xlu0 %v692, 64
    %v695 = vpop.permute.xlu0 %694
    %v697 = vmul.f32 %v679, %v695
    %s698 = scalar_lea.vmem [#allocation3], 96
    %v699 = vld [vmem:[%s698] sm:$0xff]
    %v700 = vld [vmem:[%s698 + $0x8] sm:$0xff]
    %v701 = vld [vmem:[%s698 + $0x10] sm:$0xff]
    %v702 = vld [vmem:[%s698 + $0x18] sm:$0xff]
    %s703 = scalar_lea.vmem [#allocation5], 96
    %v704 = vld [vmem:[%s703] sm:$0xff]
    %v705 = vld [vmem:[%s703 + $0x8] sm:$0xff]
    %v706 = vld [vmem:[%s703 + $0x10] sm:$0xff]
    %v707 = vld [vmem:[%s703 + $0x18] sm:$0xff]
    %v709 = vsel %vm97, %v72, 0
    %711 = vmatpush.msra.mxu0 0.0
    %712 = vmatpush.msra.mxu0 0.0
    %713 = vmatpush.msra.mxu0 0.0
    %714 = vmatpush.msra.mxu0 0.0
    %715 = vmatpush.msra.mxu0 0.0
    %716 = vmatpush.msra.mxu0 0.0
    %717 = vmatpush.msra.mxu0 0.0
    %718 = vmatpush.msra.mxu0 0.0
    %719 = vmatpush.msra.mxu0 0.0
    %720 = vmatpush.msra.mxu0 0.0
    %721 = vmatpush.msra.mxu0 0.0
    %722 = vmatpush.msra.mxu0 0.0
    %723 = vmatpush.msra.mxu0 %v707
    %724 = vmatpush.msra.mxu0 %v706
    %725 = vmatpush.msra.mxu0 %v705
    %726 = vmatpush.msra.mxu0 %v704
    %727 = vmatmul.f32.gmra.mxu0 %v709
    %v728 = vpop.f32.mrf.mxu0
    %v729 = vadd.f32 0.0, %v728
    %730 = vdwg.mxu0
    %731 = vmatpush.msra.mxu0 0.0
    %732 = vmatpush.msra.mxu0 0.0
    %733 = vmatpush.msra.mxu0 0.0
    %734 = vmatpush.msra.mxu0 0.0
    %735 = vmatpush.msra.mxu0 0.0
    %736 = vmatpush.msra.mxu0 0.0
    %737 = vmatpush.msra.mxu0 0.0
    %738 = vmatpush.msra.mxu0 0.0
    %739 = vmatpush.msra.mxu0 0.0
    %740 = vmatpush.msra.mxu0 0.0
    %741 = vmatpush.msra.mxu0 0.0
    %742 = vmatpush.msra.mxu0 0.0
    %743 = vmatpush.msra.mxu0 %v702
    %744 = vmatpush.msra.mxu0 %v701
    %745 = vmatpush.msra.mxu0 %v700
    %746 = vmatpush.msra.mxu0 %v699
    %747 = vmatmul.f32.gmra.mxu0 %v633
    %v748 = vpop.f32.mrf.mxu0
    %v749 = vadd.f32 %v729, %v748
    %750 = vdwg.mxu0
    %s751 = scalar_lea.vmem %s3, 3
    %v752 = vld [vmem:[%s751] sm:$0x1]
    %v754 = vperm.slane %v752, 0
    %v756 = vadd.f32 %v749, %v754
    %v757 = vmul.f32 %v756, 0.5
    %v758 = vtanh.pop %v757
    %v759 = vmul.f32 %v758, 0.5
    %v760 = vadd.f32 %v759, 0.5
    %v761 = vtanh.pop %v756
    %763 = vrot.lane.b32.xlu0 %v81, 32
    %v764 = vpop.permute.xlu0 %763
    %v766 = vmul.f32 %v760, %v764
    %768 = vrot.lane.b32.xlu0 %v761, 64
    %v769 = vpop.permute.xlu0 %768
    %v771 = vmul.f32 %v760, %v769
    %773 = vrot.lane.b32.xlu0 %v771, 32
    %v774 = vpop.permute.xlu0 %773
    %v776 = vadd.f32 %v766, %v774
    %v777 = vtanh.pop %v776
    %779 = vrot.lane.b32.xlu0 %v777, 64
    %v780 = vpop.permute.xlu0 %779
    %v782 = vmul.f32 %v760, %v780
    %s783 = scalar_lea.vmem %s0, 32
    %v784 = vld [vmem:[%s783] sm:$0xff]
    %786 = vset.pattern.permute.xlu0 0
    %787 = vperm.xlu0 %786, %v784
    %v788 = vpop.permute.xlu0 %787
    %v790 = vmul.f32 %v788, %v91
    %792 = vrot.lane.b32.xlu0 %v561, 32
    %v793 = vpop.permute.xlu0 %792
    %v794 = vsel %vm97, %v793, 0
    %796 = vmatpush.msra.mxu0 0.0
    %797 = vmatpush.msra.mxu0 0.0
    %798 = vmatpush.msra.mxu0 0.0
    %799 = vmatpush.msra.mxu0 0.0
    %800 = vmatpush.msra.mxu0 0.0
    %801 = vmatpush.msra.mxu0 0.0
    %802 = vmatpush.msra.mxu0 0.0
    %803 = vmatpush.msra.mxu0 0.0
    %804 = vmatpush.msra.mxu0 0.0
    %805 = vmatpush.msra.mxu0 0.0
    %806 = vmatpush.msra.mxu0 0.0
    %807 = vmatpush.msra.mxu0 0.0
    %808 = vmatpush.msra.mxu0 %v96
    %809 = vmatpush.msra.mxu0 %v95
    %810 = vmatpush.msra.mxu0 %v94
    %811 = vmatpush.msra.mxu0 %v93
    %812 = vmatmul.f32.gmra.mxu0 %v794
    %v813 = vpop.f32.mrf.mxu0
    %v814 = vadd.f32 0.0, %v813
    %815 = vdwg.mxu0
    %v816 = vadd.f32 %v790, %v814
    %v817 = vadd.f32 %v816, %v124
    %v818 = vmul.f32 %v817, 0.5
    %v819 = vtanh.pop %v818
    %v820 = vmul.f32 %v819, 0.5
    %v821 = vadd.f32 %v820, 0.5
    %v822 = vtanh.pop %v817
    %v823 = vmul.f32 %v821, %v555
    %825 = vrot.lane.b32.xlu0 %v822, 64
    %v826 = vpop.permute.xlu0 %825
    %v828 = vmul.f32 %v821, %v826
    %830 = vrot.lane.b32.xlu0 %v828, 32
    %v831 = vpop.permute.xlu0 %830
    %v833 = vadd.f32 %v823, %v831
    %v834 = vtanh.pop %v833
    %836 = vrot.lane.b32.xlu0 %v834, 64
    %v837 = vpop.permute.xlu0 %836
    %v839 = vmul.f32 %v821, %v837
    %841 = vrot.lane.b32.xlu0 %v629, 32
    %v842 = vpop.permute.xlu0 %841
    %v843 = vsel %vm97, %v842, 0
    %845 = vmatpush.msra.mxu0 0.0
    %846 = vmatpush.msra.mxu0 0.0
    %847 = vmatpush.msra.mxu0 0.0
    %848 = vmatpush.msra.mxu0 0.0
    %849 = vmatpush.msra.mxu0 0.0
    %850 = vmatpush.msra.mxu0 0.0
    %851 = vmatpush.msra.mxu0 0.0
    %852 = vmatpush.msra.mxu0 0.0
    %853 = vmatpush.msra.mxu0 0.0
    %854 = vmatpush.msra.mxu0 0.0
    %855 = vmatpush.msra.mxu0 0.0
    %856 = vmatpush.msra.mxu0 0.0
    %857 = vmatpush.msra.mxu0 %v219
    %858 = vmatpush.msra.mxu0 %v218
    %859 = vmatpush.msra.mxu0 %v217
    %860 = vmatpush.msra.mxu0 %v216
    %861 = vmatmul.f32.gmra.mxu0 %v843
    %v862 = vpop.f32.mrf.mxu0
    %v863 = vadd.f32 0.0, %v862
    %864 = vdwg.mxu0
    %865 = vmatpush.msra.mxu0 0.0
    %866 = vmatpush.msra.mxu0 0.0
    %867 = vmatpush.msra.mxu0 0.0
    %868 = vmatpush.msra.mxu0 0.0
    %869 = vmatpush.msra.mxu0 0.0
    %870 = vmatpush.msra.mxu0 0.0
    %871 = vmatpush.msra.mxu0 0.0
    %872 = vmatpush.msra.mxu0 0.0
    %873 = vmatpush.msra.mxu0 0.0
    %874 = vmatpush.msra.mxu0 0.0
    %875 = vmatpush.msra.mxu0 0.0
    %876 = vmatpush.msra.mxu0 0.0
    %877 = vmatpush.msra.mxu0 %v214
    %878 = vmatpush.msra.mxu0 %v213
    %879 = vmatpush.msra.mxu0 %v212
    %880 = vmatpush.msra.mxu0 %v211
    %881 = vmatmul.f32.gmra.mxu0 %v794
    %v882 = vpop.f32.mrf.mxu0
    %v883 = vadd.f32 %v863, %v882
    %884 = vdwg.mxu0
    %v885 = vadd.f32 %v883, %v266
    %v886 = vmul.f32 %v885, 0.5
    %v887 = vtanh.pop %v886
    %v888 = vmul.f32 %v887, 0.5
    %v889 = vadd.f32 %v888, 0.5
    %v890 = vtanh.pop %v885
    %v891 = vmul.f32 %v889, %v623
    %893 = vrot.lane.b32.xlu0 %v890, 64
    %v894 = vpop.permute.xlu0 %893
    %v896 = vmul.f32 %v889, %v894
    %898 = vrot.lane.b32.xlu0 %v896, 32
    %v899 = vpop.permute.xlu0 %898
    %v901 = vadd.f32 %v891, %v899
    %v902 = vtanh.pop %v901
    %904 = vrot.lane.b32.xlu0 %v902, 64
    %v905 = vpop.permute.xlu0 %904
    %v907 = vmul.f32 %v889, %v905
    %909 = vrot.lane.b32.xlu0 %v697, 32
    %v910 = vpop.permute.xlu0 %909
    %v911 = vsel %vm97, %v910, 0
    %913 = vmatpush.msra.mxu0 0.0
    %914 = vmatpush.msra.mxu0 0.0
    %915 = vmatpush.msra.mxu0 0.0
    %916 = vmatpush.msra.mxu0 0.0
    %917 = vmatpush.msra.mxu0 0.0
    %918 = vmatpush.msra.mxu0 0.0
    %919 = vmatpush.msra.mxu0 0.0
    %920 = vmatpush.msra.mxu0 0.0
    %921 = vmatpush.msra.mxu0 0.0
    %922 = vmatpush.msra.mxu0 0.0
    %923 = vmatpush.msra.mxu0 0.0
    %924 = vmatpush.msra.mxu0 0.0
    %925 = vmatpush.msra.mxu0 %v429
    %926 = vmatpush.msra.mxu0 %v428
    %927 = vmatpush.msra.mxu0 %v427
    %928 = vmatpush.msra.mxu0 %v426
    %929 = vmatmul.f32.gmra.mxu0 %v911
    %v930 = vpop.f32.mrf.mxu0
    %v931 = vadd.f32 0.0, %v930
    %932 = vdwg.mxu0
    %933 = vmatpush.msra.mxu0 0.0
    %934 = vmatpush.msra.mxu0 0.0
    %935 = vmatpush.msra.mxu0 0.0
    %936 = vmatpush.msra.mxu0 0.0
    %937 = vmatpush.msra.mxu0 0.0
    %938 = vmatpush.msra.mxu0 0.0
    %939 = vmatpush.msra.mxu0 0.0
    %940 = vmatpush.msra.mxu0 0.0
    %941 = vmatpush.msra.mxu0 0.0
    %942 = vmatpush.msra.mxu0 0.0
    %943 = vmatpush.msra.mxu0 0.0
    %944 = vmatpush.msra.mxu0 0.0
    %945 = vmatpush.msra.mxu0 %v424
    %946 = vmatpush.msra.mxu0 %v423
    %947 = vmatpush.msra.mxu0 %v422
    %948 = vmatpush.msra.mxu0 %v421
    %949 = vmatmul.f32.gmra.mxu0 %v843
    %v950 = vpop.f32.mrf.mxu0
    %v951 = vadd.f32 %v931, %v950
    %952 = vdwg.mxu0
    %v953 = vadd.f32 %v951, %v476
    %v954 = vmul.f32 %v953, 0.5
    %v955 = vtanh.pop %v954
    %v956 = vmul.f32 %v955, 0.5
    %v957 = vadd.f32 %v956, 0.5
    %v958 = vtanh.pop %v953
    %v959 = vmul.f32 %v957, %v691
    %961 = vrot.lane.b32.xlu0 %v958, 64
    %v962 = vpop.permute.xlu0 %961
    %v964 = vmul.f32 %v957, %v962
    %966 = vrot.lane.b32.xlu0 %v964, 32
    %v967 = vpop.permute.xlu0 %966
    %v969 = vadd.f32 %v959, %v967
    %v970 = vtanh.pop %v969
    %972 = vrot.lane.b32.xlu0 %v970, 64
    %v973 = vpop.permute.xlu0 %972
    %v975 = vmul.f32 %v957, %v973
    %977 = vrot.lane.b32.xlu0 %v782, 32
    %v978 = vpop.permute.xlu0 %977
    %v979 = vsel %vm97, %v978, 0
    %981 = vmatpush.msra.mxu0 0.0
    %982 = vmatpush.msra.mxu0 0.0
    %983 = vmatpush.msra.mxu0 0.0
    %984 = vmatpush.msra.mxu0 0.0
    %985 = vmatpush.msra.mxu0 0.0
    %986 = vmatpush.msra.mxu0 0.0
    %987 = vmatpush.msra.mxu0 0.0
    %988 = vmatpush.msra.mxu0 0.0
    %989 = vmatpush.msra.mxu0 0.0
    %990 = vmatpush.msra.mxu0 0.0
    %991 = vmatpush.msra.mxu0 0.0
    %992 = vmatpush.msra.mxu0 0.0
    %993 = vmatpush.msra.mxu0 %v707
    %994 = vmatpush.msra.mxu0 %v706
    %995 = vmatpush.msra.mxu0 %v705
    %996 = vmatpush.msra.mxu0 %v704
    %997 = vmatmul.f32.gmra.mxu0 %v979
    %v998 = vpop.f32.mrf.mxu0
    %v999 = vadd.f32 0.0, %v998
    %1000 = vdwg.mxu0
    %1001 = vmatpush.msra.mxu0 0.0
    %1002 = vmatpush.msra.mxu0 0.0
    %1003 = vmatpush.msra.mxu0 0.0
    %1004 = vmatpush.msra.mxu0 0.0
    %1005 = vmatpush.msra.mxu0 0.0
    %1006 = vmatpush.msra.mxu0 0.0
    %1007 = vmatpush.msra.mxu0 0.0
    %1008 = vmatpush.msra.mxu0 0.0
    %1009 = vmatpush.msra.mxu0 0.0
    %1010 = vmatpush.msra.mxu0 0.0
    %1011 = vmatpush.msra.mxu0 0.0
    %1012 = vmatpush.msra.mxu0 0.0
    %1013 = vmatpush.msra.mxu0 %v702
    %1014 = vmatpush.msra.mxu0 %v701
    %1015 = vmatpush.msra.mxu0 %v700
    %1016 = vmatpush.msra.mxu0 %v699
    %1017 = vmatmul.f32.gmra.mxu0 %v911
    %v1018 = vpop.f32.mrf.mxu0
    %v1019 = vadd.f32 %v999, %v1018
    %1020 = vdwg.mxu0
    %v1021 = vadd.f32 %v1019, %v754
    %v1022 = vmul.f32 %v1021, 0.5
    %v1023 = vtanh.pop %v1022
    %v1024 = vmul.f32 %v1023, 0.5
    %v1025 = vadd.f32 %v1024, 0.5
    %v1026 = vtanh.pop %v1021
    %v1027 = vmul.f32 %v1025, %v776
    %1029 = vrot.lane.b32.xlu0 %v1026, 64
    %v1030 = vpop.permute.xlu0 %1029
    %v1032 = vmul.f32 %v1025, %v1030
    %1034 = vrot.lane.b32.xlu0 %v1032, 32
    %v1035 = vpop.permute.xlu0 %1034
    %v1037 = vadd.f32 %v1027, %v1035
    %v1038 = vtanh.pop %v1037
    %1040 = vrot.lane.b32.xlu0 %v1038, 64
    %v1041 = vpop.permute.xlu0 %1040
    %v1043 = vmul.f32 %v1025, %v1041
    %s1044 = scalar_lea.vmem [#allocation3], 128
    %v1045 = vld [vmem:[%s1044] sm:$0xff]
    %v1046 = vld [vmem:[%s1044 + $0x8] sm:$0xff]
    %v1047 = vld [vmem:[%s1044 + $0x10] sm:$0xff]
    %v1048 = vld [vmem:[%s1044 + $0x18] sm:$0xff]
    %s1049 = scalar_lea.vmem [#allocation5], 128
    %v1050 = vld [vmem:[%s1049] sm:$0xff]
    %v1051 = vld [vmem:[%s1049 + $0x8] sm:$0xff]
    %v1052 = vld [vmem:[%s1049 + $0x10] sm:$0xff]
    %v1053 = vld [vmem:[%s1049 + $0x18] sm:$0xff]
    %v1055 = vsel %vm97, %v74, 0
    %1057 = vmatpush.msra.mxu0 0.0
    %1058 = vmatpush.msra.mxu0 0.0
    %1059 = vmatpush.msra.mxu0 0.0
    %1060 = vmatpush.msra.mxu0 0.0
    %1061 = vmatpush.msra.mxu0 0.0
    %1062 = vmatpush.msra.mxu0 0.0
    %1063 = vmatpush.msra.mxu0 0.0
    %1064 = vmatpush.msra.mxu0 0.0
    %1065 = vmatpush.msra.mxu0 0.0
    %1066 = vmatpush.msra.mxu0 0.0
    %1067 = vmatpush.msra.mxu0 0.0
    %1068 = vmatpush.msra.mxu0 0.0
    %1069 = vmatpush.msra.mxu0 %v1053
    %1070 = vmatpush.msra.mxu0 %v1052
    %1071 = vmatpush.msra.mxu0 %v1051
    %1072 = vmatpush.msra.mxu0 %v1050
    %1073 = vmatmul.f32.gmra.mxu0 %v1055
    %v1074 = vpop.f32.mrf.mxu0
    %v1075 = vadd.f32 0.0, %v1074
    %1076 = vdwg.mxu0
    %1077 = vmatpush.msra.mxu0 0.0
    %1078 = vmatpush.msra.mxu0 0.0
    %1079 = vmatpush.msra.mxu0 0.0
    %1080 = vmatpush.msra.mxu0 0.0
    %1081 = vmatpush.msra.mxu0 0.0
    %1082 = vmatpush.msra.mxu0 0.0
    %1083 = vmatpush.msra.mxu0 0.0
    %1084 = vmatpush.msra.mxu0 0.0
    %1085 = vmatpush.msra.mxu0 0.0
    %1086 = vmatpush.msra.mxu0 0.0
    %1087 = vmatpush.msra.mxu0 0.0
    %1088 = vmatpush.msra.mxu0 0.0
    %1089 = vmatpush.msra.mxu0 %v1048
    %1090 = vmatpush.msra.mxu0 %v1047
    %1091 = vmatpush.msra.mxu0 %v1046
    %1092 = vmatpush.msra.mxu0 %v1045
    %1093 = vmatmul.f32.gmra.mxu0 %v979
    %v1094 = vpop.f32.mrf.mxu0
    %v1095 = vadd.f32 %v1075, %v1094
    %1096 = vdwg.mxu0
    %s1097 = scalar_lea.vmem %s3, 4
    %v1098 = vld [vmem:[%s1097] sm:$0x1]
    %v1100 = vperm.slane %v1098, 0
    %v1102 = vadd.f32 %v1095, %v1100
    %v1103 = vmul.f32 %v1102, 0.5
    %v1104 = vtanh.pop %v1103
    %v1105 = vmul.f32 %v1104, 0.5
    %v1106 = vadd.f32 %v1105, 0.5
    %v1107 = vtanh.pop %v1102
    %1109 = vrot.lane.b32.xlu0 %v83, 32
    %v1110 = vpop.permute.xlu0 %1109
    %v1112 = vmul.f32 %v1106, %v1110
    %1114 = vrot.lane.b32.xlu0 %v1107, 64
    %v1115 = vpop.permute.xlu0 %1114
    %v1117 = vmul.f32 %v1106, %v1115
    %1119 = vrot.lane.b32.xlu0 %v1117, 32
    %v1120 = vpop.permute.xlu0 %1119
    %v1122 = vadd.f32 %v1112, %v1120
    %v1123 = vtanh.pop %v1122
    %1125 = vrot.lane.b32.xlu0 %v1123, 64
    %v1126 = vpop.permute.xlu0 %1125
    %v1128 = vmul.f32 %v1106, %v1126
    %s1129 = scalar_lea.vmem %s0, 40
    %v1130 = vld [vmem:[%s1129] sm:$0xff]
    %1132 = vset.pattern.permute.xlu0 0
    %1133 = vperm.xlu0 %1132, %v1130
    %v1134 = vpop.permute.xlu0 %1133
    %v1136 = vmul.f32 %v1134, %v91
    %1138 = vrot.lane.b32.xlu0 %v839, 32
    %v1139 = vpop.permute.xlu0 %1138
    %v1140 = vsel %vm97, %v1139, 0
    %1142 = vmatpush.msra.mxu0 0.0
    %1143 = vmatpush.msra.mxu0 0.0
    %1144 = vmatpush.msra.mxu0 0.0
    %1145 = vmatpush.msra.mxu0 0.0
    %1146 = vmatpush.msra.mxu0 0.0
    %1147 = vmatpush.msra.mxu0 0.0
    %1148 = vmatpush.msra.mxu0 0.0
    %1149 = vmatpush.msra.mxu0 0.0
    %1150 = vmatpush.msra.mxu0 0.0
    %1151 = vmatpush.msra.mxu0 0.0
    %1152 = vmatpush.msra.mxu0 0.0
    %1153 = vmatpush.msra.mxu0 0.0
    %1154 = vmatpush.msra.mxu0 %v96
    %1155 = vmatpush.msra.mxu0 %v95
    %1156 = vmatpush.msra.mxu0 %v94
    %1157 = vmatpush.msra.mxu0 %v93
    %1158 = vmatmul.f32.gmra.mxu0 %v1140
    %v1159 = vpop.f32.mrf.mxu0
    %v1160 = vadd.f32 0.0, %v1159
    %1161 = vdwg.mxu0
    %v1162 = vadd.f32 %v1136, %v1160
    %v1163 = vadd.f32 %v1162, %v124
    %v1164 = vmul.f32 %v1163, 0.5
    %v1165 = vtanh.pop %v1164
    %v1166 = vmul.f32 %v1165, 0.5
    %v1167 = vadd.f32 %v1166, 0.5
    %v1168 = vtanh.pop %v1163
    %v1169 = vmul.f32 %v1167, %v833
    %1171 = vrot.lane.b32.xlu0 %v1168, 64
    %v1172 = vpop.permute.xlu0 %1171
    %v1174 = vmul.f32 %v1167, %v1172
    %1176 = vrot.lane.b32.xlu0 %v1174, 32
    %v1177 = vpop.permute.xlu0 %1176
    %v1179 = vadd.f32 %v1169, %v1177
    %v1180 = vtanh.pop %v1179
    %1182 = vrot.lane.b32.xlu0 %v1180, 64
    %v1183 = vpop.permute.xlu0 %1182
    %v1185 = vmul.f32 %v1167, %v1183
    %1187 = vrot.lane.b32.xlu0 %v907, 32
    %v1188 = vpop.permute.xlu0 %1187
    %v1189 = vsel %vm97, %v1188, 0
    %1191 = vmatpush.msra.mxu0 0.0
    %1192 = vmatpush.msra.mxu0 0.0
    %1193 = vmatpush.msra.mxu0 0.0
    %1194 = vmatpush.msra.mxu0 0.0
    %1195 = vmatpush.msra.mxu0 0.0
    %1196 = vmatpush.msra.mxu0 0.0
    %1197 = vmatpush.msra.mxu0 0.0
    %1198 = vmatpush.msra.mxu0 0.0
    %1199 = vmatpush.msra.mxu0 0.0
    %1200 = vmatpush.msra.mxu0 0.0
    %1201 = vmatpush.msra.mxu0 0.0
    %1202 = vmatpush.msra.mxu0 0.0
    %1203 = vmatpush.msra.mxu0 %v219
    %1204 = vmatpush.msra.mxu0 %v218
    %1205 = vmatpush.msra.mxu0 %v217
    %1206 = vmatpush.msra.mxu0 %v216
    %1207 = vmatmul.f32.gmra.mxu0 %v1189
    %v1208 = vpop.f32.mrf.mxu0
    %v1209 = vadd.f32 0.0, %v1208
    %1210 = vdwg.mxu0
    %1211 = vmatpush.msra.mxu0 0.0
    %1212 = vmatpush.msra.mxu0 0.0
    %1213 = vmatpush.msra.mxu0 0.0
    %1214 = vmatpush.msra.mxu0 0.0
    %1215 = vmatpush.msra.mxu0 0.0
    %1216 = vmatpush.msra.mxu0 0.0
    %1217 = vmatpush.msra.mxu0 0.0
    %1218 = vmatpush.msra.mxu0 0.0
    %1219 = vmatpush.msra.mxu0 0.0
    %1220 = vmatpush.msra.mxu0 0.0
    %1221 = vmatpush.msra.mxu0 0.0
    %1222 = vmatpush.msra.mxu0 0.0
    %1223 = vmatpush.msra.mxu0 %v214
    %1224 = vmatpush.msra.mxu0 %v213
    %1225 = vmatpush.msra.mxu0 %v212
    %1226 = vmatpush.msra.mxu0 %v211
    %1227 = vmatmul.f32.gmra.mxu0 %v1140
    %v1228 = vpop.f32.mrf.mxu0
    %v1229 = vadd.f32 %v1209, %v1228
    %1230 = vdwg.mxu0
    %v1231 = vadd.f32 %v1229, %v266
    %v1232 = vmul.f32 %v1231, 0.5
    %v1233 = vtanh.pop %v1232
    %v1234 = vmul.f32 %v1233, 0.5
    %v1235 = vadd.f32 %v1234, 0.5
    %v1236 = vtanh.pop %v1231
    %v1237 = vmul.f32 %v1235, %v901
    %1239 = vrot.lane.b32.xlu0 %v1236, 64
    %v1240 = vpop.permute.xlu0 %1239
    %v1242 = vmul.f32 %v1235, %v1240
    %1244 = vrot.lane.b32.xlu0 %v1242, 32
    %v1245 = vpop.permute.xlu0 %1244
    %v1247 = vadd.f32 %v1237, %v1245
    %v1248 = vtanh.pop %v1247
    %1250 = vrot.lane.b32.xlu0 %v1248, 64
    %v1251 = vpop.permute.xlu0 %1250
    %v1253 = vmul.f32 %v1235, %v1251
    %1255 = vrot.lane.b32.xlu0 %v975, 32
    %v1256 = vpop.permute.xlu0 %1255
    %v1257 = vsel %vm97, %v1256, 0
    %1259 = vmatpush.msra.mxu0 0.0
    %1260 = vmatpush.msra.mxu0 0.0
    %1261 = vmatpush.msra.mxu0 0.0
    %1262 = vmatpush.msra.mxu0 0.0
    %1263 = vmatpush.msra.mxu0 0.0
    %1264 = vmatpush.msra.mxu0 0.0
    %1265 = vmatpush.msra.mxu0 0.0
    %1266 = vmatpush.msra.mxu0 0.0
    %1267 = vmatpush.msra.mxu0 0.0
    %1268 = vmatpush.msra.mxu0 0.0
    %1269 = vmatpush.msra.mxu0 0.0
    %1270 = vmatpush.msra.mxu0 0.0
    %1271 = vmatpush.msra.mxu0 %v429
    %1272 = vmatpush.msra.mxu0 %v428
    %1273 = vmatpush.msra.mxu0 %v427
    %1274 = vmatpush.msra.mxu0 %v426
    %1275 = vmatmul.f32.gmra.mxu0 %v1257
    %v1276 = vpop.f32.mrf.mxu0
    %v1277 = vadd.f32 0.0, %v1276
    %1278 = vdwg.mxu0
    %1279 = vmatpush.msra.mxu0 0.0
    %1280 = vmatpush.msra.mxu0 0.0
    %1281 = vmatpush.msra.mxu0 0.0
    %1282 = vmatpush.msra.mxu0 0.0
    %1283 = vmatpush.msra.mxu0 0.0
    %1284 = vmatpush.msra.mxu0 0.0
    %1285 = vmatpush.msra.mxu0 0.0
    %1286 = vmatpush.msra.mxu0 0.0
    %1287 = vmatpush.msra.mxu0 0.0
    %1288 = vmatpush.msra.mxu0 0.0
    %1289 = vmatpush.msra.mxu0 0.0
    %1290 = vmatpush.msra.mxu0 0.0
    %1291 = vmatpush.msra.mxu0 %v424
    %1292 = vmatpush.msra.mxu0 %v423
    %1293 = vmatpush.msra.mxu0 %v422
    %1294 = vmatpush.msra.mxu0 %v421
    %1295 = vmatmul.f32.gmra.mxu0 %v1189
    %v1296 = vpop.f32.mrf.mxu0
    %v1297 = vadd.f32 %v1277, %v1296
    %1298 = vdwg.mxu0
    %v1299 = vadd.f32 %v1297, %v476
    %v1300 = vmul.f32 %v1299, 0.5
    %v1301 = vtanh.pop %v1300
    %v1302 = vmul.f32 %v1301, 0.5
    %v1303 = vadd.f32 %v1302, 0.5
    %v1304 = vtanh.pop %v1299
    %v1305 = vmul.f32 %v1303, %v969
    %1307 = vrot.lane.b32.xlu0 %v1304, 64
    %v1308 = vpop.permute.xlu0 %1307
    %v1310 = vmul.f32 %v1303, %v1308
    %1312 = vrot.lane.b32.xlu0 %v1310, 32
    %v1313 = vpop.permute.xlu0 %1312
    %v1315 = vadd.f32 %v1305, %v1313
    %v1316 = vtanh.pop %v1315
    %1318 = vrot.lane.b32.xlu0 %v1316, 64
    %v1319 = vpop.permute.xlu0 %1318
    %v1321 = vmul.f32 %v1303, %v1319
    %1323 = vrot.lane.b32.xlu0 %v1043, 32
    %v1324 = vpop.permute.xlu0 %1323
    %v1325 = vsel %vm97, %v1324, 0
    %1327 = vmatpush.msra.mxu0 0.0
    %1328 = vmatpush.msra.mxu0 0.0
    %1329 = vmatpush.msra.mxu0 0.0
    %1330 = vmatpush.msra.mxu0 0.0
    %1331 = vmatpush.msra.mxu0 0.0
    %1332 = vmatpush.msra.mxu0 0.0
    %1333 = vmatpush.msra.mxu0 0.0
    %1334 = vmatpush.msra.mxu0 0.0
    %1335 = vmatpush.msra.mxu0 0.0
    %1336 = vmatpush.msra.mxu0 0.0
    %1337 = vmatpush.msra.mxu0 0.0
    %1338 = vmatpush.msra.mxu0 0.0
    %1339 = vmatpush.msra.mxu0 %v707
    %1340 = vmatpush.msra.mxu0 %v706
    %1341 = vmatpush.msra.mxu0 %v705
    %1342 = vmatpush.msra.mxu0 %v704
    %1343 = vmatmul.f32.gmra.mxu0 %v1325
    %v1344 = vpop.f32.mrf.mxu0
    %v1345 = vadd.f32 0.0, %v1344
    %1346 = vdwg.mxu0
    %1347 = vmatpush.msra.mxu0 0.0
    %1348 = vmatpush.msra.mxu0 0.0
    %1349 = vmatpush.msra.mxu0 0.0
    %1350 = vmatpush.msra.mxu0 0.0
    %1351 = vmatpush.msra.mxu0 0.0
    %1352 = vmatpush.msra.mxu0 0.0
    %1353 = vmatpush.msra.mxu0 0.0
    %1354 = vmatpush.msra.mxu0 0.0
    %1355 = vmatpush.msra.mxu0 0.0
    %1356 = vmatpush.msra.mxu0 0.0
    %1357 = vmatpush.msra.mxu0 0.0
    %1358 = vmatpush.msra.mxu0 0.0
    %1359 = vmatpush.msra.mxu0 %v702
    %1360 = vmatpush.msra.mxu0 %v701
    %1361 = vmatpush.msra.mxu0 %v700
    %1362 = vmatpush.msra.mxu0 %v699
    %1363 = vmatmul.f32.gmra.mxu0 %v1257
    %v1364 = vpop.f32.mrf.mxu0
    %v1365 = vadd.f32 %v1345, %v1364
    %1366 = vdwg.mxu0
    %v1367 = vadd.f32 %v1365, %v754
    %v1368 = vmul.f32 %v1367, 0.5
    %v1369 = vtanh.pop %v1368
    %v1370 = vmul.f32 %v1369, 0.5
    %v1371 = vadd.f32 %v1370, 0.5
    %v1372 = vtanh.pop %v1367
    %v1373 = vmul.f32 %v1371, %v1037
    %1375 = vrot.lane.b32.xlu0 %v1372, 64
    %v1376 = vpop.permute.xlu0 %1375
    %v1378 = vmul.f32 %v1371, %v1376
    %1380 = vrot.lane.b32.xlu0 %v1378, 32
    %v1381 = vpop.permute.xlu0 %1380
    %v1383 = vadd.f32 %v1373, %v1381
    %v1384 = vtanh.pop %v1383
    %1386 = vrot.lane.b32.xlu0 %v1384, 64
    %v1387 = vpop.permute.xlu0 %1386
    %v1389 = vmul.f32 %v1371, %v1387
    %1391 = vrot.lane.b32.xlu0 %v1128, 32
    %v1392 = vpop.permute.xlu0 %1391
    %v1393 = vsel %vm97, %v1392, 0
    %1395 = vmatpush.msra.mxu0 0.0
    %1396 = vmatpush.msra.mxu0 0.0
    %1397 = vmatpush.msra.mxu0 0.0
    %1398 = vmatpush.msra.mxu0 0.0
    %1399 = vmatpush.msra.mxu0 0.0
    %1400 = vmatpush.msra.mxu0 0.0
    %1401 = vmatpush.msra.mxu0 0.0
    %1402 = vmatpush.msra.mxu0 0.0
    %1403 = vmatpush.msra.mxu0 0.0
    %1404 = vmatpush.msra.mxu0 0.0
    %1405 = vmatpush.msra.mxu0 0.0
    %1406 = vmatpush.msra.mxu0 0.0
    %1407 = vmatpush.msra.mxu0 %v1053
    %1408 = vmatpush.msra.mxu0 %v1052
    %1409 = vmatpush.msra.mxu0 %v1051
    %1410 = vmatpush.msra.mxu0 %v1050
    %1411 = vmatmul.f32.gmra.mxu0 %v1393
    %v1412 = vpop.f32.mrf.mxu0
    %v1413 = vadd.f32 0.0, %v1412
    %1414 = vdwg.mxu0
    %1415 = vmatpush.msra.mxu0 0.0
    %1416 = vmatpush.msra.mxu0 0.0
    %1417 = vmatpush.msra.mxu0 0.0
    %1418 = vmatpush.msra.mxu0 0.0
    %1419 = vmatpush.msra.mxu0 0.0
    %1420 = vmatpush.msra.mxu0 0.0
    %1421 = vmatpush.msra.mxu0 0.0
    %1422 = vmatpush.msra.mxu0 0.0
    %1423 = vmatpush.msra.mxu0 0.0
    %1424 = vmatpush.msra.mxu0 0.0
    %1425 = vmatpush.msra.mxu0 0.0
    %1426 = vmatpush.msra.mxu0 0.0
    %1427 = vmatpush.msra.mxu0 %v1048
    %1428 = vmatpush.msra.mxu0 %v1047
    %1429 = vmatpush.msra.mxu0 %v1046
    %1430 = vmatpush.msra.mxu0 %v1045
    %1431 = vmatmul.f32.gmra.mxu0 %v1325
    %v1432 = vpop.f32.mrf.mxu0
    %v1433 = vadd.f32 %v1413, %v1432
    %1434 = vdwg.mxu0
    %v1435 = vadd.f32 %v1433, %v1100
    %v1436 = vmul.f32 %v1435, 0.5
    %v1437 = vtanh.pop %v1436
    %v1438 = vmul.f32 %v1437, 0.5
    %v1439 = vadd.f32 %v1438, 0.5
    %v1440 = vtanh.pop %v1435
    %v1441 = vmul.f32 %v1439, %v1122
    %1443 = vrot.lane.b32.xlu0 %v1440, 64
    %v1444 = vpop.permute.xlu0 %1443
    %v1446 = vmul.f32 %v1439, %v1444
    %1448 = vrot.lane.b32.xlu0 %v1446, 32
    %v1449 = vpop.permute.xlu0 %1448
    %v1451 = vadd.f32 %v1441, %v1449
    %v1452 = vtanh.pop %v1451
    %1454 = vrot.lane.b32.xlu0 %v1452, 64
    %v1455 = vpop.permute.xlu0 %1454
    %v1457 = vmul.f32 %v1439, %v1455
    %s1458 = scalar_lea.vmem %s0, 48
    %v1459 = vld [vmem:[%s1458] sm:$0xff]
    %1461 = vset.pattern.permute.xlu0 0
    %1462 = vperm.xlu0 %1461, %v1459
    %v1463 = vpop.permute.xlu0 %1462
    %v1465 = vmul.f32 %v1463, %v91
    %1467 = vrot.lane.b32.xlu0 %v1185, 32
    %v1468 = vpop.permute.xlu0 %1467
    %v1469 = vsel %vm97, %v1468, 0
    %1471 = vmatpush.msra.mxu0 0.0
    %1472 = vmatpush.msra.mxu0 0.0
    %1473 = vmatpush.msra.mxu0 0.0
    %1474 = vmatpush.msra.mxu0 0.0
    %1475 = vmatpush.msra.mxu0 0.0
    %1476 = vmatpush.msra.mxu0 0.0
    %1477 = vmatpush.msra.mxu0 0.0
    %1478 = vmatpush.msra.mxu0 0.0
    %1479 = vmatpush.msra.mxu0 0.0
    %1480 = vmatpush.msra.mxu0 0.0
    %1481 = vmatpush.msra.mxu0 0.0
    %1482 = vmatpush.msra.mxu0 0.0
    %1483 = vmatpush.msra.mxu0 %v96
    %1484 = vmatpush.msra.mxu0 %v95
    %1485 = vmatpush.msra.mxu0 %v94
    %1486 = vmatpush.msra.mxu0 %v93
    %1487 = vmatmul.f32.gmra.mxu0 %v1469
    %v1488 = vpop.f32.mrf.mxu0
    %v1489 = vadd.f32 0.0, %v1488
    %1490 = vdwg.mxu0
    %v1491 = vadd.f32 %v1465, %v1489
    %v1492 = vadd.f32 %v1491, %v124
    %v1493 = vmul.f32 %v1492, 0.5
    %v1494 = vtanh.pop %v1493
    %v1495 = vmul.f32 %v1494, 0.5
    %v1496 = vadd.f32 %v1495, 0.5
    %v1497 = vtanh.pop %v1492
    %v1498 = vmul.f32 %v1496, %v1179
    %1500 = vrot.lane.b32.xlu0 %v1497, 64
    %v1501 = vpop.permute.xlu0 %1500
    %v1503 = vmul.f32 %v1496, %v1501
    %1505 = vrot.lane.b32.xlu0 %v1503, 32
    %v1506 = vpop.permute.xlu0 %1505
    %v1508 = vadd.f32 %v1498, %v1506
    %v1509 = vtanh.pop %v1508
    %1511 = vrot.lane.b32.xlu0 %v1509, 64
    %v1512 = vpop.permute.xlu0 %1511
    %v1514 = vmul.f32 %v1496, %v1512
    %1516 = vrot.lane.b32.xlu0 %v1253, 32
    %v1517 = vpop.permute.xlu0 %1516
    %v1518 = vsel %vm97, %v1517, 0
    %1520 = vmatpush.msra.mxu0 0.0
    %1521 = vmatpush.msra.mxu0 0.0
    %1522 = vmatpush.msra.mxu0 0.0
    %1523 = vmatpush.msra.mxu0 0.0
    %1524 = vmatpush.msra.mxu0 0.0
    %1525 = vmatpush.msra.mxu0 0.0
    %1526 = vmatpush.msra.mxu0 0.0
    %1527 = vmatpush.msra.mxu0 0.0
    %1528 = vmatpush.msra.mxu0 0.0
    %1529 = vmatpush.msra.mxu0 0.0
    %1530 = vmatpush.msra.mxu0 0.0
    %1531 = vmatpush.msra.mxu0 0.0
    %1532 = vmatpush.msra.mxu0 %v219
    %1533 = vmatpush.msra.mxu0 %v218
    %1534 = vmatpush.msra.mxu0 %v217
    %1535 = vmatpush.msra.mxu0 %v216
    %1536 = vmatmul.f32.gmra.mxu0 %v1518
    %v1537 = vpop.f32.mrf.mxu0
    %v1538 = vadd.f32 0.0, %v1537
    %1539 = vdwg.mxu0
    %1540 = vmatpush.msra.mxu0 0.0
    %1541 = vmatpush.msra.mxu0 0.0
    %1542 = vmatpush.msra.mxu0 0.0
    %1543 = vmatpush.msra.mxu0 0.0
    %1544 = vmatpush.msra.mxu0 0.0
    %1545 = vmatpush.msra.mxu0 0.0
    %1546 = vmatpush.msra.mxu0 0.0
    %1547 = vmatpush.msra.mxu0 0.0
    %1548 = vmatpush.msra.mxu0 0.0
    %1549 = vmatpush.msra.mxu0 0.0
    %1550 = vmatpush.msra.mxu0 0.0
    %1551 = vmatpush.msra.mxu0 0.0
    %1552 = vmatpush.msra.mxu0 %v214
    %1553 = vmatpush.msra.mxu0 %v213
    %1554 = vmatpush.msra.mxu0 %v212
    %1555 = vmatpush.msra.mxu0 %v211
    %1556 = vmatmul.f32.gmra.mxu0 %v1469
    %v1557 = vpop.f32.mrf.mxu0
    %v1558 = vadd.f32 %v1538, %v1557
    %1559 = vdwg.mxu0
    %v1560 = vadd.f32 %v1558, %v266
    %v1561 = vmul.f32 %v1560, 0.5
    %v1562 = vtanh.pop %v1561
    %v1563 = vmul.f32 %v1562, 0.5
    %v1564 = vadd.f32 %v1563, 0.5
    %v1565 = vtanh.pop %v1560
    %v1566 = vmul.f32 %v1564, %v1247
    %1568 = vrot.lane.b32.xlu0 %v1565, 64
    %v1569 = vpop.permute.xlu0 %1568
    %v1571 = vmul.f32 %v1564, %v1569
    %1573 = vrot.lane.b32.xlu0 %v1571, 32
    %v1574 = vpop.permute.xlu0 %1573
    %v1576 = vadd.f32 %v1566, %v1574
    %v1577 = vtanh.pop %v1576
    %1579 = vrot.lane.b32.xlu0 %v1577, 64
    %v1580 = vpop.permute.xlu0 %1579
    %v1582 = vmul.f32 %v1564, %v1580
    %1584 = vrot.lane.b32.xlu0 %v1321, 32
    %v1585 = vpop.permute.xlu0 %1584
    %v1586 = vsel %vm97, %v1585, 0
    %1588 = vmatpush.msra.mxu0 0.0
    %1589 = vmatpush.msra.mxu0 0.0
    %1590 = vmatpush.msra.mxu0 0.0
    %1591 = vmatpush.msra.mxu0 0.0
    %1592 = vmatpush.msra.mxu0 0.0
    %1593 = vmatpush.msra.mxu0 0.0
    %1594 = vmatpush.msra.mxu0 0.0
    %1595 = vmatpush.msra.mxu0 0.0
    %1596 = vmatpush.msra.mxu0 0.0
    %1597 = vmatpush.msra.mxu0 0.0
    %1598 = vmatpush.msra.mxu0 0.0
    %1599 = vmatpush.msra.mxu0 0.0
    %1600 = vmatpush.msra.mxu0 %v429
    %1601 = vmatpush.msra.mxu0 %v428
    %1602 = vmatpush.msra.mxu0 %v427
    %1603 = vmatpush.msra.mxu0 %v426
    %1604 = vmatmul.f32.gmra.mxu0 %v1586
    %v1605 = vpop.f32.mrf.mxu0
    %v1606 = vadd.f32 0.0, %v1605
    %1607 = vdwg.mxu0
    %1608 = vmatpush.msra.mxu0 0.0
    %1609 = vmatpush.msra.mxu0 0.0
    %1610 = vmatpush.msra.mxu0 0.0
    %1611 = vmatpush.msra.mxu0 0.0
    %1612 = vmatpush.msra.mxu0 0.0
    %1613 = vmatpush.msra.mxu0 0.0
    %1614 = vmatpush.msra.mxu0 0.0
    %1615 = vmatpush.msra.mxu0 0.0
    %1616 = vmatpush.msra.mxu0 0.0
    %1617 = vmatpush.msra.mxu0 0.0
    %1618 = vmatpush.msra.mxu0 0.0
    %1619 = vmatpush.msra.mxu0 0.0
    %1620 = vmatpush.msra.mxu0 %v424
    %1621 = vmatpush.msra.mxu0 %v423
    %1622 = vmatpush.msra.mxu0 %v422
    %1623 = vmatpush.msra.mxu0 %v421
    %1624 = vmatmul.f32.gmra.mxu0 %v1518
    %v1625 = vpop.f32.mrf.mxu0
    %v1626 = vadd.f32 %v1606, %v1625
    %1627 = vdwg.mxu0
    %v1628 = vadd.f32 %v1626, %v476
    %v1629 = vmul.f32 %v1628, 0.5
    %v1630 = vtanh.pop %v1629
    %v1631 = vmul.f32 %v1630, 0.5
    %v1632 = vadd.f32 %v1631, 0.5
    %v1633 = vtanh.pop %v1628
    %v1634 = vmul.f32 %v1632, %v1315
    %1636 = vrot.lane.b32.xlu0 %v1633, 64
    %v1637 = vpop.permute.xlu0 %1636
    %v1639 = vmul.f32 %v1632, %v1637
    %1641 = vrot.lane.b32.xlu0 %v1639, 32
    %v1642 = vpop.permute.xlu0 %1641
    %v1644 = vadd.f32 %v1634, %v1642
    %v1645 = vtanh.pop %v1644
    %1647 = vrot.lane.b32.xlu0 %v1645, 64
    %v1648 = vpop.permute.xlu0 %1647
    %v1650 = vmul.f32 %v1632, %v1648
    %1652 = vrot.lane.b32.xlu0 %v1389, 32
    %v1653 = vpop.permute.xlu0 %1652
    %v1654 = vsel %vm97, %v1653, 0
    %1656 = vmatpush.msra.mxu0 0.0
    %1657 = vmatpush.msra.mxu0 0.0
    %1658 = vmatpush.msra.mxu0 0.0
    %1659 = vmatpush.msra.mxu0 0.0
    %1660 = vmatpush.msra.mxu0 0.0
    %1661 = vmatpush.msra.mxu0 0.0
    %1662 = vmatpush.msra.mxu0 0.0
    %1663 = vmatpush.msra.mxu0 0.0
    %1664 = vmatpush.msra.mxu0 0.0
    %1665 = vmatpush.msra.mxu0 0.0
    %1666 = vmatpush.msra.mxu0 0.0
    %1667 = vmatpush.msra.mxu0 0.0
    %1668 = vmatpush.msra.mxu0 %v707
    %1669 = vmatpush.msra.mxu0 %v706
    %1670 = vmatpush.msra.mxu0 %v705
    %1671 = vmatpush.msra.mxu0 %v704
    %1672 = vmatmul.f32.gmra.mxu0 %v1654
    %v1673 = vpop.f32.mrf.mxu0
    %v1674 = vadd.f32 0.0, %v1673
    %1675 = vdwg.mxu0
    %1676 = vmatpush.msra.mxu0 0.0
    %1677 = vmatpush.msra.mxu0 0.0
    %1678 = vmatpush.msra.mxu0 0.0
    %1679 = vmatpush.msra.mxu0 0.0
    %1680 = vmatpush.msra.mxu0 0.0
    %1681 = vmatpush.msra.mxu0 0.0
    %1682 = vmatpush.msra.mxu0 0.0
    %1683 = vmatpush.msra.mxu0 0.0
    %1684 = vmatpush.msra.mxu0 0.0
    %1685 = vmatpush.msra.mxu0 0.0
    %1686 = vmatpush.msra.mxu0 0.0
    %1687 = vmatpush.msra.mxu0 0.0
    %1688 = vmatpush.msra.mxu0 %v702
    %1689 = vmatpush.msra.mxu0 %v701
    %1690 = vmatpush.msra.mxu0 %v700
    %1691 = vmatpush.msra.mxu0 %v699
    %1692 = vmatmul.f32.gmra.mxu0 %v1586
    %v1693 = vpop.f32.mrf.mxu0
    %v1694 = vadd.f32 %v1674, %v1693
    %1695 = vdwg.mxu0
    %v1696 = vadd.f32 %v1694, %v754
    %v1697 = vmul.f32 %v1696, 0.5
    %v1698 = vtanh.pop %v1697
    %v1699 = vmul.f32 %v1698, 0.5
    %v1700 = vadd.f32 %v1699, 0.5
    %v1701 = vtanh.pop %v1696
    %v1702 = vmul.f32 %v1700, %v1383
    %1704 = vrot.lane.b32.xlu0 %v1701, 64
    %v1705 = vpop.permute.xlu0 %1704
    %v1707 = vmul.f32 %v1700, %v1705
    %1709 = vrot.lane.b32.xlu0 %v1707, 32
    %v1710 = vpop.permute.xlu0 %1709
    %v1712 = vadd.f32 %v1702, %v1710
    %v1713 = vtanh.pop %v1712
    %1715 = vrot.lane.b32.xlu0 %v1713, 64
    %v1716 = vpop.permute.xlu0 %1715
    %v1718 = vmul.f32 %v1700, %v1716
    %1720 = vrot.lane.b32.xlu0 %v1457, 32
    %v1721 = vpop.permute.xlu0 %1720
    %v1722 = vsel %vm97, %v1721, 0
    %1724 = vmatpush.msra.mxu0 0.0
    %1725 = vmatpush.msra.mxu0 0.0
    %1726 = vmatpush.msra.mxu0 0.0
    %1727 = vmatpush.msra.mxu0 0.0
    %1728 = vmatpush.msra.mxu0 0.0
    %1729 = vmatpush.msra.mxu0 0.0
    %1730 = vmatpush.msra.mxu0 0.0
    %1731 = vmatpush.msra.mxu0 0.0
    %1732 = vmatpush.msra.mxu0 0.0
    %1733 = vmatpush.msra.mxu0 0.0
    %1734 = vmatpush.msra.mxu0 0.0
    %1735 = vmatpush.msra.mxu0 0.0
    %1736 = vmatpush.msra.mxu0 %v1053
    %1737 = vmatpush.msra.mxu0 %v1052
    %1738 = vmatpush.msra.mxu0 %v1051
    %1739 = vmatpush.msra.mxu0 %v1050
    %1740 = vmatmul.f32.gmra.mxu0 %v1722
    %v1741 = vpop.f32.mrf.mxu0
    %v1742 = vadd.f32 0.0, %v1741
    %1743 = vdwg.mxu0
    %1744 = vmatpush.msra.mxu0 0.0
    %1745 = vmatpush.msra.mxu0 0.0
    %1746 = vmatpush.msra.mxu0 0.0
    %1747 = vmatpush.msra.mxu0 0.0
    %1748 = vmatpush.msra.mxu0 0.0
    %1749 = vmatpush.msra.mxu0 0.0
    %1750 = vmatpush.msra.mxu0 0.0
    %1751 = vmatpush.msra.mxu0 0.0
    %1752 = vmatpush.msra.mxu0 0.0
    %1753 = vmatpush.msra.mxu0 0.0
    %1754 = vmatpush.msra.mxu0 0.0
    %1755 = vmatpush.msra.mxu0 0.0
    %1756 = vmatpush.msra.mxu0 %v1048
    %1757 = vmatpush.msra.mxu0 %v1047
    %1758 = vmatpush.msra.mxu0 %v1046
    %1759 = vmatpush.msra.mxu0 %v1045
    %1760 = vmatmul.f32.gmra.mxu0 %v1654
    %v1761 = vpop.f32.mrf.mxu0
    %v1762 = vadd.f32 %v1742, %v1761
    %1763 = vdwg.mxu0
    %v1764 = vadd.f32 %v1762, %v1100
    %v1765 = vmul.f32 %v1764, 0.5
    %v1766 = vtanh.pop %v1765
    %v1767 = vmul.f32 %v1766, 0.5
    %v1768 = vadd.f32 %v1767, 0.5
    %v1769 = vtanh.pop %v1764
    %v1770 = vmul.f32 %v1768, %v1451
    %1772 = vrot.lane.b32.xlu0 %v1769, 64
    %v1773 = vpop.permute.xlu0 %1772
    %v1775 = vmul.f32 %v1768, %v1773
    %1777 = vrot.lane.b32.xlu0 %v1775, 32
    %v1778 = vpop.permute.xlu0 %1777
    %v1780 = vadd.f32 %v1770, %v1778
    %v1781 = vtanh.pop %v1780
    %1783 = vrot.lane.b32.xlu0 %v1781, 64
    %v1784 = vpop.permute.xlu0 %1783
    %v1786 = vmul.f32 %v1768, %v1784
    %s1787 = scalar_lea.vmem %s0, 56
    %v1788 = vld [vmem:[%s1787] sm:$0xff]
    %1790 = vset.pattern.permute.xlu0 0
    %1791 = vperm.xlu0 %1790, %v1788
    %v1792 = vpop.permute.xlu0 %1791
    %v1794 = vmul.f32 %v1792, %v91
    %1796 = vrot.lane.b32.xlu0 %v1514, 32
    %v1797 = vpop.permute.xlu0 %1796
    %v1798 = vsel %vm97, %v1797, 0
    %1800 = vmatpush.msra.mxu0 0.0
    %1801 = vmatpush.msra.mxu0 0.0
    %1802 = vmatpush.msra.mxu0 0.0
    %1803 = vmatpush.msra.mxu0 0.0
    %1804 = vmatpush.msra.mxu0 0.0
    %1805 = vmatpush.msra.mxu0 0.0
    %1806 = vmatpush.msra.mxu0 0.0
    %1807 = vmatpush.msra.mxu0 0.0
    %1808 = vmatpush.msra.mxu0 0.0
    %1809 = vmatpush.msra.mxu0 0.0
    %1810 = vmatpush.msra.mxu0 0.0
    %1811 = vmatpush.msra.mxu0 0.0
    %1812 = vmatpush.msra.mxu0 %v96
    %1813 = vmatpush.msra.mxu0 %v95
    %1814 = vmatpush.msra.mxu0 %v94
    %1815 = vmatpush.msra.mxu0 %v93
    %1816 = vmatmul.f32.gmra.mxu0 %v1798
    %v1817 = vpop.f32.mrf.mxu0
    %v1818 = vadd.f32 0.0, %v1817
    %1819 = vdwg.mxu0
    %v1820 = vadd.f32 %v1794, %v1818
    %v1821 = vadd.f32 %v1820, %v124
    %v1822 = vmul.f32 %v1821, 0.5
    %v1823 = vtanh.pop %v1822
    %v1824 = vmul.f32 %v1823, 0.5
    %v1825 = vadd.f32 %v1824, 0.5
    %v1826 = vtanh.pop %v1821
    %v1827 = vmul.f32 %v1825, %v1508
    %1829 = vrot.lane.b32.xlu0 %v1826, 64
    %v1830 = vpop.permute.xlu0 %1829
    %v1832 = vmul.f32 %v1825, %v1830
    %1834 = vrot.lane.b32.xlu0 %v1832, 32
    %v1835 = vpop.permute.xlu0 %1834
    %v1837 = vadd.f32 %v1827, %v1835
    %v1838 = vtanh.pop %v1837
    %1840 = vrot.lane.b32.xlu0 %v1838, 64
    %v1841 = vpop.permute.xlu0 %1840
    %v1843 = vmul.f32 %v1825, %v1841
    %1845 = vrot.lane.b32.xlu0 %v1582, 32
    %v1846 = vpop.permute.xlu0 %1845
    %v1847 = vsel %vm97, %v1846, 0
    %1849 = vmatpush.msra.mxu0 0.0
    %1850 = vmatpush.msra.mxu0 0.0
    %1851 = vmatpush.msra.mxu0 0.0
    %1852 = vmatpush.msra.mxu0 0.0
    %1853 = vmatpush.msra.mxu0 0.0
    %1854 = vmatpush.msra.mxu0 0.0
    %1855 = vmatpush.msra.mxu0 0.0
    %1856 = vmatpush.msra.mxu0 0.0
    %1857 = vmatpush.msra.mxu0 0.0
    %1858 = vmatpush.msra.mxu0 0.0
    %1859 = vmatpush.msra.mxu0 0.0
    %1860 = vmatpush.msra.mxu0 0.0
    %1861 = vmatpush.msra.mxu0 %v219
    %1862 = vmatpush.msra.mxu0 %v218
    %1863 = vmatpush.msra.mxu0 %v217
    %1864 = vmatpush.msra.mxu0 %v216
    %1865 = vmatmul.f32.gmra.mxu0 %v1847
    %v1866 = vpop.f32.mrf.mxu0
    %v1867 = vadd.f32 0.0, %v1866
    %1868 = vdwg.mxu0
    %1869 = vmatpush.msra.mxu0 0.0
    %1870 = vmatpush.msra.mxu0 0.0
    %1871 = vmatpush.msra.mxu0 0.0
    %1872 = vmatpush.msra.mxu0 0.0
    %1873 = vmatpush.msra.mxu0 0.0
    %1874 = vmatpush.msra.mxu0 0.0
    %1875 = vmatpush.msra.mxu0 0.0
    %1876 = vmatpush.msra.mxu0 0.0
    %1877 = vmatpush.msra.mxu0 0.0
    %1878 = vmatpush.msra.mxu0 0.0
    %1879 = vmatpush.msra.mxu0 0.0
    %1880 = vmatpush.msra.mxu0 0.0
    %1881 = vmatpush.msra.mxu0 %v214
    %1882 = vmatpush.msra.mxu0 %v213
    %1883 = vmatpush.msra.mxu0 %v212
    %1884 = vmatpush.msra.mxu0 %v211
    %1885 = vmatmul.f32.gmra.mxu0 %v1798
    %v1886 = vpop.f32.mrf.mxu0
    %v1887 = vadd.f32 %v1867, %v1886
    %1888 = vdwg.mxu0
    %v1889 = vadd.f32 %v1887, %v266
    %v1890 = vmul.f32 %v1889, 0.5
    %v1891 = vtanh.pop %v1890
    %v1892 = vmul.f32 %v1891, 0.5
    %v1893 = vadd.f32 %v1892, 0.5
    %v1894 = vtanh.pop %v1889
    %v1895 = vmul.f32 %v1893, %v1576
    %1897 = vrot.lane.b32.xlu0 %v1894, 64
    %v1898 = vpop.permute.xlu0 %1897
    %v1900 = vmul.f32 %v1893, %v1898
    %1902 = vrot.lane.b32.xlu0 %v1900, 32
    %v1903 = vpop.permute.xlu0 %1902
    %v1905 = vadd.f32 %v1895, %v1903
    %v1906 = vtanh.pop %v1905
    %1908 = vrot.lane.b32.xlu0 %v1906, 64
    %v1909 = vpop.permute.xlu0 %1908
    %v1911 = vmul.f32 %v1893, %v1909
    %1913 = vrot.lane.b32.xlu0 %v1650, 32
    %v1914 = vpop.permute.xlu0 %1913
    %v1915 = vsel %vm97, %v1914, 0
    %1917 = vmatpush.msra.mxu0 0.0
    %1918 = vmatpush.msra.mxu0 0.0
    %1919 = vmatpush.msra.mxu0 0.0
    %1920 = vmatpush.msra.mxu0 0.0
    %1921 = vmatpush.msra.mxu0 0.0
    %1922 = vmatpush.msra.mxu0 0.0
    %1923 = vmatpush.msra.mxu0 0.0
    %1924 = vmatpush.msra.mxu0 0.0
    %1925 = vmatpush.msra.mxu0 0.0
    %1926 = vmatpush.msra.mxu0 0.0
    %1927 = vmatpush.msra.mxu0 0.0
    %1928 = vmatpush.msra.mxu0 0.0
    %1929 = vmatpush.msra.mxu0 %v429
    %1930 = vmatpush.msra.mxu0 %v428
    %1931 = vmatpush.msra.mxu0 %v427
    %1932 = vmatpush.msra.mxu0 %v426
    %1933 = vmatmul.f32.gmra.mxu0 %v1915
    %v1934 = vpop.f32.mrf.mxu0
    %v1935 = vadd.f32 0.0, %v1934
    %1936 = vdwg.mxu0
    %1937 = vmatpush.msra.mxu0 0.0
    %1938 = vmatpush.msra.mxu0 0.0
    %1939 = vmatpush.msra.mxu0 0.0
    %1940 = vmatpush.msra.mxu0 0.0
    %1941 = vmatpush.msra.mxu0 0.0
    %1942 = vmatpush.msra.mxu0 0.0
    %1943 = vmatpush.msra.mxu0 0.0
    %1944 = vmatpush.msra.mxu0 0.0
    %1945 = vmatpush.msra.mxu0 0.0
    %1946 = vmatpush.msra.mxu0 0.0
    %1947 = vmatpush.msra.mxu0 0.0
    %1948 = vmatpush.msra.mxu0 0.0
    %1949 = vmatpush.msra.mxu0 %v424
    %1950 = vmatpush.msra.mxu0 %v423
    %1951 = vmatpush.msra.mxu0 %v422
    %1952 = vmatpush.msra.mxu0 %v421
    %1953 = vmatmul.f32.gmra.mxu0 %v1847
    %v1954 = vpop.f32.mrf.mxu0
    %v1955 = vadd.f32 %v1935, %v1954
    %1956 = vdwg.mxu0
    %v1957 = vadd.f32 %v1955, %v476
    %v1958 = vmul.f32 %v1957, 0.5
    %v1959 = vtanh.pop %v1958
    %v1960 = vmul.f32 %v1959, 0.5
    %v1961 = vadd.f32 %v1960, 0.5
    %v1962 = vtanh.pop %v1957
    %v1963 = vmul.f32 %v1961, %v1644
    %1965 = vrot.lane.b32.xlu0 %v1962, 64
    %v1966 = vpop.permute.xlu0 %1965
    %v1968 = vmul.f32 %v1961, %v1966
    %1970 = vrot.lane.b32.xlu0 %v1968, 32
    %v1971 = vpop.permute.xlu0 %1970
    %v1973 = vadd.f32 %v1963, %v1971
    %v1974 = vtanh.pop %v1973
    %1976 = vrot.lane.b32.xlu0 %v1974, 64
    %v1977 = vpop.permute.xlu0 %1976
    %v1979 = vmul.f32 %v1961, %v1977
    %1981 = vrot.lane.b32.xlu0 %v1718, 32
    %v1982 = vpop.permute.xlu0 %1981
    %v1983 = vsel %vm97, %v1982, 0
    %1985 = vmatpush.msra.mxu0 0.0
    %1986 = vmatpush.msra.mxu0 0.0
    %1987 = vmatpush.msra.mxu0 0.0
    %1988 = vmatpush.msra.mxu0 0.0
    %1989 = vmatpush.msra.mxu0 0.0
    %1990 = vmatpush.msra.mxu0 0.0
    %1991 = vmatpush.msra.mxu0 0.0
    %1992 = vmatpush.msra.mxu0 0.0
    %1993 = vmatpush.msra.mxu0 0.0
    %1994 = vmatpush.msra.mxu0 0.0
    %1995 = vmatpush.msra.mxu0 0.0
    %1996 = vmatpush.msra.mxu0 0.0
    %1997 = vmatpush.msra.mxu0 %v707
    %1998 = vmatpush.msra.mxu0 %v706
    %1999 = vmatpush.msra.mxu0 %v705
    %2000 = vmatpush.msra.mxu0 %v704
    %2001 = vmatmul.f32.gmra.mxu0 %v1983
    %v2002 = vpop.f32.mrf.mxu0
    %v2003 = vadd.f32 0.0, %v2002
    %2004 = vdwg.mxu0
    %2005 = vmatpush.msra.mxu0 0.0
    %2006 = vmatpush.msra.mxu0 0.0
    %2007 = vmatpush.msra.mxu0 0.0
    %2008 = vmatpush.msra.mxu0 0.0
    %2009 = vmatpush.msra.mxu0 0.0
    %2010 = vmatpush.msra.mxu0 0.0
    %2011 = vmatpush.msra.mxu0 0.0
    %2012 = vmatpush.msra.mxu0 0.0
    %2013 = vmatpush.msra.mxu0 0.0
    %2014 = vmatpush.msra.mxu0 0.0
    %2015 = vmatpush.msra.mxu0 0.0
    %2016 = vmatpush.msra.mxu0 0.0
    %2017 = vmatpush.msra.mxu0 %v702
    %2018 = vmatpush.msra.mxu0 %v701
    %2019 = vmatpush.msra.mxu0 %v700
    %2020 = vmatpush.msra.mxu0 %v699
    %2021 = vmatmul.f32.gmra.mxu0 %v1915
    %v2022 = vpop.f32.mrf.mxu0
    %v2023 = vadd.f32 %v2003, %v2022
    %2024 = vdwg.mxu0
    %v2025 = vadd.f32 %v2023, %v754
    %v2026 = vmul.f32 %v2025, 0.5
    %v2027 = vtanh.pop %v2026
    %v2028 = vmul.f32 %v2027, 0.5
    %v2029 = vadd.f32 %v2028, 0.5
    %v2030 = vtanh.pop %v2025
    %v2031 = vmul.f32 %v2029, %v1712
    %2033 = vrot.lane.b32.xlu0 %v2030, 64
    %v2034 = vpop.permute.xlu0 %2033
    %v2036 = vmul.f32 %v2029, %v2034
    %2038 = vrot.lane.b32.xlu0 %v2036, 32
    %v2039 = vpop.permute.xlu0 %2038
    %v2041 = vadd.f32 %v2031, %v2039
    %v2042 = vtanh.pop %v2041
    %2044 = vrot.lane.b32.xlu0 %v2042, 64
    %v2045 = vpop.permute.xlu0 %2044
    %v2047 = vmul.f32 %v2029, %v2045
    %2049 = vrot.lane.b32.xlu0 %v1786, 32
    %v2050 = vpop.permute.xlu0 %2049
    %v2051 = vsel %vm97, %v2050, 0
    %2053 = vmatpush.msra.mxu0 0.0
    %2054 = vmatpush.msra.mxu0 0.0
    %2055 = vmatpush.msra.mxu0 0.0
    %2056 = vmatpush.msra.mxu0 0.0
    %2057 = vmatpush.msra.mxu0 0.0
    %2058 = vmatpush.msra.mxu0 0.0
    %2059 = vmatpush.msra.mxu0 0.0
    %2060 = vmatpush.msra.mxu0 0.0
    %2061 = vmatpush.msra.mxu0 0.0
    %2062 = vmatpush.msra.mxu0 0.0
    %2063 = vmatpush.msra.mxu0 0.0
    %2064 = vmatpush.msra.mxu0 0.0
    %2065 = vmatpush.msra.mxu0 %v1053
    %2066 = vmatpush.msra.mxu0 %v1052
    %2067 = vmatpush.msra.mxu0 %v1051
    %2068 = vmatpush.msra.mxu0 %v1050
    %2069 = vmatmul.f32.gmra.mxu0 %v2051
    %v2070 = vpop.f32.mrf.mxu0
    %v2071 = vadd.f32 0.0, %v2070
    %2072 = vdwg.mxu0
    %2073 = vmatpush.msra.mxu0 0.0
    %2074 = vmatpush.msra.mxu0 0.0
    %2075 = vmatpush.msra.mxu0 0.0
    %2076 = vmatpush.msra.mxu0 0.0
    %2077 = vmatpush.msra.mxu0 0.0
    %2078 = vmatpush.msra.mxu0 0.0
    %2079 = vmatpush.msra.mxu0 0.0
    %2080 = vmatpush.msra.mxu0 0.0
    %2081 = vmatpush.msra.mxu0 0.0
    %2082 = vmatpush.msra.mxu0 0.0
    %2083 = vmatpush.msra.mxu0 0.0
    %2084 = vmatpush.msra.mxu0 0.0
    %2085 = vmatpush.msra.mxu0 %v1048
    %2086 = vmatpush.msra.mxu0 %v1047
    %2087 = vmatpush.msra.mxu0 %v1046
    %2088 = vmatpush.msra.mxu0 %v1045
    %2089 = vmatmul.f32.gmra.mxu0 %v1983
    %v2090 = vpop.f32.mrf.mxu0
    %v2091 = vadd.f32 %v2071, %v2090
    %2092 = vdwg.mxu0
    %v2093 = vadd.f32 %v2091, %v1100
    %v2094 = vmul.f32 %v2093, 0.5
    %v2095 = vtanh.pop %v2094
    %v2096 = vmul.f32 %v2095, 0.5
    %v2097 = vadd.f32 %v2096, 0.5
    %v2098 = vtanh.pop %v2093
    %v2099 = vmul.f32 %v2097, %v1780
    %2101 = vrot.lane.b32.xlu0 %v2098, 64
    %v2102 = vpop.permute.xlu0 %2101
    %v2104 = vmul.f32 %v2097, %v2102
    %2106 = vrot.lane.b32.xlu0 %v2104, 32
    %v2107 = vpop.permute.xlu0 %2106
    %v2109 = vadd.f32 %v2099, %v2107
    %v2110 = vtanh.pop %v2109
    %2112 = vrot.lane.b32.xlu0 %v2110, 64
    %v2113 = vpop.permute.xlu0 %2112
    %v2115 = vmul.f32 %v2097, %v2113
    %2117 = vrot.lane.b32.xlu0 %v1911, 32
    %v2118 = vpop.permute.xlu0 %2117
    %v2119 = vsel %vm97, %v2118, 0
    %2121 = vmatpush.msra.mxu0 0.0
    %2122 = vmatpush.msra.mxu0 0.0
    %2123 = vmatpush.msra.mxu0 0.0
    %2124 = vmatpush.msra.mxu0 0.0
    %2125 = vmatpush.msra.mxu0 0.0
    %2126 = vmatpush.msra.mxu0 0.0
    %2127 = vmatpush.msra.mxu0 0.0
    %2128 = vmatpush.msra.mxu0 0.0
    %2129 = vmatpush.msra.mxu0 0.0
    %2130 = vmatpush.msra.mxu0 0.0
    %2131 = vmatpush.msra.mxu0 0.0
    %2132 = vmatpush.msra.mxu0 0.0
    %2133 = vmatpush.msra.mxu0 %v219
    %2134 = vmatpush.msra.mxu0 %v218
    %2135 = vmatpush.msra.mxu0 %v217
    %2136 = vmatpush.msra.mxu0 %v216
    %2137 = vmatmul.f32.gmra.mxu0 %v2119
    %v2138 = vpop.f32.mrf.mxu0
    %v2139 = vadd.f32 0.0, %v2138
    %2140 = vdwg.mxu0
    %2142 = vrot.lane.b32.xlu0 %v1843, 32
    %v2143 = vpop.permute.xlu0 %2142
    %v2144 = vsel %vm97, %v2143, 0
    %2146 = vmatpush.msra.mxu0 0.0
    %2147 = vmatpush.msra.mxu0 0.0
    %2148 = vmatpush.msra.mxu0 0.0
    %2149 = vmatpush.msra.mxu0 0.0
    %2150 = vmatpush.msra.mxu0 0.0
    %2151 = vmatpush.msra.mxu0 0.0
    %2152 = vmatpush.msra.mxu0 0.0
    %2153 = vmatpush.msra.mxu0 0.0
    %2154 = vmatpush.msra.mxu0 0.0
    %2155 = vmatpush.msra.mxu0 0.0
    %2156 = vmatpush.msra.mxu0 0.0
    %2157 = vmatpush.msra.mxu0 0.0
    %2158 = vmatpush.msra.mxu0 %v214
    %2159 = vmatpush.msra.mxu0 %v213
    %2160 = vmatpush.msra.mxu0 %v212
    %2161 = vmatpush.msra.mxu0 %v211
    %2162 = vmatmul.f32.gmra.mxu0 %v2144
    %v2163 = vpop.f32.mrf.mxu0
    %v2164 = vadd.f32 %v2139, %v2163
    %2165 = vdwg.mxu0
    %v2166 = vadd.f32 %v2164, %v266
    %v2167 = vmul.f32 %v2166, 0.5
    %v2168 = vtanh.pop %v2167
    %v2169 = vmul.f32 %v2168, 0.5
    %v2170 = vadd.f32 %v2169, 0.5
    %v2171 = vtanh.pop %v2166
    %v2172 = vmul.f32 %v2170, %v1905
    %2174 = vrot.lane.b32.xlu0 %v2171, 64
    %v2175 = vpop.permute.xlu0 %2174
    %v2177 = vmul.f32 %v2170, %v2175
    %2179 = vrot.lane.b32.xlu0 %v2177, 32
    %v2180 = vpop.permute.xlu0 %2179
    %v2182 = vadd.f32 %v2172, %v2180
    %v2183 = vtanh.pop %v2182
    %2185 = vrot.lane.b32.xlu0 %v2183, 64
    %v2186 = vpop.permute.xlu0 %2185
    %v2188 = vmul.f32 %v2170, %v2186
    %2190 = vrot.lane.b32.xlu0 %v1979, 32
    %v2191 = vpop.permute.xlu0 %2190
    %v2192 = vsel %vm97, %v2191, 0
    %2194 = vmatpush.msra.mxu0 0.0
    %2195 = vmatpush.msra.mxu0 0.0
    %2196 = vmatpush.msra.mxu0 0.0
    %2197 = vmatpush.msra.mxu0 0.0
    %2198 = vmatpush.msra.mxu0 0.0
    %2199 = vmatpush.msra.mxu0 0.0
    %2200 = vmatpush.msra.mxu0 0.0
    %2201 = vmatpush.msra.mxu0 0.0
    %2202 = vmatpush.msra.mxu0 0.0
    %2203 = vmatpush.msra.mxu0 0.0
    %2204 = vmatpush.msra.mxu0 0.0
    %2205 = vmatpush.msra.mxu0 0.0
    %2206 = vmatpush.msra.mxu0 %v429
    %2207 = vmatpush.msra.mxu0 %v428
    %2208 = vmatpush.msra.mxu0 %v427
    %2209 = vmatpush.msra.mxu0 %v426
    %2210 = vmatmul.f32.gmra.mxu0 %v2192
    %v2211 = vpop.f32.mrf.mxu0
    %v2212 = vadd.f32 0.0, %v2211
    %2213 = vdwg.mxu0
    %2214 = vmatpush.msra.mxu0 0.0
    %2215 = vmatpush.msra.mxu0 0.0
    %2216 = vmatpush.msra.mxu0 0.0
    %2217 = vmatpush.msra.mxu0 0.0
    %2218 = vmatpush.msra.mxu0 0.0
    %2219 = vmatpush.msra.mxu0 0.0
    %2220 = vmatpush.msra.mxu0 0.0
    %2221 = vmatpush.msra.mxu0 0.0
    %2222 = vmatpush.msra.mxu0 0.0
    %2223 = vmatpush.msra.mxu0 0.0
    %2224 = vmatpush.msra.mxu0 0.0
    %2225 = vmatpush.msra.mxu0 0.0
    %2226 = vmatpush.msra.mxu0 %v424
    %2227 = vmatpush.msra.mxu0 %v423
    %2228 = vmatpush.msra.mxu0 %v422
    %2229 = vmatpush.msra.mxu0 %v421
    %2230 = vmatmul.f32.gmra.mxu0 %v2119
    %v2231 = vpop.f32.mrf.mxu0
    %v2232 = vadd.f32 %v2212, %v2231
    %2233 = vdwg.mxu0
    %v2234 = vadd.f32 %v2232, %v476
    %v2235 = vmul.f32 %v2234, 0.5
    %v2236 = vtanh.pop %v2235
    %v2237 = vmul.f32 %v2236, 0.5
    %v2238 = vadd.f32 %v2237, 0.5
    %v2239 = vtanh.pop %v2234
    %v2240 = vmul.f32 %v2238, %v1973
    %2242 = vrot.lane.b32.xlu0 %v2239, 64
    %v2243 = vpop.permute.xlu0 %2242
    %v2245 = vmul.f32 %v2238, %v2243
    %2247 = vrot.lane.b32.xlu0 %v2245, 32
    %v2248 = vpop.permute.xlu0 %2247
    %v2250 = vadd.f32 %v2240, %v2248
    %v2251 = vtanh.pop %v2250
    %2253 = vrot.lane.b32.xlu0 %v2251, 64
    %v2254 = vpop.permute.xlu0 %2253
    %v2256 = vmul.f32 %v2238, %v2254
    %2258 = vrot.lane.b32.xlu0 %v2047, 32
    %v2259 = vpop.permute.xlu0 %2258
    %v2260 = vsel %vm97, %v2259, 0
    %2262 = vmatpush.msra.mxu0 0.0
    %2263 = vmatpush.msra.mxu0 0.0
    %2264 = vmatpush.msra.mxu0 0.0
    %2265 = vmatpush.msra.mxu0 0.0
    %2266 = vmatpush.msra.mxu0 0.0
    %2267 = vmatpush.msra.mxu0 0.0
    %2268 = vmatpush.msra.mxu0 0.0
    %2269 = vmatpush.msra.mxu0 0.0
    %2270 = vmatpush.msra.mxu0 0.0
    %2271 = vmatpush.msra.mxu0 0.0
    %2272 = vmatpush.msra.mxu0 0.0
    %2273 = vmatpush.msra.mxu0 0.0
    %2274 = vmatpush.msra.mxu0 %v707
    %2275 = vmatpush.msra.mxu0 %v706
    %2276 = vmatpush.msra.mxu0 %v705
    %2277 = vmatpush.msra.mxu0 %v704
    %2278 = vmatmul.f32.gmra.mxu0 %v2260
    %v2279 = vpop.f32.mrf.mxu0
    %v2280 = vadd.f32 0.0, %v2279
    %2281 = vdwg.mxu0
    %2282 = vmatpush.msra.mxu0 0.0
    %2283 = vmatpush.msra.mxu0 0.0
    %2284 = vmatpush.msra.mxu0 0.0
    %2285 = vmatpush.msra.mxu0 0.0
    %2286 = vmatpush.msra.mxu0 0.0
    %2287 = vmatpush.msra.mxu0 0.0
    %2288 = vmatpush.msra.mxu0 0.0
    %2289 = vmatpush.msra.mxu0 0.0
    %2290 = vmatpush.msra.mxu0 0.0
    %2291 = vmatpush.msra.mxu0 0.0
    %2292 = vmatpush.msra.mxu0 0.0
    %2293 = vmatpush.msra.mxu0 0.0
    %2294 = vmatpush.msra.mxu0 %v702
    %2295 = vmatpush.msra.mxu0 %v701
    %2296 = vmatpush.msra.mxu0 %v700
    %2297 = vmatpush.msra.mxu0 %v699
    %2298 = vmatmul.f32.gmra.mxu0 %v2192
    %v2299 = vpop.f32.mrf.mxu0
    %v2300 = vadd.f32 %v2280, %v2299
    %2301 = vdwg.mxu0
    %v2302 = vadd.f32 %v2300, %v754
    %v2303 = vmul.f32 %v2302, 0.5
    %v2304 = vtanh.pop %v2303
    %v2305 = vmul.f32 %v2304, 0.5
    %v2306 = vadd.f32 %v2305, 0.5
    %v2307 = vtanh.pop %v2302
    %v2308 = vmul.f32 %v2306, %v2041
    %2310 = vrot.lane.b32.xlu0 %v2307, 64
    %v2311 = vpop.permute.xlu0 %2310
    %v2313 = vmul.f32 %v2306, %v2311
    %2315 = vrot.lane.b32.xlu0 %v2313, 32
    %v2316 = vpop.permute.xlu0 %2315
    %v2318 = vadd.f32 %v2308, %v2316
    %v2319 = vtanh.pop %v2318
    %2321 = vrot.lane.b32.xlu0 %v2319, 64
    %v2322 = vpop.permute.xlu0 %2321
    %v2324 = vmul.f32 %v2306, %v2322
    %2326 = vrot.lane.b32.xlu0 %v2115, 32
    %v2327 = vpop.permute.xlu0 %2326
    %v2328 = vsel %vm97, %v2327, 0
    %2330 = vmatpush.msra.mxu0 0.0
    %2331 = vmatpush.msra.mxu0 0.0
    %2332 = vmatpush.msra.mxu0 0.0
    %2333 = vmatpush.msra.mxu0 0.0
    %2334 = vmatpush.msra.mxu0 0.0
    %2335 = vmatpush.msra.mxu0 0.0
    %2336 = vmatpush.msra.mxu0 0.0
    %2337 = vmatpush.msra.mxu0 0.0
    %2338 = vmatpush.msra.mxu0 0.0
    %2339 = vmatpush.msra.mxu0 0.0
    %2340 = vmatpush.msra.mxu0 0.0
    %2341 = vmatpush.msra.mxu0 0.0
    %2342 = vmatpush.msra.mxu0 %v1053
    %2343 = vmatpush.msra.mxu0 %v1052
    %2344 = vmatpush.msra.mxu0 %v1051
    %2345 = vmatpush.msra.mxu0 %v1050
    %2346 = vmatmul.f32.gmra.mxu0 %v2328
    %v2347 = vpop.f32.mrf.mxu0
    %v2348 = vadd.f32 0.0, %v2347
    %2349 = vdwg.mxu0
    %2350 = vmatpush.msra.mxu0 0.0
    %2351 = vmatpush.msra.mxu0 0.0
    %2352 = vmatpush.msra.mxu0 0.0
    %2353 = vmatpush.msra.mxu0 0.0
    %2354 = vmatpush.msra.mxu0 0.0
    %2355 = vmatpush.msra.mxu0 0.0
    %2356 = vmatpush.msra.mxu0 0.0
    %2357 = vmatpush.msra.mxu0 0.0
    %2358 = vmatpush.msra.mxu0 0.0
    %2359 = vmatpush.msra.mxu0 0.0
    %2360 = vmatpush.msra.mxu0 0.0
    %2361 = vmatpush.msra.mxu0 0.0
    %2362 = vmatpush.msra.mxu0 %v1048
    %2363 = vmatpush.msra.mxu0 %v1047
    %2364 = vmatpush.msra.mxu0 %v1046
    %2365 = vmatpush.msra.mxu0 %v1045
    %2366 = vmatmul.f32.gmra.mxu0 %v2260
    %v2367 = vpop.f32.mrf.mxu0
    %v2368 = vadd.f32 %v2348, %v2367
    %2369 = vdwg.mxu0
    %v2370 = vadd.f32 %v2368, %v1100
    %v2371 = vmul.f32 %v2370, 0.5
    %v2372 = vtanh.pop %v2371
    %v2373 = vmul.f32 %v2372, 0.5
    %v2374 = vadd.f32 %v2373, 0.5
    %v2375 = vtanh.pop %v2370
    %v2376 = vmul.f32 %v2374, %v2109
    %2378 = vrot.lane.b32.xlu0 %v2375, 64
    %v2379 = vpop.permute.xlu0 %2378
    %v2381 = vmul.f32 %v2374, %v2379
    %2383 = vrot.lane.b32.xlu0 %v2381, 32
    %v2384 = vpop.permute.xlu0 %2383
    %v2386 = vadd.f32 %v2376, %v2384
    %v2387 = vtanh.pop %v2386
    %2389 = vrot.lane.b32.xlu0 %v2387, 64
    %v2390 = vpop.permute.xlu0 %2389
    %v2392 = vmul.f32 %v2374, %v2390
    %2394 = vrot.lane.b32.xlu0 %v2256, 32
    %v2395 = vpop.permute.xlu0 %2394
    %v2396 = vsel %vm97, %v2395, 0
    %2398 = vmatpush.msra.mxu0 0.0
    %2399 = vmatpush.msra.mxu0 0.0
    %2400 = vmatpush.msra.mxu0 0.0
    %2401 = vmatpush.msra.mxu0 0.0
    %2402 = vmatpush.msra.mxu0 0.0
    %2403 = vmatpush.msra.mxu0 0.0
    %2404 = vmatpush.msra.mxu0 0.0
    %2405 = vmatpush.msra.mxu0 0.0
    %2406 = vmatpush.msra.mxu0 0.0
    %2407 = vmatpush.msra.mxu0 0.0
    %2408 = vmatpush.msra.mxu0 0.0
    %2409 = vmatpush.msra.mxu0 0.0
    %2410 = vmatpush.msra.mxu0 %v429
    %2411 = vmatpush.msra.mxu0 %v428
    %2412 = vmatpush.msra.mxu0 %v427
    %2413 = vmatpush.msra.mxu0 %v426
    %2414 = vmatmul.f32.gmra.mxu0 %v2396
    %v2415 = vpop.f32.mrf.mxu0
    %v2416 = vadd.f32 0.0, %v2415
    %2417 = vdwg.mxu0
    %2419 = vrot.lane.b32.xlu0 %v2188, 32
    %v2420 = vpop.permute.xlu0 %2419
    %v2421 = vsel %vm97, %v2420, 0
    %2423 = vmatpush.msra.mxu0 0.0
    %2424 = vmatpush.msra.mxu0 0.0
    %2425 = vmatpush.msra.mxu0 0.0
    %2426 = vmatpush.msra.mxu0 0.0
    %2427 = vmatpush.msra.mxu0 0.0
    %2428 = vmatpush.msra.mxu0 0.0
    %2429 = vmatpush.msra.mxu0 0.0
    %2430 = vmatpush.msra.mxu0 0.0
    %2431 = vmatpush.msra.mxu0 0.0
    %2432 = vmatpush.msra.mxu0 0.0
    %2433 = vmatpush.msra.mxu0 0.0
    %2434 = vmatpush.msra.mxu0 0.0
    %2435 = vmatpush.msra.mxu0 %v424
    %2436 = vmatpush.msra.mxu0 %v423
    %2437 = vmatpush.msra.mxu0 %v422
    %2438 = vmatpush.msra.mxu0 %v421
    %2439 = vmatmul.f32.gmra.mxu0 %v2421
    %v2440 = vpop.f32.mrf.mxu0
    %v2441 = vadd.f32 %v2416, %v2440
    %2442 = vdwg.mxu0
    %v2443 = vadd.f32 %v2441, %v476
    %v2444 = vmul.f32 %v2443, 0.5
    %v2445 = vtanh.pop %v2444
    %v2446 = vmul.f32 %v2445, 0.5
    %v2447 = vadd.f32 %v2446, 0.5
    %v2448 = vtanh.pop %v2443
    %v2449 = vmul.f32 %v2447, %v2250
    %2451 = vrot.lane.b32.xlu0 %v2448, 64
    %v2452 = vpop.permute.xlu0 %2451
    %v2454 = vmul.f32 %v2447, %v2452
    %2456 = vrot.lane.b32.xlu0 %v2454, 32
    %v2457 = vpop.permute.xlu0 %2456
    %v2459 = vadd.f32 %v2449, %v2457
    %v2460 = vtanh.pop %v2459
    %2462 = vrot.lane.b32.xlu0 %v2460, 64
    %v2463 = vpop.permute.xlu0 %2462
    %v2465 = vmul.f32 %v2447, %v2463
    %2467 = vrot.lane.b32.xlu0 %v2324, 32
    %v2468 = vpop.permute.xlu0 %2467
    %v2469 = vsel %vm97, %v2468, 0
    %2471 = vmatpush.msra.mxu0 0.0
    %2472 = vmatpush.msra.mxu0 0.0
    %2473 = vmatpush.msra.mxu0 0.0
    %2474 = vmatpush.msra.mxu0 0.0
    %2475 = vmatpush.msra.mxu0 0.0
    %2476 = vmatpush.msra.mxu0 0.0
    %2477 = vmatpush.msra.mxu0 0.0
    %2478 = vmatpush.msra.mxu0 0.0
    %2479 = vmatpush.msra.mxu0 0.0
    %2480 = vmatpush.msra.mxu0 0.0
    %2481 = vmatpush.msra.mxu0 0.0
    %2482 = vmatpush.msra.mxu0 0.0
    %2483 = vmatpush.msra.mxu0 %v707
    %2484 = vmatpush.msra.mxu0 %v706
    %2485 = vmatpush.msra.mxu0 %v705
    %2486 = vmatpush.msra.mxu0 %v704
    %2487 = vmatmul.f32.gmra.mxu0 %v2469
    %v2488 = vpop.f32.mrf.mxu0
    %v2489 = vadd.f32 0.0, %v2488
    %2490 = vdwg.mxu0
    %2491 = vmatpush.msra.mxu0 0.0
    %2492 = vmatpush.msra.mxu0 0.0
    %2493 = vmatpush.msra.mxu0 0.0
    %2494 = vmatpush.msra.mxu0 0.0
    %2495 = vmatpush.msra.mxu0 0.0
    %2496 = vmatpush.msra.mxu0 0.0
    %2497 = vmatpush.msra.mxu0 0.0
    %2498 = vmatpush.msra.mxu0 0.0
    %2499 = vmatpush.msra.mxu0 0.0
    %2500 = vmatpush.msra.mxu0 0.0
    %2501 = vmatpush.msra.mxu0 0.0
    %2502 = vmatpush.msra.mxu0 0.0
    %2503 = vmatpush.msra.mxu0 %v702
    %2504 = vmatpush.msra.mxu0 %v701
    %2505 = vmatpush.msra.mxu0 %v700
    %2506 = vmatpush.msra.mxu0 %v699
    %2507 = vmatmul.f32.gmra.mxu0 %v2396
    %v2508 = vpop.f32.mrf.mxu0
    %v2509 = vadd.f32 %v2489, %v2508
    %2510 = vdwg.mxu0
    %v2511 = vadd.f32 %v2509, %v754
    %v2512 = vmul.f32 %v2511, 0.5
    %v2513 = vtanh.pop %v2512
    %v2514 = vmul.f32 %v2513, 0.5
    %v2515 = vadd.f32 %v2514, 0.5
    %v2516 = vtanh.pop %v2511
    %v2517 = vmul.f32 %v2515, %v2318
    %2519 = vrot.lane.b32.xlu0 %v2516, 64
    %v2520 = vpop.permute.xlu0 %2519
    %v2522 = vmul.f32 %v2515, %v2520
    %2524 = vrot.lane.b32.xlu0 %v2522, 32
    %v2525 = vpop.permute.xlu0 %2524
    %v2527 = vadd.f32 %v2517, %v2525
    %v2528 = vtanh.pop %v2527
    %2530 = vrot.lane.b32.xlu0 %v2528, 64
    %v2531 = vpop.permute.xlu0 %2530
    %v2533 = vmul.f32 %v2515, %v2531
    %2535 = vrot.lane.b32.xlu0 %v2392, 32
    %v2536 = vpop.permute.xlu0 %2535
    %v2537 = vsel %vm97, %v2536, 0
    %2539 = vmatpush.msra.mxu0 0.0
    %2540 = vmatpush.msra.mxu0 0.0
    %2541 = vmatpush.msra.mxu0 0.0
    %2542 = vmatpush.msra.mxu0 0.0
    %2543 = vmatpush.msra.mxu0 0.0
    %2544 = vmatpush.msra.mxu0 0.0
    %2545 = vmatpush.msra.mxu0 0.0
    %2546 = vmatpush.msra.mxu0 0.0
    %2547 = vmatpush.msra.mxu0 0.0
    %2548 = vmatpush.msra.mxu0 0.0
    %2549 = vmatpush.msra.mxu0 0.0
    %2550 = vmatpush.msra.mxu0 0.0
    %2551 = vmatpush.msra.mxu0 %v1053
    %2552 = vmatpush.msra.mxu0 %v1052
    %2553 = vmatpush.msra.mxu0 %v1051
    %2554 = vmatpush.msra.mxu0 %v1050
    %2555 = vmatmul.f32.gmra.mxu0 %v2537
    %v2556 = vpop.f32.mrf.mxu0
    %v2557 = vadd.f32 0.0, %v2556
    %2558 = vdwg.mxu0
    %2559 = vmatpush.msra.mxu0 0.0
    %2560 = vmatpush.msra.mxu0 0.0
    %2561 = vmatpush.msra.mxu0 0.0
    %2562 = vmatpush.msra.mxu0 0.0
    %2563 = vmatpush.msra.mxu0 0.0
    %2564 = vmatpush.msra.mxu0 0.0
    %2565 = vmatpush.msra.mxu0 0.0
    %2566 = vmatpush.msra.mxu0 0.0
    %2567 = vmatpush.msra.mxu0 0.0
    %2568 = vmatpush.msra.mxu0 0.0
    %2569 = vmatpush.msra.mxu0 0.0
    %2570 = vmatpush.msra.mxu0 0.0
    %2571 = vmatpush.msra.mxu0 %v1048
    %2572 = vmatpush.msra.mxu0 %v1047
    %2573 = vmatpush.msra.mxu0 %v1046
    %2574 = vmatpush.msra.mxu0 %v1045
    %2575 = vmatmul.f32.gmra.mxu0 %v2469
    %v2576 = vpop.f32.mrf.mxu0
    %v2577 = vadd.f32 %v2557, %v2576
    %2578 = vdwg.mxu0
    %v2579 = vadd.f32 %v2577, %v1100
    %v2580 = vmul.f32 %v2579, 0.5
    %v2581 = vtanh.pop %v2580
    %v2582 = vmul.f32 %v2581, 0.5
    %v2583 = vadd.f32 %v2582, 0.5
    %v2584 = vtanh.pop %v2579
    %v2585 = vmul.f32 %v2583, %v2386
    %2587 = vrot.lane.b32.xlu0 %v2584, 64
    %v2588 = vpop.permute.xlu0 %2587
    %v2590 = vmul.f32 %v2583, %v2588
    %2592 = vrot.lane.b32.xlu0 %v2590, 32
    %v2593 = vpop.permute.xlu0 %2592
    %v2595 = vadd.f32 %v2585, %v2593
    %v2596 = vtanh.pop %v2595
    %2598 = vrot.lane.b32.xlu0 %v2596, 64
    %v2599 = vpop.permute.xlu0 %2598
    %v2601 = vmul.f32 %v2583, %v2599
    %2603 = vrot.lane.b32.xlu0 %v2533, 32
    %v2604 = vpop.permute.xlu0 %2603
    %v2605 = vsel %vm97, %v2604, 0
    %2607 = vmatpush.msra.mxu0 0.0
    %2608 = vmatpush.msra.mxu0 0.0
    %2609 = vmatpush.msra.mxu0 0.0
    %2610 = vmatpush.msra.mxu0 0.0
    %2611 = vmatpush.msra.mxu0 0.0
    %2612 = vmatpush.msra.mxu0 0.0
    %2613 = vmatpush.msra.mxu0 0.0
    %2614 = vmatpush.msra.mxu0 0.0
    %2615 = vmatpush.msra.mxu0 0.0
    %2616 = vmatpush.msra.mxu0 0.0
    %2617 = vmatpush.msra.mxu0 0.0
    %2618 = vmatpush.msra.mxu0 0.0
    %2619 = vmatpush.msra.mxu0 %v707
    %2620 = vmatpush.msra.mxu0 %v706
    %2621 = vmatpush.msra.mxu0 %v705
    %2622 = vmatpush.msra.mxu0 %v704
    %2623 = vmatmul.f32.gmra.mxu0 %v2605
    %v2624 = vpop.f32.mrf.mxu0
    %v2625 = vadd.f32 0.0, %v2624
    %2626 = vdwg.mxu0
    %2628 = vrot.lane.b32.xlu0 %v2465, 32
    %v2629 = vpop.permute.xlu0 %2628
    %v2630 = vsel %vm97, %v2629, 0
    %2632 = vmatpush.msra.mxu0 0.0
    %2633 = vmatpush.msra.mxu0 0.0
    %2634 = vmatpush.msra.mxu0 0.0
    %2635 = vmatpush.msra.mxu0 0.0
    %2636 = vmatpush.msra.mxu0 0.0
    %2637 = vmatpush.msra.mxu0 0.0
    %2638 = vmatpush.msra.mxu0 0.0
    %2639 = vmatpush.msra.mxu0 0.0
    %2640 = vmatpush.msra.mxu0 0.0
    %2641 = vmatpush.msra.mxu0 0.0
    %2642 = vmatpush.msra.mxu0 0.0
    %2643 = vmatpush.msra.mxu0 0.0
    %2644 = vmatpush.msra.mxu0 %v702
    %2645 = vmatpush.msra.mxu0 %v701
    %2646 = vmatpush.msra.mxu0 %v700
    %2647 = vmatpush.msra.mxu0 %v699
    %2648 = vmatmul.f32.gmra.mxu0 %v2630
    %v2649 = vpop.f32.mrf.mxu0
    %v2650 = vadd.f32 %v2625, %v2649
    %2651 = vdwg.mxu0
    %v2652 = vadd.f32 %v2650, %v754
    %v2653 = vmul.f32 %v2652, 0.5
    %v2654 = vtanh.pop %v2653
    %v2655 = vmul.f32 %v2654, 0.5
    %v2656 = vadd.f32 %v2655, 0.5
    %v2657 = vtanh.pop %v2652
    %v2658 = vmul.f32 %v2656, %v2527
    %2660 = vrot.lane.b32.xlu0 %v2657, 64
    %v2661 = vpop.permute.xlu0 %2660
    %v2663 = vmul.f32 %v2656, %v2661
    %2665 = vrot.lane.b32.xlu0 %v2663, 32
    %v2666 = vpop.permute.xlu0 %2665
    %v2668 = vadd.f32 %v2658, %v2666
    %v2669 = vtanh.pop %v2668
    %2671 = vrot.lane.b32.xlu0 %v2669, 64
    %v2672 = vpop.permute.xlu0 %2671
    %v2674 = vmul.f32 %v2656, %v2672
    %2676 = vrot.lane.b32.xlu0 %v2601, 32
    %v2677 = vpop.permute.xlu0 %2676
    %v2678 = vsel %vm97, %v2677, 0
    %2680 = vmatpush.msra.mxu0 0.0
    %2681 = vmatpush.msra.mxu0 0.0
    %2682 = vmatpush.msra.mxu0 0.0
    %2683 = vmatpush.msra.mxu0 0.0
    %2684 = vmatpush.msra.mxu0 0.0
    %2685 = vmatpush.msra.mxu0 0.0
    %2686 = vmatpush.msra.mxu0 0.0
    %2687 = vmatpush.msra.mxu0 0.0
    %2688 = vmatpush.msra.mxu0 0.0
    %2689 = vmatpush.msra.mxu0 0.0
    %2690 = vmatpush.msra.mxu0 0.0
    %2691 = vmatpush.msra.mxu0 0.0
    %2692 = vmatpush.msra.mxu0 %v1053
    %2693 = vmatpush.msra.mxu0 %v1052
    %2694 = vmatpush.msra.mxu0 %v1051
    %2695 = vmatpush.msra.mxu0 %v1050
    %2696 = vmatmul.f32.gmra.mxu0 %v2678
    %v2697 = vpop.f32.mrf.mxu0
    %v2698 = vadd.f32 0.0, %v2697
    %2699 = vdwg.mxu0
    %2700 = vmatpush.msra.mxu0 0.0
    %2701 = vmatpush.msra.mxu0 0.0
    %2702 = vmatpush.msra.mxu0 0.0
    %2703 = vmatpush.msra.mxu0 0.0
    %2704 = vmatpush.msra.mxu0 0.0
    %2705 = vmatpush.msra.mxu0 0.0
    %2706 = vmatpush.msra.mxu0 0.0
    %2707 = vmatpush.msra.mxu0 0.0
    %2708 = vmatpush.msra.mxu0 0.0
    %2709 = vmatpush.msra.mxu0 0.0
    %2710 = vmatpush.msra.mxu0 0.0
    %2711 = vmatpush.msra.mxu0 0.0
    %2712 = vmatpush.msra.mxu0 %v1048
    %2713 = vmatpush.msra.mxu0 %v1047
    %2714 = vmatpush.msra.mxu0 %v1046
    %2715 = vmatpush.msra.mxu0 %v1045
    %2716 = vmatmul.f32.gmra.mxu0 %v2605
    %v2717 = vpop.f32.mrf.mxu0
    %v2718 = vadd.f32 %v2698, %v2717
    %2719 = vdwg.mxu0
    %v2720 = vadd.f32 %v2718, %v1100
    %v2721 = vmul.f32 %v2720, 0.5
    %v2722 = vtanh.pop %v2721
    %v2723 = vmul.f32 %v2722, 0.5
    %v2724 = vadd.f32 %v2723, 0.5
    %v2725 = vtanh.pop %v2720
    %v2726 = vmul.f32 %v2724, %v2595
    %2728 = vrot.lane.b32.xlu0 %v2725, 64
    %v2729 = vpop.permute.xlu0 %2728
    %v2731 = vmul.f32 %v2724, %v2729
    %2733 = vrot.lane.b32.xlu0 %v2731, 32
    %v2734 = vpop.permute.xlu0 %2733
    %v2736 = vadd.f32 %v2726, %v2734
    %v2737 = vtanh.pop %v2736
    %2739 = vrot.lane.b32.xlu0 %v2737, 64
    %v2740 = vpop.permute.xlu0 %2739
    %v2742 = vmul.f32 %v2724, %v2740
    %2744 = vrot.lane.b32.xlu0 %v2742, 32
    %v2745 = vpop.permute.xlu0 %2744
    %v2746 = vsel %vm97, %v2745, 0
    %2748 = vmatpush.msra.mxu0 0.0
    %2749 = vmatpush.msra.mxu0 0.0
    %2750 = vmatpush.msra.mxu0 0.0
    %2751 = vmatpush.msra.mxu0 0.0
    %2752 = vmatpush.msra.mxu0 0.0
    %2753 = vmatpush.msra.mxu0 0.0
    %2754 = vmatpush.msra.mxu0 0.0
    %2755 = vmatpush.msra.mxu0 0.0
    %2756 = vmatpush.msra.mxu0 0.0
    %2757 = vmatpush.msra.mxu0 0.0
    %2758 = vmatpush.msra.mxu0 0.0
    %2759 = vmatpush.msra.mxu0 0.0
    %2760 = vmatpush.msra.mxu0 %v1053
    %2761 = vmatpush.msra.mxu0 %v1052
    %2762 = vmatpush.msra.mxu0 %v1051
    %2763 = vmatpush.msra.mxu0 %v1050
    %2764 = vmatmul.f32.gmra.mxu0 %v2746
    %v2765 = vpop.f32.mrf.mxu0
    %v2766 = vadd.f32 0.0, %v2765
    %2767 = vdwg.mxu0
    %2769 = vrot.lane.b32.xlu0 %v2674, 32
    %v2770 = vpop.permute.xlu0 %2769
    %v2771 = vsel %vm97, %v2770, 0
    %2773 = vmatpush.msra.mxu0 0.0
    %2774 = vmatpush.msra.mxu0 0.0
    %2775 = vmatpush.msra.mxu0 0.0
    %2776 = vmatpush.msra.mxu0 0.0
    %2777 = vmatpush.msra.mxu0 0.0
    %2778 = vmatpush.msra.mxu0 0.0
    %2779 = vmatpush.msra.mxu0 0.0
    %2780 = vmatpush.msra.mxu0 0.0
    %2781 = vmatpush.msra.mxu0 0.0
    %2782 = vmatpush.msra.mxu0 0.0
    %2783 = vmatpush.msra.mxu0 0.0
    %2784 = vmatpush.msra.mxu0 0.0
    %2785 = vmatpush.msra.mxu0 %v1048
    %2786 = vmatpush.msra.mxu0 %v1047
    %2787 = vmatpush.msra.mxu0 %v1046
    %2788 = vmatpush.msra.mxu0 %v1045
    %2789 = vmatmul.f32.gmra.mxu0 %v2771
    %v2790 = vpop.f32.mrf.mxu0
    %v2791 = vadd.f32 %v2766, %v2790
    %2792 = vdwg.mxu0
    %v2793 = vadd.f32 %v2791, %v1100
    %v2794 = vmul.f32 %v2793, 0.5
    %v2795 = vtanh.pop %v2794
    %v2796 = vmul.f32 %v2795, 0.5
    %v2797 = vadd.f32 %v2796, 0.5
    %v2798 = vtanh.pop %v2793
    %v2799 = vmul.f32 %v2797, %v2736
    %2801 = vrot.lane.b32.xlu0 %v2798, 64
    %v2802 = vpop.permute.xlu0 %2801
    %v2804 = vmul.f32 %v2797, %v2802
    %2806 = vrot.lane.b32.xlu0 %v2804, 32
    %v2807 = vpop.permute.xlu0 %2806
    %v2809 = vadd.f32 %v2799, %v2807
    %v2810 = vtanh.pop %v2809
    %2812 = vrot.lane.b32.xlu0 %v2810, 64
    %v2813 = vpop.permute.xlu0 %2812
    %v2815 = vmul.f32 %v2797, %v2813
    %2817 = vst.msk [vmem:[%s9] sm:$0xff] %vm97, %v2143
    %2819 = vrot.lane.b32.xlu0 %v1837, 96
    %v2820 = vpop.permute.xlu0 %2819
    %2822 = vst.msk [vmem:[%s10] sm:$0xff] %vm97, %v2820
    %s2824 = scalar_lea.vmem %s9, 8
    %2825 = vst.msk [vmem:[%s2824] sm:$0xff] %vm97, %v2420
    %2827 = vrot.lane.b32.xlu0 %v2182, 96
    %v2828 = vpop.permute.xlu0 %2827
    %s2830 = scalar_lea.vmem %s10, 8
    %2831 = vst.msk [vmem:[%s2830] sm:$0xff] %vm97, %v2828
    %s2833 = scalar_lea.vmem %s9, 16
    %2834 = vst.msk [vmem:[%s2833] sm:$0xff] %vm97, %v2629
    %2836 = vrot.lane.b32.xlu0 %v2459, 96
    %v2837 = vpop.permute.xlu0 %2836
    %s2839 = scalar_lea.vmem %s10, 16
    %2840 = vst.msk [vmem:[%s2839] sm:$0xff] %vm97, %v2837
    %s2842 = scalar_lea.vmem %s9, 24
    %2843 = vst.msk [vmem:[%s2842] sm:$0xff] %vm97, %v2770
    %2845 = vrot.lane.b32.xlu0 %v2668, 96
    %v2846 = vpop.permute.xlu0 %2845
    %s2848 = scalar_lea.vmem %s10, 24
    %2849 = vst.msk [vmem:[%s2848] sm:$0xff] %vm97, %v2846
    %2851 = vrot.lane.b32.xlu0 %v2815, 32
    %v2852 = vpop.permute.xlu0 %2851
    %s2854 = scalar_lea.vmem %s9, 32
    %2855 = vst.msk [vmem:[%s2854] sm:$0xff] %vm97, %v2852
    %2857 = vrot.lane.b32.xlu0 %v2809, 96
    %v2858 = vpop.permute.xlu0 %2857
    %s2860 = scalar_lea.vmem %s10, 32
    %2861 = vst.msk [vmem:[%s2860] sm:$0xff] %vm97, %v2858
    %v2862 = vld [vmem:[%s6] sm:$0x1]
    %v2864 = vperm.slane %v2862, 0
    %2865 = vrot.lane.b32.xlu0 %v2864, 96
    %v2866 = vpop.permute.xlu0 %2865
    %v2868 = vmul.f32 %v2815, %v2866
    %2870 = vrot.lane.b32.xlu0 %v2868, 32
    %v2871 = vpop.permute.xlu0 %2870
    %v2873 = vsel %vm97, %v2871, 0.0
    %2874 = vadd.xlane.f32.xlu0 %v2873
    %v2875 = vpop.xlane.xlu0 %2874
    %v2876 = vld [vmem:[#allocation2] sm:$0x1]
    %v2878 = vperm.slane %v2876, 0
    %v2880 = vadd.f32 %v2875, %v2878
    %vm2881 = vcmask 7168
    %2882 = vst.msk [vmem:[%s8] sm:$0xff] %vm2881, %v2880
    // Predicated region
    $region42: #{lstm_forward.1} parent=1 // pred_check
      _
    $region43: #{lstm_forward.1} parent=1 // pred_check_branch
      %2884 = sbr.rel (0) target = $region45
    $region44: #{lstm_forward.1} parent=1 // pred_region
      _
    $region45: #{lstm_forward.1} parent=1 // pred_fallthru
      _
    // Predicated region
    $region46: #{lstm_forward.1} parent=1 // pred_check
      _
    $region47: #{lstm_forward.1} parent=1 // pred_check_branch
      %2886 = sbr.rel (0) target = $region49
    $region48: #{lstm_forward.1} parent=1 // pred_region
      _
    $region49: #{lstm_forward.1} parent=1 // pred_fallthru
      _
    // Predicated region
    $region50: #{lstm_forward.1} parent=1 // pred_check
      _
    $region51: #{lstm_forward.1} parent=1 // pred_check_branch
      %2888 = sbr.rel (0) target = $region53
    $region52: #{lstm_forward.1} parent=1 // pred_region
      _
    $region53: #{lstm_forward.1} parent=1 // pred_fallthru
      _
    // Predicated region
    $region54: #{lstm_forward.1} parent=1 // pred_check
      _
    $region55: #{lstm_forward.1} parent=1 // pred_check_branch
      %2890 = sbr.rel (0) target = $region57
    $region56: #{lstm_forward.1} parent=1 // pred_region
      _
    $region57: #{lstm_forward.1} parent=1 // pred_fallthru
      _
    // Predicated region
    $region58: #{lstm_forward.1} parent=1 // pred_check
      _
    $region59: #{lstm_forward.1} parent=1 // pred_check_branch
      %2892 = sbr.rel (0) target = $region61
    $region60: #{lstm_forward.1} parent=1 // pred_region
      _
    $region61: #{lstm_forward.1} parent=1 // pred_fallthru
      _
    // Predicated region
    $region62: #{lstm_forward.1} parent=1 // pred_check
      _
    $region63: #{lstm_forward.1} parent=1 // pred_check_branch
      %2894 = sbr.rel (0) target = $region65
    $region64: #{lstm_forward.1} parent=1 // pred_region
      _
    $region65: #{lstm_forward.1} parent=1 // pred_fallthru
      _
    %2895 = vsyncpa [#allocation4], 1
    %2896 = vsyncpa [#allocation6], 1

</llo_original>
